<compile_context>
chip_gen: v5e
topology: v5e:2x2
jax: 0.10.0
libtpu: 0.0.40
codegen_flags: <defaults>
</compile_context>

<pallas_src>
import numpy as np
import jax
import jax.numpy as jnp
from jax.experimental import pallas as pl
from jax.experimental.pallas import tpu as pltpu

_EPS = 1e-5
_NEG_SLOPE = 0.05
_K = 4          # every conv in D2 is 4x4
_LANE = 128     # lane-dense padding for the fc output


def _out_hw(h_in, stride, pad, k=_K):
    return (h_in + 2 * pad - k) // stride + 1


# ---------------------------------------------------------------------------
# Host-side packing (pure glue, done once, tiny arrays).
# ---------------------------------------------------------------------------

def _gather_stack(h_in, w_in, h_out, w_out, stride, pad, batch, dtype):
    """One-hot tap-gather matrices stacked over the 16 taps.

    g[t, (b*Ho + i)*Wo + j, (b*Hi + r)*Wi + q] == 1
        iff r == stride*i + di - pad and q == stride*j + dj - pad,
    with t = di*4 + dj; missing rows encode the conv zero-padding.
    """
    k = _K
    g = np.zeros((k * k, h_out * w_out, h_in * w_in), np.float32)
    for di in range(k):
        for dj in range(k):
            t = di * k + dj
            for i in range(h_out):
                r = stride * i + di - pad
                if r < 0 or r >= h_in:
                    continue
                for j in range(w_out):
                    q = stride * j + dj - pad
                    if q < 0 or q >= w_in:
                        continue
                    g[t, i * w_out + j, r * w_in + q] = 1.0
    eye = np.eye(batch, dtype=np.float32)           # block-diag over the tile
    g = np.einsum('tpq,bc->tbpcq', g, eye).reshape(
        k * k, batch * h_out * w_out, batch * h_in * w_in)
    return jnp.asarray(g, dtype)


def _pack_weight(w_oihw, pad_out=None, dtype=jnp.bfloat16):
    """(C_out, C_in, kH, kW) -> (kH*kW*C_in, C_out[padded]); tap-major, c-minor."""
    c_out, c_in, kh, kw = w_oihw.shape
    wp = jnp.transpose(jnp.asarray(w_oihw), (2, 3, 1, 0)).reshape(kh * kw * c_in,
                                                                  c_out)
    if pad_out is not None and pad_out > c_out:
        wp = jnp.pad(wp, ((0, 0), (0, pad_out - c_out)))
    return wp.astype(dtype)


def pack_params(params, batch_tile, input_hw=32, mxu_dtype=jnp.bfloat16):
    """PyTorch OIHW weights -> kernel constants + static metadata."""
    h0 = input_hw
    h1 = _out_hw(h0, 2, 1)          # 16
    h2 = _out_hw(h1, 2, 1)          # 8
    h3 = _out_hw(h2, 2, 1)          # 4
    h4 = _out_hw(h3, 1, 0)          # 1
    assert h4 == 1

    w1, w2, w3, w4 = params["conv1"], params["conv2"], params["conv3"], params["fc"]
    c1, c2, c3, n_out = w1.shape[0], w2.shape[0], w3.shape[0], w4.shape[0]

    packed = (
        _pack_weight(w1, dtype=mxu_dtype),                               # (16, C1)
        _gather_stack(h1, h1, h2, h2, 2, 1, batch_tile, mxu_dtype),      # (16, B*64, B*256)
        _pack_weight(w2, dtype=mxu_dtype),                               # (16*C1, C2)
        _gather_stack(h2, h2, h3, h3, 2, 1, batch_tile, mxu_dtype),      # (16, B*16, B*64)
        _pack_weight(w3, dtype=mxu_dtype),                               # (16*C2, C3)
        _gather_stack(h3, h3, h4, h4, 1, 0, batch_tile, mxu_dtype),      # (16, B, B*16)
        _pack_weight(w4, pad_out=_LANE, dtype=mxu_dtype),                # (16*C3, 128)
    )
    meta = dict(batch_tile=batch_tile, input_hw=h0, n_out=n_out,
                h=(h1, h2, h3, h4), c=(1, c1, c2, c3))
    return packed, meta


# ---------------------------------------------------------------------------
# Fused kernel.
# ---------------------------------------------------------------------------

def _leaky(y):
    return jnp.where(y >= 0, y, _NEG_SLOPE * y)


def _instance_norm(y, batch, p_out):
    """Per-sample, per-channel norm on a (batch*P, C) channels-last block."""
    c = y.shape[-1]
    y3 = y.reshape(batch, p_out, c)
    mean = jnp.mean(y3, axis=1, keepdims=True)
    d = y3 - mean
    var = jnp.mean(d * d, axis=1, keepdims=True)       # two-pass, biased (torch)
    y3 = d * jax.lax.rsqrt(var + _EPS)
    return y3.reshape(batch * p_out, c)


def _conv_block(a_f32, g_ref, w_ref, *, batch, p_out, inorm, leaky):
    """One conv layer, channels-last.

    a_f32: (batch*P_in, C_in) f32, rows ordered (b, h, w).
    g_ref: (16, batch*P_out, batch*P_in) one-hot tap gathers (bf16).
    w_ref: (16*C_in, C_out) packed weights (bf16).
    """
    a16 = a_f32.astype(jnp.bfloat16)
    taps = [jnp.dot(g_ref[t], a16, preferred_element_type=jnp.float32)
            for t in range(_K * _K)]
    patches = jnp.concatenate(taps, axis=1).astype(jnp.bfloat16)  # (B*P_out, 16*C_in)
    y = jnp.dot(patches, w_ref[...], preferred_element_type=jnp.float32)
    if inorm:
        y = _instance_norm(y, batch, p_out)
    if leaky:
        y = _leaky(y)
    return y


def _make_kernel(meta):
    batch = meta["batch_tile"]
    _, h2, h3, _ = meta["h"]

    def kernel(p1_ref, w1_ref, g2_ref, w2_ref, g3_ref, w3_ref, g4_ref, w4_ref,
               out_ref):
        # conv1: host-built patches (B*256, 16) @ (16, C1), then LeakyReLU.
        a1 = jnp.dot(p1_ref[...].astype(jnp.bfloat16), w1_ref[...],
                     preferred_element_type=jnp.float32)
        a1 = _leaky(a1)                                               # (B*256, C1)
        a2 = _conv_block(a1, g2_ref, w2_ref, batch=batch, p_out=h2 * h2,
                         inorm=True, leaky=True)                      # (B*64, C2)
        a3 = _conv_block(a2, g3_ref, w3_ref, batch=batch, p_out=h3 * h3,
                         inorm=True, leaky=True)                      # (B*16, C3)
        a4 = _conv_block(a3, g4_ref, w4_ref, batch=batch, p_out=1,
                         inorm=False, leaky=False)                    # (B, 128)
        out_ref[0] = a4.astype(out_ref.dtype)

    return kernel


# ---------------------------------------------------------------------------
# Wrapper: conv1 patch extraction (layout glue), pallas_call, output slicing.
# ---------------------------------------------------------------------------

def make_d2_forward(meta):
    kernel = _make_kernel(meta)
    bt = meta["batch_tile"]
    hw = meta["input_hw"]
    h1, h2, h3, _ = meta["h"]
    n_out = meta["n_out"]
    _, c1, c2, c3 = meta["c"]

    def _const_spec(arr):
        nd = arr.ndim
        return pl.BlockSpec(arr.shape, lambda i, _nd=nd: (0,) * _nd)

    @jax.jit
    def forward(x_nchw, *consts):
        n, c, h, w = x_nchw.shape
        assert (c, h, w) == (1, hw, hw), (c, h, w)
        assert n % bt == 0
        n_blk = n // bt

        # conv1 im2col in the wrapper (C_in == 1, tiny; pure layout glue).
        xp = jnp.pad(jnp.transpose(x_nchw, (0, 2, 3, 1)),
                     ((0, 0), (1, 1), (1, 1), (0, 0)))                # (N,34,34,1)
        stop = 2 * (h1 - 1) + 1
        taps = [xp[:, di:di + stop:2, dj:dj + stop:2, :]
                for di in range(_K) for dj in range(_K)]              # 16x(N,16,16,1)
        p1 = jnp.concatenate(taps, axis=-1).reshape(n * h1 * h1, _K * _K)

        # Advisory cost estimate (true conv MACs + gather MACs).
        p1s, p2s, p3s = h1 * h1, h2 * h2, h3 * h3
        macs = (n * p1s * 16 * 1 * c1 + n * p2s * 16 * c1 * c2 +
                n * p3s * 16 * c2 * c3 + n * 1 * 16 * c3 * _LANE)
        gather_macs = 16 * n_blk * ((bt * p2s) * (bt * p1s) * c1 +
                                    (bt * p3s) * (bt * p2s) * c2 +
                                    bt * (bt * p3s) * c3)
        const_bytes = sum(int(np.prod(a.shape)) * a.dtype.itemsize for a in consts)
        cost = pl.CostEstimate(flops=2 * (macs + gather_macs),
                               transcendentals=n * (c2 + c3),
                               bytes_accessed=int(p1.size) * 4 + const_bytes
                               + n * _LANE * 4)

        out = pl.pallas_call(
            kernel,
            out_shape=jax.ShapeDtypeStruct((n_blk, bt, _LANE), jnp.float32),
            grid=(n_blk,),
            in_specs=[pl.BlockSpec((bt * h1 * h1, _K * _K), lambda i: (i, 0))]
                     + [_const_spec(a) for a in consts],
            out_specs=pl.BlockSpec((1, bt, _LANE), lambda i: (i, 0, 0)),
            compiler_params=pltpu.CompilerParams(
                dimension_semantics=("parallel",),
                vmem_limit_bytes=48 * 1024 * 1024),
            cost_estimate=cost,
        )(p1, *consts)

        logits = out.reshape(n, _LANE)[:, :n_out]
        return jnp.squeeze(logits)          # torch-style .squeeze()

    return forward


# ---------------------------------------------------------------------------
# Synthetic parameters (PyTorch Conv2d OIHW layout, bias=False).
# ---------------------------------------------------------------------------

def init_params(key, conv_dim=8, use_labels=False):
    n_out = 11 if use_labels else 1
    ks = jax.random.split(key, 4)

    def w(k, co, ci, ksz):
        scale = 1.0 / np.sqrt(ci * ksz * ksz)
        return jax.random.uniform(k, (co, ci, ksz, ksz), jnp.float32, -scale, scale)

    return {
        "conv1": w(ks[0], conv_dim, 1, 4),               # no InstanceNorm
        "conv2": w(ks[1], conv_dim * 2, conv_dim, 4),
        "conv3": w(ks[2], conv_dim * 4, conv_dim * 2, 4),
        "fc":    w(ks[3], n_out, conv_dim * 4, 4),       # stride 1, pad 0
    }


if __name__ == "__main__":
    key = jax.random.PRNGKey(0)
    k_param, k_x = jax.random.split(key)

    conv_dim = 8          # small test size (module default is 64)
    batch = 2
    use_labels = False

    # SVHN-style grayscale 32x32 input.
    x = jax.random.normal(k_x, (batch, 1, 32, 32), jnp.float32)
    params = init_params(k_param, conv_dim=conv_dim, use_labels=use_labels)

    # batch_tile == batch: the whole batch is folded into every matmul's M
    # dimension and the full batch is processed by a single pallas_call.
    packed, meta = pack_params(params, batch_tile=batch)
    forward = make_d2_forward(meta)

    out = forward(x, *packed)
    jax.block_until_ready(out)
    expected = (batch,) if not use_labels else (batch, 11)
    assert out.shape == expected, out.shape
    print("KERNEL_OK")
</pallas_src>

<mosaic_0001>
module attributes {stable_mosaic.version = 11 : i64} {
  func.func @kernel(%arg0: i32, %arg1: memref<512x16xf32, #tpu.memory_space<vmem>>, %arg2: memref<16x8xbf16, #tpu.memory_space<vmem>>, %arg3: memref<16x128x512xbf16, #tpu.memory_space<vmem>>, %arg4: memref<128x16xbf16, #tpu.memory_space<vmem>>, %arg5: memref<16x32x128xbf16, #tpu.memory_space<vmem>>, %arg6: memref<256x32xbf16, #tpu.memory_space<vmem>>, %arg7: memref<16x2x32xbf16, #tpu.memory_space<vmem>>, %arg8: memref<512x128xbf16, #tpu.memory_space<vmem>>, %arg9: memref<1x2x128xf32, #tpu.memory_space<vmem>>) attributes {dimension_semantics = [#tpu.dimension_semantics<parallel>], iteration_bounds = array<i64: 1>, scalar_prefetch = 0 : i64, scratch_operands = 0 : i64, tpu.core_type = #tpu.core_type<tc>, window_params = [{transform_indices = @transform_0, window_bounds = array<i64: 512, 16>}, {pipeline_mode = #tpu.pipeline_mode<synchronous>, transform_indices = @transform_1, window_bounds = array<i64: 16, 8>}, {pipeline_mode = #tpu.pipeline_mode<synchronous>, transform_indices = @transform_2, window_bounds = array<i64: 16, 128, 512>}, {pipeline_mode = #tpu.pipeline_mode<synchronous>, transform_indices = @transform_3, window_bounds = array<i64: 128, 16>}, {pipeline_mode = #tpu.pipeline_mode<synchronous>, transform_indices = @transform_4, window_bounds = array<i64: 16, 32, 128>}, {pipeline_mode = #tpu.pipeline_mode<synchronous>, transform_indices = @transform_5, window_bounds = array<i64: 256, 32>}, {pipeline_mode = #tpu.pipeline_mode<synchronous>, transform_indices = @transform_6, window_bounds = array<i64: 16, 2, 32>}, {pipeline_mode = #tpu.pipeline_mode<synchronous>, transform_indices = @transform_7, window_bounds = array<i64: 512, 128>}, {transform_indices = @transform_8, window_bounds = array<i64: 1, 2, 128>}]} {
    %c0 = arith.constant 0 : index
    %c0_0 = arith.constant 0 : index
    %0 = vector.load %arg1[%c0, %c0_0] : memref<512x16xf32, #tpu.memory_space<vmem>>, vector<512x16xf32>
    %1 = arith.truncf %0 : vector<512x16xf32> to vector<512x16xbf16>
    %c0_1 = arith.constant 0 : index
    %c0_2 = arith.constant 0 : index
    %2 = vector.load %arg2[%c0_1, %c0_2] : memref<16x8xbf16, #tpu.memory_space<vmem>>, vector<16x8xbf16>
    %cst = arith.constant dense<0.000000e+00> : vector<512x8xf32>
    %3 = tpu.matmul %1, %2, %cst {dimension_numbers = #tpu.dot_dimension_numbers<[1], [0], [0], [1], [0, 0, 1, 1], [], []>} : vector<512x16xbf16>, vector<16x8xbf16>, vector<512x8xf32> -> vector<512x8xf32>
    %cst_3 = arith.constant 0.000000e+00 : f32
    %4 = vector.broadcast %cst_3 : f32 to vector<512x8xf32>
    %5 = arith.cmpf oge, %3, %4 : vector<512x8xf32>
    %cst_4 = arith.constant 5.000000e-02 : f32
    %6 = vector.broadcast %cst_4 : f32 to vector<512x8xf32>
    %7 = arith.mulf %6, %3 : vector<512x8xf32>
    %8 = arith.select %5, %3, %7 : vector<512x8xi1>, vector<512x8xf32>
    %9 = arith.truncf %8 : vector<512x8xf32> to vector<512x8xbf16>
    %c0_5 = arith.constant 0 : index
    %c0_6 = arith.constant 0 : index
    %c0_7 = arith.constant 0 : index
    %10 = vector.load %arg3[%c0_5, %c0_6, %c0_7] : memref<16x128x512xbf16, #tpu.memory_space<vmem>>, vector<1x128x512xbf16>
    %11 = vector.shape_cast %10 : vector<1x128x512xbf16> to vector<128x512xbf16>
    %cst_8 = arith.constant dense<0.000000e+00> : vector<128x8xf32>
    %12 = tpu.matmul %11, %9, %cst_8 {dimension_numbers = #tpu.dot_dimension_numbers<[1], [0], [0], [1], [0, 0, 1, 1], [], []>} : vector<128x512xbf16>, vector<512x8xbf16>, vector<128x8xf32> -> vector<128x8xf32>
    %c1 = arith.constant 1 : index
    %c0_9 = arith.constant 0 : index
    %c0_10 = arith.constant 0 : index
    %13 = vector.load %arg3[%c1, %c0_9, %c0_10] : memref<16x128x512xbf16, #tpu.memory_space<vmem>>, vector<1x128x512xbf16>
    %14 = vector.shape_cast %13 : vector<1x128x512xbf16> to vector<128x512xbf16>
    %cst_11 = arith.constant dense<0.000000e+00> : vector<128x8xf32>
    %15 = tpu.matmul %14, %9, %cst_11 {dimension_numbers = #tpu.dot_dimension_numbers<[1], [0], [0], [1], [0, 0, 1, 1], [], []>} : vector<128x512xbf16>, vector<512x8xbf16>, vector<128x8xf32> -> vector<128x8xf32>
    %c2 = arith.constant 2 : index
    %c0_12 = arith.constant 0 : index
    %c0_13 = arith.constant 0 : index
    %16 = vector.load %arg3[%c2, %c0_12, %c0_13] : memref<16x128x512xbf16, #tpu.memory_space<vmem>>, vector<1x128x512xbf16>
    %17 = vector.shape_cast %16 : vector<1x128x512xbf16> to vector<128x512xbf16>
    %cst_14 = arith.constant dense<0.000000e+00> : vector<128x8xf32>
    %18 = tpu.matmul %17, %9, %cst_14 {dimension_numbers = #tpu.dot_dimension_numbers<[1], [0], [0], [1], [0, 0, 1, 1], [], []>} : vector<128x512xbf16>, vector<512x8xbf16>, vector<128x8xf32> -> vector<128x8xf32>
    %c3 = arith.constant 3 : index
    %c0_15 = arith.constant 0 : index
    %c0_16 = arith.constant 0 : index
    %19 = vector.load %arg3[%c3, %c0_15, %c0_16] : memref<16x128x512xbf16, #tpu.memory_space<vmem>>, vector<1x128x512xbf16>
    %20 = vector.shape_cast %19 : vector<1x128x512xbf16> to vector<128x512xbf16>
    %cst_17 = arith.constant dense<0.000000e+00> : vector<128x8xf32>
    %21 = tpu.matmul %20, %9, %cst_17 {dimension_numbers = #tpu.dot_dimension_numbers<[1], [0], [0], [1], [0, 0, 1, 1], [], []>} : vector<128x512xbf16>, vector<512x8xbf16>, vector<128x8xf32> -> vector<128x8xf32>
    %c4 = arith.constant 4 : index
    %c0_18 = arith.constant 0 : index
    %c0_19 = arith.constant 0 : index
    %22 = vector.load %arg3[%c4, %c0_18, %c0_19] : memref<16x128x512xbf16, #tpu.memory_space<vmem>>, vector<1x128x512xbf16>
    %23 = vector.shape_cast %22 : vector<1x128x512xbf16> to vector<128x512xbf16>
    %cst_20 = arith.constant dense<0.000000e+00> : vector<128x8xf32>
    %24 = tpu.matmul %23, %9, %cst_20 {dimension_numbers = #tpu.dot_dimension_numbers<[1], [0], [0], [1], [0, 0, 1, 1], [], []>} : vector<128x512xbf16>, vector<512x8xbf16>, vector<128x8xf32> -> vector<128x8xf32>
    %c5 = arith.constant 5 : index
    %c0_21 = arith.constant 0 : index
    %c0_22 = arith.constant 0 : index
    %25 = vector.load %arg3[%c5, %c0_21, %c0_22] : memref<16x128x512xbf16, #tpu.memory_space<vmem>>, vector<1x128x512xbf16>
    %26 = vector.shape_cast %25 : vector<1x128x512xbf16> to vector<128x512xbf16>
    %cst_23 = arith.constant dense<0.000000e+00> : vector<128x8xf32>
    %27 = tpu.matmul %26, %9, %cst_23 {dimension_numbers = #tpu.dot_dimension_numbers<[1], [0], [0], [1], [0, 0, 1, 1], [], []>} : vector<128x512xbf16>, vector<512x8xbf16>, vector<128x8xf32> -> vector<128x8xf32>
    %c6 = arith.constant 6 : index
    %c0_24 = arith.constant 0 : index
    %c0_25 = arith.constant 0 : index
    %28 = vector.load %arg3[%c6, %c0_24, %c0_25] : memref<16x128x512xbf16, #tpu.memory_space<vmem>>, vector<1x128x512xbf16>
    %29 = vector.shape_cast %28 : vector<1x128x512xbf16> to vector<128x512xbf16>
    %cst_26 = arith.constant dense<0.000000e+00> : vector<128x8xf32>
    %30 = tpu.matmul %29, %9, %cst_26 {dimension_numbers = #tpu.dot_dimension_numbers<[1], [0], [0], [1], [0, 0, 1, 1], [], []>} : vector<128x512xbf16>, vector<512x8xbf16>, vector<128x8xf32> -> vector<128x8xf32>
    %c7 = arith.constant 7 : index
    %c0_27 = arith.constant 0 : index
    %c0_28 = arith.constant 0 : index
    %31 = vector.load %arg3[%c7, %c0_27, %c0_28] : memref<16x128x512xbf16, #tpu.memory_space<vmem>>, vector<1x128x512xbf16>
    %32 = vector.shape_cast %31 : vector<1x128x512xbf16> to vector<128x512xbf16>
    %cst_29 = arith.constant dense<0.000000e+00> : vector<128x8xf32>
    %33 = tpu.matmul %32, %9, %cst_29 {dimension_numbers = #tpu.dot_dimension_numbers<[1], [0], [0], [1], [0, 0, 1, 1], [], []>} : vector<128x512xbf16>, vector<512x8xbf16>, vector<128x8xf32> -> vector<128x8xf32>
    %c8 = arith.constant 8 : index
    %c0_30 = arith.constant 0 : index
    %c0_31 = arith.constant 0 : index
    %34 = vector.load %arg3[%c8, %c0_30, %c0_31] : memref<16x128x512xbf16, #tpu.memory_space<vmem>>, vector<1x128x512xbf16>
    %35 = vector.shape_cast %34 : vector<1x128x512xbf16> to vector<128x512xbf16>
    %cst_32 = arith.constant dense<0.000000e+00> : vector<128x8xf32>
    %36 = tpu.matmul %35, %9, %cst_32 {dimension_numbers = #tpu.dot_dimension_numbers<[1], [0], [0], [1], [0, 0, 1, 1], [], []>} : vector<128x512xbf16>, vector<512x8xbf16>, vector<128x8xf32> -> vector<128x8xf32>
    %c9 = arith.constant 9 : index
    %c0_33 = arith.constant 0 : index
    %c0_34 = arith.constant 0 : index
    %37 = vector.load %arg3[%c9, %c0_33, %c0_34] : memref<16x128x512xbf16, #tpu.memory_space<vmem>>, vector<1x128x512xbf16>
    %38 = vector.shape_cast %37 : vector<1x128x512xbf16> to vector<128x512xbf16>
    %cst_35 = arith.constant dense<0.000000e+00> : vector<128x8xf32>
    %39 = tpu.matmul %38, %9, %cst_35 {dimension_numbers = #tpu.dot_dimension_numbers<[1], [0], [0], [1], [0, 0, 1, 1], [], []>} : vector<128x512xbf16>, vector<512x8xbf16>, vector<128x8xf32> -> vector<128x8xf32>
    %c10 = arith.constant 10 : index
    %c0_36 = arith.constant 0 : index
    %c0_37 = arith.constant 0 : index
    %40 = vector.load %arg3[%c10, %c0_36, %c0_37] : memref<16x128x512xbf16, #tpu.memory_space<vmem>>, vector<1x128x512xbf16>
    %41 = vector.shape_cast %40 : vector<1x128x512xbf16> to vector<128x512xbf16>
    %cst_38 = arith.constant dense<0.000000e+00> : vector<128x8xf32>
    %42 = tpu.matmul %41, %9, %cst_38 {dimension_numbers = #tpu.dot_dimension_numbers<[1], [0], [0], [1], [0, 0, 1, 1], [], []>} : vector<128x512xbf16>, vector<512x8xbf16>, vector<128x8xf32> -> vector<128x8xf32>
    %c11 = arith.constant 11 : index
    %c0_39 = arith.constant 0 : index
    %c0_40 = arith.constant 0 : index
    %43 = vector.load %arg3[%c11, %c0_39, %c0_40] : memref<16x128x512xbf16, #tpu.memory_space<vmem>>, vector<1x128x512xbf16>
    %44 = vector.shape_cast %43 : vector<1x128x512xbf16> to vector<128x512xbf16>
    %cst_41 = arith.constant dense<0.000000e+00> : vector<128x8xf32>
    %45 = tpu.matmul %44, %9, %cst_41 {dimension_numbers = #tpu.dot_dimension_numbers<[1], [0], [0], [1], [0, 0, 1, 1], [], []>} : vector<128x512xbf16>, vector<512x8xbf16>, vector<128x8xf32> -> vector<128x8xf32>
    %c12 = arith.constant 12 : index
    %c0_42 = arith.constant 0 : index
    %c0_43 = arith.constant 0 : index
    %46 = vector.load %arg3[%c12, %c0_42, %c0_43] : memref<16x128x512xbf16, #tpu.memory_space<vmem>>, vector<1x128x512xbf16>
    %47 = vector.shape_cast %46 : vector<1x128x512xbf16> to vector<128x512xbf16>
    %cst_44 = arith.constant dense<0.000000e+00> : vector<128x8xf32>
    %48 = tpu.matmul %47, %9, %cst_44 {dimension_numbers = #tpu.dot_dimension_numbers<[1], [0], [0], [1], [0, 0, 1, 1], [], []>} : vector<128x512xbf16>, vector<512x8xbf16>, vector<128x8xf32> -> vector<128x8xf32>
    %c13 = arith.constant 13 : index
    %c0_45 = arith.constant 0 : index
    %c0_46 = arith.constant 0 : index
    %49 = vector.load %arg3[%c13, %c0_45, %c0_46] : memref<16x128x512xbf16, #tpu.memory_space<vmem>>, vector<1x128x512xbf16>
    %50 = vector.shape_cast %49 : vector<1x128x512xbf16> to vector<128x512xbf16>
    %cst_47 = arith.constant dense<0.000000e+00> : vector<128x8xf32>
    %51 = tpu.matmul %50, %9, %cst_47 {dimension_numbers = #tpu.dot_dimension_numbers<[1], [0], [0], [1], [0, 0, 1, 1], [], []>} : vector<128x512xbf16>, vector<512x8xbf16>, vector<128x8xf32> -> vector<128x8xf32>
    %c14 = arith.constant 14 : index
    %c0_48 = arith.constant 0 : index
    %c0_49 = arith.constant 0 : index
    %52 = vector.load %arg3[%c14, %c0_48, %c0_49] : memref<16x128x512xbf16, #tpu.memory_space<vmem>>, vector<1x128x512xbf16>
    %53 = vector.shape_cast %52 : vector<1x128x512xbf16> to vector<128x512xbf16>
    %cst_50 = arith.constant dense<0.000000e+00> : vector<128x8xf32>
    %54 = tpu.matmul %53, %9, %cst_50 {dimension_numbers = #tpu.dot_dimension_numbers<[1], [0], [0], [1], [0, 0, 1, 1], [], []>} : vector<128x512xbf16>, vector<512x8xbf16>, vector<128x8xf32> -> vector<128x8xf32>
    %c15 = arith.constant 15 : index
    %c0_51 = arith.constant 0 : index
    %c0_52 = arith.constant 0 : index
    %55 = vector.load %arg3[%c15, %c0_51, %c0_52] : memref<16x128x512xbf16, #tpu.memory_space<vmem>>, vector<1x128x512xbf16>
    %56 = vector.shape_cast %55 : vector<1x128x512xbf16> to vector<128x512xbf16>
    %cst_53 = arith.constant dense<0.000000e+00> : vector<128x8xf32>
    %57 = tpu.matmul %56, %9, %cst_53 {dimension_numbers = #tpu.dot_dimension_numbers<[1], [0], [0], [1], [0, 0, 1, 1], [], []>} : vector<128x512xbf16>, vector<512x8xbf16>, vector<128x8xf32> -> vector<128x8xf32>
    %58 = tpu.concatenate %12, %15, %18, %21, %24, %27, %30, %33, %36, %39, %42, %45, %48, %51, %54, %57 in 1 : vector<128x8xf32>, vector<128x8xf32>, vector<128x8xf32>, vector<128x8xf32>, vector<128x8xf32>, vector<128x8xf32>, vector<128x8xf32>, vector<128x8xf32>, vector<128x8xf32>, vector<128x8xf32>, vector<128x8xf32>, vector<128x8xf32>, vector<128x8xf32>, vector<128x8xf32>, vector<128x8xf32>, vector<128x8xf32> -> vector<128x128xf32>
    %59 = arith.truncf %58 : vector<128x128xf32> to vector<128x128xbf16>
    %c0_54 = arith.constant 0 : index
    %c0_55 = arith.constant 0 : index
    %60 = vector.load %arg4[%c0_54, %c0_55] : memref<128x16xbf16, #tpu.memory_space<vmem>>, vector<128x16xbf16>
    %cst_56 = arith.constant dense<0.000000e+00> : vector<128x16xf32>
    %61 = tpu.matmul %59, %60, %cst_56 {dimension_numbers = #tpu.dot_dimension_numbers<[1], [0], [0], [1], [0, 0, 1, 1], [], []>} : vector<128x128xbf16>, vector<128x16xbf16>, vector<128x16xf32> -> vector<128x16xf32>
    %62 = vector.shape_cast %61 : vector<128x16xf32> to vector<2x64x16xf32>
    %cst_57 = arith.constant dense<0.000000e+00> : vector<2x16xf32>
    %63 = vector.multi_reduction <add>, %62, %cst_57 [1] : vector<2x64x16xf32> to vector<2x16xf32>
    %64 = vector.shape_cast %63 : vector<2x16xf32> to vector<2x1x16xf32>
    %cst_58 = arith.constant 6.400000e+01 : f32
    %65 = vector.broadcast %cst_58 : f32 to vector<2x1x16xf32>
    %66 = arith.divf %64, %65 : vector<2x1x16xf32>
    %67 = vector.broadcast %66 : vector<2x1x16xf32> to vector<2x64x16xf32>
    %68 = arith.subf %62, %67 : vector<2x64x16xf32>
    %69 = arith.mulf %68, %68 : vector<2x64x16xf32>
    %cst_59 = arith.constant dense<0.000000e+00> : vector<2x16xf32>
    %70 = vector.multi_reduction <add>, %69, %cst_59 [1] : vector<2x64x16xf32> to vector<2x16xf32>
    %71 = vector.shape_cast %70 : vector<2x16xf32> to vector<2x1x16xf32>
    %cst_60 = arith.constant 6.400000e+01 : f32
    %72 = vector.broadcast %cst_60 : f32 to vector<2x1x16xf32>
    %73 = arith.divf %71, %72 : vector<2x1x16xf32>
    %cst_61 = arith.constant 9.99999974E-6 : f32
    %74 = vector.broadcast %cst_61 : f32 to vector<2x1x16xf32>
    %75 = arith.addf %73, %74 : vector<2x1x16xf32>
    %76 = math.rsqrt %75 : vector<2x1x16xf32>
    %77 = vector.broadcast %76 : vector<2x1x16xf32> to vector<2x64x16xf32>
    %78 = arith.mulf %68, %77 : vector<2x64x16xf32>
    %79 = vector.shape_cast %78 : vector<2x64x16xf32> to vector<128x16xf32>
    %cst_62 = arith.constant 0.000000e+00 : f32
    %80 = vector.broadcast %cst_62 : f32 to vector<128x16xf32>
    %81 = arith.cmpf oge, %79, %80 : vector<128x16xf32>
    %cst_63 = arith.constant 5.000000e-02 : f32
    %82 = vector.broadcast %cst_63 : f32 to vector<128x16xf32>
    %83 = arith.mulf %82, %79 : vector<128x16xf32>
    %84 = arith.select %81, %79, %83 : vector<128x16xi1>, vector<128x16xf32>
    %85 = arith.truncf %84 : vector<128x16xf32> to vector<128x16xbf16>
    %c0_64 = arith.constant 0 : index
    %c0_65 = arith.constant 0 : index
    %c0_66 = arith.constant 0 : index
    %86 = vector.load %arg5[%c0_64, %c0_65, %c0_66] : memref<16x32x128xbf16, #tpu.memory_space<vmem>>, vector<1x32x128xbf16>
    %87 = vector.shape_cast %86 : vector<1x32x128xbf16> to vector<32x128xbf16>
    %cst_67 = arith.constant dense<0.000000e+00> : vector<32x16xf32>
    %88 = tpu.matmul %87, %85, %cst_67 {dimension_numbers = #tpu.dot_dimension_numbers<[1], [0], [0], [1], [0, 0, 1, 1], [], []>} : vector<32x128xbf16>, vector<128x16xbf16>, vector<32x16xf32> -> vector<32x16xf32>
    %c1_68 = arith.constant 1 : index
    %c0_69 = arith.constant 0 : index
    %c0_70 = arith.constant 0 : index
    %89 = vector.load %arg5[%c1_68, %c0_69, %c0_70] : memref<16x32x128xbf16, #tpu.memory_space<vmem>>, vector<1x32x128xbf16>
    %90 = vector.shape_cast %89 : vector<1x32x128xbf16> to vector<32x128xbf16>
    %cst_71 = arith.constant dense<0.000000e+00> : vector<32x16xf32>
    %91 = tpu.matmul %90, %85, %cst_71 {dimension_numbers = #tpu.dot_dimension_numbers<[1], [0], [0], [1], [0, 0, 1, 1], [], []>} : vector<32x128xbf16>, vector<128x16xbf16>, vector<32x16xf32> -> vector<32x16xf32>
    %c2_72 = arith.constant 2 : index
    %c0_73 = arith.constant 0 : index
    %c0_74 = arith.constant 0 : index
    %92 = vector.load %arg5[%c2_72, %c0_73, %c0_74] : memref<16x32x128xbf16, #tpu.memory_space<vmem>>, vector<1x32x128xbf16>
    %93 = vector.shape_cast %92 : vector<1x32x128xbf16> to vector<32x128xbf16>
    %cst_75 = arith.constant dense<0.000000e+00> : vector<32x16xf32>
    %94 = tpu.matmul %93, %85, %cst_75 {dimension_numbers = #tpu.dot_dimension_numbers<[1], [0], [0], [1], [0, 0, 1, 1], [], []>} : vector<32x128xbf16>, vector<128x16xbf16>, vector<32x16xf32> -> vector<32x16xf32>
    %c3_76 = arith.constant 3 : index
    %c0_77 = arith.constant 0 : index
    %c0_78 = arith.constant 0 : index
    %95 = vector.load %arg5[%c3_76, %c0_77, %c0_78] : memref<16x32x128xbf16, #tpu.memory_space<vmem>>, vector<1x32x128xbf16>
    %96 = vector.shape_cast %95 : vector<1x32x128xbf16> to vector<32x128xbf16>
    %cst_79 = arith.constant dense<0.000000e+00> : vector<32x16xf32>
    %97 = tpu.matmul %96, %85, %cst_79 {dimension_numbers = #tpu.dot_dimension_numbers<[1], [0], [0], [1], [0, 0, 1, 1], [], []>} : vector<32x128xbf16>, vector<128x16xbf16>, vector<32x16xf32> -> vector<32x16xf32>
    %c4_80 = arith.constant 4 : index
    %c0_81 = arith.constant 0 : index
    %c0_82 = arith.constant 0 : index
    %98 = vector.load %arg5[%c4_80, %c0_81, %c0_82] : memref<16x32x128xbf16, #tpu.memory_space<vmem>>, vector<1x32x128xbf16>
    %99 = vector.shape_cast %98 : vector<1x32x128xbf16> to vector<32x128xbf16>
    %cst_83 = arith.constant dense<0.000000e+00> : vector<32x16xf32>
    %100 = tpu.matmul %99, %85, %cst_83 {dimension_numbers = #tpu.dot_dimension_numbers<[1], [0], [0], [1], [0, 0, 1, 1], [], []>} : vector<32x128xbf16>, vector<128x16xbf16>, vector<32x16xf32> -> vector<32x16xf32>
    %c5_84 = arith.constant 5 : index
    %c0_85 = arith.constant 0 : index
    %c0_86 = arith.constant 0 : index
    %101 = vector.load %arg5[%c5_84, %c0_85, %c0_86] : memref<16x32x128xbf16, #tpu.memory_space<vmem>>, vector<1x32x128xbf16>
    %102 = vector.shape_cast %101 : vector<1x32x128xbf16> to vector<32x128xbf16>
    %cst_87 = arith.constant dense<0.000000e+00> : vector<32x16xf32>
    %103 = tpu.matmul %102, %85, %cst_87 {dimension_numbers = #tpu.dot_dimension_numbers<[1], [0], [0], [1], [0, 0, 1, 1], [], []>} : vector<32x128xbf16>, vector<128x16xbf16>, vector<32x16xf32> -> vector<32x16xf32>
    %c6_88 = arith.constant 6 : index
    %c0_89 = arith.constant 0 : index
    %c0_90 = arith.constant 0 : index
    %104 = vector.load %arg5[%c6_88, %c0_89, %c0_90] : memref<16x32x128xbf16, #tpu.memory_space<vmem>>, vector<1x32x128xbf16>
    %105 = vector.shape_cast %104 : vector<1x32x128xbf16> to vector<32x128xbf16>
    %cst_91 = arith.constant dense<0.000000e+00> : vector<32x16xf32>
    %106 = tpu.matmul %105, %85, %cst_91 {dimension_numbers = #tpu.dot_dimension_numbers<[1], [0], [0], [1], [0, 0, 1, 1], [], []>} : vector<32x128xbf16>, vector<128x16xbf16>, vector<32x16xf32> -> vector<32x16xf32>
    %c7_92 = arith.constant 7 : index
    %c0_93 = arith.constant 0 : index
    %c0_94 = arith.constant 0 : index
    %107 = vector.load %arg5[%c7_92, %c0_93, %c0_94] : memref<16x32x128xbf16, #tpu.memory_space<vmem>>, vector<1x32x128xbf16>
    %108 = vector.shape_cast %107 : vector<1x32x128xbf16> to vector<32x128xbf16>
    %cst_95 = arith.constant dense<0.000000e+00> : vector<32x16xf32>
    %109 = tpu.matmul %108, %85, %cst_95 {dimension_numbers = #tpu.dot_dimension_numbers<[1], [0], [0], [1], [0, 0, 1, 1], [], []>} : vector<32x128xbf16>, vector<128x16xbf16>, vector<32x16xf32> -> vector<32x16xf32>
    %c8_96 = arith.constant 8 : index
    %c0_97 = arith.constant 0 : index
    %c0_98 = arith.constant 0 : index
    %110 = vector.load %arg5[%c8_96, %c0_97, %c0_98] : memref<16x32x128xbf16, #tpu.memory_space<vmem>>, vector<1x32x128xbf16>
    %111 = vector.shape_cast %110 : vector<1x32x128xbf16> to vector<32x128xbf16>
    %cst_99 = arith.constant dense<0.000000e+00> : vector<32x16xf32>
    %112 = tpu.matmul %111, %85, %cst_99 {dimension_numbers = #tpu.dot_dimension_numbers<[1], [0], [0], [1], [0, 0, 1, 1], [], []>} : vector<32x128xbf16>, vector<128x16xbf16>, vector<32x16xf32> -> vector<32x16xf32>
    %c9_100 = arith.constant 9 : index
    %c0_101 = arith.constant 0 : index
    %c0_102 = arith.constant 0 : index
    %113 = vector.load %arg5[%c9_100, %c0_101, %c0_102] : memref<16x32x128xbf16, #tpu.memory_space<vmem>>, vector<1x32x128xbf16>
    %114 = vector.shape_cast %113 : vector<1x32x128xbf16> to vector<32x128xbf16>
    %cst_103 = arith.constant dense<0.000000e+00> : vector<32x16xf32>
    %115 = tpu.matmul %114, %85, %cst_103 {dimension_numbers = #tpu.dot_dimension_numbers<[1], [0], [0], [1], [0, 0, 1, 1], [], []>} : vector<32x128xbf16>, vector<128x16xbf16>, vector<32x16xf32> -> vector<32x16xf32>
    %c10_104 = arith.constant 10 : index
    %c0_105 = arith.constant 0 : index
    %c0_106 = arith.constant 0 : index
    %116 = vector.load %arg5[%c10_104, %c0_105, %c0_106] : memref<16x32x128xbf16, #tpu.memory_space<vmem>>, vector<1x32x128xbf16>
    %117 = vector.shape_cast %116 : vector<1x32x128xbf16> to vector<32x128xbf16>
    %cst_107 = arith.constant dense<0.000000e+00> : vector<32x16xf32>
    %118 = tpu.matmul %117, %85, %cst_107 {dimension_numbers = #tpu.dot_dimension_numbers<[1], [0], [0], [1], [0, 0, 1, 1], [], []>} : vector<32x128xbf16>, vector<128x16xbf16>, vector<32x16xf32> -> vector<32x16xf32>
    %c11_108 = arith.constant 11 : index
    %c0_109 = arith.constant 0 : index
    %c0_110 = arith.constant 0 : index
    %119 = vector.load %arg5[%c11_108, %c0_109, %c0_110] : memref<16x32x128xbf16, #tpu.memory_space<vmem>>, vector<1x32x128xbf16>
    %120 = vector.shape_cast %119 : vector<1x32x128xbf16> to vector<32x128xbf16>
    %cst_111 = arith.constant dense<0.000000e+00> : vector<32x16xf32>
    %121 = tpu.matmul %120, %85, %cst_111 {dimension_numbers = #tpu.dot_dimension_numbers<[1], [0], [0], [1], [0, 0, 1, 1], [], []>} : vector<32x128xbf16>, vector<128x16xbf16>, vector<32x16xf32> -> vector<32x16xf32>
    %c12_112 = arith.constant 12 : index
    %c0_113 = arith.constant 0 : index
    %c0_114 = arith.constant 0 : index
    %122 = vector.load %arg5[%c12_112, %c0_113, %c0_114] : memref<16x32x128xbf16, #tpu.memory_space<vmem>>, vector<1x32x128xbf16>
    %123 = vector.shape_cast %122 : vector<1x32x128xbf16> to vector<32x128xbf16>
    %cst_115 = arith.constant dense<0.000000e+00> : vector<32x16xf32>
    %124 = tpu.matmul %123, %85, %cst_115 {dimension_numbers = #tpu.dot_dimension_numbers<[1], [0], [0], [1], [0, 0, 1, 1], [], []>} : vector<32x128xbf16>, vector<128x16xbf16>, vector<32x16xf32> -> vector<32x16xf32>
    %c13_116 = arith.constant 13 : index
    %c0_117 = arith.constant 0 : index
    %c0_118 = arith.constant 0 : index
    %125 = vector.load %arg5[%c13_116, %c0_117, %c0_118] : memref<16x32x128xbf16, #tpu.memory_space<vmem>>, vector<1x32x128xbf16>
    %126 = vector.shape_cast %125 : vector<1x32x128xbf16> to vector<32x128xbf16>
    %cst_119 = arith.constant dense<0.000000e+00> : vector<32x16xf32>
    %127 = tpu.matmul %126, %85, %cst_119 {dimension_numbers = #tpu.dot_dimension_numbers<[1], [0], [0], [1], [0, 0, 1, 1], [], []>} : vector<32x128xbf16>, vector<128x16xbf16>, vector<32x16xf32> -> vector<32x16xf32>
    %c14_120 = arith.constant 14 : index
    %c0_121 = arith.constant 0 : index
    %c0_122 = arith.constant 0 : index
    %128 = vector.load %arg5[%c14_120, %c0_121, %c0_122] : memref<16x32x128xbf16, #tpu.memory_space<vmem>>, vector<1x32x128xbf16>
    %129 = vector.shape_cast %128 : vector<1x32x128xbf16> to vector<32x128xbf16>
    %cst_123 = arith.constant dense<0.000000e+00> : vector<32x16xf32>
    %130 = tpu.matmul %129, %85, %cst_123 {dimension_numbers = #tpu.dot_dimension_numbers<[1], [0], [0], [1], [0, 0, 1, 1], [], []>} : vector<32x128xbf16>, vector<128x16xbf16>, vector<32x16xf32> -> vector<32x16xf32>
    %c15_124 = arith.constant 15 : index
    %c0_125 = arith.constant 0 : index
    %c0_126 = arith.constant 0 : index
    %131 = vector.load %arg5[%c15_124, %c0_125, %c0_126] : memref<16x32x128xbf16, #tpu.memory_space<vmem>>, vector<1x32x128xbf16>
    %132 = vector.shape_cast %131 : vector<1x32x128xbf16> to vector<32x128xbf16>
    %cst_127 = arith.constant dense<0.000000e+00> : vector<32x16xf32>
    %133 = tpu.matmul %132, %85, %cst_127 {dimension_numbers = #tpu.dot_dimension_numbers<[1], [0], [0], [1], [0, 0, 1, 1], [], []>} : vector<32x128xbf16>, vector<128x16xbf16>, vector<32x16xf32> -> vector<32x16xf32>
    %134 = tpu.concatenate %88, %91, %94, %97, %100, %103, %106, %109, %112, %115, %118, %121, %124, %127, %130, %133 in 1 : vector<32x16xf32>, vector<32x16xf32>, vector<32x16xf32>, vector<32x16xf32>, vector<32x16xf32>, vector<32x16xf32>, vector<32x16xf32>, vector<32x16xf32>, vector<32x16xf32>, vector<32x16xf32>, vector<32x16xf32>, vector<32x16xf32>, vector<32x16xf32>, vector<32x16xf32>, vector<32x16xf32>, vector<32x16xf32> -> vector<32x256xf32>
    %135 = arith.truncf %134 : vector<32x256xf32> to vector<32x256xbf16>
    %c0_128 = arith.constant 0 : index
    %c0_129 = arith.constant 0 : index
    %136 = vector.load %arg6[%c0_128, %c0_129] : memref<256x32xbf16, #tpu.memory_space<vmem>>, vector<256x32xbf16>
    %cst_130 = arith.constant dense<0.000000e+00> : vector<32x32xf32>
    %137 = tpu.matmul %135, %136, %cst_130 {dimension_numbers = #tpu.dot_dimension_numbers<[1], [0], [0], [1], [0, 0, 1, 1], [], []>} : vector<32x256xbf16>, vector<256x32xbf16>, vector<32x32xf32> -> vector<32x32xf32>
    %138 = vector.shape_cast %137 : vector<32x32xf32> to vector<2x16x32xf32>
    %cst_131 = arith.constant dense<0.000000e+00> : vector<2x32xf32>
    %139 = vector.multi_reduction <add>, %138, %cst_131 [1] : vector<2x16x32xf32> to vector<2x32xf32>
    %140 = vector.shape_cast %139 : vector<2x32xf32> to vector<2x1x32xf32>
    %cst_132 = arith.constant 1.600000e+01 : f32
    %141 = vector.broadcast %cst_132 : f32 to vector<2x1x32xf32>
    %142 = arith.divf %140, %141 : vector<2x1x32xf32>
    %143 = vector.broadcast %142 : vector<2x1x32xf32> to vector<2x16x32xf32>
    %144 = arith.subf %138, %143 : vector<2x16x32xf32>
    %145 = arith.mulf %144, %144 : vector<2x16x32xf32>
    %cst_133 = arith.constant dense<0.000000e+00> : vector<2x32xf32>
    %146 = vector.multi_reduction <add>, %145, %cst_133 [1] : vector<2x16x32xf32> to vector<2x32xf32>
    %147 = vector.shape_cast %146 : vector<2x32xf32> to vector<2x1x32xf32>
    %cst_134 = arith.constant 1.600000e+01 : f32
    %148 = vector.broadcast %cst_134 : f32 to vector<2x1x32xf32>
    %149 = arith.divf %147, %148 : vector<2x1x32xf32>
    %cst_135 = arith.constant 9.99999974E-6 : f32
    %150 = vector.broadcast %cst_135 : f32 to vector<2x1x32xf32>
    %151 = arith.addf %149, %150 : vector<2x1x32xf32>
    %152 = math.rsqrt %151 : vector<2x1x32xf32>
    %153 = vector.broadcast %152 : vector<2x1x32xf32> to vector<2x16x32xf32>
    %154 = arith.mulf %144, %153 : vector<2x16x32xf32>
    %155 = vector.shape_cast %154 : vector<2x16x32xf32> to vector<32x32xf32>
    %cst_136 = arith.constant 0.000000e+00 : f32
    %156 = vector.broadcast %cst_136 : f32 to vector<32x32xf32>
    %157 = arith.cmpf oge, %155, %156 : vector<32x32xf32>
    %cst_137 = arith.constant 5.000000e-02 : f32
    %158 = vector.broadcast %cst_137 : f32 to vector<32x32xf32>
    %159 = arith.mulf %158, %155 : vector<32x32xf32>
    %160 = arith.select %157, %155, %159 : vector<32x32xi1>, vector<32x32xf32>
    %161 = arith.truncf %160 : vector<32x32xf32> to vector<32x32xbf16>
    %c0_138 = arith.constant 0 : index
    %c0_139 = arith.constant 0 : index
    %c0_140 = arith.constant 0 : index
    %162 = vector.load %arg7[%c0_138, %c0_139, %c0_140] : memref<16x2x32xbf16, #tpu.memory_space<vmem>>, vector<1x2x32xbf16>
    %163 = vector.shape_cast %162 : vector<1x2x32xbf16> to vector<2x32xbf16>
    %cst_141 = arith.constant dense<0.000000e+00> : vector<2x32xf32>
    %164 = tpu.matmul %163, %161, %cst_141 {dimension_numbers = #tpu.dot_dimension_numbers<[1], [0], [0], [1], [0, 0, 1, 1], [], []>} : vector<2x32xbf16>, vector<32x32xbf16>, vector<2x32xf32> -> vector<2x32xf32>
    %c1_142 = arith.constant 1 : index
    %c0_143 = arith.constant 0 : index
    %c0_144 = arith.constant 0 : index
    %165 = vector.load %arg7[%c1_142, %c0_143, %c0_144] : memref<16x2x32xbf16, #tpu.memory_space<vmem>>, vector<1x2x32xbf16>
    %166 = vector.shape_cast %165 : vector<1x2x32xbf16> to vector<2x32xbf16>
    %cst_145 = arith.constant dense<0.000000e+00> : vector<2x32xf32>
    %167 = tpu.matmul %166, %161, %cst_145 {dimension_numbers = #tpu.dot_dimension_numbers<[1], [0], [0], [1], [0, 0, 1, 1], [], []>} : vector<2x32xbf16>, vector<32x32xbf16>, vector<2x32xf32> -> vector<2x32xf32>
    %c2_146 = arith.constant 2 : index
    %c0_147 = arith.constant 0 : index
    %c0_148 = arith.constant 0 : index
    %168 = vector.load %arg7[%c2_146, %c0_147, %c0_148] : memref<16x2x32xbf16, #tpu.memory_space<vmem>>, vector<1x2x32xbf16>
    %169 = vector.shape_cast %168 : vector<1x2x32xbf16> to vector<2x32xbf16>
    %cst_149 = arith.constant dense<0.000000e+00> : vector<2x32xf32>
    %170 = tpu.matmul %169, %161, %cst_149 {dimension_numbers = #tpu.dot_dimension_numbers<[1], [0], [0], [1], [0, 0, 1, 1], [], []>} : vector<2x32xbf16>, vector<32x32xbf16>, vector<2x32xf32> -> vector<2x32xf32>
    %c3_150 = arith.constant 3 : index
    %c0_151 = arith.constant 0 : index
    %c0_152 = arith.constant 0 : index
    %171 = vector.load %arg7[%c3_150, %c0_151, %c0_152] : memref<16x2x32xbf16, #tpu.memory_space<vmem>>, vector<1x2x32xbf16>
    %172 = vector.shape_cast %171 : vector<1x2x32xbf16> to vector<2x32xbf16>
    %cst_153 = arith.constant dense<0.000000e+00> : vector<2x32xf32>
    %173 = tpu.matmul %172, %161, %cst_153 {dimension_numbers = #tpu.dot_dimension_numbers<[1], [0], [0], [1], [0, 0, 1, 1], [], []>} : vector<2x32xbf16>, vector<32x32xbf16>, vector<2x32xf32> -> vector<2x32xf32>
    %c4_154 = arith.constant 4 : index
    %c0_155 = arith.constant 0 : index
    %c0_156 = arith.constant 0 : index
    %174 = vector.load %arg7[%c4_154, %c0_155, %c0_156] : memref<16x2x32xbf16, #tpu.memory_space<vmem>>, vector<1x2x32xbf16>
    %175 = vector.shape_cast %174 : vector<1x2x32xbf16> to vector<2x32xbf16>
    %cst_157 = arith.constant dense<0.000000e+00> : vector<2x32xf32>
    %176 = tpu.matmul %175, %161, %cst_157 {dimension_numbers = #tpu.dot_dimension_numbers<[1], [0], [0], [1], [0, 0, 1, 1], [], []>} : vector<2x32xbf16>, vector<32x32xbf16>, vector<2x32xf32> -> vector<2x32xf32>
    %c5_158 = arith.constant 5 : index
    %c0_159 = arith.constant 0 : index
    %c0_160 = arith.constant 0 : index
    %177 = vector.load %arg7[%c5_158, %c0_159, %c0_160] : memref<16x2x32xbf16, #tpu.memory_space<vmem>>, vector<1x2x32xbf16>
    %178 = vector.shape_cast %177 : vector<1x2x32xbf16> to vector<2x32xbf16>
    %cst_161 = arith.constant dense<0.000000e+00> : vector<2x32xf32>
    %179 = tpu.matmul %178, %161, %cst_161 {dimension_numbers = #tpu.dot_dimension_numbers<[1], [0], [0], [1], [0, 0, 1, 1], [], []>} : vector<2x32xbf16>, vector<32x32xbf16>, vector<2x32xf32> -> vector<2x32xf32>
    %c6_162 = arith.constant 6 : index
    %c0_163 = arith.constant 0 : index
    %c0_164 = arith.constant 0 : index
    %180 = vector.load %arg7[%c6_162, %c0_163, %c0_164] : memref<16x2x32xbf16, #tpu.memory_space<vmem>>, vector<1x2x32xbf16>
    %181 = vector.shape_cast %180 : vector<1x2x32xbf16> to vector<2x32xbf16>
    %cst_165 = arith.constant dense<0.000000e+00> : vector<2x32xf32>
    %182 = tpu.matmul %181, %161, %cst_165 {dimension_numbers = #tpu.dot_dimension_numbers<[1], [0], [0], [1], [0, 0, 1, 1], [], []>} : vector<2x32xbf16>, vector<32x32xbf16>, vector<2x32xf32> -> vector<2x32xf32>
    %c7_166 = arith.constant 7 : index
    %c0_167 = arith.constant 0 : index
    %c0_168 = arith.constant 0 : index
    %183 = vector.load %arg7[%c7_166, %c0_167, %c0_168] : memref<16x2x32xbf16, #tpu.memory_space<vmem>>, vector<1x2x32xbf16>
    %184 = vector.shape_cast %183 : vector<1x2x32xbf16> to vector<2x32xbf16>
    %cst_169 = arith.constant dense<0.000000e+00> : vector<2x32xf32>
    %185 = tpu.matmul %184, %161, %cst_169 {dimension_numbers = #tpu.dot_dimension_numbers<[1], [0], [0], [1], [0, 0, 1, 1], [], []>} : vector<2x32xbf16>, vector<32x32xbf16>, vector<2x32xf32> -> vector<2x32xf32>
    %c8_170 = arith.constant 8 : index
    %c0_171 = arith.constant 0 : index
    %c0_172 = arith.constant 0 : index
    %186 = vector.load %arg7[%c8_170, %c0_171, %c0_172] : memref<16x2x32xbf16, #tpu.memory_space<vmem>>, vector<1x2x32xbf16>
    %187 = vector.shape_cast %186 : vector<1x2x32xbf16> to vector<2x32xbf16>
    %cst_173 = arith.constant dense<0.000000e+00> : vector<2x32xf32>
    %188 = tpu.matmul %187, %161, %cst_173 {dimension_numbers = #tpu.dot_dimension_numbers<[1], [0], [0], [1], [0, 0, 1, 1], [], []>} : vector<2x32xbf16>, vector<32x32xbf16>, vector<2x32xf32> -> vector<2x32xf32>
    %c9_174 = arith.constant 9 : index
    %c0_175 = arith.constant 0 : index
    %c0_176 = arith.constant 0 : index
    %189 = vector.load %arg7[%c9_174, %c0_175, %c0_176] : memref<16x2x32xbf16, #tpu.memory_space<vmem>>, vector<1x2x32xbf16>
    %190 = vector.shape_cast %189 : vector<1x2x32xbf16> to vector<2x32xbf16>
    %cst_177 = arith.constant dense<0.000000e+00> : vector<2x32xf32>
    %191 = tpu.matmul %190, %161, %cst_177 {dimension_numbers = #tpu.dot_dimension_numbers<[1], [0], [0], [1], [0, 0, 1, 1], [], []>} : vector<2x32xbf16>, vector<32x32xbf16>, vector<2x32xf32> -> vector<2x32xf32>
    %c10_178 = arith.constant 10 : index
    %c0_179 = arith.constant 0 : index
    %c0_180 = arith.constant 0 : index
    %192 = vector.load %arg7[%c10_178, %c0_179, %c0_180] : memref<16x2x32xbf16, #tpu.memory_space<vmem>>, vector<1x2x32xbf16>
    %193 = vector.shape_cast %192 : vector<1x2x32xbf16> to vector<2x32xbf16>
    %cst_181 = arith.constant dense<0.000000e+00> : vector<2x32xf32>
    %194 = tpu.matmul %193, %161, %cst_181 {dimension_numbers = #tpu.dot_dimension_numbers<[1], [0], [0], [1], [0, 0, 1, 1], [], []>} : vector<2x32xbf16>, vector<32x32xbf16>, vector<2x32xf32> -> vector<2x32xf32>
    %c11_182 = arith.constant 11 : index
    %c0_183 = arith.constant 0 : index
    %c0_184 = arith.constant 0 : index
    %195 = vector.load %arg7[%c11_182, %c0_183, %c0_184] : memref<16x2x32xbf16, #tpu.memory_space<vmem>>, vector<1x2x32xbf16>
    %196 = vector.shape_cast %195 : vector<1x2x32xbf16> to vector<2x32xbf16>
    %cst_185 = arith.constant dense<0.000000e+00> : vector<2x32xf32>
    %197 = tpu.matmul %196, %161, %cst_185 {dimension_numbers = #tpu.dot_dimension_numbers<[1], [0], [0], [1], [0, 0, 1, 1], [], []>} : vector<2x32xbf16>, vector<32x32xbf16>, vector<2x32xf32> -> vector<2x32xf32>
    %c12_186 = arith.constant 12 : index
    %c0_187 = arith.constant 0 : index
    %c0_188 = arith.constant 0 : index
    %198 = vector.load %arg7[%c12_186, %c0_187, %c0_188] : memref<16x2x32xbf16, #tpu.memory_space<vmem>>, vector<1x2x32xbf16>
    %199 = vector.shape_cast %198 : vector<1x2x32xbf16> to vector<2x32xbf16>
    %cst_189 = arith.constant dense<0.000000e+00> : vector<2x32xf32>
    %200 = tpu.matmul %199, %161, %cst_189 {dimension_numbers = #tpu.dot_dimension_numbers<[1], [0], [0], [1], [0, 0, 1, 1], [], []>} : vector<2x32xbf16>, vector<32x32xbf16>, vector<2x32xf32> -> vector<2x32xf32>
    %c13_190 = arith.constant 13 : index
    %c0_191 = arith.constant 0 : index
    %c0_192 = arith.constant 0 : index
    %201 = vector.load %arg7[%c13_190, %c0_191, %c0_192] : memref<16x2x32xbf16, #tpu.memory_space<vmem>>, vector<1x2x32xbf16>
    %202 = vector.shape_cast %201 : vector<1x2x32xbf16> to vector<2x32xbf16>
    %cst_193 = arith.constant dense<0.000000e+00> : vector<2x32xf32>
    %203 = tpu.matmul %202, %161, %cst_193 {dimension_numbers = #tpu.dot_dimension_numbers<[1], [0], [0], [1], [0, 0, 1, 1], [], []>} : vector<2x32xbf16>, vector<32x32xbf16>, vector<2x32xf32> -> vector<2x32xf32>
    %c14_194 = arith.constant 14 : index
    %c0_195 = arith.constant 0 : index
    %c0_196 = arith.constant 0 : index
    %204 = vector.load %arg7[%c14_194, %c0_195, %c0_196] : memref<16x2x32xbf16, #tpu.memory_space<vmem>>, vector<1x2x32xbf16>
    %205 = vector.shape_cast %204 : vector<1x2x32xbf16> to vector<2x32xbf16>
    %cst_197 = arith.constant dense<0.000000e+00> : vector<2x32xf32>
    %206 = tpu.matmul %205, %161, %cst_197 {dimension_numbers = #tpu.dot_dimension_numbers<[1], [0], [0], [1], [0, 0, 1, 1], [], []>} : vector<2x32xbf16>, vector<32x32xbf16>, vector<2x32xf32> -> vector<2x32xf32>
    %c15_198 = arith.constant 15 : index
    %c0_199 = arith.constant 0 : index
    %c0_200 = arith.constant 0 : index
    %207 = vector.load %arg7[%c15_198, %c0_199, %c0_200] : memref<16x2x32xbf16, #tpu.memory_space<vmem>>, vector<1x2x32xbf16>
    %208 = vector.shape_cast %207 : vector<1x2x32xbf16> to vector<2x32xbf16>
    %cst_201 = arith.constant dense<0.000000e+00> : vector<2x32xf32>
    %209 = tpu.matmul %208, %161, %cst_201 {dimension_numbers = #tpu.dot_dimension_numbers<[1], [0], [0], [1], [0, 0, 1, 1], [], []>} : vector<2x32xbf16>, vector<32x32xbf16>, vector<2x32xf32> -> vector<2x32xf32>
    %210 = tpu.concatenate %164, %167, %170, %173, %176, %179, %182, %185, %188, %191, %194, %197, %200, %203, %206, %209 in 1 : vector<2x32xf32>, vector<2x32xf32>, vector<2x32xf32>, vector<2x32xf32>, vector<2x32xf32>, vector<2x32xf32>, vector<2x32xf32>, vector<2x32xf32>, vector<2x32xf32>, vector<2x32xf32>, vector<2x32xf32>, vector<2x32xf32>, vector<2x32xf32>, vector<2x32xf32>, vector<2x32xf32>, vector<2x32xf32> -> vector<2x512xf32>
    %211 = arith.truncf %210 : vector<2x512xf32> to vector<2x512xbf16>
    %c0_202 = arith.constant 0 : index
    %c0_203 = arith.constant 0 : index
    %212 = vector.load %arg8[%c0_202, %c0_203] : memref<512x128xbf16, #tpu.memory_space<vmem>>, vector<512x128xbf16>
    %cst_204 = arith.constant dense<0.000000e+00> : vector<2x128xf32>
    %213 = tpu.matmul %211, %212, %cst_204 {dimension_numbers = #tpu.dot_dimension_numbers<[1], [0], [0], [1], [0, 0, 1, 1], [], []>} : vector<2x512xbf16>, vector<512x128xbf16>, vector<2x128xf32> -> vector<2x128xf32>
    %c0_205 = arith.constant 0 : index
    %c0_206 = arith.constant 0 : index
    %c0_207 = arith.constant 0 : index
    %214 = vector.load %arg9[%c0_205, %c0_206, %c0_207] : memref<1x2x128xf32, #tpu.memory_space<vmem>>, vector<1x2x128xf32>
    %215 = vector.shape_cast %214 : vector<1x2x128xf32> to vector<2x128xf32>
    %216 = vector.shape_cast %213 : vector<2x128xf32> to vector<1x2x128xf32>
    tpu.vector_store %arg9[%c0_205, %c0_206, %c0_207], %216 {strides = array<i32>} : memref<1x2x128xf32, #tpu.memory_space<vmem>>, vector<1x2x128xf32>,
    return
  }
  func.func @transform_0(%arg0: i32) -> (i32, i32) {
    %c0_i32 = arith.constant 0 : i32
    %c0_i32_0 = arith.constant 0 : i32
    return %arg0, %c0_i32 : i32, i32
  }
  func.func @transform_1(%arg0: i32) -> (i32, i32) {
    %c0_i32 = arith.constant 0 : i32
    %c0_i32_0 = arith.constant 0 : i32
    %c0_i32_1 = arith.constant 0 : i32
    return %c0_i32, %c0_i32_0 : i32, i32
  }
  func.func @transform_2(%arg0: i32) -> (i32, i32, i32) {
    %c0_i32 = arith.constant 0 : i32
    %c0_i32_0 = arith.constant 0 : i32
    %c0_i32_1 = arith.constant 0 : i32
    %c0_i32_2 = arith.constant 0 : i32
    return %c0_i32, %c0_i32_0, %c0_i32_1 : i32, i32, i32
  }
  func.func @transform_3(%arg0: i32) -> (i32, i32) {
    %c0_i32 = arith.constant 0 : i32
    %c0_i32_0 = arith.constant 0 : i32
    %c0_i32_1 = arith.constant 0 : i32
    return %c0_i32, %c0_i32_0 : i32, i32
  }
  func.func @transform_4(%arg0: i32) -> (i32, i32, i32) {
    %c0_i32 = arith.constant 0 : i32
    %c0_i32_0 = arith.constant 0 : i32
    %c0_i32_1 = arith.constant 0 : i32
    %c0_i32_2 = arith.constant 0 : i32
    return %c0_i32, %c0_i32_0, %c0_i32_1 : i32, i32, i32
  }
  func.func @transform_5(%arg0: i32) -> (i32, i32) {
    %c0_i32 = arith.constant 0 : i32
    %c0_i32_0 = arith.constant 0 : i32
    %c0_i32_1 = arith.constant 0 : i32
    return %c0_i32, %c0_i32_0 : i32, i32
  }
  func.func @transform_6(%arg0: i32) -> (i32, i32, i32) {
    %c0_i32 = arith.constant 0 : i32
    %c0_i32_0 = arith.constant 0 : i32
    %c0_i32_1 = arith.constant 0 : i32
    %c0_i32_2 = arith.constant 0 : i32
    return %c0_i32, %c0_i32_0, %c0_i32_1 : i32, i32, i32
  }
  func.func @transform_7(%arg0: i32) -> (i32, i32) {
    %c0_i32 = arith.constant 0 : i32
    %c0_i32_0 = arith.constant 0 : i32
    %c0_i32_1 = arith.constant 0 : i32
    return %c0_i32, %c0_i32_0 : i32, i32
  }
  func.func @transform_8(%arg0: i32) -> (i32, i32, i32) {
    %c0_i32 = arith.constant 0 : i32
    %c0_i32_0 = arith.constant 0 : i32
    %c0_i32_1 = arith.constant 0 : i32
    return %arg0, %c0_i32, %c0_i32_0 : i32, i32, i32
  }
}

</mosaic_0001>

<llo_original>
// kernel: forward.1
$region0: #{forward.1}
  #allocation0 [shape = 'u32[]', space=smem, size = 0x4, offset = 0x4, fixed_abs, tag = 'smem constant byte address 0x4 - core index']
  #allocation1 [shape = 'u32[72,128]{1,0:T(1,128)}', space=vmem, size = 0x9000, scoped, tag = 'internal scratch']
  %s0 = inlined_call_operand.vmem [shape: f32[512,16], index: 0, kind: input, shape index: {}]
  %s1 = inlined_call_operand.vmem [shape: bf16[16,8], index: 1, kind: input, shape index: {}]
  %s2 = inlined_call_operand.hbm [shape: bf16[16,128,512], index: 2, kind: input, shape index: {}]
  %s3 = inlined_call_operand.vmem [shape: bf16[128,16], index: 3, kind: input, shape index: {}]
  %s4 = inlined_call_operand.hbm [shape: bf16[16,32,128], index: 4, kind: input, shape index: {}]
  %s5 = inlined_call_operand.vmem [shape: bf16[256,32], index: 5, kind: input, shape index: {}]
  %s6 = inlined_call_operand.hbm [shape: bf16[16,2,32], index: 6, kind: input, shape index: {}]
  %s7 = inlined_call_operand.hbm [shape: bf16[512,128], index: 7, kind: input, shape index: {}]
  %s8 = inlined_call_operand.vmem [shape: f32[1,2,128], index: 8, kind: output, shape index: {}]
  %s9 = sld [smem:[#allocation0]]
  $region58: #{forward.1} parent=0
    _
  %s11 = ssub.s32 1, %s9
  %s12 = scalar_select 0, %s11, %s9
  $region1: #{forward.1} parent=0
    #allocation2 [shape = 'u8[2097152]{0}', space=vmem, size = 0x200000, scoped, tag = 'input window, operand 2, single buffered']
    #allocation3 [shape = 's32[1]{0}', space=sflag, size = 0x4, scoped, tag = 'scoped memory for forward.1']
    #allocation4 [shape = 'u8[131072]{0}', space=vmem, size = 0x20000, scoped, tag = 'input window, operand 4, single buffered']
    #allocation5 [shape = 's32[1]{0}', space=sflag, size = 0x4, scoped, tag = 'scoped memory for forward.1']
    #allocation6 [shape = 'u8[8192]{0}', space=vmem, size = 0x2000, scoped, tag = 'input window, operand 6, single buffered']
    #allocation7 [shape = 'u8[131072]{0}', space=vmem, size = 0x20000, scoped, tag = 'input window, operand 7, single buffered']
    #allocation8 [shape = 's32[1]{0}', space=sflag, size = 0x4, scoped, tag = 'scoped memory for forward.1']
    %13 = vsyncpa [#allocation3], 0
    %14 = vsyncpa [#allocation5], 0
    %15 = vsyncpa [#allocation8], 0
    // Predicated region
    $region2: #{forward.1} parent=1 // pred_check
      _
    $region3: #{forward.1} parent=1 // pred_check_branch
      %17 = sbr.rel (0) target = $region5
    $region4: #{forward.1} parent=1 // pred_region
      _
    $region5: #{forward.1} parent=1 // pred_fallthru
      _
    // Predicated region
    $region6: #{forward.1} parent=1 // pred_check
      _
    $region7: #{forward.1} parent=1 // pred_check_branch
      %19 = sbr.rel (0) target = $region9
    $region8: #{forward.1} parent=1 // pred_region
      _
    $region9: #{forward.1} parent=1 // pred_fallthru
      _
    // Predicated region
    $region10: #{forward.1} parent=1 // pred_check
      _
    $region11: #{forward.1} parent=1 // pred_check_branch
      %21 = sbr.rel (0) target = $region13
    $region12: #{forward.1} parent=1 // pred_region
      %23 = vsyncadd [#allocation3], 0
      %s24 = sshll.u32 %s2, 4
      %s25 = int_to_ptr.hbm [resolvable:$true] %s24
      %s26 = sshll.u32 [#allocation2], 4
      %s27 = int_to_ptr.vmem [resolvable:$true] %s26
      %32 = dma.hbm_to_vmem [thread:$0]  %s25, 65536, %s27, [#allocation3], 256, 256, 16
    $region13: #{forward.1} parent=1 // pred_fallthru
      _
    // Predicated region
    $region14: #{forward.1} parent=1 // pred_check
      _
    $region15: #{forward.1} parent=1 // pred_check_branch
      %34 = sbr.rel (0) target = $region17
    $region16: #{forward.1} parent=1 // pred_region
      _
    $region17: #{forward.1} parent=1 // pred_fallthru
      _
    // Predicated region
    $region18: #{forward.1} parent=1 // pred_check
      _
    $region19: #{forward.1} parent=1 // pred_check_branch
      %36 = sbr.rel (0) target = $region21
    $region20: #{forward.1} parent=1 // pred_region
      %38 = vsyncadd [#allocation5], 0
      %s39 = sshll.u32 %s4, 4
      %s40 = int_to_ptr.hbm [resolvable:$true] %s39
      %s41 = sshll.u32 [#allocation4], 4
      %s42 = int_to_ptr.vmem [resolvable:$true] %s41
      %47 = dma.hbm_to_vmem [thread:$0]  %s40, 4096, %s42, [#allocation5], 64, 64, 4
    $region21: #{forward.1} parent=1 // pred_fallthru
      _
    // Predicated region
    $region22: #{forward.1} parent=1 // pred_check
      _
    $region23: #{forward.1} parent=1 // pred_check_branch
      %49 = sbr.rel (0) target = $region25
    $region24: #{forward.1} parent=1 // pred_region
      _
    $region25: #{forward.1} parent=1 // pred_fallthru
      _
    // Predicated region
    $region26: #{forward.1} parent=1 // pred_check
      _
    $region27: #{forward.1} parent=1 // pred_check_branch
      %51 = sbr.rel (0) target = $region29
    $region28: #{forward.1} parent=1 // pred_region
      %53 = vsyncadd [#allocation5], 0
      %s54 = sshll.u32 %s6, 4
      %s55 = int_to_ptr.hbm [resolvable:$true] %s54
      %s56 = sshll.u32 [#allocation6], 4
      %s57 = int_to_ptr.vmem [resolvable:$true] %s56
      %62 = dma.hbm_to_vmem [thread:$0]  %s55, 256, %s57, [#allocation5], 16, 16, 1
    $region29: #{forward.1} parent=1 // pred_fallthru
      _
    // Predicated region
    $region30: #{forward.1} parent=1 // pred_check
      _
    $region31: #{forward.1} parent=1 // pred_check_branch
      %64 = sbr.rel (0) target = $region33
    $region32: #{forward.1} parent=1 // pred_region
      %66 = vsyncadd [#allocation8], 0
      %s67 = sshll.u32 %s7, 4
      %s68 = int_to_ptr.hbm [resolvable:$true] %s67
      %s69 = sshll.u32 [#allocation7], 4
      %s70 = int_to_ptr.vmem [resolvable:$true] %s69
      %75 = dma.hbm_to_vmem [thread:$0]  %s68, 4096, %s70, [#allocation8], 64, 64, 4
    $region33: #{forward.1} parent=1 // pred_fallthru
      _
    // Predicated region
    $region34: #{forward.1} parent=1 // pred_check
      _
    $region35: #{forward.1} parent=1 // pred_check_branch
      %77 = sbr.rel (0) target = $region37
    $region36: #{forward.1} parent=1 // pred_region
      %79 = dma.done [#allocation3], 65536
    $region37: #{forward.1} parent=1 // pred_fallthru
      _
    // Predicated region
    $region38: #{forward.1} parent=1 // pred_check
      _
    $region39: #{forward.1} parent=1 // pred_check_branch
      %81 = sbr.rel (0) target = $region41
    $region40: #{forward.1} parent=1 // pred_region
      %83 = dma.done [#allocation5], 4096
    $region41: #{forward.1} parent=1 // pred_fallthru
      _
    // Predicated region
    $region42: #{forward.1} parent=1 // pred_check
      _
    $region43: #{forward.1} parent=1 // pred_check_branch
      %85 = sbr.rel (0) target = $region45
    $region44: #{forward.1} parent=1 // pred_region
      %87 = dma.done [#allocation5], 256
    $region45: #{forward.1} parent=1 // pred_fallthru
      _
    // Predicated region
    $region46: #{forward.1} parent=1 // pred_check
      _
    $region47: #{forward.1} parent=1 // pred_check_branch
      %89 = sbr.rel (0) target = $region49
    $region48: #{forward.1} parent=1 // pred_region
      %91 = dma.done [#allocation8], 4096
    $region49: #{forward.1} parent=1 // pred_fallthru
      _
    %v93 = vld [vmem:[%s0] sm:$0xff]
    %v94 = vld [vmem:[%s0 + $0x8] sm:$0xff]
    %v95 = vld [vmem:[%s0 + $0x10] sm:$0xff]
    %v96 = vld [vmem:[%s0 + $0x18] sm:$0xff]
    %v97 = vld [vmem:[%s0 + $0x20] sm:$0xff]
    %v98 = vld [vmem:[%s0 + $0x28] sm:$0xff]
    %v99 = vld [vmem:[%s0 + $0x30] sm:$0xff]
    %v100 = vld [vmem:[%s0 + $0x38] sm:$0xff]
    %v101 = vld [vmem:[%s0 + $0x40] sm:$0xff]
    %v102 = vld [vmem:[%s0 + $0x48] sm:$0xff]
    %v103 = vld [vmem:[%s0 + $0x50] sm:$0xff]
    %v104 = vld [vmem:[%s0 + $0x58] sm:$0xff]
    %v105 = vld [vmem:[%s0 + $0x60] sm:$0xff]
    %v106 = vld [vmem:[%s0 + $0x68] sm:$0xff]
    %v107 = vld [vmem:[%s0 + $0x70] sm:$0xff]
    %v108 = vld [vmem:[%s0 + $0x78] sm:$0xff]
    %v109 = vld [vmem:[%s0 + $0x80] sm:$0xff]
    %v110 = vld [vmem:[%s0 + $0x88] sm:$0xff]
    %v111 = vld [vmem:[%s0 + $0x90] sm:$0xff]
    %v112 = vld [vmem:[%s0 + $0x98] sm:$0xff]
    %v113 = vld [vmem:[%s0 + $0xa0] sm:$0xff]
    %v114 = vld [vmem:[%s0 + $0xa8] sm:$0xff]
    %v115 = vld [vmem:[%s0 + $0xb0] sm:$0xff]
    %v116 = vld [vmem:[%s0 + $0xb8] sm:$0xff]
    %v117 = vld [vmem:[%s0 + $0xc0] sm:$0xff]
    %v118 = vld [vmem:[%s0 + $0xc8] sm:$0xff]
    %v119 = vld [vmem:[%s0 + $0xd0] sm:$0xff]
    %v120 = vld [vmem:[%s0 + $0xd8] sm:$0xff]
    %v121 = vld [vmem:[%s0 + $0xe0] sm:$0xff]
    %v122 = vld [vmem:[%s0 + $0xe8] sm:$0xff]
    %v123 = vld [vmem:[%s0 + $0xf0] sm:$0xff]
    %v124 = vld [vmem:[%s0 + $0xf8] sm:$0xff]
    %v125 = vld [vmem:[%s0 + $0x100] sm:$0xff]
    %v126 = vld [vmem:[%s0 + $0x108] sm:$0xff]
    %v127 = vld [vmem:[%s0 + $0x110] sm:$0xff]
    %v128 = vld [vmem:[%s0 + $0x118] sm:$0xff]
    %v129 = vld [vmem:[%s0 + $0x120] sm:$0xff]
    %v130 = vld [vmem:[%s0 + $0x128] sm:$0xff]
    %v131 = vld [vmem:[%s0 + $0x130] sm:$0xff]
    %v132 = vld [vmem:[%s0 + $0x138] sm:$0xff]
    %v133 = vld [vmem:[%s0 + $0x140] sm:$0xff]
    %v134 = vld [vmem:[%s0 + $0x148] sm:$0xff]
    %v135 = vld [vmem:[%s0 + $0x150] sm:$0xff]
    %v136 = vld [vmem:[%s0 + $0x158] sm:$0xff]
    %v137 = vld [vmem:[%s0 + $0x160] sm:$0xff]
    %v138 = vld [vmem:[%s0 + $0x168] sm:$0xff]
    %v139 = vld [vmem:[%s0 + $0x170] sm:$0xff]
    %v140 = vld [vmem:[%s0 + $0x178] sm:$0xff]
    %v141 = vld [vmem:[%s0 + $0x180] sm:$0xff]
    %v142 = vld [vmem:[%s0 + $0x188] sm:$0xff]
    %v143 = vld [vmem:[%s0 + $0x190] sm:$0xff]
    %v144 = vld [vmem:[%s0 + $0x198] sm:$0xff]
    %v145 = vld [vmem:[%s0 + $0x1a0] sm:$0xff]
    %v146 = vld [vmem:[%s0 + $0x1a8] sm:$0xff]
    %v147 = vld [vmem:[%s0 + $0x1b0] sm:$0xff]
    %v148 = vld [vmem:[%s0 + $0x1b8] sm:$0xff]
    %v149 = vld [vmem:[%s0 + $0x1c0] sm:$0xff]
    %v150 = vld [vmem:[%s0 + $0x1c8] sm:$0xff]
    %v151 = vld [vmem:[%s0 + $0x1d0] sm:$0xff]
    %v152 = vld [vmem:[%s0 + $0x1d8] sm:$0xff]
    %v153 = vld [vmem:[%s0 + $0x1e0] sm:$0xff]
    %v154 = vld [vmem:[%s0 + $0x1e8] sm:$0xff]
    %v155 = vld [vmem:[%s0 + $0x1f0] sm:$0xff]
    %v156 = vld [vmem:[%s0 + $0x1f8] sm:$0xff]
    %v157 = vpack.c.bf16 %v94, %v93
    %v158 = vpack.c.bf16 %v96, %v95
    %v159 = vpack.c.bf16 %v98, %v97
    %v160 = vpack.c.bf16 %v100, %v99
    %v161 = vpack.c.bf16 %v102, %v101
    %v162 = vpack.c.bf16 %v104, %v103
    %v163 = vpack.c.bf16 %v106, %v105
    %v164 = vpack.c.bf16 %v108, %v107
    %v165 = vpack.c.bf16 %v110, %v109
    %v166 = vpack.c.bf16 %v112, %v111
    %v167 = vpack.c.bf16 %v114, %v113
    %v168 = vpack.c.bf16 %v116, %v115
    %v169 = vpack.c.bf16 %v118, %v117
    %v170 = vpack.c.bf16 %v120, %v119
    %v171 = vpack.c.bf16 %v122, %v121
    %v172 = vpack.c.bf16 %v124, %v123
    %v173 = vpack.c.bf16 %v126, %v125
    %v174 = vpack.c.bf16 %v128, %v127
    %v175 = vpack.c.bf16 %v130, %v129
    %v176 = vpack.c.bf16 %v132, %v131
    %v177 = vpack.c.bf16 %v134, %v133
    %v178 = vpack.c.bf16 %v136, %v135
    %v179 = vpack.c.bf16 %v138, %v137
    %v180 = vpack.c.bf16 %v140, %v139
    %v181 = vpack.c.bf16 %v142, %v141
    %v182 = vpack.c.bf16 %v144, %v143
    %v183 = vpack.c.bf16 %v146, %v145
    %v184 = vpack.c.bf16 %v148, %v147
    %v185 = vpack.c.bf16 %v150, %v149
    %v186 = vpack.c.bf16 %v152, %v151
    %v187 = vpack.c.bf16 %v154, %v153
    %v188 = vpack.c.bf16 %v156, %v155
    %v189 = vld [vmem:[%s1] sm:$0xf]
    %v190 = vld [vmem:[%s1 + $0x4] sm:$0xf]
    %v193 = vunpack.c.l.b16 %v189
    %v194 = vunpack.c.l.b16 %v190
    %v195 = vpack.c.b16 %v194, %v193
    %vm197 = vcmask 130048
    %v199 = vsel %vm197, %v157, 0
    %v202 = vsel %vm197, %v158, 0
    %v205 = vsel %vm197, %v159, 0
    %v208 = vsel %vm197, %v160, 0
    %v211 = vsel %vm197, %v161, 0
    %v214 = vsel %vm197, %v162, 0
    %v217 = vsel %vm197, %v163, 0
    %v220 = vsel %vm197, %v164, 0
    %v223 = vsel %vm197, %v165, 0
    %v226 = vsel %vm197, %v166, 0
    %v229 = vsel %vm197, %v167, 0
    %v232 = vsel %vm197, %v168, 0
    %v235 = vsel %vm197, %v169, 0
    %v238 = vsel %vm197, %v170, 0
    %v241 = vsel %vm197, %v171, 0
    %v244 = vsel %vm197, %v172, 0
    %v247 = vsel %vm197, %v173, 0
    %v250 = vsel %vm197, %v174, 0
    %v253 = vsel %vm197, %v175, 0
    %v256 = vsel %vm197, %v176, 0
    %v259 = vsel %vm197, %v177, 0
    %v262 = vsel %vm197, %v178, 0
    %v265 = vsel %vm197, %v179, 0
    %v268 = vsel %vm197, %v180, 0
    %v271 = vsel %vm197, %v181, 0
    %v274 = vsel %vm197, %v182, 0
    %v277 = vsel %vm197, %v183, 0
    %v280 = vsel %vm197, %v184, 0
    %v283 = vsel %vm197, %v185, 0
    %v286 = vsel %vm197, %v186, 0
    %v289 = vsel %vm197, %v187, 0
    %v292 = vsel %vm197, %v188, 0
    %294 = vmatpush.bf16.msra.mxu0 0
    %295 = vmatpush.bf16.msra.mxu0 0
    %296 = vmatpush.bf16.msra.mxu0 0
    %297 = vmatpush.bf16.msra.mxu0 0
    %298 = vmatpush.bf16.msra.mxu0 0
    %299 = vmatpush.bf16.msra.mxu0 0
    %300 = vmatpush.bf16.msra.mxu0 0
    %301 = vmatpush.bf16.msra.mxu0 %v195
    %302 = vmatmul.bf16.gmra.mxu0 %v199
    %v303 = vpop.f32.mrf.mxu0
    %v304 = vadd.f32 0.0, %v303
    %v305 = vpop.f32.mrf.mxu0
    %v306 = vadd.f32 0.0, %v305
    %307 = vmatmul.bf16.gmra.mxu0 %v202
    %v308 = vpop.f32.mrf.mxu0
    %v309 = vadd.f32 0.0, %v308
    %v310 = vpop.f32.mrf.mxu0
    %v311 = vadd.f32 0.0, %v310
    %312 = vmatmul.bf16.gmra.mxu0 %v205
    %v313 = vpop.f32.mrf.mxu0
    %v314 = vadd.f32 0.0, %v313
    %v315 = vpop.f32.mrf.mxu0
    %v316 = vadd.f32 0.0, %v315
    %317 = vmatmul.bf16.gmra.mxu0 %v208
    %v318 = vpop.f32.mrf.mxu0
    %v319 = vadd.f32 0.0, %v318
    %v320 = vpop.f32.mrf.mxu0
    %v321 = vadd.f32 0.0, %v320
    %322 = vmatmul.bf16.gmra.mxu0 %v211
    %v323 = vpop.f32.mrf.mxu0
    %v324 = vadd.f32 0.0, %v323
    %v325 = vpop.f32.mrf.mxu0
    %v326 = vadd.f32 0.0, %v325
    %327 = vmatmul.bf16.gmra.mxu0 %v214
    %v328 = vpop.f32.mrf.mxu0
    %v329 = vadd.f32 0.0, %v328
    %v330 = vpop.f32.mrf.mxu0
    %v331 = vadd.f32 0.0, %v330
    %332 = vmatmul.bf16.gmra.mxu0 %v217
    %v333 = vpop.f32.mrf.mxu0
    %v334 = vadd.f32 0.0, %v333
    %v335 = vpop.f32.mrf.mxu0
    %v336 = vadd.f32 0.0, %v335
    %337 = vmatmul.bf16.gmra.mxu0 %v220
    %v338 = vpop.f32.mrf.mxu0
    %v339 = vadd.f32 0.0, %v338
    %v340 = vpop.f32.mrf.mxu0
    %v341 = vadd.f32 0.0, %v340
    %342 = vmatmul.bf16.gmra.mxu0 %v223
    %v343 = vpop.f32.mrf.mxu0
    %v344 = vadd.f32 0.0, %v343
    %v345 = vpop.f32.mrf.mxu0
    %v346 = vadd.f32 0.0, %v345
    %347 = vmatmul.bf16.gmra.mxu0 %v226
    %v348 = vpop.f32.mrf.mxu0
    %v349 = vadd.f32 0.0, %v348
    %v350 = vpop.f32.mrf.mxu0
    %v351 = vadd.f32 0.0, %v350
    %352 = vmatmul.bf16.gmra.mxu0 %v229
    %v353 = vpop.f32.mrf.mxu0
    %v354 = vadd.f32 0.0, %v353
    %v355 = vpop.f32.mrf.mxu0
    %v356 = vadd.f32 0.0, %v355
    %357 = vmatmul.bf16.gmra.mxu0 %v232
    %v358 = vpop.f32.mrf.mxu0
    %v359 = vadd.f32 0.0, %v358
    %v360 = vpop.f32.mrf.mxu0
    %v361 = vadd.f32 0.0, %v360
    %362 = vmatmul.bf16.gmra.mxu0 %v235
    %v363 = vpop.f32.mrf.mxu0
    %v364 = vadd.f32 0.0, %v363
    %v365 = vpop.f32.mrf.mxu0
    %v366 = vadd.f32 0.0, %v365
    %367 = vmatmul.bf16.gmra.mxu0 %v238
    %v368 = vpop.f32.mrf.mxu0
    %v369 = vadd.f32 0.0, %v368
    %v370 = vpop.f32.mrf.mxu0
    %v371 = vadd.f32 0.0, %v370
    %372 = vmatmul.bf16.gmra.mxu0 %v241
    %v373 = vpop.f32.mrf.mxu0
    %v374 = vadd.f32 0.0, %v373
    %v375 = vpop.f32.mrf.mxu0
    %v376 = vadd.f32 0.0, %v375
    %377 = vmatmul.bf16.gmra.mxu0 %v244
    %v378 = vpop.f32.mrf.mxu0
    %v379 = vadd.f32 0.0, %v378
    %v380 = vpop.f32.mrf.mxu0
    %v381 = vadd.f32 0.0, %v380
    %382 = vmatmul.bf16.gmra.mxu0 %v247
    %v383 = vpop.f32.mrf.mxu0
    %v384 = vadd.f32 0.0, %v383
    %v385 = vpop.f32.mrf.mxu0
    %v386 = vadd.f32 0.0, %v385
    %387 = vmatmul.bf16.gmra.mxu0 %v250
    %v388 = vpop.f32.mrf.mxu0
    %v389 = vadd.f32 0.0, %v388
    %v390 = vpop.f32.mrf.mxu0
    %v391 = vadd.f32 0.0, %v390
    %392 = vmatmul.bf16.gmra.mxu0 %v253
    %v393 = vpop.f32.mrf.mxu0
    %v394 = vadd.f32 0.0, %v393
    %v395 = vpop.f32.mrf.mxu0
    %v396 = vadd.f32 0.0, %v395
    %397 = vmatmul.bf16.gmra.mxu0 %v256
    %v398 = vpop.f32.mrf.mxu0
    %v399 = vadd.f32 0.0, %v398
    %v400 = vpop.f32.mrf.mxu0
    %v401 = vadd.f32 0.0, %v400
    %402 = vmatmul.bf16.gmra.mxu0 %v259
    %v403 = vpop.f32.mrf.mxu0
    %v404 = vadd.f32 0.0, %v403
    %v405 = vpop.f32.mrf.mxu0
    %v406 = vadd.f32 0.0, %v405
    %407 = vmatmul.bf16.gmra.mxu0 %v262
    %v408 = vpop.f32.mrf.mxu0
    %v409 = vadd.f32 0.0, %v408
    %v410 = vpop.f32.mrf.mxu0
    %v411 = vadd.f32 0.0, %v410
    %412 = vmatmul.bf16.gmra.mxu0 %v265
    %v413 = vpop.f32.mrf.mxu0
    %v414 = vadd.f32 0.0, %v413
    %v415 = vpop.f32.mrf.mxu0
    %v416 = vadd.f32 0.0, %v415
    %417 = vmatmul.bf16.gmra.mxu0 %v268
    %v418 = vpop.f32.mrf.mxu0
    %v419 = vadd.f32 0.0, %v418
    %v420 = vpop.f32.mrf.mxu0
    %v421 = vadd.f32 0.0, %v420
    %422 = vmatmul.bf16.gmra.mxu0 %v271
    %v423 = vpop.f32.mrf.mxu0
    %v424 = vadd.f32 0.0, %v423
    %v425 = vpop.f32.mrf.mxu0
    %v426 = vadd.f32 0.0, %v425
    %427 = vmatmul.bf16.gmra.mxu0 %v274
    %v428 = vpop.f32.mrf.mxu0
    %v429 = vadd.f32 0.0, %v428
    %v430 = vpop.f32.mrf.mxu0
    %v431 = vadd.f32 0.0, %v430
    %432 = vmatmul.bf16.gmra.mxu0 %v277
    %v433 = vpop.f32.mrf.mxu0
    %v434 = vadd.f32 0.0, %v433
    %v435 = vpop.f32.mrf.mxu0
    %v436 = vadd.f32 0.0, %v435
    %437 = vmatmul.bf16.gmra.mxu0 %v280
    %v438 = vpop.f32.mrf.mxu0
    %v439 = vadd.f32 0.0, %v438
    %v440 = vpop.f32.mrf.mxu0
    %v441 = vadd.f32 0.0, %v440
    %442 = vmatmul.bf16.gmra.mxu0 %v283
    %v443 = vpop.f32.mrf.mxu0
    %v444 = vadd.f32 0.0, %v443
    %v445 = vpop.f32.mrf.mxu0
    %v446 = vadd.f32 0.0, %v445
    %447 = vmatmul.bf16.gmra.mxu0 %v286
    %v448 = vpop.f32.mrf.mxu0
    %v449 = vadd.f32 0.0, %v448
    %v450 = vpop.f32.mrf.mxu0
    %v451 = vadd.f32 0.0, %v450
    %452 = vmatmul.bf16.gmra.mxu0 %v289
    %v453 = vpop.f32.mrf.mxu0
    %v454 = vadd.f32 0.0, %v453
    %v455 = vpop.f32.mrf.mxu0
    %v456 = vadd.f32 0.0, %v455
    %457 = vmatmul.bf16.gmra.mxu0 %v292
    %v458 = vpop.f32.mrf.mxu0
    %v459 = vadd.f32 0.0, %v458
    %v460 = vpop.f32.mrf.mxu0
    %v461 = vadd.f32 0.0, %v460
    %462 = vdwg.mxu0
    %vm463 = vcmp.ge.f32.partialorder %v304, 0.0
    %vm464 = vcmp.ge.f32.partialorder %v306, 0.0
    %vm465 = vcmp.ge.f32.partialorder %v309, 0.0
    %vm466 = vcmp.ge.f32.partialorder %v311, 0.0
    %vm467 = vcmp.ge.f32.partialorder %v314, 0.0
    %vm468 = vcmp.ge.f32.partialorder %v316, 0.0
    %vm469 = vcmp.ge.f32.partialorder %v319, 0.0
    %vm470 = vcmp.ge.f32.partialorder %v321, 0.0
    %vm471 = vcmp.ge.f32.partialorder %v324, 0.0
    %vm472 = vcmp.ge.f32.partialorder %v326, 0.0
    %vm473 = vcmp.ge.f32.partialorder %v329, 0.0
    %vm474 = vcmp.ge.f32.partialorder %v331, 0.0
    %vm475 = vcmp.ge.f32.partialorder %v334, 0.0
    %vm476 = vcmp.ge.f32.partialorder %v336, 0.0
    %vm477 = vcmp.ge.f32.partialorder %v339, 0.0
    %vm478 = vcmp.ge.f32.partialorder %v341, 0.0
    %vm479 = vcmp.ge.f32.partialorder %v344, 0.0
    %vm480 = vcmp.ge.f32.partialorder %v346, 0.0
    %vm481 = vcmp.ge.f32.partialorder %v349, 0.0
    %vm482 = vcmp.ge.f32.partialorder %v351, 0.0
    %vm483 = vcmp.ge.f32.partialorder %v354, 0.0
    %vm484 = vcmp.ge.f32.partialorder %v356, 0.0
    %vm485 = vcmp.ge.f32.partialorder %v359, 0.0
    %vm486 = vcmp.ge.f32.partialorder %v361, 0.0
    %vm487 = vcmp.ge.f32.partialorder %v364, 0.0
    %vm488 = vcmp.ge.f32.partialorder %v366, 0.0
    %vm489 = vcmp.ge.f32.partialorder %v369, 0.0
    %vm490 = vcmp.ge.f32.partialorder %v371, 0.0
    %vm491 = vcmp.ge.f32.partialorder %v374, 0.0
    %vm492 = vcmp.ge.f32.partialorder %v376, 0.0
    %vm493 = vcmp.ge.f32.partialorder %v379, 0.0
    %vm494 = vcmp.ge.f32.partialorder %v381, 0.0
    %vm495 = vcmp.ge.f32.partialorder %v384, 0.0
    %vm496 = vcmp.ge.f32.partialorder %v386, 0.0
    %vm497 = vcmp.ge.f32.partialorder %v389, 0.0
    %vm498 = vcmp.ge.f32.partialorder %v391, 0.0
    %vm499 = vcmp.ge.f32.partialorder %v394, 0.0
    %vm500 = vcmp.ge.f32.partialorder %v396, 0.0
    %vm501 = vcmp.ge.f32.partialorder %v399, 0.0
    %vm502 = vcmp.ge.f32.partialorder %v401, 0.0
    %vm503 = vcmp.ge.f32.partialorder %v404, 0.0
    %vm504 = vcmp.ge.f32.partialorder %v406, 0.0
    %vm505 = vcmp.ge.f32.partialorder %v409, 0.0
    %vm506 = vcmp.ge.f32.partialorder %v411, 0.0
    %vm507 = vcmp.ge.f32.partialorder %v414, 0.0
    %vm508 = vcmp.ge.f32.partialorder %v416, 0.0
    %vm509 = vcmp.ge.f32.partialorder %v419, 0.0
    %vm510 = vcmp.ge.f32.partialorder %v421, 0.0
    %vm511 = vcmp.ge.f32.partialorder %v424, 0.0
    %vm512 = vcmp.ge.f32.partialorder %v426, 0.0
    %vm513 = vcmp.ge.f32.partialorder %v429, 0.0
    %vm514 = vcmp.ge.f32.partialorder %v431, 0.0
    %vm515 = vcmp.ge.f32.partialorder %v434, 0.0
    %vm516 = vcmp.ge.f32.partialorder %v436, 0.0
    %vm517 = vcmp.ge.f32.partialorder %v439, 0.0
    %vm518 = vcmp.ge.f32.partialorder %v441, 0.0
    %vm519 = vcmp.ge.f32.partialorder %v444, 0.0
    %vm520 = vcmp.ge.f32.partialorder %v446, 0.0
    %vm521 = vcmp.ge.f32.partialorder %v449, 0.0
    %vm522 = vcmp.ge.f32.partialorder %v451, 0.0
    %vm523 = vcmp.ge.f32.partialorder %v454, 0.0
    %vm524 = vcmp.ge.f32.partialorder %v456, 0.0
    %vm525 = vcmp.ge.f32.partialorder %v459, 0.0
    %vm526 = vcmp.ge.f32.partialorder %v461, 0.0
    %v527 = vmul.f32 %v304, 0.05
    %v528 = vmul.f32 %v306, 0.05
    %v529 = vmul.f32 %v309, 0.05
    %v530 = vmul.f32 %v311, 0.05
    %v531 = vmul.f32 %v314, 0.05
    %v532 = vmul.f32 %v316, 0.05
    %v533 = vmul.f32 %v319, 0.05
    %v534 = vmul.f32 %v321, 0.05
    %v535 = vmul.f32 %v324, 0.05
    %v536 = vmul.f32 %v326, 0.05
    %v537 = vmul.f32 %v329, 0.05
    %v538 = vmul.f32 %v331, 0.05
    %v539 = vmul.f32 %v334, 0.05
    %v540 = vmul.f32 %v336, 0.05
    %v541 = vmul.f32 %v339, 0.05
    %v542 = vmul.f32 %v341, 0.05
    %v543 = vmul.f32 %v344, 0.05
    %v544 = vmul.f32 %v346, 0.05
    %v545 = vmul.f32 %v349, 0.05
    %v546 = vmul.f32 %v351, 0.05
    %v547 = vmul.f32 %v354, 0.05
    %v548 = vmul.f32 %v356, 0.05
    %v549 = vmul.f32 %v359, 0.05
    %v550 = vmul.f32 %v361, 0.05
    %v551 = vmul.f32 %v364, 0.05
    %v552 = vmul.f32 %v366, 0.05
    %v553 = vmul.f32 %v369, 0.05
    %v554 = vmul.f32 %v371, 0.05
    %v555 = vmul.f32 %v374, 0.05
    %v556 = vmul.f32 %v376, 0.05
    %v557 = vmul.f32 %v379, 0.05
    %v558 = vmul.f32 %v381, 0.05
    %v559 = vmul.f32 %v384, 0.05
    %v560 = vmul.f32 %v386, 0.05
    %v561 = vmul.f32 %v389, 0.05
    %v562 = vmul.f32 %v391, 0.05
    %v563 = vmul.f32 %v394, 0.05
    %v564 = vmul.f32 %v396, 0.05
    %v565 = vmul.f32 %v399, 0.05
    %v566 = vmul.f32 %v401, 0.05
    %v567 = vmul.f32 %v404, 0.05
    %v568 = vmul.f32 %v406, 0.05
    %v569 = vmul.f32 %v409, 0.05
    %v570 = vmul.f32 %v411, 0.05
    %v571 = vmul.f32 %v414, 0.05
    %v572 = vmul.f32 %v416, 0.05
    %v573 = vmul.f32 %v419, 0.05
    %v574 = vmul.f32 %v421, 0.05
    %v575 = vmul.f32 %v424, 0.05
    %v576 = vmul.f32 %v426, 0.05
    %v577 = vmul.f32 %v429, 0.05
    %v578 = vmul.f32 %v431, 0.05
    %v579 = vmul.f32 %v434, 0.05
    %v580 = vmul.f32 %v436, 0.05
    %v581 = vmul.f32 %v439, 0.05
    %v582 = vmul.f32 %v441, 0.05
    %v583 = vmul.f32 %v444, 0.05
    %v584 = vmul.f32 %v446, 0.05
    %v585 = vmul.f32 %v449, 0.05
    %v586 = vmul.f32 %v451, 0.05
    %v587 = vmul.f32 %v454, 0.05
    %v588 = vmul.f32 %v456, 0.05
    %v589 = vmul.f32 %v459, 0.05
    %v590 = vmul.f32 %v461, 0.05
    %v591 = vsel %vm463, %v304, %v527
    %v592 = vsel %vm464, %v306, %v528
    %v593 = vsel %vm465, %v309, %v529
    %v594 = vsel %vm466, %v311, %v530
    %v595 = vsel %vm467, %v314, %v531
    %v596 = vsel %vm468, %v316, %v532
    %v597 = vsel %vm469, %v319, %v533
    %v598 = vsel %vm470, %v321, %v534
    %v599 = vsel %vm471, %v324, %v535
    %v600 = vsel %vm472, %v326, %v536
    %v601 = vsel %vm473, %v329, %v537
    %v602 = vsel %vm474, %v331, %v538
    %v603 = vsel %vm475, %v334, %v539
    %v604 = vsel %vm476, %v336, %v540
    %v605 = vsel %vm477, %v339, %v541
    %v606 = vsel %vm478, %v341, %v542
    %v607 = vsel %vm479, %v344, %v543
    %v608 = vsel %vm480, %v346, %v544
    %v609 = vsel %vm481, %v349, %v545
    %v610 = vsel %vm482, %v351, %v546
    %v611 = vsel %vm483, %v354, %v547
    %v612 = vsel %vm484, %v356, %v548
    %v613 = vsel %vm485, %v359, %v549
    %v614 = vsel %vm486, %v361, %v550
    %v615 = vsel %vm487, %v364, %v551
    %v616 = vsel %vm488, %v366, %v552
    %v617 = vsel %vm489, %v369, %v553
    %v618 = vsel %vm490, %v371, %v554
    %v619 = vsel %vm491, %v374, %v555
    %v620 = vsel %vm492, %v376, %v556
    %v621 = vsel %vm493, %v379, %v557
    %v622 = vsel %vm494, %v381, %v558
    %v623 = vsel %vm495, %v384, %v559
    %v624 = vsel %vm496, %v386, %v560
    %v625 = vsel %vm497, %v389, %v561
    %v626 = vsel %vm498, %v391, %v562
    %v627 = vsel %vm499, %v394, %v563
    %v628 = vsel %vm500, %v396, %v564
    %v629 = vsel %vm501, %v399, %v565
    %v630 = vsel %vm502, %v401, %v566
    %v631 = vsel %vm503, %v404, %v567
    %v632 = vsel %vm504, %v406, %v568
    %v633 = vsel %vm505, %v409, %v569
    %v634 = vsel %vm506, %v411, %v570
    %v635 = vsel %vm507, %v414, %v571
    %v636 = vsel %vm508, %v416, %v572
    %v637 = vsel %vm509, %v419, %v573
    %v638 = vsel %vm510, %v421, %v574
    %v639 = vsel %vm511, %v424, %v575
    %v640 = vsel %vm512, %v426, %v576
    %v641 = vsel %vm513, %v429, %v577
    %v642 = vsel %vm514, %v431, %v578
    %v643 = vsel %vm515, %v434, %v579
    %v644 = vsel %vm516, %v436, %v580
    %v645 = vsel %vm517, %v439, %v581
    %v646 = vsel %vm518, %v441, %v582
    %v647 = vsel %vm519, %v444, %v583
    %v648 = vsel %vm520, %v446, %v584
    %v649 = vsel %vm521, %v449, %v585
    %v650 = vsel %vm522, %v451, %v586
    %v651 = vsel %vm523, %v454, %v587
    %v652 = vsel %vm524, %v456, %v588
    %v653 = vsel %vm525, %v459, %v589
    %v654 = vsel %vm526, %v461, %v590
    %v655 = vpack.c.bf16 %v592, %v591
    %v656 = vpack.c.bf16 %v594, %v593
    %v657 = vpack.c.bf16 %v596, %v595
    %v658 = vpack.c.bf16 %v598, %v597
    %v659 = vpack.c.bf16 %v600, %v599
    %v660 = vpack.c.bf16 %v602, %v601
    %v661 = vpack.c.bf16 %v604, %v603
    %v662 = vpack.c.bf16 %v606, %v605
    %v663 = vpack.c.bf16 %v608, %v607
    %v664 = vpack.c.bf16 %v610, %v609
    %v665 = vpack.c.bf16 %v612, %v611
    %v666 = vpack.c.bf16 %v614, %v613
    %v667 = vpack.c.bf16 %v616, %v615
    %v668 = vpack.c.bf16 %v618, %v617
    %v669 = vpack.c.bf16 %v620, %v619
    %v670 = vpack.c.bf16 %v622, %v621
    %v671 = vpack.c.bf16 %v624, %v623
    %v672 = vpack.c.bf16 %v626, %v625
    %v673 = vpack.c.bf16 %v628, %v627
    %v674 = vpack.c.bf16 %v630, %v629
    %v675 = vpack.c.bf16 %v632, %v631
    %v676 = vpack.c.bf16 %v634, %v633
    %v677 = vpack.c.bf16 %v636, %v635
    %v678 = vpack.c.bf16 %v638, %v637
    %v679 = vpack.c.bf16 %v640, %v639
    %v680 = vpack.c.bf16 %v642, %v641
    %v681 = vpack.c.bf16 %v644, %v643
    %v682 = vpack.c.bf16 %v646, %v645
    %v683 = vpack.c.bf16 %v648, %v647
    %v684 = vpack.c.bf16 %v650, %v649
    %v685 = vpack.c.bf16 %v652, %v651
    %v686 = vpack.c.bf16 %v654, %v653
    %v687 = vld [vmem:[#allocation2] sm:$0xff]
    %v688 = vld [vmem:[#allocation2 + $0x8] sm:$0xff]
    %v689 = vld [vmem:[#allocation2 + $0x10] sm:$0xff]
    %v690 = vld [vmem:[#allocation2 + $0x18] sm:$0xff]
    %v691 = vld [vmem:[#allocation2 + $0x20] sm:$0xff]
    %v692 = vld [vmem:[#allocation2 + $0x28] sm:$0xff]
    %v693 = vld [vmem:[#allocation2 + $0x30] sm:$0xff]
    %v694 = vld [vmem:[#allocation2 + $0x38] sm:$0xff]
    %v695 = vld [vmem:[#allocation2 + $0x40] sm:$0xff]
    %v696 = vld [vmem:[#allocation2 + $0x48] sm:$0xff]
    %v697 = vld [vmem:[#allocation2 + $0x50] sm:$0xff]
    %v698 = vld [vmem:[#allocation2 + $0x58] sm:$0xff]
    %v699 = vld [vmem:[#allocation2 + $0x60] sm:$0xff]
    %v700 = vld [vmem:[#allocation2 + $0x68] sm:$0xff]
    %v701 = vld [vmem:[#allocation2 + $0x70] sm:$0xff]
    %v702 = vld [vmem:[#allocation2 + $0x78] sm:$0xff]
    %v703 = vld [vmem:[#allocation2 + $0x80] sm:$0xff]
    %v704 = vld [vmem:[#allocation2 + $0x88] sm:$0xff]
    %v705 = vld [vmem:[#allocation2 + $0x90] sm:$0xff]
    %v706 = vld [vmem:[#allocation2 + $0x98] sm:$0xff]
    %v707 = vld [vmem:[#allocation2 + $0xa0] sm:$0xff]
    %v708 = vld [vmem:[#allocation2 + $0xa8] sm:$0xff]
    %v709 = vld [vmem:[#allocation2 + $0xb0] sm:$0xff]
    %v710 = vld [vmem:[#allocation2 + $0xb8] sm:$0xff]
    %v711 = vld [vmem:[#allocation2 + $0xc0] sm:$0xff]
    %v712 = vld [vmem:[#allocation2 + $0xc8] sm:$0xff]
    %v713 = vld [vmem:[#allocation2 + $0xd0] sm:$0xff]
    %v714 = vld [vmem:[#allocation2 + $0xd8] sm:$0xff]
    %v715 = vld [vmem:[#allocation2 + $0xe0] sm:$0xff]
    %v716 = vld [vmem:[#allocation2 + $0xe8] sm:$0xff]
    %v717 = vld [vmem:[#allocation2 + $0xf0] sm:$0xff]
    %v718 = vld [vmem:[#allocation2 + $0xf8] sm:$0xff]
    %v751 = vunpack.c.l.b16 %v687
    %v752 = vunpack.c.h.b16 %v687
    %v753 = vunpack.c.l.b16 %v688
    %v754 = vunpack.c.h.b16 %v688
    %v755 = vunpack.c.l.b16 %v689
    %v756 = vunpack.c.h.b16 %v689
    %v757 = vunpack.c.l.b16 %v690
    %v758 = vunpack.c.h.b16 %v690
    %v759 = vunpack.c.l.b16 %v691
    %v760 = vunpack.c.h.b16 %v691
    %v761 = vunpack.c.l.b16 %v692
    %v762 = vunpack.c.h.b16 %v692
    %v763 = vunpack.c.l.b16 %v693
    %v764 = vunpack.c.h.b16 %v693
    %v765 = vunpack.c.l.b16 %v694
    %v766 = vunpack.c.h.b16 %v694
    %v767 = vunpack.c.l.b16 %v695
    %v768 = vunpack.c.h.b16 %v695
    %v769 = vunpack.c.l.b16 %v696
    %v770 = vunpack.c.h.b16 %v696
    %v771 = vunpack.c.l.b16 %v697
    %v772 = vunpack.c.h.b16 %v697
    %v773 = vunpack.c.l.b16 %v698
    %v774 = vunpack.c.h.b16 %v698
    %v775 = vunpack.c.l.b16 %v699
    %v776 = vunpack.c.h.b16 %v699
    %v777 = vunpack.c.l.b16 %v700
    %v778 = vunpack.c.h.b16 %v700
    %v779 = vunpack.c.l.b16 %v701
    %v780 = vunpack.c.h.b16 %v701
    %v781 = vunpack.c.l.b16 %v702
    %v782 = vunpack.c.h.b16 %v702
    %v783 = vunpack.c.l.b16 %v703
    %v784 = vunpack.c.h.b16 %v703
    %v785 = vunpack.c.l.b16 %v704
    %v786 = vunpack.c.h.b16 %v704
    %v787 = vunpack.c.l.b16 %v705
    %v788 = vunpack.c.h.b16 %v705
    %v789 = vunpack.c.l.b16 %v706
    %v790 = vunpack.c.h.b16 %v706
    %v791 = vunpack.c.l.b16 %v707
    %v792 = vunpack.c.h.b16 %v707
    %v793 = vunpack.c.l.b16 %v708
    %v794 = vunpack.c.h.b16 %v708
    %v795 = vunpack.c.l.b16 %v709
    %v796 = vunpack.c.h.b16 %v709
    %v797 = vunpack.c.l.b16 %v710
    %v798 = vunpack.c.h.b16 %v710
    %v799 = vunpack.c.l.b16 %v711
    %v800 = vunpack.c.h.b16 %v711
    %v801 = vunpack.c.l.b16 %v712
    %v802 = vunpack.c.h.b16 %v712
    %v803 = vunpack.c.l.b16 %v713
    %v804 = vunpack.c.h.b16 %v713
    %v805 = vunpack.c.l.b16 %v714
    %v806 = vunpack.c.h.b16 %v714
    %v807 = vunpack.c.l.b16 %v715
    %v808 = vunpack.c.h.b16 %v715
    %v809 = vunpack.c.l.b16 %v716
    %v810 = vunpack.c.h.b16 %v716
    %v811 = vunpack.c.l.b16 %v717
    %v812 = vunpack.c.h.b16 %v717
    %v813 = vunpack.c.l.b16 %v718
    %v814 = vunpack.c.h.b16 %v718
    %v815 = vpack.c.b16 %v755, %v751
    %v816 = vpack.c.b16 %v756, %v752
    %v817 = vpack.c.b16 %v757, %v753
    %v818 = vpack.c.b16 %v758, %v754
    %v819 = vpack.c.b16 %v763, %v759
    %v820 = vpack.c.b16 %v764, %v760
    %v821 = vpack.c.b16 %v765, %v761
    %v822 = vpack.c.b16 %v766, %v762
    %v823 = vpack.c.b16 %v771, %v767
    %v824 = vpack.c.b16 %v772, %v768
    %v825 = vpack.c.b16 %v773, %v769
    %v826 = vpack.c.b16 %v774, %v770
    %v827 = vpack.c.b16 %v779, %v775
    %v828 = vpack.c.b16 %v780, %v776
    %v829 = vpack.c.b16 %v781, %v777
    %v830 = vpack.c.b16 %v782, %v778
    %v831 = vpack.c.b16 %v787, %v783
    %v832 = vpack.c.b16 %v788, %v784
    %v833 = vpack.c.b16 %v789, %v785
    %v834 = vpack.c.b16 %v790, %v786
    %v835 = vpack.c.b16 %v795, %v791
    %v836 = vpack.c.b16 %v796, %v792
    %v837 = vpack.c.b16 %v797, %v793
    %v838 = vpack.c.b16 %v798, %v794
    %v839 = vpack.c.b16 %v803, %v799
    %v840 = vpack.c.b16 %v804, %v800
    %v841 = vpack.c.b16 %v805, %v801
    %v842 = vpack.c.b16 %v806, %v802
    %v843 = vpack.c.b16 %v811, %v807
    %v844 = vpack.c.b16 %v812, %v808
    %v845 = vpack.c.b16 %v813, %v809
    %v846 = vpack.c.b16 %v814, %v810
    %879 = vmatpush.bf16.msra.mxu0 %v662
    %880 = vmatpush.bf16.msra.mxu0 %v661
    %881 = vmatpush.bf16.msra.mxu0 %v660
    %882 = vmatpush.bf16.msra.mxu0 %v659
    %883 = vmatpush.bf16.msra.mxu0 %v658
    %884 = vmatpush.bf16.msra.mxu0 %v657
    %885 = vmatpush.bf16.msra.mxu0 %v656
    %886 = vmatpush.bf16.msra.mxu0 %v655
    %887 = vmatmul.bf16.gmra.mxu0 %v815
    %v888 = vpop.f32.mrf.mxu0
    %v889 = vadd.f32 0.0, %v888
    %v890 = vpop.f32.mrf.mxu0
    %v891 = vadd.f32 0.0, %v890
    %892 = vmatmul.bf16.gmra.mxu0 %v819
    %v893 = vpop.f32.mrf.mxu0
    %v894 = vadd.f32 0.0, %v893
    %v895 = vpop.f32.mrf.mxu0
    %v896 = vadd.f32 0.0, %v895
    %897 = vmatmul.bf16.gmra.mxu0 %v823
    %v898 = vpop.f32.mrf.mxu0
    %v899 = vadd.f32 0.0, %v898
    %v900 = vpop.f32.mrf.mxu0
    %v901 = vadd.f32 0.0, %v900
    %902 = vmatmul.bf16.gmra.mxu0 %v827
    %v903 = vpop.f32.mrf.mxu0
    %v904 = vadd.f32 0.0, %v903
    %v905 = vpop.f32.mrf.mxu0
    %v906 = vadd.f32 0.0, %v905
    %907 = vmatmul.bf16.gmra.mxu0 %v831
    %v908 = vpop.f32.mrf.mxu0
    %v909 = vadd.f32 0.0, %v908
    %v910 = vpop.f32.mrf.mxu0
    %v911 = vadd.f32 0.0, %v910
    %912 = vmatmul.bf16.gmra.mxu0 %v835
    %v913 = vpop.f32.mrf.mxu0
    %v914 = vadd.f32 0.0, %v913
    %v915 = vpop.f32.mrf.mxu0
    %v916 = vadd.f32 0.0, %v915
    %917 = vmatmul.bf16.gmra.mxu0 %v839
    %v918 = vpop.f32.mrf.mxu0
    %v919 = vadd.f32 0.0, %v918
    %v920 = vpop.f32.mrf.mxu0
    %v921 = vadd.f32 0.0, %v920
    %922 = vmatmul.bf16.gmra.mxu0 %v843
    %v923 = vpop.f32.mrf.mxu0
    %v924 = vadd.f32 0.0, %v923
    %v925 = vpop.f32.mrf.mxu0
    %v926 = vadd.f32 0.0, %v925
    %927 = vdwg.mxu0
    %928 = vmatpush.bf16.msra.mxu0 %v670
    %929 = vmatpush.bf16.msra.mxu0 %v669
    %930 = vmatpush.bf16.msra.mxu0 %v668
    %931 = vmatpush.bf16.msra.mxu0 %v667
    %932 = vmatpush.bf16.msra.mxu0 %v666
    %933 = vmatpush.bf16.msra.mxu0 %v665
    %934 = vmatpush.bf16.msra.mxu0 %v664
    %935 = vmatpush.bf16.msra.mxu0 %v663
    %936 = vmatmul.bf16.gmra.mxu0 %v816
    %v937 = vpop.f32.mrf.mxu0
    %v938 = vadd.f32 %v889, %v937
    %v939 = vpop.f32.mrf.mxu0
    %v940 = vadd.f32 %v891, %v939
    %941 = vmatmul.bf16.gmra.mxu0 %v820
    %v942 = vpop.f32.mrf.mxu0
    %v943 = vadd.f32 %v894, %v942
    %v944 = vpop.f32.mrf.mxu0
    %v945 = vadd.f32 %v896, %v944
    %946 = vmatmul.bf16.gmra.mxu0 %v824
    %v947 = vpop.f32.mrf.mxu0
    %v948 = vadd.f32 %v899, %v947
    %v949 = vpop.f32.mrf.mxu0
    %v950 = vadd.f32 %v901, %v949
    %951 = vmatmul.bf16.gmra.mxu0 %v828
    %v952 = vpop.f32.mrf.mxu0
    %v953 = vadd.f32 %v904, %v952
    %v954 = vpop.f32.mrf.mxu0
    %v955 = vadd.f32 %v906, %v954
    %956 = vmatmul.bf16.gmra.mxu0 %v832
    %v957 = vpop.f32.mrf.mxu0
    %v958 = vadd.f32 %v909, %v957
    %v959 = vpop.f32.mrf.mxu0
    %v960 = vadd.f32 %v911, %v959
    %961 = vmatmul.bf16.gmra.mxu0 %v836
    %v962 = vpop.f32.mrf.mxu0
    %v963 = vadd.f32 %v914, %v962
    %v964 = vpop.f32.mrf.mxu0
    %v965 = vadd.f32 %v916, %v964
    %966 = vmatmul.bf16.gmra.mxu0 %v840
    %v967 = vpop.f32.mrf.mxu0
    %v968 = vadd.f32 %v919, %v967
    %v969 = vpop.f32.mrf.mxu0
    %v970 = vadd.f32 %v921, %v969
    %971 = vmatmul.bf16.gmra.mxu0 %v844
    %v972 = vpop.f32.mrf.mxu0
    %v973 = vadd.f32 %v924, %v972
    %v974 = vpop.f32.mrf.mxu0
    %v975 = vadd.f32 %v926, %v974
    %976 = vdwg.mxu0
    %977 = vmatpush.bf16.msra.mxu0 %v678
    %978 = vmatpush.bf16.msra.mxu0 %v677
    %979 = vmatpush.bf16.msra.mxu0 %v676
    %980 = vmatpush.bf16.msra.mxu0 %v675
    %981 = vmatpush.bf16.msra.mxu0 %v674
    %982 = vmatpush.bf16.msra.mxu0 %v673
    %983 = vmatpush.bf16.msra.mxu0 %v672
    %984 = vmatpush.bf16.msra.mxu0 %v671
    %985 = vmatmul.bf16.gmra.mxu0 %v817
    %v986 = vpop.f32.mrf.mxu0
    %v987 = vadd.f32 %v938, %v986
    %v988 = vpop.f32.mrf.mxu0
    %v989 = vadd.f32 %v940, %v988
    %990 = vmatmul.bf16.gmra.mxu0 %v821
    %v991 = vpop.f32.mrf.mxu0
    %v992 = vadd.f32 %v943, %v991
    %v993 = vpop.f32.mrf.mxu0
    %v994 = vadd.f32 %v945, %v993
    %995 = vmatmul.bf16.gmra.mxu0 %v825
    %v996 = vpop.f32.mrf.mxu0
    %v997 = vadd.f32 %v948, %v996
    %v998 = vpop.f32.mrf.mxu0
    %v999 = vadd.f32 %v950, %v998
    %1000 = vmatmul.bf16.gmra.mxu0 %v829
    %v1001 = vpop.f32.mrf.mxu0
    %v1002 = vadd.f32 %v953, %v1001
    %v1003 = vpop.f32.mrf.mxu0
    %v1004 = vadd.f32 %v955, %v1003
    %1005 = vmatmul.bf16.gmra.mxu0 %v833
    %v1006 = vpop.f32.mrf.mxu0
    %v1007 = vadd.f32 %v958, %v1006
    %v1008 = vpop.f32.mrf.mxu0
    %v1009 = vadd.f32 %v960, %v1008
    %1010 = vmatmul.bf16.gmra.mxu0 %v837
    %v1011 = vpop.f32.mrf.mxu0
    %v1012 = vadd.f32 %v963, %v1011
    %v1013 = vpop.f32.mrf.mxu0
    %v1014 = vadd.f32 %v965, %v1013
    %1015 = vmatmul.bf16.gmra.mxu0 %v841
    %v1016 = vpop.f32.mrf.mxu0
    %v1017 = vadd.f32 %v968, %v1016
    %v1018 = vpop.f32.mrf.mxu0
    %v1019 = vadd.f32 %v970, %v1018
    %1020 = vmatmul.bf16.gmra.mxu0 %v845
    %v1021 = vpop.f32.mrf.mxu0
    %v1022 = vadd.f32 %v973, %v1021
    %v1023 = vpop.f32.mrf.mxu0
    %v1024 = vadd.f32 %v975, %v1023
    %1025 = vdwg.mxu0
    %1026 = vmatpush.bf16.msra.mxu0 %v686
    %1027 = vmatpush.bf16.msra.mxu0 %v685
    %1028 = vmatpush.bf16.msra.mxu0 %v684
    %1029 = vmatpush.bf16.msra.mxu0 %v683
    %1030 = vmatpush.bf16.msra.mxu0 %v682
    %1031 = vmatpush.bf16.msra.mxu0 %v681
    %1032 = vmatpush.bf16.msra.mxu0 %v680
    %1033 = vmatpush.bf16.msra.mxu0 %v679
    %1034 = vmatmul.bf16.gmra.mxu0 %v818
    %v1035 = vpop.f32.mrf.mxu0
    %v1036 = vadd.f32 %v987, %v1035
    %v1037 = vpop.f32.mrf.mxu0
    %v1038 = vadd.f32 %v989, %v1037
    %1039 = vmatmul.bf16.gmra.mxu0 %v822
    %v1040 = vpop.f32.mrf.mxu0
    %v1041 = vadd.f32 %v992, %v1040
    %v1042 = vpop.f32.mrf.mxu0
    %v1043 = vadd.f32 %v994, %v1042
    %1044 = vmatmul.bf16.gmra.mxu0 %v826
    %v1045 = vpop.f32.mrf.mxu0
    %v1046 = vadd.f32 %v997, %v1045
    %v1047 = vpop.f32.mrf.mxu0
    %v1048 = vadd.f32 %v999, %v1047
    %1049 = vmatmul.bf16.gmra.mxu0 %v830
    %v1050 = vpop.f32.mrf.mxu0
    %v1051 = vadd.f32 %v1002, %v1050
    %v1052 = vpop.f32.mrf.mxu0
    %v1053 = vadd.f32 %v1004, %v1052
    %1054 = vmatmul.bf16.gmra.mxu0 %v834
    %v1055 = vpop.f32.mrf.mxu0
    %v1056 = vadd.f32 %v1007, %v1055
    %v1057 = vpop.f32.mrf.mxu0
    %v1058 = vadd.f32 %v1009, %v1057
    %1059 = vmatmul.bf16.gmra.mxu0 %v838
    %v1060 = vpop.f32.mrf.mxu0
    %v1061 = vadd.f32 %v1012, %v1060
    %v1062 = vpop.f32.mrf.mxu0
    %v1063 = vadd.f32 %v1014, %v1062
    %1064 = vmatmul.bf16.gmra.mxu0 %v842
    %v1065 = vpop.f32.mrf.mxu0
    %v1066 = vadd.f32 %v1017, %v1065
    %v1067 = vpop.f32.mrf.mxu0
    %v1068 = vadd.f32 %v1019, %v1067
    %1069 = vmatmul.bf16.gmra.mxu0 %v846
    %v1070 = vpop.f32.mrf.mxu0
    %v1071 = vadd.f32 %v1022, %v1070
    %v1072 = vpop.f32.mrf.mxu0
    %v1073 = vadd.f32 %v1024, %v1072
    %1074 = vdwg.mxu0
    %s1075 = scalar_lea.vmem [#allocation2], 256
    %v1076 = vld [vmem:[%s1075] sm:$0xff]
    %v1077 = vld [vmem:[%s1075 + $0x8] sm:$0xff]
    %v1078 = vld [vmem:[%s1075 + $0x10] sm:$0xff]
    %v1079 = vld [vmem:[%s1075 + $0x18] sm:$0xff]
    %v1080 = vld [vmem:[%s1075 + $0x20] sm:$0xff]
    %v1081 = vld [vmem:[%s1075 + $0x28] sm:$0xff]
    %v1082 = vld [vmem:[%s1075 + $0x30] sm:$0xff]
    %v1083 = vld [vmem:[%s1075 + $0x38] sm:$0xff]
    %v1084 = vld [vmem:[%s1075 + $0x40] sm:$0xff]
    %v1085 = vld [vmem:[%s1075 + $0x48] sm:$0xff]
    %v1086 = vld [vmem:[%s1075 + $0x50] sm:$0xff]
    %v1087 = vld [vmem:[%s1075 + $0x58] sm:$0xff]
    %v1088 = vld [vmem:[%s1075 + $0x60] sm:$0xff]
    %v1089 = vld [vmem:[%s1075 + $0x68] sm:$0xff]
    %v1090 = vld [vmem:[%s1075 + $0x70] sm:$0xff]
    %v1091 = vld [vmem:[%s1075 + $0x78] sm:$0xff]
    %v1092 = vld [vmem:[%s1075 + $0x80] sm:$0xff]
    %v1093 = vld [vmem:[%s1075 + $0x88] sm:$0xff]
    %v1094 = vld [vmem:[%s1075 + $0x90] sm:$0xff]
    %v1095 = vld [vmem:[%s1075 + $0x98] sm:$0xff]
    %v1096 = vld [vmem:[%s1075 + $0xa0] sm:$0xff]
    %v1097 = vld [vmem:[%s1075 + $0xa8] sm:$0xff]
    %v1098 = vld [vmem:[%s1075 + $0xb0] sm:$0xff]
    %v1099 = vld [vmem:[%s1075 + $0xb8] sm:$0xff]
    %v1100 = vld [vmem:[%s1075 + $0xc0] sm:$0xff]
    %v1101 = vld [vmem:[%s1075 + $0xc8] sm:$0xff]
    %v1102 = vld [vmem:[%s1075 + $0xd0] sm:$0xff]
    %v1103 = vld [vmem:[%s1075 + $0xd8] sm:$0xff]
    %v1104 = vld [vmem:[%s1075 + $0xe0] sm:$0xff]
    %v1105 = vld [vmem:[%s1075 + $0xe8] sm:$0xff]
    %v1106 = vld [vmem:[%s1075 + $0xf0] sm:$0xff]
    %v1107 = vld [vmem:[%s1075 + $0xf8] sm:$0xff]
    %v1140 = vunpack.c.l.b16 %v1076
    %v1141 = vunpack.c.h.b16 %v1076
    %v1142 = vunpack.c.l.b16 %v1077
    %v1143 = vunpack.c.h.b16 %v1077
    %v1144 = vunpack.c.l.b16 %v1078
    %v1145 = vunpack.c.h.b16 %v1078
    %v1146 = vunpack.c.l.b16 %v1079
    %v1147 = vunpack.c.h.b16 %v1079
    %v1148 = vunpack.c.l.b16 %v1080
    %v1149 = vunpack.c.h.b16 %v1080
    %v1150 = vunpack.c.l.b16 %v1081
    %v1151 = vunpack.c.h.b16 %v1081
    %v1152 = vunpack.c.l.b16 %v1082
    %v1153 = vunpack.c.h.b16 %v1082
    %v1154 = vunpack.c.l.b16 %v1083
    %v1155 = vunpack.c.h.b16 %v1083
    %v1156 = vunpack.c.l.b16 %v1084
    %v1157 = vunpack.c.h.b16 %v1084
    %v1158 = vunpack.c.l.b16 %v1085
    %v1159 = vunpack.c.h.b16 %v1085
    %v1160 = vunpack.c.l.b16 %v1086
    %v1161 = vunpack.c.h.b16 %v1086
    %v1162 = vunpack.c.l.b16 %v1087
    %v1163 = vunpack.c.h.b16 %v1087
    %v1164 = vunpack.c.l.b16 %v1088
    %v1165 = vunpack.c.h.b16 %v1088
    %v1166 = vunpack.c.l.b16 %v1089
    %v1167 = vunpack.c.h.b16 %v1089
    %v1168 = vunpack.c.l.b16 %v1090
    %v1169 = vunpack.c.h.b16 %v1090
    %v1170 = vunpack.c.l.b16 %v1091
    %v1171 = vunpack.c.h.b16 %v1091
    %v1172 = vunpack.c.l.b16 %v1092
    %v1173 = vunpack.c.h.b16 %v1092
    %v1174 = vunpack.c.l.b16 %v1093
    %v1175 = vunpack.c.h.b16 %v1093
    %v1176 = vunpack.c.l.b16 %v1094
    %v1177 = vunpack.c.h.b16 %v1094
    %v1178 = vunpack.c.l.b16 %v1095
    %v1179 = vunpack.c.h.b16 %v1095
    %v1180 = vunpack.c.l.b16 %v1096
    %v1181 = vunpack.c.h.b16 %v1096
    %v1182 = vunpack.c.l.b16 %v1097
    %v1183 = vunpack.c.h.b16 %v1097
    %v1184 = vunpack.c.l.b16 %v1098
    %v1185 = vunpack.c.h.b16 %v1098
    %v1186 = vunpack.c.l.b16 %v1099
    %v1187 = vunpack.c.h.b16 %v1099
    %v1188 = vunpack.c.l.b16 %v1100
    %v1189 = vunpack.c.h.b16 %v1100
    %v1190 = vunpack.c.l.b16 %v1101
    %v1191 = vunpack.c.h.b16 %v1101
    %v1192 = vunpack.c.l.b16 %v1102
    %v1193 = vunpack.c.h.b16 %v1102
    %v1194 = vunpack.c.l.b16 %v1103
    %v1195 = vunpack.c.h.b16 %v1103
    %v1196 = vunpack.c.l.b16 %v1104
    %v1197 = vunpack.c.h.b16 %v1104
    %v1198 = vunpack.c.l.b16 %v1105
    %v1199 = vunpack.c.h.b16 %v1105
    %v1200 = vunpack.c.l.b16 %v1106
    %v1201 = vunpack.c.h.b16 %v1106
    %v1202 = vunpack.c.l.b16 %v1107
    %v1203 = vunpack.c.h.b16 %v1107
    %v1204 = vpack.c.b16 %v1144, %v1140
    %v1205 = vpack.c.b16 %v1145, %v1141
    %v1206 = vpack.c.b16 %v1146, %v1142
    %v1207 = vpack.c.b16 %v1147, %v1143
    %v1208 = vpack.c.b16 %v1152, %v1148
    %v1209 = vpack.c.b16 %v1153, %v1149
    %v1210 = vpack.c.b16 %v1154, %v1150
    %v1211 = vpack.c.b16 %v1155, %v1151
    %v1212 = vpack.c.b16 %v1160, %v1156
    %v1213 = vpack.c.b16 %v1161, %v1157
    %v1214 = vpack.c.b16 %v1162, %v1158
    %v1215 = vpack.c.b16 %v1163, %v1159
    %v1216 = vpack.c.b16 %v1168, %v1164
    %v1217 = vpack.c.b16 %v1169, %v1165
    %v1218 = vpack.c.b16 %v1170, %v1166
    %v1219 = vpack.c.b16 %v1171, %v1167
    %v1220 = vpack.c.b16 %v1176, %v1172
    %v1221 = vpack.c.b16 %v1177, %v1173
    %v1222 = vpack.c.b16 %v1178, %v1174
    %v1223 = vpack.c.b16 %v1179, %v1175
    %v1224 = vpack.c.b16 %v1184, %v1180
    %v1225 = vpack.c.b16 %v1185, %v1181
    %v1226 = vpack.c.b16 %v1186, %v1182
    %v1227 = vpack.c.b16 %v1187, %v1183
    %v1228 = vpack.c.b16 %v1192, %v1188
    %v1229 = vpack.c.b16 %v1193, %v1189
    %v1230 = vpack.c.b16 %v1194, %v1190
    %v1231 = vpack.c.b16 %v1195, %v1191
    %v1232 = vpack.c.b16 %v1200, %v1196
    %v1233 = vpack.c.b16 %v1201, %v1197
    %v1234 = vpack.c.b16 %v1202, %v1198
    %v1235 = vpack.c.b16 %v1203, %v1199
    %1268 = vmatpush.bf16.msra.mxu0 %v662
    %1269 = vmatpush.bf16.msra.mxu0 %v661
    %1270 = vmatpush.bf16.msra.mxu0 %v660
    %1271 = vmatpush.bf16.msra.mxu0 %v659
    %1272 = vmatpush.bf16.msra.mxu0 %v658
    %1273 = vmatpush.bf16.msra.mxu0 %v657
    %1274 = vmatpush.bf16.msra.mxu0 %v656
    %1275 = vmatpush.bf16.msra.mxu0 %v655
    %1276 = vmatmul.bf16.gmra.mxu0 %v1204
    %v1277 = vpop.f32.mrf.mxu0
    %v1278 = vadd.f32 0.0, %v1277
    %v1279 = vpop.f32.mrf.mxu0
    %v1280 = vadd.f32 0.0, %v1279
    %1281 = vmatmul.bf16.gmra.mxu0 %v1208
    %v1282 = vpop.f32.mrf.mxu0
    %v1283 = vadd.f32 0.0, %v1282
    %v1284 = vpop.f32.mrf.mxu0
    %v1285 = vadd.f32 0.0, %v1284
    %1286 = vmatmul.bf16.gmra.mxu0 %v1212
    %v1287 = vpop.f32.mrf.mxu0
    %v1288 = vadd.f32 0.0, %v1287
    %v1289 = vpop.f32.mrf.mxu0
    %v1290 = vadd.f32 0.0, %v1289
    %1291 = vmatmul.bf16.gmra.mxu0 %v1216
    %v1292 = vpop.f32.mrf.mxu0
    %v1293 = vadd.f32 0.0, %v1292
    %v1294 = vpop.f32.mrf.mxu0
    %v1295 = vadd.f32 0.0, %v1294
    %1296 = vmatmul.bf16.gmra.mxu0 %v1220
    %v1297 = vpop.f32.mrf.mxu0
    %v1298 = vadd.f32 0.0, %v1297
    %v1299 = vpop.f32.mrf.mxu0
    %v1300 = vadd.f32 0.0, %v1299
    %1301 = vmatmul.bf16.gmra.mxu0 %v1224
    %v1302 = vpop.f32.mrf.mxu0
    %v1303 = vadd.f32 0.0, %v1302
    %v1304 = vpop.f32.mrf.mxu0
    %v1305 = vadd.f32 0.0, %v1304
    %1306 = vmatmul.bf16.gmra.mxu0 %v1228
    %v1307 = vpop.f32.mrf.mxu0
    %v1308 = vadd.f32 0.0, %v1307
    %v1309 = vpop.f32.mrf.mxu0
    %v1310 = vadd.f32 0.0, %v1309
    %1311 = vmatmul.bf16.gmra.mxu0 %v1232
    %v1312 = vpop.f32.mrf.mxu0
    %v1313 = vadd.f32 0.0, %v1312
    %v1314 = vpop.f32.mrf.mxu0
    %v1315 = vadd.f32 0.0, %v1314
    %1316 = vdwg.mxu0
    %1317 = vmatpush.bf16.msra.mxu0 %v670
    %1318 = vmatpush.bf16.msra.mxu0 %v669
    %1319 = vmatpush.bf16.msra.mxu0 %v668
    %1320 = vmatpush.bf16.msra.mxu0 %v667
    %1321 = vmatpush.bf16.msra.mxu0 %v666
    %1322 = vmatpush.bf16.msra.mxu0 %v665
    %1323 = vmatpush.bf16.msra.mxu0 %v664
    %1324 = vmatpush.bf16.msra.mxu0 %v663
    %1325 = vmatmul.bf16.gmra.mxu0 %v1205
    %v1326 = vpop.f32.mrf.mxu0
    %v1327 = vadd.f32 %v1278, %v1326
    %v1328 = vpop.f32.mrf.mxu0
    %v1329 = vadd.f32 %v1280, %v1328
    %1330 = vmatmul.bf16.gmra.mxu0 %v1209
    %v1331 = vpop.f32.mrf.mxu0
    %v1332 = vadd.f32 %v1283, %v1331
    %v1333 = vpop.f32.mrf.mxu0
    %v1334 = vadd.f32 %v1285, %v1333
    %1335 = vmatmul.bf16.gmra.mxu0 %v1213
    %v1336 = vpop.f32.mrf.mxu0
    %v1337 = vadd.f32 %v1288, %v1336
    %v1338 = vpop.f32.mrf.mxu0
    %v1339 = vadd.f32 %v1290, %v1338
    %1340 = vmatmul.bf16.gmra.mxu0 %v1217
    %v1341 = vpop.f32.mrf.mxu0
    %v1342 = vadd.f32 %v1293, %v1341
    %v1343 = vpop.f32.mrf.mxu0
    %v1344 = vadd.f32 %v1295, %v1343
    %1345 = vmatmul.bf16.gmra.mxu0 %v1221
    %v1346 = vpop.f32.mrf.mxu0
    %v1347 = vadd.f32 %v1298, %v1346
    %v1348 = vpop.f32.mrf.mxu0
    %v1349 = vadd.f32 %v1300, %v1348
    %1350 = vmatmul.bf16.gmra.mxu0 %v1225
    %v1351 = vpop.f32.mrf.mxu0
    %v1352 = vadd.f32 %v1303, %v1351
    %v1353 = vpop.f32.mrf.mxu0
    %v1354 = vadd.f32 %v1305, %v1353
    %1355 = vmatmul.bf16.gmra.mxu0 %v1229
    %v1356 = vpop.f32.mrf.mxu0
    %v1357 = vadd.f32 %v1308, %v1356
    %v1358 = vpop.f32.mrf.mxu0
    %v1359 = vadd.f32 %v1310, %v1358
    %1360 = vmatmul.bf16.gmra.mxu0 %v1233
    %v1361 = vpop.f32.mrf.mxu0
    %v1362 = vadd.f32 %v1313, %v1361
    %v1363 = vpop.f32.mrf.mxu0
    %v1364 = vadd.f32 %v1315, %v1363
    %1365 = vdwg.mxu0
    %1366 = vmatpush.bf16.msra.mxu0 %v678
    %1367 = vmatpush.bf16.msra.mxu0 %v677
    %1368 = vmatpush.bf16.msra.mxu0 %v676
    %1369 = vmatpush.bf16.msra.mxu0 %v675
    %1370 = vmatpush.bf16.msra.mxu0 %v674
    %1371 = vmatpush.bf16.msra.mxu0 %v673
    %1372 = vmatpush.bf16.msra.mxu0 %v672
    %1373 = vmatpush.bf16.msra.mxu0 %v671
    %1374 = vmatmul.bf16.gmra.mxu0 %v1206
    %v1375 = vpop.f32.mrf.mxu0
    %v1376 = vadd.f32 %v1327, %v1375
    %v1377 = vpop.f32.mrf.mxu0
    %v1378 = vadd.f32 %v1329, %v1377
    %1379 = vmatmul.bf16.gmra.mxu0 %v1210
    %v1380 = vpop.f32.mrf.mxu0
    %v1381 = vadd.f32 %v1332, %v1380
    %v1382 = vpop.f32.mrf.mxu0
    %v1383 = vadd.f32 %v1334, %v1382
    %1384 = vmatmul.bf16.gmra.mxu0 %v1214
    %v1385 = vpop.f32.mrf.mxu0
    %v1386 = vadd.f32 %v1337, %v1385
    %v1387 = vpop.f32.mrf.mxu0
    %v1388 = vadd.f32 %v1339, %v1387
    %1389 = vmatmul.bf16.gmra.mxu0 %v1218
    %v1390 = vpop.f32.mrf.mxu0
    %v1391 = vadd.f32 %v1342, %v1390
    %v1392 = vpop.f32.mrf.mxu0
    %v1393 = vadd.f32 %v1344, %v1392
    %1394 = vmatmul.bf16.gmra.mxu0 %v1222
    %v1395 = vpop.f32.mrf.mxu0
    %v1396 = vadd.f32 %v1347, %v1395
    %v1397 = vpop.f32.mrf.mxu0
    %v1398 = vadd.f32 %v1349, %v1397
    %1399 = vmatmul.bf16.gmra.mxu0 %v1226
    %v1400 = vpop.f32.mrf.mxu0
    %v1401 = vadd.f32 %v1352, %v1400
    %v1402 = vpop.f32.mrf.mxu0
    %v1403 = vadd.f32 %v1354, %v1402
    %1404 = vmatmul.bf16.gmra.mxu0 %v1230
    %v1405 = vpop.f32.mrf.mxu0
    %v1406 = vadd.f32 %v1357, %v1405
    %v1407 = vpop.f32.mrf.mxu0
    %v1408 = vadd.f32 %v1359, %v1407
    %1409 = vmatmul.bf16.gmra.mxu0 %v1234
    %v1410 = vpop.f32.mrf.mxu0
    %v1411 = vadd.f32 %v1362, %v1410
    %v1412 = vpop.f32.mrf.mxu0
    %v1413 = vadd.f32 %v1364, %v1412
    %1414 = vdwg.mxu0
    %1415 = vmatpush.bf16.msra.mxu0 %v686
    %1416 = vmatpush.bf16.msra.mxu0 %v685
    %1417 = vmatpush.bf16.msra.mxu0 %v684
    %1418 = vmatpush.bf16.msra.mxu0 %v683
    %1419 = vmatpush.bf16.msra.mxu0 %v682
    %1420 = vmatpush.bf16.msra.mxu0 %v681
    %1421 = vmatpush.bf16.msra.mxu0 %v680
    %1422 = vmatpush.bf16.msra.mxu0 %v679
    %1423 = vmatmul.bf16.gmra.mxu0 %v1207
    %v1424 = vpop.f32.mrf.mxu0
    %v1425 = vadd.f32 %v1376, %v1424
    %v1426 = vpop.f32.mrf.mxu0
    %v1427 = vadd.f32 %v1378, %v1426
    %1428 = vmatmul.bf16.gmra.mxu0 %v1211
    %v1429 = vpop.f32.mrf.mxu0
    %v1430 = vadd.f32 %v1381, %v1429
    %v1431 = vpop.f32.mrf.mxu0
    %v1432 = vadd.f32 %v1383, %v1431
    %1433 = vmatmul.bf16.gmra.mxu0 %v1215
    %v1434 = vpop.f32.mrf.mxu0
    %v1435 = vadd.f32 %v1386, %v1434
    %v1436 = vpop.f32.mrf.mxu0
    %v1437 = vadd.f32 %v1388, %v1436
    %1438 = vmatmul.bf16.gmra.mxu0 %v1219
    %v1439 = vpop.f32.mrf.mxu0
    %v1440 = vadd.f32 %v1391, %v1439
    %v1441 = vpop.f32.mrf.mxu0
    %v1442 = vadd.f32 %v1393, %v1441
    %1443 = vmatmul.bf16.gmra.mxu0 %v1223
    %v1444 = vpop.f32.mrf.mxu0
    %v1445 = vadd.f32 %v1396, %v1444
    %v1446 = vpop.f32.mrf.mxu0
    %v1447 = vadd.f32 %v1398, %v1446
    %1448 = vmatmul.bf16.gmra.mxu0 %v1227
    %v1449 = vpop.f32.mrf.mxu0
    %v1450 = vadd.f32 %v1401, %v1449
    %v1451 = vpop.f32.mrf.mxu0
    %v1452 = vadd.f32 %v1403, %v1451
    %1453 = vmatmul.bf16.gmra.mxu0 %v1231
    %v1454 = vpop.f32.mrf.mxu0
    %v1455 = vadd.f32 %v1406, %v1454
    %v1456 = vpop.f32.mrf.mxu0
    %v1457 = vadd.f32 %v1408, %v1456
    %1458 = vmatmul.bf16.gmra.mxu0 %v1235
    %v1459 = vpop.f32.mrf.mxu0
    %v1460 = vadd.f32 %v1411, %v1459
    %v1461 = vpop.f32.mrf.mxu0
    %v1462 = vadd.f32 %v1413, %v1461
    %1463 = vdwg.mxu0
    %s1464 = scalar_lea.vmem [#allocation2], 512
    %v1465 = vld [vmem:[%s1464] sm:$0xff]
    %v1466 = vld [vmem:[%s1464 + $0x8] sm:$0xff]
    %v1467 = vld [vmem:[%s1464 + $0x10] sm:$0xff]
    %v1468 = vld [vmem:[%s1464 + $0x18] sm:$0xff]
    %v1469 = vld [vmem:[%s1464 + $0x20] sm:$0xff]
    %v1470 = vld [vmem:[%s1464 + $0x28] sm:$0xff]
    %v1471 = vld [vmem:[%s1464 + $0x30] sm:$0xff]
    %v1472 = vld [vmem:[%s1464 + $0x38] sm:$0xff]
    %v1473 = vld [vmem:[%s1464 + $0x40] sm:$0xff]
    %v1474 = vld [vmem:[%s1464 + $0x48] sm:$0xff]
    %v1475 = vld [vmem:[%s1464 + $0x50] sm:$0xff]
    %v1476 = vld [vmem:[%s1464 + $0x58] sm:$0xff]
    %v1477 = vld [vmem:[%s1464 + $0x60] sm:$0xff]
    %v1478 = vld [vmem:[%s1464 + $0x68] sm:$0xff]
    %v1479 = vld [vmem:[%s1464 + $0x70] sm:$0xff]
    %v1480 = vld [vmem:[%s1464 + $0x78] sm:$0xff]
    %v1481 = vld [vmem:[%s1464 + $0x80] sm:$0xff]
    %v1482 = vld [vmem:[%s1464 + $0x88] sm:$0xff]
    %v1483 = vld [vmem:[%s1464 + $0x90] sm:$0xff]
    %v1484 = vld [vmem:[%s1464 + $0x98] sm:$0xff]
    %v1485 = vld [vmem:[%s1464 + $0xa0] sm:$0xff]
    %v1486 = vld [vmem:[%s1464 + $0xa8] sm:$0xff]
    %v1487 = vld [vmem:[%s1464 + $0xb0] sm:$0xff]
    %v1488 = vld [vmem:[%s1464 + $0xb8] sm:$0xff]
    %v1489 = vld [vmem:[%s1464 + $0xc0] sm:$0xff]
    %v1490 = vld [vmem:[%s1464 + $0xc8] sm:$0xff]
    %v1491 = vld [vmem:[%s1464 + $0xd0] sm:$0xff]
    %v1492 = vld [vmem:[%s1464 + $0xd8] sm:$0xff]
    %v1493 = vld [vmem:[%s1464 + $0xe0] sm:$0xff]
    %v1494 = vld [vmem:[%s1464 + $0xe8] sm:$0xff]
    %v1495 = vld [vmem:[%s1464 + $0xf0] sm:$0xff]
    %v1496 = vld [vmem:[%s1464 + $0xf8] sm:$0xff]
    %v1529 = vunpack.c.l.b16 %v1465
    %v1530 = vunpack.c.h.b16 %v1465
    %v1531 = vunpack.c.l.b16 %v1466
    %v1532 = vunpack.c.h.b16 %v1466
    %v1533 = vunpack.c.l.b16 %v1467
    %v1534 = vunpack.c.h.b16 %v1467
    %v1535 = vunpack.c.l.b16 %v1468
    %v1536 = vunpack.c.h.b16 %v1468
    %v1537 = vunpack.c.l.b16 %v1469
    %v1538 = vunpack.c.h.b16 %v1469
    %v1539 = vunpack.c.l.b16 %v1470
    %v1540 = vunpack.c.h.b16 %v1470
    %v1541 = vunpack.c.l.b16 %v1471
    %v1542 = vunpack.c.h.b16 %v1471
    %v1543 = vunpack.c.l.b16 %v1472
    %v1544 = vunpack.c.h.b16 %v1472
    %v1545 = vunpack.c.l.b16 %v1473
    %v1546 = vunpack.c.h.b16 %v1473
    %v1547 = vunpack.c.l.b16 %v1474
    %v1548 = vunpack.c.h.b16 %v1474
    %v1549 = vunpack.c.l.b16 %v1475
    %v1550 = vunpack.c.h.b16 %v1475
    %v1551 = vunpack.c.l.b16 %v1476
    %v1552 = vunpack.c.h.b16 %v1476
    %v1553 = vunpack.c.l.b16 %v1477
    %v1554 = vunpack.c.h.b16 %v1477
    %v1555 = vunpack.c.l.b16 %v1478
    %v1556 = vunpack.c.h.b16 %v1478
    %v1557 = vunpack.c.l.b16 %v1479
    %v1558 = vunpack.c.h.b16 %v1479
    %v1559 = vunpack.c.l.b16 %v1480
    %v1560 = vunpack.c.h.b16 %v1480
    %v1561 = vunpack.c.l.b16 %v1481
    %v1562 = vunpack.c.h.b16 %v1481
    %v1563 = vunpack.c.l.b16 %v1482
    %v1564 = vunpack.c.h.b16 %v1482
    %v1565 = vunpack.c.l.b16 %v1483
    %v1566 = vunpack.c.h.b16 %v1483
    %v1567 = vunpack.c.l.b16 %v1484
    %v1568 = vunpack.c.h.b16 %v1484
    %v1569 = vunpack.c.l.b16 %v1485
    %v1570 = vunpack.c.h.b16 %v1485
    %v1571 = vunpack.c.l.b16 %v1486
    %v1572 = vunpack.c.h.b16 %v1486
    %v1573 = vunpack.c.l.b16 %v1487
    %v1574 = vunpack.c.h.b16 %v1487
    %v1575 = vunpack.c.l.b16 %v1488
    %v1576 = vunpack.c.h.b16 %v1488
    %v1577 = vunpack.c.l.b16 %v1489
    %v1578 = vunpack.c.h.b16 %v1489
    %v1579 = vunpack.c.l.b16 %v1490
    %v1580 = vunpack.c.h.b16 %v1490
    %v1581 = vunpack.c.l.b16 %v1491
    %v1582 = vunpack.c.h.b16 %v1491
    %v1583 = vunpack.c.l.b16 %v1492
    %v1584 = vunpack.c.h.b16 %v1492
    %v1585 = vunpack.c.l.b16 %v1493
    %v1586 = vunpack.c.h.b16 %v1493
    %v1587 = vunpack.c.l.b16 %v1494
    %v1588 = vunpack.c.h.b16 %v1494
    %v1589 = vunpack.c.l.b16 %v1495
    %v1590 = vunpack.c.h.b16 %v1495
    %v1591 = vunpack.c.l.b16 %v1496
    %v1592 = vunpack.c.h.b16 %v1496
    %v1593 = vpack.c.b16 %v1533, %v1529
    %v1594 = vpack.c.b16 %v1534, %v1530
    %v1595 = vpack.c.b16 %v1535, %v1531
    %v1596 = vpack.c.b16 %v1536, %v1532
    %v1597 = vpack.c.b16 %v1541, %v1537
    %v1598 = vpack.c.b16 %v1542, %v1538
    %v1599 = vpack.c.b16 %v1543, %v1539
    %v1600 = vpack.c.b16 %v1544, %v1540
    %v1601 = vpack.c.b16 %v1549, %v1545
    %v1602 = vpack.c.b16 %v1550, %v1546
    %v1603 = vpack.c.b16 %v1551, %v1547
    %v1604 = vpack.c.b16 %v1552, %v1548
    %v1605 = vpack.c.b16 %v1557, %v1553
    %v1606 = vpack.c.b16 %v1558, %v1554
    %v1607 = vpack.c.b16 %v1559, %v1555
    %v1608 = vpack.c.b16 %v1560, %v1556
    %v1609 = vpack.c.b16 %v1565, %v1561
    %v1610 = vpack.c.b16 %v1566, %v1562
    %v1611 = vpack.c.b16 %v1567, %v1563
    %v1612 = vpack.c.b16 %v1568, %v1564
    %v1613 = vpack.c.b16 %v1573, %v1569
    %v1614 = vpack.c.b16 %v1574, %v1570
    %v1615 = vpack.c.b16 %v1575, %v1571
    %v1616 = vpack.c.b16 %v1576, %v1572
    %v1617 = vpack.c.b16 %v1581, %v1577
    %v1618 = vpack.c.b16 %v1582, %v1578
    %v1619 = vpack.c.b16 %v1583, %v1579
    %v1620 = vpack.c.b16 %v1584, %v1580
    %v1621 = vpack.c.b16 %v1589, %v1585
    %v1622 = vpack.c.b16 %v1590, %v1586
    %v1623 = vpack.c.b16 %v1591, %v1587
    %v1624 = vpack.c.b16 %v1592, %v1588
    %1657 = vmatpush.bf16.msra.mxu0 %v662
    %1658 = vmatpush.bf16.msra.mxu0 %v661
    %1659 = vmatpush.bf16.msra.mxu0 %v660
    %1660 = vmatpush.bf16.msra.mxu0 %v659
    %1661 = vmatpush.bf16.msra.mxu0 %v658
    %1662 = vmatpush.bf16.msra.mxu0 %v657
    %1663 = vmatpush.bf16.msra.mxu0 %v656
    %1664 = vmatpush.bf16.msra.mxu0 %v655
    %1665 = vmatmul.bf16.gmra.mxu0 %v1593
    %v1666 = vpop.f32.mrf.mxu0
    %v1667 = vadd.f32 0.0, %v1666
    %v1668 = vpop.f32.mrf.mxu0
    %v1669 = vadd.f32 0.0, %v1668
    %1670 = vmatmul.bf16.gmra.mxu0 %v1597
    %v1671 = vpop.f32.mrf.mxu0
    %v1672 = vadd.f32 0.0, %v1671
    %v1673 = vpop.f32.mrf.mxu0
    %v1674 = vadd.f32 0.0, %v1673
    %1675 = vmatmul.bf16.gmra.mxu0 %v1601
    %v1676 = vpop.f32.mrf.mxu0
    %v1677 = vadd.f32 0.0, %v1676
    %v1678 = vpop.f32.mrf.mxu0
    %v1679 = vadd.f32 0.0, %v1678
    %1680 = vmatmul.bf16.gmra.mxu0 %v1605
    %v1681 = vpop.f32.mrf.mxu0
    %v1682 = vadd.f32 0.0, %v1681
    %v1683 = vpop.f32.mrf.mxu0
    %v1684 = vadd.f32 0.0, %v1683
    %1685 = vmatmul.bf16.gmra.mxu0 %v1609
    %v1686 = vpop.f32.mrf.mxu0
    %v1687 = vadd.f32 0.0, %v1686
    %v1688 = vpop.f32.mrf.mxu0
    %v1689 = vadd.f32 0.0, %v1688
    %1690 = vmatmul.bf16.gmra.mxu0 %v1613
    %v1691 = vpop.f32.mrf.mxu0
    %v1692 = vadd.f32 0.0, %v1691
    %v1693 = vpop.f32.mrf.mxu0
    %v1694 = vadd.f32 0.0, %v1693
    %1695 = vmatmul.bf16.gmra.mxu0 %v1617
    %v1696 = vpop.f32.mrf.mxu0
    %v1697 = vadd.f32 0.0, %v1696
    %v1698 = vpop.f32.mrf.mxu0
    %v1699 = vadd.f32 0.0, %v1698
    %1700 = vmatmul.bf16.gmra.mxu0 %v1621
    %v1701 = vpop.f32.mrf.mxu0
    %v1702 = vadd.f32 0.0, %v1701
    %v1703 = vpop.f32.mrf.mxu0
    %v1704 = vadd.f32 0.0, %v1703
    %1705 = vdwg.mxu0
    %1706 = vmatpush.bf16.msra.mxu0 %v670
    %1707 = vmatpush.bf16.msra.mxu0 %v669
    %1708 = vmatpush.bf16.msra.mxu0 %v668
    %1709 = vmatpush.bf16.msra.mxu0 %v667
    %1710 = vmatpush.bf16.msra.mxu0 %v666
    %1711 = vmatpush.bf16.msra.mxu0 %v665
    %1712 = vmatpush.bf16.msra.mxu0 %v664
    %1713 = vmatpush.bf16.msra.mxu0 %v663
    %1714 = vmatmul.bf16.gmra.mxu0 %v1594
    %v1715 = vpop.f32.mrf.mxu0
    %v1716 = vadd.f32 %v1667, %v1715
    %v1717 = vpop.f32.mrf.mxu0
    %v1718 = vadd.f32 %v1669, %v1717
    %1719 = vmatmul.bf16.gmra.mxu0 %v1598
    %v1720 = vpop.f32.mrf.mxu0
    %v1721 = vadd.f32 %v1672, %v1720
    %v1722 = vpop.f32.mrf.mxu0
    %v1723 = vadd.f32 %v1674, %v1722
    %1724 = vmatmul.bf16.gmra.mxu0 %v1602
    %v1725 = vpop.f32.mrf.mxu0
    %v1726 = vadd.f32 %v1677, %v1725
    %v1727 = vpop.f32.mrf.mxu0
    %v1728 = vadd.f32 %v1679, %v1727
    %1729 = vmatmul.bf16.gmra.mxu0 %v1606
    %v1730 = vpop.f32.mrf.mxu0
    %v1731 = vadd.f32 %v1682, %v1730
    %v1732 = vpop.f32.mrf.mxu0
    %v1733 = vadd.f32 %v1684, %v1732
    %1734 = vmatmul.bf16.gmra.mxu0 %v1610
    %v1735 = vpop.f32.mrf.mxu0
    %v1736 = vadd.f32 %v1687, %v1735
    %v1737 = vpop.f32.mrf.mxu0
    %v1738 = vadd.f32 %v1689, %v1737
    %1739 = vmatmul.bf16.gmra.mxu0 %v1614
    %v1740 = vpop.f32.mrf.mxu0
    %v1741 = vadd.f32 %v1692, %v1740
    %v1742 = vpop.f32.mrf.mxu0
    %v1743 = vadd.f32 %v1694, %v1742
    %1744 = vmatmul.bf16.gmra.mxu0 %v1618
    %v1745 = vpop.f32.mrf.mxu0
    %v1746 = vadd.f32 %v1697, %v1745
    %v1747 = vpop.f32.mrf.mxu0
    %v1748 = vadd.f32 %v1699, %v1747
    %1749 = vmatmul.bf16.gmra.mxu0 %v1622
    %v1750 = vpop.f32.mrf.mxu0
    %v1751 = vadd.f32 %v1702, %v1750
    %v1752 = vpop.f32.mrf.mxu0
    %v1753 = vadd.f32 %v1704, %v1752
    %1754 = vdwg.mxu0
    %1755 = vmatpush.bf16.msra.mxu0 %v678
    %1756 = vmatpush.bf16.msra.mxu0 %v677
    %1757 = vmatpush.bf16.msra.mxu0 %v676
    %1758 = vmatpush.bf16.msra.mxu0 %v675
    %1759 = vmatpush.bf16.msra.mxu0 %v674
    %1760 = vmatpush.bf16.msra.mxu0 %v673
    %1761 = vmatpush.bf16.msra.mxu0 %v672
    %1762 = vmatpush.bf16.msra.mxu0 %v671
    %1763 = vmatmul.bf16.gmra.mxu0 %v1595
    %v1764 = vpop.f32.mrf.mxu0
    %v1765 = vadd.f32 %v1716, %v1764
    %v1766 = vpop.f32.mrf.mxu0
    %v1767 = vadd.f32 %v1718, %v1766
    %1768 = vmatmul.bf16.gmra.mxu0 %v1599
    %v1769 = vpop.f32.mrf.mxu0
    %v1770 = vadd.f32 %v1721, %v1769
    %v1771 = vpop.f32.mrf.mxu0
    %v1772 = vadd.f32 %v1723, %v1771
    %1773 = vmatmul.bf16.gmra.mxu0 %v1603
    %v1774 = vpop.f32.mrf.mxu0
    %v1775 = vadd.f32 %v1726, %v1774
    %v1776 = vpop.f32.mrf.mxu0
    %v1777 = vadd.f32 %v1728, %v1776
    %1778 = vmatmul.bf16.gmra.mxu0 %v1607
    %v1779 = vpop.f32.mrf.mxu0
    %v1780 = vadd.f32 %v1731, %v1779
    %v1781 = vpop.f32.mrf.mxu0
    %v1782 = vadd.f32 %v1733, %v1781
    %1783 = vmatmul.bf16.gmra.mxu0 %v1611
    %v1784 = vpop.f32.mrf.mxu0
    %v1785 = vadd.f32 %v1736, %v1784
    %v1786 = vpop.f32.mrf.mxu0
    %v1787 = vadd.f32 %v1738, %v1786
    %1788 = vmatmul.bf16.gmra.mxu0 %v1615
    %v1789 = vpop.f32.mrf.mxu0
    %v1790 = vadd.f32 %v1741, %v1789
    %v1791 = vpop.f32.mrf.mxu0
    %v1792 = vadd.f32 %v1743, %v1791
    %1793 = vmatmul.bf16.gmra.mxu0 %v1619
    %v1794 = vpop.f32.mrf.mxu0
    %v1795 = vadd.f32 %v1746, %v1794
    %v1796 = vpop.f32.mrf.mxu0
    %v1797 = vadd.f32 %v1748, %v1796
    %1798 = vmatmul.bf16.gmra.mxu0 %v1623
    %v1799 = vpop.f32.mrf.mxu0
    %v1800 = vadd.f32 %v1751, %v1799
    %v1801 = vpop.f32.mrf.mxu0
    %v1802 = vadd.f32 %v1753, %v1801
    %1803 = vdwg.mxu0
    %1804 = vmatpush.bf16.msra.mxu0 %v686
    %1805 = vmatpush.bf16.msra.mxu0 %v685
    %1806 = vmatpush.bf16.msra.mxu0 %v684
    %1807 = vmatpush.bf16.msra.mxu0 %v683
    %1808 = vmatpush.bf16.msra.mxu0 %v682
    %1809 = vmatpush.bf16.msra.mxu0 %v681
    %1810 = vmatpush.bf16.msra.mxu0 %v680
    %1811 = vmatpush.bf16.msra.mxu0 %v679
    %1812 = vmatmul.bf16.gmra.mxu0 %v1596
    %v1813 = vpop.f32.mrf.mxu0
    %v1814 = vadd.f32 %v1765, %v1813
    %v1815 = vpop.f32.mrf.mxu0
    %v1816 = vadd.f32 %v1767, %v1815
    %1817 = vmatmul.bf16.gmra.mxu0 %v1600
    %v1818 = vpop.f32.mrf.mxu0
    %v1819 = vadd.f32 %v1770, %v1818
    %v1820 = vpop.f32.mrf.mxu0
    %v1821 = vadd.f32 %v1772, %v1820
    %1822 = vmatmul.bf16.gmra.mxu0 %v1604
    %v1823 = vpop.f32.mrf.mxu0
    %v1824 = vadd.f32 %v1775, %v1823
    %v1825 = vpop.f32.mrf.mxu0
    %v1826 = vadd.f32 %v1777, %v1825
    %1827 = vmatmul.bf16.gmra.mxu0 %v1608
    %v1828 = vpop.f32.mrf.mxu0
    %v1829 = vadd.f32 %v1780, %v1828
    %v1830 = vpop.f32.mrf.mxu0
    %v1831 = vadd.f32 %v1782, %v1830
    %1832 = vmatmul.bf16.gmra.mxu0 %v1612
    %v1833 = vpop.f32.mrf.mxu0
    %v1834 = vadd.f32 %v1785, %v1833
    %v1835 = vpop.f32.mrf.mxu0
    %v1836 = vadd.f32 %v1787, %v1835
    %1837 = vmatmul.bf16.gmra.mxu0 %v1616
    %v1838 = vpop.f32.mrf.mxu0
    %v1839 = vadd.f32 %v1790, %v1838
    %v1840 = vpop.f32.mrf.mxu0
    %v1841 = vadd.f32 %v1792, %v1840
    %1842 = vmatmul.bf16.gmra.mxu0 %v1620
    %v1843 = vpop.f32.mrf.mxu0
    %v1844 = vadd.f32 %v1795, %v1843
    %v1845 = vpop.f32.mrf.mxu0
    %v1846 = vadd.f32 %v1797, %v1845
    %1847 = vmatmul.bf16.gmra.mxu0 %v1624
    %v1848 = vpop.f32.mrf.mxu0
    %v1849 = vadd.f32 %v1800, %v1848
    %v1850 = vpop.f32.mrf.mxu0
    %v1851 = vadd.f32 %v1802, %v1850
    %1852 = vdwg.mxu0
    %s1853 = scalar_lea.vmem [#allocation2], 768
    %v1854 = vld [vmem:[%s1853] sm:$0xff]
    %v1855 = vld [vmem:[%s1853 + $0x8] sm:$0xff]
    %v1856 = vld [vmem:[%s1853 + $0x10] sm:$0xff]
    %v1857 = vld [vmem:[%s1853 + $0x18] sm:$0xff]
    %v1858 = vld [vmem:[%s1853 + $0x20] sm:$0xff]
    %v1859 = vld [vmem:[%s1853 + $0x28] sm:$0xff]
    %v1860 = vld [vmem:[%s1853 + $0x30] sm:$0xff]
    %v1861 = vld [vmem:[%s1853 + $0x38] sm:$0xff]
    %v1862 = vld [vmem:[%s1853 + $0x40] sm:$0xff]
    %v1863 = vld [vmem:[%s1853 + $0x48] sm:$0xff]
    %v1864 = vld [vmem:[%s1853 + $0x50] sm:$0xff]
    %v1865 = vld [vmem:[%s1853 + $0x58] sm:$0xff]
    %v1866 = vld [vmem:[%s1853 + $0x60] sm:$0xff]
    %v1867 = vld [vmem:[%s1853 + $0x68] sm:$0xff]
    %v1868 = vld [vmem:[%s1853 + $0x70] sm:$0xff]
    %v1869 = vld [vmem:[%s1853 + $0x78] sm:$0xff]
    %v1870 = vld [vmem:[%s1853 + $0x80] sm:$0xff]
    %v1871 = vld [vmem:[%s1853 + $0x88] sm:$0xff]
    %v1872 = vld [vmem:[%s1853 + $0x90] sm:$0xff]
    %v1873 = vld [vmem:[%s1853 + $0x98] sm:$0xff]
    %v1874 = vld [vmem:[%s1853 + $0xa0] sm:$0xff]
    %v1875 = vld [vmem:[%s1853 + $0xa8] sm:$0xff]
    %v1876 = vld [vmem:[%s1853 + $0xb0] sm:$0xff]
    %v1877 = vld [vmem:[%s1853 + $0xb8] sm:$0xff]
    %v1878 = vld [vmem:[%s1853 + $0xc0] sm:$0xff]
    %v1879 = vld [vmem:[%s1853 + $0xc8] sm:$0xff]
    %v1880 = vld [vmem:[%s1853 + $0xd0] sm:$0xff]
    %v1881 = vld [vmem:[%s1853 + $0xd8] sm:$0xff]
    %v1882 = vld [vmem:[%s1853 + $0xe0] sm:$0xff]
    %v1883 = vld [vmem:[%s1853 + $0xe8] sm:$0xff]
    %v1884 = vld [vmem:[%s1853 + $0xf0] sm:$0xff]
    %v1885 = vld [vmem:[%s1853 + $0xf8] sm:$0xff]
    %v1918 = vunpack.c.l.b16 %v1854
    %v1919 = vunpack.c.h.b16 %v1854
    %v1920 = vunpack.c.l.b16 %v1855
    %v1921 = vunpack.c.h.b16 %v1855
    %v1922 = vunpack.c.l.b16 %v1856
    %v1923 = vunpack.c.h.b16 %v1856
    %v1924 = vunpack.c.l.b16 %v1857
    %v1925 = vunpack.c.h.b16 %v1857
    %v1926 = vunpack.c.l.b16 %v1858
    %v1927 = vunpack.c.h.b16 %v1858
    %v1928 = vunpack.c.l.b16 %v1859
    %v1929 = vunpack.c.h.b16 %v1859
    %v1930 = vunpack.c.l.b16 %v1860
    %v1931 = vunpack.c.h.b16 %v1860
    %v1932 = vunpack.c.l.b16 %v1861
    %v1933 = vunpack.c.h.b16 %v1861
    %v1934 = vunpack.c.l.b16 %v1862
    %v1935 = vunpack.c.h.b16 %v1862
    %v1936 = vunpack.c.l.b16 %v1863
    %v1937 = vunpack.c.h.b16 %v1863
    %v1938 = vunpack.c.l.b16 %v1864
    %v1939 = vunpack.c.h.b16 %v1864
    %v1940 = vunpack.c.l.b16 %v1865
    %v1941 = vunpack.c.h.b16 %v1865
    %v1942 = vunpack.c.l.b16 %v1866
    %v1943 = vunpack.c.h.b16 %v1866
    %v1944 = vunpack.c.l.b16 %v1867
    %v1945 = vunpack.c.h.b16 %v1867
    %v1946 = vunpack.c.l.b16 %v1868
    %v1947 = vunpack.c.h.b16 %v1868
    %v1948 = vunpack.c.l.b16 %v1869
    %v1949 = vunpack.c.h.b16 %v1869
    %v1950 = vunpack.c.l.b16 %v1870
    %v1951 = vunpack.c.h.b16 %v1870
    %v1952 = vunpack.c.l.b16 %v1871
    %v1953 = vunpack.c.h.b16 %v1871
    %v1954 = vunpack.c.l.b16 %v1872
    %v1955 = vunpack.c.h.b16 %v1872
    %v1956 = vunpack.c.l.b16 %v1873
    %v1957 = vunpack.c.h.b16 %v1873
    %v1958 = vunpack.c.l.b16 %v1874
    %v1959 = vunpack.c.h.b16 %v1874
    %v1960 = vunpack.c.l.b16 %v1875
    %v1961 = vunpack.c.h.b16 %v1875
    %v1962 = vunpack.c.l.b16 %v1876
    %v1963 = vunpack.c.h.b16 %v1876
    %v1964 = vunpack.c.l.b16 %v1877
    %v1965 = vunpack.c.h.b16 %v1877
    %v1966 = vunpack.c.l.b16 %v1878
    %v1967 = vunpack.c.h.b16 %v1878
    %v1968 = vunpack.c.l.b16 %v1879
    %v1969 = vunpack.c.h.b16 %v1879
    %v1970 = vunpack.c.l.b16 %v1880
    %v1971 = vunpack.c.h.b16 %v1880
    %v1972 = vunpack.c.l.b16 %v1881
    %v1973 = vunpack.c.h.b16 %v1881
    %v1974 = vunpack.c.l.b16 %v1882
    %v1975 = vunpack.c.h.b16 %v1882
    %v1976 = vunpack.c.l.b16 %v1883
    %v1977 = vunpack.c.h.b16 %v1883
    %v1978 = vunpack.c.l.b16 %v1884
    %v1979 = vunpack.c.h.b16 %v1884
    %v1980 = vunpack.c.l.b16 %v1885
    %v1981 = vunpack.c.h.b16 %v1885
    %v1982 = vpack.c.b16 %v1922, %v1918
    %v1983 = vpack.c.b16 %v1923, %v1919
    %v1984 = vpack.c.b16 %v1924, %v1920
    %v1985 = vpack.c.b16 %v1925, %v1921
    %v1986 = vpack.c.b16 %v1930, %v1926
    %v1987 = vpack.c.b16 %v1931, %v1927
    %v1988 = vpack.c.b16 %v1932, %v1928
    %v1989 = vpack.c.b16 %v1933, %v1929
    %v1990 = vpack.c.b16 %v1938, %v1934
    %v1991 = vpack.c.b16 %v1939, %v1935
    %v1992 = vpack.c.b16 %v1940, %v1936
    %v1993 = vpack.c.b16 %v1941, %v1937
    %v1994 = vpack.c.b16 %v1946, %v1942
    %v1995 = vpack.c.b16 %v1947, %v1943
    %v1996 = vpack.c.b16 %v1948, %v1944
    %v1997 = vpack.c.b16 %v1949, %v1945
    %v1998 = vpack.c.b16 %v1954, %v1950
    %v1999 = vpack.c.b16 %v1955, %v1951
    %v2000 = vpack.c.b16 %v1956, %v1952
    %v2001 = vpack.c.b16 %v1957, %v1953
    %v2002 = vpack.c.b16 %v1962, %v1958
    %v2003 = vpack.c.b16 %v1963, %v1959
    %v2004 = vpack.c.b16 %v1964, %v1960
    %v2005 = vpack.c.b16 %v1965, %v1961
    %v2006 = vpack.c.b16 %v1970, %v1966
    %v2007 = vpack.c.b16 %v1971, %v1967
    %v2008 = vpack.c.b16 %v1972, %v1968
    %v2009 = vpack.c.b16 %v1973, %v1969
    %v2010 = vpack.c.b16 %v1978, %v1974
    %v2011 = vpack.c.b16 %v1979, %v1975
    %v2012 = vpack.c.b16 %v1980, %v1976
    %v2013 = vpack.c.b16 %v1981, %v1977
    %2046 = vmatpush.bf16.msra.mxu0 %v662
    %2047 = vmatpush.bf16.msra.mxu0 %v661
    %2048 = vmatpush.bf16.msra.mxu0 %v660
    %2049 = vmatpush.bf16.msra.mxu0 %v659
    %2050 = vmatpush.bf16.msra.mxu0 %v658
    %2051 = vmatpush.bf16.msra.mxu0 %v657
    %2052 = vmatpush.bf16.msra.mxu0 %v656
    %2053 = vmatpush.bf16.msra.mxu0 %v655
    %2054 = vmatmul.bf16.gmra.mxu0 %v1982
    %v2055 = vpop.f32.mrf.mxu0
    %v2056 = vadd.f32 0.0, %v2055
    %v2057 = vpop.f32.mrf.mxu0
    %v2058 = vadd.f32 0.0, %v2057
    %2059 = vmatmul.bf16.gmra.mxu0 %v1986
    %v2060 = vpop.f32.mrf.mxu0
    %v2061 = vadd.f32 0.0, %v2060
    %v2062 = vpop.f32.mrf.mxu0
    %v2063 = vadd.f32 0.0, %v2062
    %2064 = vmatmul.bf16.gmra.mxu0 %v1990
    %v2065 = vpop.f32.mrf.mxu0
    %v2066 = vadd.f32 0.0, %v2065
    %v2067 = vpop.f32.mrf.mxu0
    %v2068 = vadd.f32 0.0, %v2067
    %2069 = vmatmul.bf16.gmra.mxu0 %v1994
    %v2070 = vpop.f32.mrf.mxu0
    %v2071 = vadd.f32 0.0, %v2070
    %v2072 = vpop.f32.mrf.mxu0
    %v2073 = vadd.f32 0.0, %v2072
    %2074 = vmatmul.bf16.gmra.mxu0 %v1998
    %v2075 = vpop.f32.mrf.mxu0
    %v2076 = vadd.f32 0.0, %v2075
    %v2077 = vpop.f32.mrf.mxu0
    %v2078 = vadd.f32 0.0, %v2077
    %2079 = vmatmul.bf16.gmra.mxu0 %v2002
    %v2080 = vpop.f32.mrf.mxu0
    %v2081 = vadd.f32 0.0, %v2080
    %v2082 = vpop.f32.mrf.mxu0
    %v2083 = vadd.f32 0.0, %v2082
    %2084 = vmatmul.bf16.gmra.mxu0 %v2006
    %v2085 = vpop.f32.mrf.mxu0
    %v2086 = vadd.f32 0.0, %v2085
    %v2087 = vpop.f32.mrf.mxu0
    %v2088 = vadd.f32 0.0, %v2087
    %2089 = vmatmul.bf16.gmra.mxu0 %v2010
    %v2090 = vpop.f32.mrf.mxu0
    %v2091 = vadd.f32 0.0, %v2090
    %v2092 = vpop.f32.mrf.mxu0
    %v2093 = vadd.f32 0.0, %v2092
    %2094 = vdwg.mxu0
    %2095 = vmatpush.bf16.msra.mxu0 %v670
    %2096 = vmatpush.bf16.msra.mxu0 %v669
    %2097 = vmatpush.bf16.msra.mxu0 %v668
    %2098 = vmatpush.bf16.msra.mxu0 %v667
    %2099 = vmatpush.bf16.msra.mxu0 %v666
    %2100 = vmatpush.bf16.msra.mxu0 %v665
    %2101 = vmatpush.bf16.msra.mxu0 %v664
    %2102 = vmatpush.bf16.msra.mxu0 %v663
    %2103 = vmatmul.bf16.gmra.mxu0 %v1983
    %v2104 = vpop.f32.mrf.mxu0
    %v2105 = vadd.f32 %v2056, %v2104
    %v2106 = vpop.f32.mrf.mxu0
    %v2107 = vadd.f32 %v2058, %v2106
    %2108 = vmatmul.bf16.gmra.mxu0 %v1987
    %v2109 = vpop.f32.mrf.mxu0
    %v2110 = vadd.f32 %v2061, %v2109
    %v2111 = vpop.f32.mrf.mxu0
    %v2112 = vadd.f32 %v2063, %v2111
    %2113 = vmatmul.bf16.gmra.mxu0 %v1991
    %v2114 = vpop.f32.mrf.mxu0
    %v2115 = vadd.f32 %v2066, %v2114
    %v2116 = vpop.f32.mrf.mxu0
    %v2117 = vadd.f32 %v2068, %v2116
    %2118 = vmatmul.bf16.gmra.mxu0 %v1995
    %v2119 = vpop.f32.mrf.mxu0
    %v2120 = vadd.f32 %v2071, %v2119
    %v2121 = vpop.f32.mrf.mxu0
    %v2122 = vadd.f32 %v2073, %v2121
    %2123 = vmatmul.bf16.gmra.mxu0 %v1999
    %v2124 = vpop.f32.mrf.mxu0
    %v2125 = vadd.f32 %v2076, %v2124
    %v2126 = vpop.f32.mrf.mxu0
    %v2127 = vadd.f32 %v2078, %v2126
    %2128 = vmatmul.bf16.gmra.mxu0 %v2003
    %v2129 = vpop.f32.mrf.mxu0
    %v2130 = vadd.f32 %v2081, %v2129
    %v2131 = vpop.f32.mrf.mxu0
    %v2132 = vadd.f32 %v2083, %v2131
    %2133 = vmatmul.bf16.gmra.mxu0 %v2007
    %v2134 = vpop.f32.mrf.mxu0
    %v2135 = vadd.f32 %v2086, %v2134
    %v2136 = vpop.f32.mrf.mxu0
    %v2137 = vadd.f32 %v2088, %v2136
    %2138 = vmatmul.bf16.gmra.mxu0 %v2011
    %v2139 = vpop.f32.mrf.mxu0
    %v2140 = vadd.f32 %v2091, %v2139
    %v2141 = vpop.f32.mrf.mxu0
    %v2142 = vadd.f32 %v2093, %v2141
    %2143 = vdwg.mxu0
    %2144 = vmatpush.bf16.msra.mxu0 %v678
    %2145 = vmatpush.bf16.msra.mxu0 %v677
    %2146 = vmatpush.bf16.msra.mxu0 %v676
    %2147 = vmatpush.bf16.msra.mxu0 %v675
    %2148 = vmatpush.bf16.msra.mxu0 %v674
    %2149 = vmatpush.bf16.msra.mxu0 %v673
    %2150 = vmatpush.bf16.msra.mxu0 %v672
    %2151 = vmatpush.bf16.msra.mxu0 %v671
    %2152 = vmatmul.bf16.gmra.mxu0 %v1984
    %v2153 = vpop.f32.mrf.mxu0
    %v2154 = vadd.f32 %v2105, %v2153
    %v2155 = vpop.f32.mrf.mxu0
    %v2156 = vadd.f32 %v2107, %v2155
    %2157 = vmatmul.bf16.gmra.mxu0 %v1988
    %v2158 = vpop.f32.mrf.mxu0
    %v2159 = vadd.f32 %v2110, %v2158
    %v2160 = vpop.f32.mrf.mxu0
    %v2161 = vadd.f32 %v2112, %v2160
    %2162 = vmatmul.bf16.gmra.mxu0 %v1992
    %v2163 = vpop.f32.mrf.mxu0
    %v2164 = vadd.f32 %v2115, %v2163
    %v2165 = vpop.f32.mrf.mxu0
    %v2166 = vadd.f32 %v2117, %v2165
    %2167 = vmatmul.bf16.gmra.mxu0 %v1996
    %v2168 = vpop.f32.mrf.mxu0
    %v2169 = vadd.f32 %v2120, %v2168
    %v2170 = vpop.f32.mrf.mxu0
    %v2171 = vadd.f32 %v2122, %v2170
    %2172 = vmatmul.bf16.gmra.mxu0 %v2000
    %v2173 = vpop.f32.mrf.mxu0
    %v2174 = vadd.f32 %v2125, %v2173
    %v2175 = vpop.f32.mrf.mxu0
    %v2176 = vadd.f32 %v2127, %v2175
    %2177 = vmatmul.bf16.gmra.mxu0 %v2004
    %v2178 = vpop.f32.mrf.mxu0
    %v2179 = vadd.f32 %v2130, %v2178
    %v2180 = vpop.f32.mrf.mxu0
    %v2181 = vadd.f32 %v2132, %v2180
    %2182 = vmatmul.bf16.gmra.mxu0 %v2008
    %v2183 = vpop.f32.mrf.mxu0
    %v2184 = vadd.f32 %v2135, %v2183
    %v2185 = vpop.f32.mrf.mxu0
    %v2186 = vadd.f32 %v2137, %v2185
    %2187 = vmatmul.bf16.gmra.mxu0 %v2012
    %v2188 = vpop.f32.mrf.mxu0
    %v2189 = vadd.f32 %v2140, %v2188
    %v2190 = vpop.f32.mrf.mxu0
    %v2191 = vadd.f32 %v2142, %v2190
    %2192 = vdwg.mxu0
    %2193 = vmatpush.bf16.msra.mxu0 %v686
    %2194 = vmatpush.bf16.msra.mxu0 %v685
    %2195 = vmatpush.bf16.msra.mxu0 %v684
    %2196 = vmatpush.bf16.msra.mxu0 %v683
    %2197 = vmatpush.bf16.msra.mxu0 %v682
    %2198 = vmatpush.bf16.msra.mxu0 %v681
    %2199 = vmatpush.bf16.msra.mxu0 %v680
    %2200 = vmatpush.bf16.msra.mxu0 %v679
    %2201 = vmatmul.bf16.gmra.mxu0 %v1985
    %v2202 = vpop.f32.mrf.mxu0
    %v2203 = vadd.f32 %v2154, %v2202
    %v2204 = vpop.f32.mrf.mxu0
    %v2205 = vadd.f32 %v2156, %v2204
    %2206 = vmatmul.bf16.gmra.mxu0 %v1989
    %v2207 = vpop.f32.mrf.mxu0
    %v2208 = vadd.f32 %v2159, %v2207
    %v2209 = vpop.f32.mrf.mxu0
    %v2210 = vadd.f32 %v2161, %v2209
    %2211 = vmatmul.bf16.gmra.mxu0 %v1993
    %v2212 = vpop.f32.mrf.mxu0
    %v2213 = vadd.f32 %v2164, %v2212
    %v2214 = vpop.f32.mrf.mxu0
    %v2215 = vadd.f32 %v2166, %v2214
    %2216 = vmatmul.bf16.gmra.mxu0 %v1997
    %v2217 = vpop.f32.mrf.mxu0
    %v2218 = vadd.f32 %v2169, %v2217
    %v2219 = vpop.f32.mrf.mxu0
    %v2220 = vadd.f32 %v2171, %v2219
    %2221 = vmatmul.bf16.gmra.mxu0 %v2001
    %v2222 = vpop.f32.mrf.mxu0
    %v2223 = vadd.f32 %v2174, %v2222
    %v2224 = vpop.f32.mrf.mxu0
    %v2225 = vadd.f32 %v2176, %v2224
    %2226 = vmatmul.bf16.gmra.mxu0 %v2005
    %v2227 = vpop.f32.mrf.mxu0
    %v2228 = vadd.f32 %v2179, %v2227
    %v2229 = vpop.f32.mrf.mxu0
    %v2230 = vadd.f32 %v2181, %v2229
    %2231 = vmatmul.bf16.gmra.mxu0 %v2009
    %v2232 = vpop.f32.mrf.mxu0
    %v2233 = vadd.f32 %v2184, %v2232
    %v2234 = vpop.f32.mrf.mxu0
    %v2235 = vadd.f32 %v2186, %v2234
    %2236 = vmatmul.bf16.gmra.mxu0 %v2013
    %v2237 = vpop.f32.mrf.mxu0
    %v2238 = vadd.f32 %v2189, %v2237
    %v2239 = vpop.f32.mrf.mxu0
    %v2240 = vadd.f32 %v2191, %v2239
    %2241 = vdwg.mxu0
    %s2242 = scalar_lea.vmem [#allocation2], 1024
    %v2243 = vld [vmem:[%s2242] sm:$0xff]
    %v2244 = vld [vmem:[%s2242 + $0x8] sm:$0xff]
    %v2245 = vld [vmem:[%s2242 + $0x10] sm:$0xff]
    %v2246 = vld [vmem:[%s2242 + $0x18] sm:$0xff]
    %v2247 = vld [vmem:[%s2242 + $0x20] sm:$0xff]
    %v2248 = vld [vmem:[%s2242 + $0x28] sm:$0xff]
    %v2249 = vld [vmem:[%s2242 + $0x30] sm:$0xff]
    %v2250 = vld [vmem:[%s2242 + $0x38] sm:$0xff]
    %v2251 = vld [vmem:[%s2242 + $0x40] sm:$0xff]
    %v2252 = vld [vmem:[%s2242 + $0x48] sm:$0xff]
    %v2253 = vld [vmem:[%s2242 + $0x50] sm:$0xff]
    %v2254 = vld [vmem:[%s2242 + $0x58] sm:$0xff]
    %v2255 = vld [vmem:[%s2242 + $0x60] sm:$0xff]
    %v2256 = vld [vmem:[%s2242 + $0x68] sm:$0xff]
    %v2257 = vld [vmem:[%s2242 + $0x70] sm:$0xff]
    %v2258 = vld [vmem:[%s2242 + $0x78] sm:$0xff]
    %v2259 = vld [vmem:[%s2242 + $0x80] sm:$0xff]
    %v2260 = vld [vmem:[%s2242 + $0x88] sm:$0xff]
    %v2261 = vld [vmem:[%s2242 + $0x90] sm:$0xff]
    %v2262 = vld [vmem:[%s2242 + $0x98] sm:$0xff]
    %v2263 = vld [vmem:[%s2242 + $0xa0] sm:$0xff]
    %v2264 = vld [vmem:[%s2242 + $0xa8] sm:$0xff]
    %v2265 = vld [vmem:[%s2242 + $0xb0] sm:$0xff]
    %v2266 = vld [vmem:[%s2242 + $0xb8] sm:$0xff]
    %v2267 = vld [vmem:[%s2242 + $0xc0] sm:$0xff]
    %v2268 = vld [vmem:[%s2242 + $0xc8] sm:$0xff]
    %v2269 = vld [vmem:[%s2242 + $0xd0] sm:$0xff]
    %v2270 = vld [vmem:[%s2242 + $0xd8] sm:$0xff]
    %v2271 = vld [vmem:[%s2242 + $0xe0] sm:$0xff]
    %v2272 = vld [vmem:[%s2242 + $0xe8] sm:$0xff]
    %v2273 = vld [vmem:[%s2242 + $0xf0] sm:$0xff]
    %v2274 = vld [vmem:[%s2242 + $0xf8] sm:$0xff]
    %v2307 = vunpack.c.l.b16 %v2243
    %v2308 = vunpack.c.h.b16 %v2243
    %v2309 = vunpack.c.l.b16 %v2244
    %v2310 = vunpack.c.h.b16 %v2244
    %v2311 = vunpack.c.l.b16 %v2245
    %v2312 = vunpack.c.h.b16 %v2245
    %v2313 = vunpack.c.l.b16 %v2246
    %v2314 = vunpack.c.h.b16 %v2246
    %v2315 = vunpack.c.l.b16 %v2247
    %v2316 = vunpack.c.h.b16 %v2247
    %v2317 = vunpack.c.l.b16 %v2248
    %v2318 = vunpack.c.h.b16 %v2248
    %v2319 = vunpack.c.l.b16 %v2249
    %v2320 = vunpack.c.h.b16 %v2249
    %v2321 = vunpack.c.l.b16 %v2250
    %v2322 = vunpack.c.h.b16 %v2250
    %v2323 = vunpack.c.l.b16 %v2251
    %v2324 = vunpack.c.h.b16 %v2251
    %v2325 = vunpack.c.l.b16 %v2252
    %v2326 = vunpack.c.h.b16 %v2252
    %v2327 = vunpack.c.l.b16 %v2253
    %v2328 = vunpack.c.h.b16 %v2253
    %v2329 = vunpack.c.l.b16 %v2254
    %v2330 = vunpack.c.h.b16 %v2254
    %v2331 = vunpack.c.l.b16 %v2255
    %v2332 = vunpack.c.h.b16 %v2255
    %v2333 = vunpack.c.l.b16 %v2256
    %v2334 = vunpack.c.h.b16 %v2256
    %v2335 = vunpack.c.l.b16 %v2257
    %v2336 = vunpack.c.h.b16 %v2257
    %v2337 = vunpack.c.l.b16 %v2258
    %v2338 = vunpack.c.h.b16 %v2258
    %v2339 = vunpack.c.l.b16 %v2259
    %v2340 = vunpack.c.h.b16 %v2259
    %v2341 = vunpack.c.l.b16 %v2260
    %v2342 = vunpack.c.h.b16 %v2260
    %v2343 = vunpack.c.l.b16 %v2261
    %v2344 = vunpack.c.h.b16 %v2261
    %v2345 = vunpack.c.l.b16 %v2262
    %v2346 = vunpack.c.h.b16 %v2262
    %v2347 = vunpack.c.l.b16 %v2263
    %v2348 = vunpack.c.h.b16 %v2263
    %v2349 = vunpack.c.l.b16 %v2264
    %v2350 = vunpack.c.h.b16 %v2264
    %v2351 = vunpack.c.l.b16 %v2265
    %v2352 = vunpack.c.h.b16 %v2265
    %v2353 = vunpack.c.l.b16 %v2266
    %v2354 = vunpack.c.h.b16 %v2266
    %v2355 = vunpack.c.l.b16 %v2267
    %v2356 = vunpack.c.h.b16 %v2267
    %v2357 = vunpack.c.l.b16 %v2268
    %v2358 = vunpack.c.h.b16 %v2268
    %v2359 = vunpack.c.l.b16 %v2269
    %v2360 = vunpack.c.h.b16 %v2269
    %v2361 = vunpack.c.l.b16 %v2270
    %v2362 = vunpack.c.h.b16 %v2270
    %v2363 = vunpack.c.l.b16 %v2271
    %v2364 = vunpack.c.h.b16 %v2271
    %v2365 = vunpack.c.l.b16 %v2272
    %v2366 = vunpack.c.h.b16 %v2272
    %v2367 = vunpack.c.l.b16 %v2273
    %v2368 = vunpack.c.h.b16 %v2273
    %v2369 = vunpack.c.l.b16 %v2274
    %v2370 = vunpack.c.h.b16 %v2274
    %v2371 = vpack.c.b16 %v2311, %v2307
    %v2372 = vpack.c.b16 %v2312, %v2308
    %v2373 = vpack.c.b16 %v2313, %v2309
    %v2374 = vpack.c.b16 %v2314, %v2310
    %v2375 = vpack.c.b16 %v2319, %v2315
    %v2376 = vpack.c.b16 %v2320, %v2316
    %v2377 = vpack.c.b16 %v2321, %v2317
    %v2378 = vpack.c.b16 %v2322, %v2318
    %v2379 = vpack.c.b16 %v2327, %v2323
    %v2380 = vpack.c.b16 %v2328, %v2324
    %v2381 = vpack.c.b16 %v2329, %v2325
    %v2382 = vpack.c.b16 %v2330, %v2326
    %v2383 = vpack.c.b16 %v2335, %v2331
    %v2384 = vpack.c.b16 %v2336, %v2332
    %v2385 = vpack.c.b16 %v2337, %v2333
    %v2386 = vpack.c.b16 %v2338, %v2334
    %v2387 = vpack.c.b16 %v2343, %v2339
    %v2388 = vpack.c.b16 %v2344, %v2340
    %v2389 = vpack.c.b16 %v2345, %v2341
    %v2390 = vpack.c.b16 %v2346, %v2342
    %v2391 = vpack.c.b16 %v2351, %v2347
    %v2392 = vpack.c.b16 %v2352, %v2348
    %v2393 = vpack.c.b16 %v2353, %v2349
    %v2394 = vpack.c.b16 %v2354, %v2350
    %v2395 = vpack.c.b16 %v2359, %v2355
    %v2396 = vpack.c.b16 %v2360, %v2356
    %v2397 = vpack.c.b16 %v2361, %v2357
    %v2398 = vpack.c.b16 %v2362, %v2358
    %v2399 = vpack.c.b16 %v2367, %v2363
    %v2400 = vpack.c.b16 %v2368, %v2364
    %v2401 = vpack.c.b16 %v2369, %v2365
    %v2402 = vpack.c.b16 %v2370, %v2366
    %2435 = vmatpush.bf16.msra.mxu0 %v662
    %2436 = vmatpush.bf16.msra.mxu0 %v661
    %2437 = vmatpush.bf16.msra.mxu0 %v660
    %2438 = vmatpush.bf16.msra.mxu0 %v659
    %2439 = vmatpush.bf16.msra.mxu0 %v658
    %2440 = vmatpush.bf16.msra.mxu0 %v657
    %2441 = vmatpush.bf16.msra.mxu0 %v656
    %2442 = vmatpush.bf16.msra.mxu0 %v655
    %2443 = vmatmul.bf16.gmra.mxu0 %v2371
    %v2444 = vpop.f32.mrf.mxu0
    %v2445 = vadd.f32 0.0, %v2444
    %v2446 = vpop.f32.mrf.mxu0
    %v2447 = vadd.f32 0.0, %v2446
    %2448 = vmatmul.bf16.gmra.mxu0 %v2375
    %v2449 = vpop.f32.mrf.mxu0
    %v2450 = vadd.f32 0.0, %v2449
    %v2451 = vpop.f32.mrf.mxu0
    %v2452 = vadd.f32 0.0, %v2451
    %2453 = vmatmul.bf16.gmra.mxu0 %v2379
    %v2454 = vpop.f32.mrf.mxu0
    %v2455 = vadd.f32 0.0, %v2454
    %v2456 = vpop.f32.mrf.mxu0
    %v2457 = vadd.f32 0.0, %v2456
    %2458 = vmatmul.bf16.gmra.mxu0 %v2383
    %v2459 = vpop.f32.mrf.mxu0
    %v2460 = vadd.f32 0.0, %v2459
    %v2461 = vpop.f32.mrf.mxu0
    %v2462 = vadd.f32 0.0, %v2461
    %2463 = vmatmul.bf16.gmra.mxu0 %v2387
    %v2464 = vpop.f32.mrf.mxu0
    %v2465 = vadd.f32 0.0, %v2464
    %v2466 = vpop.f32.mrf.mxu0
    %v2467 = vadd.f32 0.0, %v2466
    %2468 = vmatmul.bf16.gmra.mxu0 %v2391
    %v2469 = vpop.f32.mrf.mxu0
    %v2470 = vadd.f32 0.0, %v2469
    %v2471 = vpop.f32.mrf.mxu0
    %v2472 = vadd.f32 0.0, %v2471
    %2473 = vmatmul.bf16.gmra.mxu0 %v2395
    %v2474 = vpop.f32.mrf.mxu0
    %v2475 = vadd.f32 0.0, %v2474
    %v2476 = vpop.f32.mrf.mxu0
    %v2477 = vadd.f32 0.0, %v2476
    %2478 = vmatmul.bf16.gmra.mxu0 %v2399
    %v2479 = vpop.f32.mrf.mxu0
    %v2480 = vadd.f32 0.0, %v2479
    %v2481 = vpop.f32.mrf.mxu0
    %v2482 = vadd.f32 0.0, %v2481
    %2483 = vdwg.mxu0
    %2484 = vmatpush.bf16.msra.mxu0 %v670
    %2485 = vmatpush.bf16.msra.mxu0 %v669
    %2486 = vmatpush.bf16.msra.mxu0 %v668
    %2487 = vmatpush.bf16.msra.mxu0 %v667
    %2488 = vmatpush.bf16.msra.mxu0 %v666
    %2489 = vmatpush.bf16.msra.mxu0 %v665
    %2490 = vmatpush.bf16.msra.mxu0 %v664
    %2491 = vmatpush.bf16.msra.mxu0 %v663
    %2492 = vmatmul.bf16.gmra.mxu0 %v2372
    %v2493 = vpop.f32.mrf.mxu0
    %v2494 = vadd.f32 %v2445, %v2493
    %v2495 = vpop.f32.mrf.mxu0
    %v2496 = vadd.f32 %v2447, %v2495
    %2497 = vmatmul.bf16.gmra.mxu0 %v2376
    %v2498 = vpop.f32.mrf.mxu0
    %v2499 = vadd.f32 %v2450, %v2498
    %v2500 = vpop.f32.mrf.mxu0
    %v2501 = vadd.f32 %v2452, %v2500
    %2502 = vmatmul.bf16.gmra.mxu0 %v2380
    %v2503 = vpop.f32.mrf.mxu0
    %v2504 = vadd.f32 %v2455, %v2503
    %v2505 = vpop.f32.mrf.mxu0
    %v2506 = vadd.f32 %v2457, %v2505
    %2507 = vmatmul.bf16.gmra.mxu0 %v2384
    %v2508 = vpop.f32.mrf.mxu0
    %v2509 = vadd.f32 %v2460, %v2508
    %v2510 = vpop.f32.mrf.mxu0
    %v2511 = vadd.f32 %v2462, %v2510
    %2512 = vmatmul.bf16.gmra.mxu0 %v2388
    %v2513 = vpop.f32.mrf.mxu0
    %v2514 = vadd.f32 %v2465, %v2513
    %v2515 = vpop.f32.mrf.mxu0
    %v2516 = vadd.f32 %v2467, %v2515
    %2517 = vmatmul.bf16.gmra.mxu0 %v2392
    %v2518 = vpop.f32.mrf.mxu0
    %v2519 = vadd.f32 %v2470, %v2518
    %v2520 = vpop.f32.mrf.mxu0
    %v2521 = vadd.f32 %v2472, %v2520
    %2522 = vmatmul.bf16.gmra.mxu0 %v2396
    %v2523 = vpop.f32.mrf.mxu0
    %v2524 = vadd.f32 %v2475, %v2523
    %v2525 = vpop.f32.mrf.mxu0
    %v2526 = vadd.f32 %v2477, %v2525
    %2527 = vmatmul.bf16.gmra.mxu0 %v2400
    %v2528 = vpop.f32.mrf.mxu0
    %v2529 = vadd.f32 %v2480, %v2528
    %v2530 = vpop.f32.mrf.mxu0
    %v2531 = vadd.f32 %v2482, %v2530
    %2532 = vdwg.mxu0
    %2533 = vmatpush.bf16.msra.mxu0 %v678
    %2534 = vmatpush.bf16.msra.mxu0 %v677
    %2535 = vmatpush.bf16.msra.mxu0 %v676
    %2536 = vmatpush.bf16.msra.mxu0 %v675
    %2537 = vmatpush.bf16.msra.mxu0 %v674
    %2538 = vmatpush.bf16.msra.mxu0 %v673
    %2539 = vmatpush.bf16.msra.mxu0 %v672
    %2540 = vmatpush.bf16.msra.mxu0 %v671
    %2541 = vmatmul.bf16.gmra.mxu0 %v2373
    %v2542 = vpop.f32.mrf.mxu0
    %v2543 = vadd.f32 %v2494, %v2542
    %v2544 = vpop.f32.mrf.mxu0
    %v2545 = vadd.f32 %v2496, %v2544
    %2546 = vmatmul.bf16.gmra.mxu0 %v2377
    %v2547 = vpop.f32.mrf.mxu0
    %v2548 = vadd.f32 %v2499, %v2547
    %v2549 = vpop.f32.mrf.mxu0
    %v2550 = vadd.f32 %v2501, %v2549
    %2551 = vmatmul.bf16.gmra.mxu0 %v2381
    %v2552 = vpop.f32.mrf.mxu0
    %v2553 = vadd.f32 %v2504, %v2552
    %v2554 = vpop.f32.mrf.mxu0
    %v2555 = vadd.f32 %v2506, %v2554
    %2556 = vmatmul.bf16.gmra.mxu0 %v2385
    %v2557 = vpop.f32.mrf.mxu0
    %v2558 = vadd.f32 %v2509, %v2557
    %v2559 = vpop.f32.mrf.mxu0
    %v2560 = vadd.f32 %v2511, %v2559
    %2561 = vmatmul.bf16.gmra.mxu0 %v2389
    %v2562 = vpop.f32.mrf.mxu0
    %v2563 = vadd.f32 %v2514, %v2562
    %v2564 = vpop.f32.mrf.mxu0
    %v2565 = vadd.f32 %v2516, %v2564
    %2566 = vmatmul.bf16.gmra.mxu0 %v2393
    %v2567 = vpop.f32.mrf.mxu0
    %v2568 = vadd.f32 %v2519, %v2567
    %v2569 = vpop.f32.mrf.mxu0
    %v2570 = vadd.f32 %v2521, %v2569
    %2571 = vmatmul.bf16.gmra.mxu0 %v2397
    %v2572 = vpop.f32.mrf.mxu0
    %v2573 = vadd.f32 %v2524, %v2572
    %v2574 = vpop.f32.mrf.mxu0
    %v2575 = vadd.f32 %v2526, %v2574
    %2576 = vmatmul.bf16.gmra.mxu0 %v2401
    %v2577 = vpop.f32.mrf.mxu0
    %v2578 = vadd.f32 %v2529, %v2577
    %v2579 = vpop.f32.mrf.mxu0
    %v2580 = vadd.f32 %v2531, %v2579
    %2581 = vdwg.mxu0
    %2582 = vmatpush.bf16.msra.mxu0 %v686
    %2583 = vmatpush.bf16.msra.mxu0 %v685
    %2584 = vmatpush.bf16.msra.mxu0 %v684
    %2585 = vmatpush.bf16.msra.mxu0 %v683
    %2586 = vmatpush.bf16.msra.mxu0 %v682
    %2587 = vmatpush.bf16.msra.mxu0 %v681
    %2588 = vmatpush.bf16.msra.mxu0 %v680
    %2589 = vmatpush.bf16.msra.mxu0 %v679
    %2590 = vmatmul.bf16.gmra.mxu0 %v2374
    %v2591 = vpop.f32.mrf.mxu0
    %v2592 = vadd.f32 %v2543, %v2591
    %v2593 = vpop.f32.mrf.mxu0
    %v2594 = vadd.f32 %v2545, %v2593
    %2595 = vmatmul.bf16.gmra.mxu0 %v2378
    %v2596 = vpop.f32.mrf.mxu0
    %v2597 = vadd.f32 %v2548, %v2596
    %v2598 = vpop.f32.mrf.mxu0
    %v2599 = vadd.f32 %v2550, %v2598
    %2600 = vmatmul.bf16.gmra.mxu0 %v2382
    %v2601 = vpop.f32.mrf.mxu0
    %v2602 = vadd.f32 %v2553, %v2601
    %v2603 = vpop.f32.mrf.mxu0
    %v2604 = vadd.f32 %v2555, %v2603
    %2605 = vmatmul.bf16.gmra.mxu0 %v2386
    %v2606 = vpop.f32.mrf.mxu0
    %v2607 = vadd.f32 %v2558, %v2606
    %v2608 = vpop.f32.mrf.mxu0
    %v2609 = vadd.f32 %v2560, %v2608
    %2610 = vmatmul.bf16.gmra.mxu0 %v2390
    %v2611 = vpop.f32.mrf.mxu0
    %v2612 = vadd.f32 %v2563, %v2611
    %v2613 = vpop.f32.mrf.mxu0
    %v2614 = vadd.f32 %v2565, %v2613
    %2615 = vmatmul.bf16.gmra.mxu0 %v2394
    %v2616 = vpop.f32.mrf.mxu0
    %v2617 = vadd.f32 %v2568, %v2616
    %v2618 = vpop.f32.mrf.mxu0
    %v2619 = vadd.f32 %v2570, %v2618
    %2620 = vmatmul.bf16.gmra.mxu0 %v2398
    %v2621 = vpop.f32.mrf.mxu0
    %v2622 = vadd.f32 %v2573, %v2621
    %v2623 = vpop.f32.mrf.mxu0
    %v2624 = vadd.f32 %v2575, %v2623
    %2625 = vmatmul.bf16.gmra.mxu0 %v2402
    %v2626 = vpop.f32.mrf.mxu0
    %v2627 = vadd.f32 %v2578, %v2626
    %v2628 = vpop.f32.mrf.mxu0
    %v2629 = vadd.f32 %v2580, %v2628
    %2630 = vdwg.mxu0
    %s2631 = scalar_lea.vmem [#allocation2], 1280
    %v2632 = vld [vmem:[%s2631] sm:$0xff]
    %v2633 = vld [vmem:[%s2631 + $0x8] sm:$0xff]
    %v2634 = vld [vmem:[%s2631 + $0x10] sm:$0xff]
    %v2635 = vld [vmem:[%s2631 + $0x18] sm:$0xff]
    %v2636 = vld [vmem:[%s2631 + $0x20] sm:$0xff]
    %v2637 = vld [vmem:[%s2631 + $0x28] sm:$0xff]
    %v2638 = vld [vmem:[%s2631 + $0x30] sm:$0xff]
    %v2639 = vld [vmem:[%s2631 + $0x38] sm:$0xff]
    %v2640 = vld [vmem:[%s2631 + $0x40] sm:$0xff]
    %v2641 = vld [vmem:[%s2631 + $0x48] sm:$0xff]
    %v2642 = vld [vmem:[%s2631 + $0x50] sm:$0xff]
    %v2643 = vld [vmem:[%s2631 + $0x58] sm:$0xff]
    %v2644 = vld [vmem:[%s2631 + $0x60] sm:$0xff]
    %v2645 = vld [vmem:[%s2631 + $0x68] sm:$0xff]
    %v2646 = vld [vmem:[%s2631 + $0x70] sm:$0xff]
    %v2647 = vld [vmem:[%s2631 + $0x78] sm:$0xff]
    %v2648 = vld [vmem:[%s2631 + $0x80] sm:$0xff]
    %v2649 = vld [vmem:[%s2631 + $0x88] sm:$0xff]
    %v2650 = vld [vmem:[%s2631 + $0x90] sm:$0xff]
    %v2651 = vld [vmem:[%s2631 + $0x98] sm:$0xff]
    %v2652 = vld [vmem:[%s2631 + $0xa0] sm:$0xff]
    %v2653 = vld [vmem:[%s2631 + $0xa8] sm:$0xff]
    %v2654 = vld [vmem:[%s2631 + $0xb0] sm:$0xff]
    %v2655 = vld [vmem:[%s2631 + $0xb8] sm:$0xff]
    %v2656 = vld [vmem:[%s2631 + $0xc0] sm:$0xff]
    %v2657 = vld [vmem:[%s2631 + $0xc8] sm:$0xff]
    %v2658 = vld [vmem:[%s2631 + $0xd0] sm:$0xff]
    %v2659 = vld [vmem:[%s2631 + $0xd8] sm:$0xff]
    %v2660 = vld [vmem:[%s2631 + $0xe0] sm:$0xff]
    %v2661 = vld [vmem:[%s2631 + $0xe8] sm:$0xff]
    %v2662 = vld [vmem:[%s2631 + $0xf0] sm:$0xff]
    %v2663 = vld [vmem:[%s2631 + $0xf8] sm:$0xff]
    %v2696 = vunpack.c.l.b16 %v2632
    %v2697 = vunpack.c.h.b16 %v2632
    %v2698 = vunpack.c.l.b16 %v2633
    %v2699 = vunpack.c.h.b16 %v2633
    %v2700 = vunpack.c.l.b16 %v2634
    %v2701 = vunpack.c.h.b16 %v2634
    %v2702 = vunpack.c.l.b16 %v2635
    %v2703 = vunpack.c.h.b16 %v2635
    %v2704 = vunpack.c.l.b16 %v2636
    %v2705 = vunpack.c.h.b16 %v2636
    %v2706 = vunpack.c.l.b16 %v2637
    %v2707 = vunpack.c.h.b16 %v2637
    %v2708 = vunpack.c.l.b16 %v2638
    %v2709 = vunpack.c.h.b16 %v2638
    %v2710 = vunpack.c.l.b16 %v2639
    %v2711 = vunpack.c.h.b16 %v2639
    %v2712 = vunpack.c.l.b16 %v2640
    %v2713 = vunpack.c.h.b16 %v2640
    %v2714 = vunpack.c.l.b16 %v2641
    %v2715 = vunpack.c.h.b16 %v2641
    %v2716 = vunpack.c.l.b16 %v2642
    %v2717 = vunpack.c.h.b16 %v2642
    %v2718 = vunpack.c.l.b16 %v2643
    %v2719 = vunpack.c.h.b16 %v2643
    %v2720 = vunpack.c.l.b16 %v2644
    %v2721 = vunpack.c.h.b16 %v2644
    %v2722 = vunpack.c.l.b16 %v2645
    %v2723 = vunpack.c.h.b16 %v2645
    %v2724 = vunpack.c.l.b16 %v2646
    %v2725 = vunpack.c.h.b16 %v2646
    %v2726 = vunpack.c.l.b16 %v2647
    %v2727 = vunpack.c.h.b16 %v2647
    %v2728 = vunpack.c.l.b16 %v2648
    %v2729 = vunpack.c.h.b16 %v2648
    %v2730 = vunpack.c.l.b16 %v2649
    %v2731 = vunpack.c.h.b16 %v2649
    %v2732 = vunpack.c.l.b16 %v2650
    %v2733 = vunpack.c.h.b16 %v2650
    %v2734 = vunpack.c.l.b16 %v2651
    %v2735 = vunpack.c.h.b16 %v2651
    %v2736 = vunpack.c.l.b16 %v2652
    %v2737 = vunpack.c.h.b16 %v2652
    %v2738 = vunpack.c.l.b16 %v2653
    %v2739 = vunpack.c.h.b16 %v2653
    %v2740 = vunpack.c.l.b16 %v2654
    %v2741 = vunpack.c.h.b16 %v2654
    %v2742 = vunpack.c.l.b16 %v2655
    %v2743 = vunpack.c.h.b16 %v2655
    %v2744 = vunpack.c.l.b16 %v2656
    %v2745 = vunpack.c.h.b16 %v2656
    %v2746 = vunpack.c.l.b16 %v2657
    %v2747 = vunpack.c.h.b16 %v2657
    %v2748 = vunpack.c.l.b16 %v2658
    %v2749 = vunpack.c.h.b16 %v2658
    %v2750 = vunpack.c.l.b16 %v2659
    %v2751 = vunpack.c.h.b16 %v2659
    %v2752 = vunpack.c.l.b16 %v2660
    %v2753 = vunpack.c.h.b16 %v2660
    %v2754 = vunpack.c.l.b16 %v2661
    %v2755 = vunpack.c.h.b16 %v2661
    %v2756 = vunpack.c.l.b16 %v2662
    %v2757 = vunpack.c.h.b16 %v2662
    %v2758 = vunpack.c.l.b16 %v2663
    %v2759 = vunpack.c.h.b16 %v2663
    %v2760 = vpack.c.b16 %v2700, %v2696
    %v2761 = vpack.c.b16 %v2701, %v2697
    %v2762 = vpack.c.b16 %v2702, %v2698
    %v2763 = vpack.c.b16 %v2703, %v2699
    %v2764 = vpack.c.b16 %v2708, %v2704
    %v2765 = vpack.c.b16 %v2709, %v2705
    %v2766 = vpack.c.b16 %v2710, %v2706
    %v2767 = vpack.c.b16 %v2711, %v2707
    %v2768 = vpack.c.b16 %v2716, %v2712
    %v2769 = vpack.c.b16 %v2717, %v2713
    %v2770 = vpack.c.b16 %v2718, %v2714
    %v2771 = vpack.c.b16 %v2719, %v2715
    %v2772 = vpack.c.b16 %v2724, %v2720
    %v2773 = vpack.c.b16 %v2725, %v2721
    %v2774 = vpack.c.b16 %v2726, %v2722
    %v2775 = vpack.c.b16 %v2727, %v2723
    %v2776 = vpack.c.b16 %v2732, %v2728
    %v2777 = vpack.c.b16 %v2733, %v2729
    %v2778 = vpack.c.b16 %v2734, %v2730
    %v2779 = vpack.c.b16 %v2735, %v2731
    %v2780 = vpack.c.b16 %v2740, %v2736
    %v2781 = vpack.c.b16 %v2741, %v2737
    %v2782 = vpack.c.b16 %v2742, %v2738
    %v2783 = vpack.c.b16 %v2743, %v2739
    %v2784 = vpack.c.b16 %v2748, %v2744
    %v2785 = vpack.c.b16 %v2749, %v2745
    %v2786 = vpack.c.b16 %v2750, %v2746
    %v2787 = vpack.c.b16 %v2751, %v2747
    %v2788 = vpack.c.b16 %v2756, %v2752
    %v2789 = vpack.c.b16 %v2757, %v2753
    %v2790 = vpack.c.b16 %v2758, %v2754
    %v2791 = vpack.c.b16 %v2759, %v2755
    %2824 = vmatpush.bf16.msra.mxu0 %v662
    %2825 = vmatpush.bf16.msra.mxu0 %v661
    %2826 = vmatpush.bf16.msra.mxu0 %v660
    %2827 = vmatpush.bf16.msra.mxu0 %v659
    %2828 = vmatpush.bf16.msra.mxu0 %v658
    %2829 = vmatpush.bf16.msra.mxu0 %v657
    %2830 = vmatpush.bf16.msra.mxu0 %v656
    %2831 = vmatpush.bf16.msra.mxu0 %v655
    %2832 = vmatmul.bf16.gmra.mxu0 %v2760
    %v2833 = vpop.f32.mrf.mxu0
    %v2834 = vadd.f32 0.0, %v2833
    %v2835 = vpop.f32.mrf.mxu0
    %v2836 = vadd.f32 0.0, %v2835
    %2837 = vmatmul.bf16.gmra.mxu0 %v2764
    %v2838 = vpop.f32.mrf.mxu0
    %v2839 = vadd.f32 0.0, %v2838
    %v2840 = vpop.f32.mrf.mxu0
    %v2841 = vadd.f32 0.0, %v2840
    %2842 = vmatmul.bf16.gmra.mxu0 %v2768
    %v2843 = vpop.f32.mrf.mxu0
    %v2844 = vadd.f32 0.0, %v2843
    %v2845 = vpop.f32.mrf.mxu0
    %v2846 = vadd.f32 0.0, %v2845
    %2847 = vmatmul.bf16.gmra.mxu0 %v2772
    %v2848 = vpop.f32.mrf.mxu0
    %v2849 = vadd.f32 0.0, %v2848
    %v2850 = vpop.f32.mrf.mxu0
    %v2851 = vadd.f32 0.0, %v2850
    %2852 = vmatmul.bf16.gmra.mxu0 %v2776
    %v2853 = vpop.f32.mrf.mxu0
    %v2854 = vadd.f32 0.0, %v2853
    %v2855 = vpop.f32.mrf.mxu0
    %v2856 = vadd.f32 0.0, %v2855
    %2857 = vmatmul.bf16.gmra.mxu0 %v2780
    %v2858 = vpop.f32.mrf.mxu0
    %v2859 = vadd.f32 0.0, %v2858
    %v2860 = vpop.f32.mrf.mxu0
    %v2861 = vadd.f32 0.0, %v2860
    %2862 = vmatmul.bf16.gmra.mxu0 %v2784
    %v2863 = vpop.f32.mrf.mxu0
    %v2864 = vadd.f32 0.0, %v2863
    %v2865 = vpop.f32.mrf.mxu0
    %v2866 = vadd.f32 0.0, %v2865
    %2867 = vmatmul.bf16.gmra.mxu0 %v2788
    %v2868 = vpop.f32.mrf.mxu0
    %v2869 = vadd.f32 0.0, %v2868
    %v2870 = vpop.f32.mrf.mxu0
    %v2871 = vadd.f32 0.0, %v2870
    %2872 = vdwg.mxu0
    %2873 = vmatpush.bf16.msra.mxu0 %v670
    %2874 = vmatpush.bf16.msra.mxu0 %v669
    %2875 = vmatpush.bf16.msra.mxu0 %v668
    %2876 = vmatpush.bf16.msra.mxu0 %v667
    %2877 = vmatpush.bf16.msra.mxu0 %v666
    %2878 = vmatpush.bf16.msra.mxu0 %v665
    %2879 = vmatpush.bf16.msra.mxu0 %v664
    %2880 = vmatpush.bf16.msra.mxu0 %v663
    %2881 = vmatmul.bf16.gmra.mxu0 %v2761
    %v2882 = vpop.f32.mrf.mxu0
    %v2883 = vadd.f32 %v2834, %v2882
    %v2884 = vpop.f32.mrf.mxu0
    %v2885 = vadd.f32 %v2836, %v2884
    %2886 = vmatmul.bf16.gmra.mxu0 %v2765
    %v2887 = vpop.f32.mrf.mxu0
    %v2888 = vadd.f32 %v2839, %v2887
    %v2889 = vpop.f32.mrf.mxu0
    %v2890 = vadd.f32 %v2841, %v2889
    %2891 = vmatmul.bf16.gmra.mxu0 %v2769
    %v2892 = vpop.f32.mrf.mxu0
    %v2893 = vadd.f32 %v2844, %v2892
    %v2894 = vpop.f32.mrf.mxu0
    %v2895 = vadd.f32 %v2846, %v2894
    %2896 = vmatmul.bf16.gmra.mxu0 %v2773
    %v2897 = vpop.f32.mrf.mxu0
    %v2898 = vadd.f32 %v2849, %v2897
    %v2899 = vpop.f32.mrf.mxu0
    %v2900 = vadd.f32 %v2851, %v2899
    %2901 = vmatmul.bf16.gmra.mxu0 %v2777
    %v2902 = vpop.f32.mrf.mxu0
    %v2903 = vadd.f32 %v2854, %v2902
    %v2904 = vpop.f32.mrf.mxu0
    %v2905 = vadd.f32 %v2856, %v2904
    %2906 = vmatmul.bf16.gmra.mxu0 %v2781
    %v2907 = vpop.f32.mrf.mxu0
    %v2908 = vadd.f32 %v2859, %v2907
    %v2909 = vpop.f32.mrf.mxu0
    %v2910 = vadd.f32 %v2861, %v2909
    %2911 = vmatmul.bf16.gmra.mxu0 %v2785
    %v2912 = vpop.f32.mrf.mxu0
    %v2913 = vadd.f32 %v2864, %v2912
    %v2914 = vpop.f32.mrf.mxu0
    %v2915 = vadd.f32 %v2866, %v2914
    %2916 = vmatmul.bf16.gmra.mxu0 %v2789
    %v2917 = vpop.f32.mrf.mxu0
    %v2918 = vadd.f32 %v2869, %v2917
    %v2919 = vpop.f32.mrf.mxu0
    %v2920 = vadd.f32 %v2871, %v2919
    %2921 = vdwg.mxu0
    %2922 = vmatpush.bf16.msra.mxu0 %v678
    %2923 = vmatpush.bf16.msra.mxu0 %v677
    %2924 = vmatpush.bf16.msra.mxu0 %v676
    %2925 = vmatpush.bf16.msra.mxu0 %v675
    %2926 = vmatpush.bf16.msra.mxu0 %v674
    %2927 = vmatpush.bf16.msra.mxu0 %v673
    %2928 = vmatpush.bf16.msra.mxu0 %v672
    %2929 = vmatpush.bf16.msra.mxu0 %v671
    %2930 = vmatmul.bf16.gmra.mxu0 %v2762
    %v2931 = vpop.f32.mrf.mxu0
    %v2932 = vadd.f32 %v2883, %v2931
    %v2933 = vpop.f32.mrf.mxu0
    %v2934 = vadd.f32 %v2885, %v2933
    %2935 = vmatmul.bf16.gmra.mxu0 %v2766
    %v2936 = vpop.f32.mrf.mxu0
    %v2937 = vadd.f32 %v2888, %v2936
    %v2938 = vpop.f32.mrf.mxu0
    %v2939 = vadd.f32 %v2890, %v2938
    %2940 = vmatmul.bf16.gmra.mxu0 %v2770
    %v2941 = vpop.f32.mrf.mxu0
    %v2942 = vadd.f32 %v2893, %v2941
    %v2943 = vpop.f32.mrf.mxu0
    %v2944 = vadd.f32 %v2895, %v2943
    %2945 = vmatmul.bf16.gmra.mxu0 %v2774
    %v2946 = vpop.f32.mrf.mxu0
    %v2947 = vadd.f32 %v2898, %v2946
    %v2948 = vpop.f32.mrf.mxu0
    %v2949 = vadd.f32 %v2900, %v2948
    %2950 = vmatmul.bf16.gmra.mxu0 %v2778
    %v2951 = vpop.f32.mrf.mxu0
    %v2952 = vadd.f32 %v2903, %v2951
    %v2953 = vpop.f32.mrf.mxu0
    %v2954 = vadd.f32 %v2905, %v2953
    %2955 = vmatmul.bf16.gmra.mxu0 %v2782
    %v2956 = vpop.f32.mrf.mxu0
    %v2957 = vadd.f32 %v2908, %v2956
    %v2958 = vpop.f32.mrf.mxu0
    %v2959 = vadd.f32 %v2910, %v2958
    %2960 = vmatmul.bf16.gmra.mxu0 %v2786
    %v2961 = vpop.f32.mrf.mxu0
    %v2962 = vadd.f32 %v2913, %v2961
    %v2963 = vpop.f32.mrf.mxu0
    %v2964 = vadd.f32 %v2915, %v2963
    %2965 = vmatmul.bf16.gmra.mxu0 %v2790
    %v2966 = vpop.f32.mrf.mxu0
    %v2967 = vadd.f32 %v2918, %v2966
    %v2968 = vpop.f32.mrf.mxu0
    %v2969 = vadd.f32 %v2920, %v2968
    %2970 = vdwg.mxu0
    %2971 = vmatpush.bf16.msra.mxu0 %v686
    %2972 = vmatpush.bf16.msra.mxu0 %v685
    %2973 = vmatpush.bf16.msra.mxu0 %v684
    %2974 = vmatpush.bf16.msra.mxu0 %v683
    %2975 = vmatpush.bf16.msra.mxu0 %v682
    %2976 = vmatpush.bf16.msra.mxu0 %v681
    %2977 = vmatpush.bf16.msra.mxu0 %v680
    %2978 = vmatpush.bf16.msra.mxu0 %v679
    %2979 = vmatmul.bf16.gmra.mxu0 %v2763
    %v2980 = vpop.f32.mrf.mxu0
    %v2981 = vadd.f32 %v2932, %v2980
    %v2982 = vpop.f32.mrf.mxu0
    %v2983 = vadd.f32 %v2934, %v2982
    %2984 = vmatmul.bf16.gmra.mxu0 %v2767
    %v2985 = vpop.f32.mrf.mxu0
    %v2986 = vadd.f32 %v2937, %v2985
    %v2987 = vpop.f32.mrf.mxu0
    %v2988 = vadd.f32 %v2939, %v2987
    %2989 = vmatmul.bf16.gmra.mxu0 %v2771
    %v2990 = vpop.f32.mrf.mxu0
    %v2991 = vadd.f32 %v2942, %v2990
    %v2992 = vpop.f32.mrf.mxu0
    %v2993 = vadd.f32 %v2944, %v2992
    %2994 = vmatmul.bf16.gmra.mxu0 %v2775
    %v2995 = vpop.f32.mrf.mxu0
    %v2996 = vadd.f32 %v2947, %v2995
    %v2997 = vpop.f32.mrf.mxu0
    %v2998 = vadd.f32 %v2949, %v2997
    %2999 = vmatmul.bf16.gmra.mxu0 %v2779
    %v3000 = vpop.f32.mrf.mxu0
    %v3001 = vadd.f32 %v2952, %v3000
    %v3002 = vpop.f32.mrf.mxu0
    %v3003 = vadd.f32 %v2954, %v3002
    %3004 = vmatmul.bf16.gmra.mxu0 %v2783
    %v3005 = vpop.f32.mrf.mxu0
    %v3006 = vadd.f32 %v2957, %v3005
    %v3007 = vpop.f32.mrf.mxu0
    %v3008 = vadd.f32 %v2959, %v3007
    %3009 = vmatmul.bf16.gmra.mxu0 %v2787
    %v3010 = vpop.f32.mrf.mxu0
    %v3011 = vadd.f32 %v2962, %v3010
    %v3012 = vpop.f32.mrf.mxu0
    %v3013 = vadd.f32 %v2964, %v3012
    %3014 = vmatmul.bf16.gmra.mxu0 %v2791
    %v3015 = vpop.f32.mrf.mxu0
    %v3016 = vadd.f32 %v2967, %v3015
    %v3017 = vpop.f32.mrf.mxu0
    %v3018 = vadd.f32 %v2969, %v3017
    %3019 = vdwg.mxu0
    %s3020 = scalar_lea.vmem [#allocation2], 1536
    %v3021 = vld [vmem:[%s3020] sm:$0xff]
    %v3022 = vld [vmem:[%s3020 + $0x8] sm:$0xff]
    %v3023 = vld [vmem:[%s3020 + $0x10] sm:$0xff]
    %v3024 = vld [vmem:[%s3020 + $0x18] sm:$0xff]
    %v3025 = vld [vmem:[%s3020 + $0x20] sm:$0xff]
    %v3026 = vld [vmem:[%s3020 + $0x28] sm:$0xff]
    %v3027 = vld [vmem:[%s3020 + $0x30] sm:$0xff]
    %v3028 = vld [vmem:[%s3020 + $0x38] sm:$0xff]
    %v3029 = vld [vmem:[%s3020 + $0x40] sm:$0xff]
    %v3030 = vld [vmem:[%s3020 + $0x48] sm:$0xff]
    %v3031 = vld [vmem:[%s3020 + $0x50] sm:$0xff]
    %v3032 = vld [vmem:[%s3020 + $0x58] sm:$0xff]
    %v3033 = vld [vmem:[%s3020 + $0x60] sm:$0xff]
    %v3034 = vld [vmem:[%s3020 + $0x68] sm:$0xff]
    %v3035 = vld [vmem:[%s3020 + $0x70] sm:$0xff]
    %v3036 = vld [vmem:[%s3020 + $0x78] sm:$0xff]
    %v3037 = vld [vmem:[%s3020 + $0x80] sm:$0xff]
    %v3038 = vld [vmem:[%s3020 + $0x88] sm:$0xff]
    %v3039 = vld [vmem:[%s3020 + $0x90] sm:$0xff]
    %v3040 = vld [vmem:[%s3020 + $0x98] sm:$0xff]
    %v3041 = vld [vmem:[%s3020 + $0xa0] sm:$0xff]
    %v3042 = vld [vmem:[%s3020 + $0xa8] sm:$0xff]
    %v3043 = vld [vmem:[%s3020 + $0xb0] sm:$0xff]
    %v3044 = vld [vmem:[%s3020 + $0xb8] sm:$0xff]
    %v3045 = vld [vmem:[%s3020 + $0xc0] sm:$0xff]
    %v3046 = vld [vmem:[%s3020 + $0xc8] sm:$0xff]
    %v3047 = vld [vmem:[%s3020 + $0xd0] sm:$0xff]
    %v3048 = vld [vmem:[%s3020 + $0xd8] sm:$0xff]
    %v3049 = vld [vmem:[%s3020 + $0xe0] sm:$0xff]
    %v3050 = vld [vmem:[%s3020 + $0xe8] sm:$0xff]
    %v3051 = vld [vmem:[%s3020 + $0xf0] sm:$0xff]
    %v3052 = vld [vmem:[%s3020 + $0xf8] sm:$0xff]
    %v3085 = vunpack.c.l.b16 %v3021
    %v3086 = vunpack.c.h.b16 %v3021
    %v3087 = vunpack.c.l.b16 %v3022
    %v3088 = vunpack.c.h.b16 %v3022
    %v3089 = vunpack.c.l.b16 %v3023
    %v3090 = vunpack.c.h.b16 %v3023
    %v3091 = vunpack.c.l.b16 %v3024
    %v3092 = vunpack.c.h.b16 %v3024
    %v3093 = vunpack.c.l.b16 %v3025
    %v3094 = vunpack.c.h.b16 %v3025
    %v3095 = vunpack.c.l.b16 %v3026
    %v3096 = vunpack.c.h.b16 %v3026
    %v3097 = vunpack.c.l.b16 %v3027
    %v3098 = vunpack.c.h.b16 %v3027
    %v3099 = vunpack.c.l.b16 %v3028
    %v3100 = vunpack.c.h.b16 %v3028
    %v3101 = vunpack.c.l.b16 %v3029
    %v3102 = vunpack.c.h.b16 %v3029
    %v3103 = vunpack.c.l.b16 %v3030
    %v3104 = vunpack.c.h.b16 %v3030
    %v3105 = vunpack.c.l.b16 %v3031
    %v3106 = vunpack.c.h.b16 %v3031
    %v3107 = vunpack.c.l.b16 %v3032
    %v3108 = vunpack.c.h.b16 %v3032
    %v3109 = vunpack.c.l.b16 %v3033
    %v3110 = vunpack.c.h.b16 %v3033
    %v3111 = vunpack.c.l.b16 %v3034
    %v3112 = vunpack.c.h.b16 %v3034
    %v3113 = vunpack.c.l.b16 %v3035
    %v3114 = vunpack.c.h.b16 %v3035
    %v3115 = vunpack.c.l.b16 %v3036
    %v3116 = vunpack.c.h.b16 %v3036
    %v3117 = vunpack.c.l.b16 %v3037
    %v3118 = vunpack.c.h.b16 %v3037
    %v3119 = vunpack.c.l.b16 %v3038
    %v3120 = vunpack.c.h.b16 %v3038
    %v3121 = vunpack.c.l.b16 %v3039
    %v3122 = vunpack.c.h.b16 %v3039
    %v3123 = vunpack.c.l.b16 %v3040
    %v3124 = vunpack.c.h.b16 %v3040
    %v3125 = vunpack.c.l.b16 %v3041
    %v3126 = vunpack.c.h.b16 %v3041
    %v3127 = vunpack.c.l.b16 %v3042
    %v3128 = vunpack.c.h.b16 %v3042
    %v3129 = vunpack.c.l.b16 %v3043
    %v3130 = vunpack.c.h.b16 %v3043
    %v3131 = vunpack.c.l.b16 %v3044
    %v3132 = vunpack.c.h.b16 %v3044
    %v3133 = vunpack.c.l.b16 %v3045
    %v3134 = vunpack.c.h.b16 %v3045
    %v3135 = vunpack.c.l.b16 %v3046
    %v3136 = vunpack.c.h.b16 %v3046
    %v3137 = vunpack.c.l.b16 %v3047
    %v3138 = vunpack.c.h.b16 %v3047
    %v3139 = vunpack.c.l.b16 %v3048
    %v3140 = vunpack.c.h.b16 %v3048
    %v3141 = vunpack.c.l.b16 %v3049
    %v3142 = vunpack.c.h.b16 %v3049
    %v3143 = vunpack.c.l.b16 %v3050
    %v3144 = vunpack.c.h.b16 %v3050
    %v3145 = vunpack.c.l.b16 %v3051
    %v3146 = vunpack.c.h.b16 %v3051
    %v3147 = vunpack.c.l.b16 %v3052
    %v3148 = vunpack.c.h.b16 %v3052
    %v3149 = vpack.c.b16 %v3089, %v3085
    %v3150 = vpack.c.b16 %v3090, %v3086
    %v3151 = vpack.c.b16 %v3091, %v3087
    %v3152 = vpack.c.b16 %v3092, %v3088
    %v3153 = vpack.c.b16 %v3097, %v3093
    %v3154 = vpack.c.b16 %v3098, %v3094
    %v3155 = vpack.c.b16 %v3099, %v3095
    %v3156 = vpack.c.b16 %v3100, %v3096
    %v3157 = vpack.c.b16 %v3105, %v3101
    %v3158 = vpack.c.b16 %v3106, %v3102
    %v3159 = vpack.c.b16 %v3107, %v3103
    %v3160 = vpack.c.b16 %v3108, %v3104
    %v3161 = vpack.c.b16 %v3113, %v3109
    %v3162 = vpack.c.b16 %v3114, %v3110
    %v3163 = vpack.c.b16 %v3115, %v3111
    %v3164 = vpack.c.b16 %v3116, %v3112
    %v3165 = vpack.c.b16 %v3121, %v3117
    %v3166 = vpack.c.b16 %v3122, %v3118
    %v3167 = vpack.c.b16 %v3123, %v3119
    %v3168 = vpack.c.b16 %v3124, %v3120
    %v3169 = vpack.c.b16 %v3129, %v3125
    %v3170 = vpack.c.b16 %v3130, %v3126
    %v3171 = vpack.c.b16 %v3131, %v3127
    %v3172 = vpack.c.b16 %v3132, %v3128
    %v3173 = vpack.c.b16 %v3137, %v3133
    %v3174 = vpack.c.b16 %v3138, %v3134
    %v3175 = vpack.c.b16 %v3139, %v3135
    %v3176 = vpack.c.b16 %v3140, %v3136
    %v3177 = vpack.c.b16 %v3145, %v3141
    %v3178 = vpack.c.b16 %v3146, %v3142
    %v3179 = vpack.c.b16 %v3147, %v3143
    %v3180 = vpack.c.b16 %v3148, %v3144
    %3213 = vmatpush.bf16.msra.mxu0 %v662
    %3214 = vmatpush.bf16.msra.mxu0 %v661
    %3215 = vmatpush.bf16.msra.mxu0 %v660
    %3216 = vmatpush.bf16.msra.mxu0 %v659
    %3217 = vmatpush.bf16.msra.mxu0 %v658
    %3218 = vmatpush.bf16.msra.mxu0 %v657
    %3219 = vmatpush.bf16.msra.mxu0 %v656
    %3220 = vmatpush.bf16.msra.mxu0 %v655
    %3221 = vmatmul.bf16.gmra.mxu0 %v3149
    %v3222 = vpop.f32.mrf.mxu0
    %v3223 = vadd.f32 0.0, %v3222
    %v3224 = vpop.f32.mrf.mxu0
    %v3225 = vadd.f32 0.0, %v3224
    %3226 = vmatmul.bf16.gmra.mxu0 %v3153
    %v3227 = vpop.f32.mrf.mxu0
    %v3228 = vadd.f32 0.0, %v3227
    %v3229 = vpop.f32.mrf.mxu0
    %v3230 = vadd.f32 0.0, %v3229
    %3231 = vmatmul.bf16.gmra.mxu0 %v3157
    %v3232 = vpop.f32.mrf.mxu0
    %v3233 = vadd.f32 0.0, %v3232
    %v3234 = vpop.f32.mrf.mxu0
    %v3235 = vadd.f32 0.0, %v3234
    %3236 = vmatmul.bf16.gmra.mxu0 %v3161
    %v3237 = vpop.f32.mrf.mxu0
    %v3238 = vadd.f32 0.0, %v3237
    %v3239 = vpop.f32.mrf.mxu0
    %v3240 = vadd.f32 0.0, %v3239
    %3241 = vmatmul.bf16.gmra.mxu0 %v3165
    %v3242 = vpop.f32.mrf.mxu0
    %v3243 = vadd.f32 0.0, %v3242
    %v3244 = vpop.f32.mrf.mxu0
    %v3245 = vadd.f32 0.0, %v3244
    %3246 = vmatmul.bf16.gmra.mxu0 %v3169
    %v3247 = vpop.f32.mrf.mxu0
    %v3248 = vadd.f32 0.0, %v3247
    %v3249 = vpop.f32.mrf.mxu0
    %v3250 = vadd.f32 0.0, %v3249
    %3251 = vmatmul.bf16.gmra.mxu0 %v3173
    %v3252 = vpop.f32.mrf.mxu0
    %v3253 = vadd.f32 0.0, %v3252
    %v3254 = vpop.f32.mrf.mxu0
    %v3255 = vadd.f32 0.0, %v3254
    %3256 = vmatmul.bf16.gmra.mxu0 %v3177
    %v3257 = vpop.f32.mrf.mxu0
    %v3258 = vadd.f32 0.0, %v3257
    %v3259 = vpop.f32.mrf.mxu0
    %v3260 = vadd.f32 0.0, %v3259
    %3261 = vdwg.mxu0
    %3262 = vmatpush.bf16.msra.mxu0 %v670
    %3263 = vmatpush.bf16.msra.mxu0 %v669
    %3264 = vmatpush.bf16.msra.mxu0 %v668
    %3265 = vmatpush.bf16.msra.mxu0 %v667
    %3266 = vmatpush.bf16.msra.mxu0 %v666
    %3267 = vmatpush.bf16.msra.mxu0 %v665
    %3268 = vmatpush.bf16.msra.mxu0 %v664
    %3269 = vmatpush.bf16.msra.mxu0 %v663
    %3270 = vmatmul.bf16.gmra.mxu0 %v3150
    %v3271 = vpop.f32.mrf.mxu0
    %v3272 = vadd.f32 %v3223, %v3271
    %v3273 = vpop.f32.mrf.mxu0
    %v3274 = vadd.f32 %v3225, %v3273
    %3275 = vmatmul.bf16.gmra.mxu0 %v3154
    %v3276 = vpop.f32.mrf.mxu0
    %v3277 = vadd.f32 %v3228, %v3276
    %v3278 = vpop.f32.mrf.mxu0
    %v3279 = vadd.f32 %v3230, %v3278
    %3280 = vmatmul.bf16.gmra.mxu0 %v3158
    %v3281 = vpop.f32.mrf.mxu0
    %v3282 = vadd.f32 %v3233, %v3281
    %v3283 = vpop.f32.mrf.mxu0
    %v3284 = vadd.f32 %v3235, %v3283
    %3285 = vmatmul.bf16.gmra.mxu0 %v3162
    %v3286 = vpop.f32.mrf.mxu0
    %v3287 = vadd.f32 %v3238, %v3286
    %v3288 = vpop.f32.mrf.mxu0
    %v3289 = vadd.f32 %v3240, %v3288
    %3290 = vmatmul.bf16.gmra.mxu0 %v3166
    %v3291 = vpop.f32.mrf.mxu0
    %v3292 = vadd.f32 %v3243, %v3291
    %v3293 = vpop.f32.mrf.mxu0
    %v3294 = vadd.f32 %v3245, %v3293
    %3295 = vmatmul.bf16.gmra.mxu0 %v3170
    %v3296 = vpop.f32.mrf.mxu0
    %v3297 = vadd.f32 %v3248, %v3296
    %v3298 = vpop.f32.mrf.mxu0
    %v3299 = vadd.f32 %v3250, %v3298
    %3300 = vmatmul.bf16.gmra.mxu0 %v3174
    %v3301 = vpop.f32.mrf.mxu0
    %v3302 = vadd.f32 %v3253, %v3301
    %v3303 = vpop.f32.mrf.mxu0
    %v3304 = vadd.f32 %v3255, %v3303
    %3305 = vmatmul.bf16.gmra.mxu0 %v3178
    %v3306 = vpop.f32.mrf.mxu0
    %v3307 = vadd.f32 %v3258, %v3306
    %v3308 = vpop.f32.mrf.mxu0
    %v3309 = vadd.f32 %v3260, %v3308
    %3310 = vdwg.mxu0
    %3311 = vmatpush.bf16.msra.mxu0 %v678
    %3312 = vmatpush.bf16.msra.mxu0 %v677
    %3313 = vmatpush.bf16.msra.mxu0 %v676
    %3314 = vmatpush.bf16.msra.mxu0 %v675
    %3315 = vmatpush.bf16.msra.mxu0 %v674
    %3316 = vmatpush.bf16.msra.mxu0 %v673
    %3317 = vmatpush.bf16.msra.mxu0 %v672
    %3318 = vmatpush.bf16.msra.mxu0 %v671
    %3319 = vmatmul.bf16.gmra.mxu0 %v3151
    %v3320 = vpop.f32.mrf.mxu0
    %v3321 = vadd.f32 %v3272, %v3320
    %v3322 = vpop.f32.mrf.mxu0
    %v3323 = vadd.f32 %v3274, %v3322
    %3324 = vmatmul.bf16.gmra.mxu0 %v3155
    %v3325 = vpop.f32.mrf.mxu0
    %v3326 = vadd.f32 %v3277, %v3325
    %v3327 = vpop.f32.mrf.mxu0
    %v3328 = vadd.f32 %v3279, %v3327
    %3329 = vmatmul.bf16.gmra.mxu0 %v3159
    %v3330 = vpop.f32.mrf.mxu0
    %v3331 = vadd.f32 %v3282, %v3330
    %v3332 = vpop.f32.mrf.mxu0
    %v3333 = vadd.f32 %v3284, %v3332
    %3334 = vmatmul.bf16.gmra.mxu0 %v3163
    %v3335 = vpop.f32.mrf.mxu0
    %v3336 = vadd.f32 %v3287, %v3335
    %v3337 = vpop.f32.mrf.mxu0
    %v3338 = vadd.f32 %v3289, %v3337
    %3339 = vmatmul.bf16.gmra.mxu0 %v3167
    %v3340 = vpop.f32.mrf.mxu0
    %v3341 = vadd.f32 %v3292, %v3340
    %v3342 = vpop.f32.mrf.mxu0
    %v3343 = vadd.f32 %v3294, %v3342
    %3344 = vmatmul.bf16.gmra.mxu0 %v3171
    %v3345 = vpop.f32.mrf.mxu0
    %v3346 = vadd.f32 %v3297, %v3345
    %v3347 = vpop.f32.mrf.mxu0
    %v3348 = vadd.f32 %v3299, %v3347
    %3349 = vmatmul.bf16.gmra.mxu0 %v3175
    %v3350 = vpop.f32.mrf.mxu0
    %v3351 = vadd.f32 %v3302, %v3350
    %v3352 = vpop.f32.mrf.mxu0
    %v3353 = vadd.f32 %v3304, %v3352
    %3354 = vmatmul.bf16.gmra.mxu0 %v3179
    %v3355 = vpop.f32.mrf.mxu0
    %v3356 = vadd.f32 %v3307, %v3355
    %v3357 = vpop.f32.mrf.mxu0
    %v3358 = vadd.f32 %v3309, %v3357
    %3359 = vdwg.mxu0
    %3360 = vmatpush.bf16.msra.mxu0 %v686
    %3361 = vmatpush.bf16.msra.mxu0 %v685
    %3362 = vmatpush.bf16.msra.mxu0 %v684
    %3363 = vmatpush.bf16.msra.mxu0 %v683
    %3364 = vmatpush.bf16.msra.mxu0 %v682
    %3365 = vmatpush.bf16.msra.mxu0 %v681
    %3366 = vmatpush.bf16.msra.mxu0 %v680
    %3367 = vmatpush.bf16.msra.mxu0 %v679
    %3368 = vmatmul.bf16.gmra.mxu0 %v3152
    %v3369 = vpop.f32.mrf.mxu0
    %v3370 = vadd.f32 %v3321, %v3369
    %v3371 = vpop.f32.mrf.mxu0
    %v3372 = vadd.f32 %v3323, %v3371
    %3373 = vmatmul.bf16.gmra.mxu0 %v3156
    %v3374 = vpop.f32.mrf.mxu0
    %v3375 = vadd.f32 %v3326, %v3374
    %v3376 = vpop.f32.mrf.mxu0
    %v3377 = vadd.f32 %v3328, %v3376
    %3378 = vmatmul.bf16.gmra.mxu0 %v3160
    %v3379 = vpop.f32.mrf.mxu0
    %v3380 = vadd.f32 %v3331, %v3379
    %v3381 = vpop.f32.mrf.mxu0
    %v3382 = vadd.f32 %v3333, %v3381
    %3383 = vmatmul.bf16.gmra.mxu0 %v3164
    %v3384 = vpop.f32.mrf.mxu0
    %v3385 = vadd.f32 %v3336, %v3384
    %v3386 = vpop.f32.mrf.mxu0
    %v3387 = vadd.f32 %v3338, %v3386
    %3388 = vmatmul.bf16.gmra.mxu0 %v3168
    %v3389 = vpop.f32.mrf.mxu0
    %v3390 = vadd.f32 %v3341, %v3389
    %v3391 = vpop.f32.mrf.mxu0
    %v3392 = vadd.f32 %v3343, %v3391
    %3393 = vmatmul.bf16.gmra.mxu0 %v3172
    %v3394 = vpop.f32.mrf.mxu0
    %v3395 = vadd.f32 %v3346, %v3394
    %v3396 = vpop.f32.mrf.mxu0
    %v3397 = vadd.f32 %v3348, %v3396
    %3398 = vmatmul.bf16.gmra.mxu0 %v3176
    %v3399 = vpop.f32.mrf.mxu0
    %v3400 = vadd.f32 %v3351, %v3399
    %v3401 = vpop.f32.mrf.mxu0
    %v3402 = vadd.f32 %v3353, %v3401
    %3403 = vmatmul.bf16.gmra.mxu0 %v3180
    %v3404 = vpop.f32.mrf.mxu0
    %v3405 = vadd.f32 %v3356, %v3404
    %v3406 = vpop.f32.mrf.mxu0
    %v3407 = vadd.f32 %v3358, %v3406
    %3408 = vdwg.mxu0
    %s3409 = scalar_lea.vmem [#allocation2], 1792
    %v3410 = vld [vmem:[%s3409] sm:$0xff]
    %v3411 = vld [vmem:[%s3409 + $0x8] sm:$0xff]
    %v3412 = vld [vmem:[%s3409 + $0x10] sm:$0xff]
    %v3413 = vld [vmem:[%s3409 + $0x18] sm:$0xff]
    %v3414 = vld [vmem:[%s3409 + $0x20] sm:$0xff]
    %v3415 = vld [vmem:[%s3409 + $0x28] sm:$0xff]
    %v3416 = vld [vmem:[%s3409 + $0x30] sm:$0xff]
    %v3417 = vld [vmem:[%s3409 + $0x38] sm:$0xff]
    %v3418 = vld [vmem:[%s3409 + $0x40] sm:$0xff]
    %v3419 = vld [vmem:[%s3409 + $0x48] sm:$0xff]
    %v3420 = vld [vmem:[%s3409 + $0x50] sm:$0xff]
    %v3421 = vld [vmem:[%s3409 + $0x58] sm:$0xff]
    %v3422 = vld [vmem:[%s3409 + $0x60] sm:$0xff]
    %v3423 = vld [vmem:[%s3409 + $0x68] sm:$0xff]
    %v3424 = vld [vmem:[%s3409 + $0x70] sm:$0xff]
    %v3425 = vld [vmem:[%s3409 + $0x78] sm:$0xff]
    %v3426 = vld [vmem:[%s3409 + $0x80] sm:$0xff]
    %v3427 = vld [vmem:[%s3409 + $0x88] sm:$0xff]
    %v3428 = vld [vmem:[%s3409 + $0x90] sm:$0xff]
    %v3429 = vld [vmem:[%s3409 + $0x98] sm:$0xff]
    %v3430 = vld [vmem:[%s3409 + $0xa0] sm:$0xff]
    %v3431 = vld [vmem:[%s3409 + $0xa8] sm:$0xff]
    %v3432 = vld [vmem:[%s3409 + $0xb0] sm:$0xff]
    %v3433 = vld [vmem:[%s3409 + $0xb8] sm:$0xff]
    %v3434 = vld [vmem:[%s3409 + $0xc0] sm:$0xff]
    %v3435 = vld [vmem:[%s3409 + $0xc8] sm:$0xff]
    %v3436 = vld [vmem:[%s3409 + $0xd0] sm:$0xff]
    %v3437 = vld [vmem:[%s3409 + $0xd8] sm:$0xff]
    %v3438 = vld [vmem:[%s3409 + $0xe0] sm:$0xff]
    %v3439 = vld [vmem:[%s3409 + $0xe8] sm:$0xff]
    %v3440 = vld [vmem:[%s3409 + $0xf0] sm:$0xff]
    %v3441 = vld [vmem:[%s3409 + $0xf8] sm:$0xff]
    %v3474 = vunpack.c.l.b16 %v3410
    %v3475 = vunpack.c.h.b16 %v3410
    %v3476 = vunpack.c.l.b16 %v3411
    %v3477 = vunpack.c.h.b16 %v3411
    %v3478 = vunpack.c.l.b16 %v3412
    %v3479 = vunpack.c.h.b16 %v3412
    %v3480 = vunpack.c.l.b16 %v3413
    %v3481 = vunpack.c.h.b16 %v3413
    %v3482 = vunpack.c.l.b16 %v3414
    %v3483 = vunpack.c.h.b16 %v3414
    %v3484 = vunpack.c.l.b16 %v3415
    %v3485 = vunpack.c.h.b16 %v3415
    %v3486 = vunpack.c.l.b16 %v3416
    %v3487 = vunpack.c.h.b16 %v3416
    %v3488 = vunpack.c.l.b16 %v3417
    %v3489 = vunpack.c.h.b16 %v3417
    %v3490 = vunpack.c.l.b16 %v3418
    %v3491 = vunpack.c.h.b16 %v3418
    %v3492 = vunpack.c.l.b16 %v3419
    %v3493 = vunpack.c.h.b16 %v3419
    %v3494 = vunpack.c.l.b16 %v3420
    %v3495 = vunpack.c.h.b16 %v3420
    %v3496 = vunpack.c.l.b16 %v3421
    %v3497 = vunpack.c.h.b16 %v3421
    %v3498 = vunpack.c.l.b16 %v3422
    %v3499 = vunpack.c.h.b16 %v3422
    %v3500 = vunpack.c.l.b16 %v3423
    %v3501 = vunpack.c.h.b16 %v3423
    %v3502 = vunpack.c.l.b16 %v3424
    %v3503 = vunpack.c.h.b16 %v3424
    %v3504 = vunpack.c.l.b16 %v3425
    %v3505 = vunpack.c.h.b16 %v3425
    %v3506 = vunpack.c.l.b16 %v3426
    %v3507 = vunpack.c.h.b16 %v3426
    %v3508 = vunpack.c.l.b16 %v3427
    %v3509 = vunpack.c.h.b16 %v3427
    %v3510 = vunpack.c.l.b16 %v3428
    %v3511 = vunpack.c.h.b16 %v3428
    %v3512 = vunpack.c.l.b16 %v3429
    %v3513 = vunpack.c.h.b16 %v3429
    %v3514 = vunpack.c.l.b16 %v3430
    %v3515 = vunpack.c.h.b16 %v3430
    %v3516 = vunpack.c.l.b16 %v3431
    %v3517 = vunpack.c.h.b16 %v3431
    %v3518 = vunpack.c.l.b16 %v3432
    %v3519 = vunpack.c.h.b16 %v3432
    %v3520 = vunpack.c.l.b16 %v3433
    %v3521 = vunpack.c.h.b16 %v3433
    %v3522 = vunpack.c.l.b16 %v3434
    %v3523 = vunpack.c.h.b16 %v3434
    %v3524 = vunpack.c.l.b16 %v3435
    %v3525 = vunpack.c.h.b16 %v3435
    %v3526 = vunpack.c.l.b16 %v3436
    %v3527 = vunpack.c.h.b16 %v3436
    %v3528 = vunpack.c.l.b16 %v3437
    %v3529 = vunpack.c.h.b16 %v3437
    %v3530 = vunpack.c.l.b16 %v3438
    %v3531 = vunpack.c.h.b16 %v3438
    %v3532 = vunpack.c.l.b16 %v3439
    %v3533 = vunpack.c.h.b16 %v3439
    %v3534 = vunpack.c.l.b16 %v3440
    %v3535 = vunpack.c.h.b16 %v3440
    %v3536 = vunpack.c.l.b16 %v3441
    %v3537 = vunpack.c.h.b16 %v3441
    %v3538 = vpack.c.b16 %v3478, %v3474
    %v3539 = vpack.c.b16 %v3479, %v3475
    %v3540 = vpack.c.b16 %v3480, %v3476
    %v3541 = vpack.c.b16 %v3481, %v3477
    %v3542 = vpack.c.b16 %v3486, %v3482
    %v3543 = vpack.c.b16 %v3487, %v3483
    %v3544 = vpack.c.b16 %v3488, %v3484
    %v3545 = vpack.c.b16 %v3489, %v3485
    %v3546 = vpack.c.b16 %v3494, %v3490
    %v3547 = vpack.c.b16 %v3495, %v3491
    %v3548 = vpack.c.b16 %v3496, %v3492
    %v3549 = vpack.c.b16 %v3497, %v3493
    %v3550 = vpack.c.b16 %v3502, %v3498
    %v3551 = vpack.c.b16 %v3503, %v3499
    %v3552 = vpack.c.b16 %v3504, %v3500
    %v3553 = vpack.c.b16 %v3505, %v3501
    %v3554 = vpack.c.b16 %v3510, %v3506
    %v3555 = vpack.c.b16 %v3511, %v3507
    %v3556 = vpack.c.b16 %v3512, %v3508
    %v3557 = vpack.c.b16 %v3513, %v3509
    %v3558 = vpack.c.b16 %v3518, %v3514
    %v3559 = vpack.c.b16 %v3519, %v3515
    %v3560 = vpack.c.b16 %v3520, %v3516
    %v3561 = vpack.c.b16 %v3521, %v3517
    %v3562 = vpack.c.b16 %v3526, %v3522
    %v3563 = vpack.c.b16 %v3527, %v3523
    %v3564 = vpack.c.b16 %v3528, %v3524
    %v3565 = vpack.c.b16 %v3529, %v3525
    %v3566 = vpack.c.b16 %v3534, %v3530
    %v3567 = vpack.c.b16 %v3535, %v3531
    %v3568 = vpack.c.b16 %v3536, %v3532
    %v3569 = vpack.c.b16 %v3537, %v3533
    %3602 = vmatpush.bf16.msra.mxu0 %v662
    %3603 = vmatpush.bf16.msra.mxu0 %v661
    %3604 = vmatpush.bf16.msra.mxu0 %v660
    %3605 = vmatpush.bf16.msra.mxu0 %v659
    %3606 = vmatpush.bf16.msra.mxu0 %v658
    %3607 = vmatpush.bf16.msra.mxu0 %v657
    %3608 = vmatpush.bf16.msra.mxu0 %v656
    %3609 = vmatpush.bf16.msra.mxu0 %v655
    %3610 = vmatmul.bf16.gmra.mxu0 %v3538
    %v3611 = vpop.f32.mrf.mxu0
    %v3612 = vadd.f32 0.0, %v3611
    %v3613 = vpop.f32.mrf.mxu0
    %v3614 = vadd.f32 0.0, %v3613
    %3615 = vmatmul.bf16.gmra.mxu0 %v3542
    %v3616 = vpop.f32.mrf.mxu0
    %v3617 = vadd.f32 0.0, %v3616
    %v3618 = vpop.f32.mrf.mxu0
    %v3619 = vadd.f32 0.0, %v3618
    %3620 = vmatmul.bf16.gmra.mxu0 %v3546
    %v3621 = vpop.f32.mrf.mxu0
    %v3622 = vadd.f32 0.0, %v3621
    %v3623 = vpop.f32.mrf.mxu0
    %v3624 = vadd.f32 0.0, %v3623
    %3625 = vmatmul.bf16.gmra.mxu0 %v3550
    %v3626 = vpop.f32.mrf.mxu0
    %v3627 = vadd.f32 0.0, %v3626
    %v3628 = vpop.f32.mrf.mxu0
    %v3629 = vadd.f32 0.0, %v3628
    %3630 = vmatmul.bf16.gmra.mxu0 %v3554
    %v3631 = vpop.f32.mrf.mxu0
    %v3632 = vadd.f32 0.0, %v3631
    %v3633 = vpop.f32.mrf.mxu0
    %v3634 = vadd.f32 0.0, %v3633
    %3635 = vmatmul.bf16.gmra.mxu0 %v3558
    %v3636 = vpop.f32.mrf.mxu0
    %v3637 = vadd.f32 0.0, %v3636
    %v3638 = vpop.f32.mrf.mxu0
    %v3639 = vadd.f32 0.0, %v3638
    %3640 = vmatmul.bf16.gmra.mxu0 %v3562
    %v3641 = vpop.f32.mrf.mxu0
    %v3642 = vadd.f32 0.0, %v3641
    %v3643 = vpop.f32.mrf.mxu0
    %v3644 = vadd.f32 0.0, %v3643
    %3645 = vmatmul.bf16.gmra.mxu0 %v3566
    %v3646 = vpop.f32.mrf.mxu0
    %v3647 = vadd.f32 0.0, %v3646
    %v3648 = vpop.f32.mrf.mxu0
    %v3649 = vadd.f32 0.0, %v3648
    %3650 = vdwg.mxu0
    %3651 = vmatpush.bf16.msra.mxu0 %v670
    %3652 = vmatpush.bf16.msra.mxu0 %v669
    %3653 = vmatpush.bf16.msra.mxu0 %v668
    %3654 = vmatpush.bf16.msra.mxu0 %v667
    %3655 = vmatpush.bf16.msra.mxu0 %v666
    %3656 = vmatpush.bf16.msra.mxu0 %v665
    %3657 = vmatpush.bf16.msra.mxu0 %v664
    %3658 = vmatpush.bf16.msra.mxu0 %v663
    %3659 = vmatmul.bf16.gmra.mxu0 %v3539
    %v3660 = vpop.f32.mrf.mxu0
    %v3661 = vadd.f32 %v3612, %v3660
    %v3662 = vpop.f32.mrf.mxu0
    %v3663 = vadd.f32 %v3614, %v3662
    %3664 = vmatmul.bf16.gmra.mxu0 %v3543
    %v3665 = vpop.f32.mrf.mxu0
    %v3666 = vadd.f32 %v3617, %v3665
    %v3667 = vpop.f32.mrf.mxu0
    %v3668 = vadd.f32 %v3619, %v3667
    %3669 = vmatmul.bf16.gmra.mxu0 %v3547
    %v3670 = vpop.f32.mrf.mxu0
    %v3671 = vadd.f32 %v3622, %v3670
    %v3672 = vpop.f32.mrf.mxu0
    %v3673 = vadd.f32 %v3624, %v3672
    %3674 = vmatmul.bf16.gmra.mxu0 %v3551
    %v3675 = vpop.f32.mrf.mxu0
    %v3676 = vadd.f32 %v3627, %v3675
    %v3677 = vpop.f32.mrf.mxu0
    %v3678 = vadd.f32 %v3629, %v3677
    %3679 = vmatmul.bf16.gmra.mxu0 %v3555
    %v3680 = vpop.f32.mrf.mxu0
    %v3681 = vadd.f32 %v3632, %v3680
    %v3682 = vpop.f32.mrf.mxu0
    %v3683 = vadd.f32 %v3634, %v3682
    %3684 = vmatmul.bf16.gmra.mxu0 %v3559
    %v3685 = vpop.f32.mrf.mxu0
    %v3686 = vadd.f32 %v3637, %v3685
    %v3687 = vpop.f32.mrf.mxu0
    %v3688 = vadd.f32 %v3639, %v3687
    %3689 = vmatmul.bf16.gmra.mxu0 %v3563
    %v3690 = vpop.f32.mrf.mxu0
    %v3691 = vadd.f32 %v3642, %v3690
    %v3692 = vpop.f32.mrf.mxu0
    %v3693 = vadd.f32 %v3644, %v3692
    %3694 = vmatmul.bf16.gmra.mxu0 %v3567
    %v3695 = vpop.f32.mrf.mxu0
    %v3696 = vadd.f32 %v3647, %v3695
    %v3697 = vpop.f32.mrf.mxu0
    %v3698 = vadd.f32 %v3649, %v3697
    %3699 = vdwg.mxu0
    %3700 = vmatpush.bf16.msra.mxu0 %v678
    %3701 = vmatpush.bf16.msra.mxu0 %v677
    %3702 = vmatpush.bf16.msra.mxu0 %v676
    %3703 = vmatpush.bf16.msra.mxu0 %v675
    %3704 = vmatpush.bf16.msra.mxu0 %v674
    %3705 = vmatpush.bf16.msra.mxu0 %v673
    %3706 = vmatpush.bf16.msra.mxu0 %v672
    %3707 = vmatpush.bf16.msra.mxu0 %v671
    %3708 = vmatmul.bf16.gmra.mxu0 %v3540
    %v3709 = vpop.f32.mrf.mxu0
    %v3710 = vadd.f32 %v3661, %v3709
    %v3711 = vpop.f32.mrf.mxu0
    %v3712 = vadd.f32 %v3663, %v3711
    %3713 = vmatmul.bf16.gmra.mxu0 %v3544
    %v3714 = vpop.f32.mrf.mxu0
    %v3715 = vadd.f32 %v3666, %v3714
    %v3716 = vpop.f32.mrf.mxu0
    %v3717 = vadd.f32 %v3668, %v3716
    %3718 = vmatmul.bf16.gmra.mxu0 %v3548
    %v3719 = vpop.f32.mrf.mxu0
    %v3720 = vadd.f32 %v3671, %v3719
    %v3721 = vpop.f32.mrf.mxu0
    %v3722 = vadd.f32 %v3673, %v3721
    %3723 = vmatmul.bf16.gmra.mxu0 %v3552
    %v3724 = vpop.f32.mrf.mxu0
    %v3725 = vadd.f32 %v3676, %v3724
    %v3726 = vpop.f32.mrf.mxu0
    %v3727 = vadd.f32 %v3678, %v3726
    %3728 = vmatmul.bf16.gmra.mxu0 %v3556
    %v3729 = vpop.f32.mrf.mxu0
    %v3730 = vadd.f32 %v3681, %v3729
    %v3731 = vpop.f32.mrf.mxu0
    %v3732 = vadd.f32 %v3683, %v3731
    %3733 = vmatmul.bf16.gmra.mxu0 %v3560
    %v3734 = vpop.f32.mrf.mxu0
    %v3735 = vadd.f32 %v3686, %v3734
    %v3736 = vpop.f32.mrf.mxu0
    %v3737 = vadd.f32 %v3688, %v3736
    %3738 = vmatmul.bf16.gmra.mxu0 %v3564
    %v3739 = vpop.f32.mrf.mxu0
    %v3740 = vadd.f32 %v3691, %v3739
    %v3741 = vpop.f32.mrf.mxu0
    %v3742 = vadd.f32 %v3693, %v3741
    %3743 = vmatmul.bf16.gmra.mxu0 %v3568
    %v3744 = vpop.f32.mrf.mxu0
    %v3745 = vadd.f32 %v3696, %v3744
    %v3746 = vpop.f32.mrf.mxu0
    %v3747 = vadd.f32 %v3698, %v3746
    %3748 = vdwg.mxu0
    %3749 = vmatpush.bf16.msra.mxu0 %v686
    %3750 = vmatpush.bf16.msra.mxu0 %v685
    %3751 = vmatpush.bf16.msra.mxu0 %v684
    %3752 = vmatpush.bf16.msra.mxu0 %v683
    %3753 = vmatpush.bf16.msra.mxu0 %v682
    %3754 = vmatpush.bf16.msra.mxu0 %v681
    %3755 = vmatpush.bf16.msra.mxu0 %v680
    %3756 = vmatpush.bf16.msra.mxu0 %v679
    %3757 = vmatmul.bf16.gmra.mxu0 %v3541
    %v3758 = vpop.f32.mrf.mxu0
    %v3759 = vadd.f32 %v3710, %v3758
    %v3760 = vpop.f32.mrf.mxu0
    %v3761 = vadd.f32 %v3712, %v3760
    %3762 = vmatmul.bf16.gmra.mxu0 %v3545
    %v3763 = vpop.f32.mrf.mxu0
    %v3764 = vadd.f32 %v3715, %v3763
    %v3765 = vpop.f32.mrf.mxu0
    %v3766 = vadd.f32 %v3717, %v3765
    %3767 = vmatmul.bf16.gmra.mxu0 %v3549
    %v3768 = vpop.f32.mrf.mxu0
    %v3769 = vadd.f32 %v3720, %v3768
    %v3770 = vpop.f32.mrf.mxu0
    %v3771 = vadd.f32 %v3722, %v3770
    %3772 = vmatmul.bf16.gmra.mxu0 %v3553
    %v3773 = vpop.f32.mrf.mxu0
    %v3774 = vadd.f32 %v3725, %v3773
    %v3775 = vpop.f32.mrf.mxu0
    %v3776 = vadd.f32 %v3727, %v3775
    %3777 = vmatmul.bf16.gmra.mxu0 %v3557
    %v3778 = vpop.f32.mrf.mxu0
    %v3779 = vadd.f32 %v3730, %v3778
    %v3780 = vpop.f32.mrf.mxu0
    %v3781 = vadd.f32 %v3732, %v3780
    %3782 = vmatmul.bf16.gmra.mxu0 %v3561
    %v3783 = vpop.f32.mrf.mxu0
    %v3784 = vadd.f32 %v3735, %v3783
    %v3785 = vpop.f32.mrf.mxu0
    %v3786 = vadd.f32 %v3737, %v3785
    %3787 = vmatmul.bf16.gmra.mxu0 %v3565
    %v3788 = vpop.f32.mrf.mxu0
    %v3789 = vadd.f32 %v3740, %v3788
    %v3790 = vpop.f32.mrf.mxu0
    %v3791 = vadd.f32 %v3742, %v3790
    %3792 = vmatmul.bf16.gmra.mxu0 %v3569
    %v3793 = vpop.f32.mrf.mxu0
    %v3794 = vadd.f32 %v3745, %v3793
    %v3795 = vpop.f32.mrf.mxu0
    %v3796 = vadd.f32 %v3747, %v3795
    %3797 = vdwg.mxu0
    %s3798 = scalar_lea.vmem [#allocation2], 2048
    %v3799 = vld [vmem:[%s3798] sm:$0xff]
    %v3800 = vld [vmem:[%s3798 + $0x8] sm:$0xff]
    %v3801 = vld [vmem:[%s3798 + $0x10] sm:$0xff]
    %v3802 = vld [vmem:[%s3798 + $0x18] sm:$0xff]
    %v3803 = vld [vmem:[%s3798 + $0x20] sm:$0xff]
    %v3804 = vld [vmem:[%s3798 + $0x28] sm:$0xff]
    %v3805 = vld [vmem:[%s3798 + $0x30] sm:$0xff]
    %v3806 = vld [vmem:[%s3798 + $0x38] sm:$0xff]
    %v3807 = vld [vmem:[%s3798 + $0x40] sm:$0xff]
    %v3808 = vld [vmem:[%s3798 + $0x48] sm:$0xff]
    %v3809 = vld [vmem:[%s3798 + $0x50] sm:$0xff]
    %v3810 = vld [vmem:[%s3798 + $0x58] sm:$0xff]
    %v3811 = vld [vmem:[%s3798 + $0x60] sm:$0xff]
    %v3812 = vld [vmem:[%s3798 + $0x68] sm:$0xff]
    %v3813 = vld [vmem:[%s3798 + $0x70] sm:$0xff]
    %v3814 = vld [vmem:[%s3798 + $0x78] sm:$0xff]
    %v3815 = vld [vmem:[%s3798 + $0x80] sm:$0xff]
    %v3816 = vld [vmem:[%s3798 + $0x88] sm:$0xff]
    %v3817 = vld [vmem:[%s3798 + $0x90] sm:$0xff]
    %v3818 = vld [vmem:[%s3798 + $0x98] sm:$0xff]
    %v3819 = vld [vmem:[%s3798 + $0xa0] sm:$0xff]
    %v3820 = vld [vmem:[%s3798 + $0xa8] sm:$0xff]
    %v3821 = vld [vmem:[%s3798 + $0xb0] sm:$0xff]
    %v3822 = vld [vmem:[%s3798 + $0xb8] sm:$0xff]
    %v3823 = vld [vmem:[%s3798 + $0xc0] sm:$0xff]
    %v3824 = vld [vmem:[%s3798 + $0xc8] sm:$0xff]
    %v3825 = vld [vmem:[%s3798 + $0xd0] sm:$0xff]
    %v3826 = vld [vmem:[%s3798 + $0xd8] sm:$0xff]
    %v3827 = vld [vmem:[%s3798 + $0xe0] sm:$0xff]
    %v3828 = vld [vmem:[%s3798 + $0xe8] sm:$0xff]
    %v3829 = vld [vmem:[%s3798 + $0xf0] sm:$0xff]
    %v3830 = vld [vmem:[%s3798 + $0xf8] sm:$0xff]
    %v3863 = vunpack.c.l.b16 %v3799
    %v3864 = vunpack.c.h.b16 %v3799
    %v3865 = vunpack.c.l.b16 %v3800
    %v3866 = vunpack.c.h.b16 %v3800
    %v3867 = vunpack.c.l.b16 %v3801
    %v3868 = vunpack.c.h.b16 %v3801
    %v3869 = vunpack.c.l.b16 %v3802
    %v3870 = vunpack.c.h.b16 %v3802
    %v3871 = vunpack.c.l.b16 %v3803
    %v3872 = vunpack.c.h.b16 %v3803
    %v3873 = vunpack.c.l.b16 %v3804
    %v3874 = vunpack.c.h.b16 %v3804
    %v3875 = vunpack.c.l.b16 %v3805
    %v3876 = vunpack.c.h.b16 %v3805
    %v3877 = vunpack.c.l.b16 %v3806
    %v3878 = vunpack.c.h.b16 %v3806
    %v3879 = vunpack.c.l.b16 %v3807
    %v3880 = vunpack.c.h.b16 %v3807
    %v3881 = vunpack.c.l.b16 %v3808
    %v3882 = vunpack.c.h.b16 %v3808
    %v3883 = vunpack.c.l.b16 %v3809
    %v3884 = vunpack.c.h.b16 %v3809
    %v3885 = vunpack.c.l.b16 %v3810
    %v3886 = vunpack.c.h.b16 %v3810
    %v3887 = vunpack.c.l.b16 %v3811
    %v3888 = vunpack.c.h.b16 %v3811
    %v3889 = vunpack.c.l.b16 %v3812
    %v3890 = vunpack.c.h.b16 %v3812
    %v3891 = vunpack.c.l.b16 %v3813
    %v3892 = vunpack.c.h.b16 %v3813
    %v3893 = vunpack.c.l.b16 %v3814
    %v3894 = vunpack.c.h.b16 %v3814
    %v3895 = vunpack.c.l.b16 %v3815
    %v3896 = vunpack.c.h.b16 %v3815
    %v3897 = vunpack.c.l.b16 %v3816
    %v3898 = vunpack.c.h.b16 %v3816
    %v3899 = vunpack.c.l.b16 %v3817
    %v3900 = vunpack.c.h.b16 %v3817
    %v3901 = vunpack.c.l.b16 %v3818
    %v3902 = vunpack.c.h.b16 %v3818
    %v3903 = vunpack.c.l.b16 %v3819
    %v3904 = vunpack.c.h.b16 %v3819
    %v3905 = vunpack.c.l.b16 %v3820
    %v3906 = vunpack.c.h.b16 %v3820
    %v3907 = vunpack.c.l.b16 %v3821
    %v3908 = vunpack.c.h.b16 %v3821
    %v3909 = vunpack.c.l.b16 %v3822
    %v3910 = vunpack.c.h.b16 %v3822
    %v3911 = vunpack.c.l.b16 %v3823
    %v3912 = vunpack.c.h.b16 %v3823
    %v3913 = vunpack.c.l.b16 %v3824
    %v3914 = vunpack.c.h.b16 %v3824
    %v3915 = vunpack.c.l.b16 %v3825
    %v3916 = vunpack.c.h.b16 %v3825
    %v3917 = vunpack.c.l.b16 %v3826
    %v3918 = vunpack.c.h.b16 %v3826
    %v3919 = vunpack.c.l.b16 %v3827
    %v3920 = vunpack.c.h.b16 %v3827
    %v3921 = vunpack.c.l.b16 %v3828
    %v3922 = vunpack.c.h.b16 %v3828
    %v3923 = vunpack.c.l.b16 %v3829
    %v3924 = vunpack.c.h.b16 %v3829
    %v3925 = vunpack.c.l.b16 %v3830
    %v3926 = vunpack.c.h.b16 %v3830
    %v3927 = vpack.c.b16 %v3867, %v3863
    %v3928 = vpack.c.b16 %v3868, %v3864
    %v3929 = vpack.c.b16 %v3869, %v3865
    %v3930 = vpack.c.b16 %v3870, %v3866
    %v3931 = vpack.c.b16 %v3875, %v3871
    %v3932 = vpack.c.b16 %v3876, %v3872
    %v3933 = vpack.c.b16 %v3877, %v3873
    %v3934 = vpack.c.b16 %v3878, %v3874
    %v3935 = vpack.c.b16 %v3883, %v3879
    %v3936 = vpack.c.b16 %v3884, %v3880
    %v3937 = vpack.c.b16 %v3885, %v3881
    %v3938 = vpack.c.b16 %v3886, %v3882
    %v3939 = vpack.c.b16 %v3891, %v3887
    %v3940 = vpack.c.b16 %v3892, %v3888
    %v3941 = vpack.c.b16 %v3893, %v3889
    %v3942 = vpack.c.b16 %v3894, %v3890
    %v3943 = vpack.c.b16 %v3899, %v3895
    %v3944 = vpack.c.b16 %v3900, %v3896
    %v3945 = vpack.c.b16 %v3901, %v3897
    %v3946 = vpack.c.b16 %v3902, %v3898
    %v3947 = vpack.c.b16 %v3907, %v3903
    %v3948 = vpack.c.b16 %v3908, %v3904
    %v3949 = vpack.c.b16 %v3909, %v3905
    %v3950 = vpack.c.b16 %v3910, %v3906
    %v3951 = vpack.c.b16 %v3915, %v3911
    %v3952 = vpack.c.b16 %v3916, %v3912
    %v3953 = vpack.c.b16 %v3917, %v3913
    %v3954 = vpack.c.b16 %v3918, %v3914
    %v3955 = vpack.c.b16 %v3923, %v3919
    %v3956 = vpack.c.b16 %v3924, %v3920
    %v3957 = vpack.c.b16 %v3925, %v3921
    %v3958 = vpack.c.b16 %v3926, %v3922
    %3991 = vmatpush.bf16.msra.mxu0 %v662
    %3992 = vmatpush.bf16.msra.mxu0 %v661
    %3993 = vmatpush.bf16.msra.mxu0 %v660
    %3994 = vmatpush.bf16.msra.mxu0 %v659
    %3995 = vmatpush.bf16.msra.mxu0 %v658
    %3996 = vmatpush.bf16.msra.mxu0 %v657
    %3997 = vmatpush.bf16.msra.mxu0 %v656
    %3998 = vmatpush.bf16.msra.mxu0 %v655
    %3999 = vmatmul.bf16.gmra.mxu0 %v3927
    %v4000 = vpop.f32.mrf.mxu0
    %v4001 = vadd.f32 0.0, %v4000
    %v4002 = vpop.f32.mrf.mxu0
    %v4003 = vadd.f32 0.0, %v4002
    %4004 = vmatmul.bf16.gmra.mxu0 %v3931
    %v4005 = vpop.f32.mrf.mxu0
    %v4006 = vadd.f32 0.0, %v4005
    %v4007 = vpop.f32.mrf.mxu0
    %v4008 = vadd.f32 0.0, %v4007
    %4009 = vmatmul.bf16.gmra.mxu0 %v3935
    %v4010 = vpop.f32.mrf.mxu0
    %v4011 = vadd.f32 0.0, %v4010
    %v4012 = vpop.f32.mrf.mxu0
    %v4013 = vadd.f32 0.0, %v4012
    %4014 = vmatmul.bf16.gmra.mxu0 %v3939
    %v4015 = vpop.f32.mrf.mxu0
    %v4016 = vadd.f32 0.0, %v4015
    %v4017 = vpop.f32.mrf.mxu0
    %v4018 = vadd.f32 0.0, %v4017
    %4019 = vmatmul.bf16.gmra.mxu0 %v3943
    %v4020 = vpop.f32.mrf.mxu0
    %v4021 = vadd.f32 0.0, %v4020
    %v4022 = vpop.f32.mrf.mxu0
    %v4023 = vadd.f32 0.0, %v4022
    %4024 = vmatmul.bf16.gmra.mxu0 %v3947
    %v4025 = vpop.f32.mrf.mxu0
    %v4026 = vadd.f32 0.0, %v4025
    %v4027 = vpop.f32.mrf.mxu0
    %v4028 = vadd.f32 0.0, %v4027
    %4029 = vmatmul.bf16.gmra.mxu0 %v3951
    %v4030 = vpop.f32.mrf.mxu0
    %v4031 = vadd.f32 0.0, %v4030
    %v4032 = vpop.f32.mrf.mxu0
    %v4033 = vadd.f32 0.0, %v4032
    %4034 = vmatmul.bf16.gmra.mxu0 %v3955
    %v4035 = vpop.f32.mrf.mxu0
    %v4036 = vadd.f32 0.0, %v4035
    %v4037 = vpop.f32.mrf.mxu0
    %v4038 = vadd.f32 0.0, %v4037
    %4039 = vdwg.mxu0
    %4040 = vmatpush.bf16.msra.mxu0 %v670
    %4041 = vmatpush.bf16.msra.mxu0 %v669
    %4042 = vmatpush.bf16.msra.mxu0 %v668
    %4043 = vmatpush.bf16.msra.mxu0 %v667
    %4044 = vmatpush.bf16.msra.mxu0 %v666
    %4045 = vmatpush.bf16.msra.mxu0 %v665
    %4046 = vmatpush.bf16.msra.mxu0 %v664
    %4047 = vmatpush.bf16.msra.mxu0 %v663
    %4048 = vmatmul.bf16.gmra.mxu0 %v3928
    %v4049 = vpop.f32.mrf.mxu0
    %v4050 = vadd.f32 %v4001, %v4049
    %v4051 = vpop.f32.mrf.mxu0
    %v4052 = vadd.f32 %v4003, %v4051
    %4053 = vmatmul.bf16.gmra.mxu0 %v3932
    %v4054 = vpop.f32.mrf.mxu0
    %v4055 = vadd.f32 %v4006, %v4054
    %v4056 = vpop.f32.mrf.mxu0
    %v4057 = vadd.f32 %v4008, %v4056
    %4058 = vmatmul.bf16.gmra.mxu0 %v3936
    %v4059 = vpop.f32.mrf.mxu0
    %v4060 = vadd.f32 %v4011, %v4059
    %v4061 = vpop.f32.mrf.mxu0
    %v4062 = vadd.f32 %v4013, %v4061
    %4063 = vmatmul.bf16.gmra.mxu0 %v3940
    %v4064 = vpop.f32.mrf.mxu0
    %v4065 = vadd.f32 %v4016, %v4064
    %v4066 = vpop.f32.mrf.mxu0
    %v4067 = vadd.f32 %v4018, %v4066
    %4068 = vmatmul.bf16.gmra.mxu0 %v3944
    %v4069 = vpop.f32.mrf.mxu0
    %v4070 = vadd.f32 %v4021, %v4069
    %v4071 = vpop.f32.mrf.mxu0
    %v4072 = vadd.f32 %v4023, %v4071
    %4073 = vmatmul.bf16.gmra.mxu0 %v3948
    %v4074 = vpop.f32.mrf.mxu0
    %v4075 = vadd.f32 %v4026, %v4074
    %v4076 = vpop.f32.mrf.mxu0
    %v4077 = vadd.f32 %v4028, %v4076
    %4078 = vmatmul.bf16.gmra.mxu0 %v3952
    %v4079 = vpop.f32.mrf.mxu0
    %v4080 = vadd.f32 %v4031, %v4079
    %v4081 = vpop.f32.mrf.mxu0
    %v4082 = vadd.f32 %v4033, %v4081
    %4083 = vmatmul.bf16.gmra.mxu0 %v3956
    %v4084 = vpop.f32.mrf.mxu0
    %v4085 = vadd.f32 %v4036, %v4084
    %v4086 = vpop.f32.mrf.mxu0
    %v4087 = vadd.f32 %v4038, %v4086
    %4088 = vdwg.mxu0
    %4089 = vmatpush.bf16.msra.mxu0 %v678
    %4090 = vmatpush.bf16.msra.mxu0 %v677
    %4091 = vmatpush.bf16.msra.mxu0 %v676
    %4092 = vmatpush.bf16.msra.mxu0 %v675
    %4093 = vmatpush.bf16.msra.mxu0 %v674
    %4094 = vmatpush.bf16.msra.mxu0 %v673
    %4095 = vmatpush.bf16.msra.mxu0 %v672
    %4096 = vmatpush.bf16.msra.mxu0 %v671
    %4097 = vmatmul.bf16.gmra.mxu0 %v3929
    %v4098 = vpop.f32.mrf.mxu0
    %v4099 = vadd.f32 %v4050, %v4098
    %v4100 = vpop.f32.mrf.mxu0
    %v4101 = vadd.f32 %v4052, %v4100
    %4102 = vmatmul.bf16.gmra.mxu0 %v3933
    %v4103 = vpop.f32.mrf.mxu0
    %v4104 = vadd.f32 %v4055, %v4103
    %v4105 = vpop.f32.mrf.mxu0
    %v4106 = vadd.f32 %v4057, %v4105
    %4107 = vmatmul.bf16.gmra.mxu0 %v3937
    %v4108 = vpop.f32.mrf.mxu0
    %v4109 = vadd.f32 %v4060, %v4108
    %v4110 = vpop.f32.mrf.mxu0
    %v4111 = vadd.f32 %v4062, %v4110
    %4112 = vmatmul.bf16.gmra.mxu0 %v3941
    %v4113 = vpop.f32.mrf.mxu0
    %v4114 = vadd.f32 %v4065, %v4113
    %v4115 = vpop.f32.mrf.mxu0
    %v4116 = vadd.f32 %v4067, %v4115
    %4117 = vmatmul.bf16.gmra.mxu0 %v3945
    %v4118 = vpop.f32.mrf.mxu0
    %v4119 = vadd.f32 %v4070, %v4118
    %v4120 = vpop.f32.mrf.mxu0
    %v4121 = vadd.f32 %v4072, %v4120
    %4122 = vmatmul.bf16.gmra.mxu0 %v3949
    %v4123 = vpop.f32.mrf.mxu0
    %v4124 = vadd.f32 %v4075, %v4123
    %v4125 = vpop.f32.mrf.mxu0
    %v4126 = vadd.f32 %v4077, %v4125
    %4127 = vmatmul.bf16.gmra.mxu0 %v3953
    %v4128 = vpop.f32.mrf.mxu0
    %v4129 = vadd.f32 %v4080, %v4128
    %v4130 = vpop.f32.mrf.mxu0
    %v4131 = vadd.f32 %v4082, %v4130
    %4132 = vmatmul.bf16.gmra.mxu0 %v3957
    %v4133 = vpop.f32.mrf.mxu0
    %v4134 = vadd.f32 %v4085, %v4133
    %v4135 = vpop.f32.mrf.mxu0
    %v4136 = vadd.f32 %v4087, %v4135
    %4137 = vdwg.mxu0
    %4138 = vmatpush.bf16.msra.mxu0 %v686
    %4139 = vmatpush.bf16.msra.mxu0 %v685
    %4140 = vmatpush.bf16.msra.mxu0 %v684
    %4141 = vmatpush.bf16.msra.mxu0 %v683
    %4142 = vmatpush.bf16.msra.mxu0 %v682
    %4143 = vmatpush.bf16.msra.mxu0 %v681
    %4144 = vmatpush.bf16.msra.mxu0 %v680
    %4145 = vmatpush.bf16.msra.mxu0 %v679
    %4146 = vmatmul.bf16.gmra.mxu0 %v3930
    %v4147 = vpop.f32.mrf.mxu0
    %v4148 = vadd.f32 %v4099, %v4147
    %v4149 = vpop.f32.mrf.mxu0
    %v4150 = vadd.f32 %v4101, %v4149
    %4151 = vmatmul.bf16.gmra.mxu0 %v3934
    %v4152 = vpop.f32.mrf.mxu0
    %v4153 = vadd.f32 %v4104, %v4152
    %v4154 = vpop.f32.mrf.mxu0
    %v4155 = vadd.f32 %v4106, %v4154
    %4156 = vmatmul.bf16.gmra.mxu0 %v3938
    %v4157 = vpop.f32.mrf.mxu0
    %v4158 = vadd.f32 %v4109, %v4157
    %v4159 = vpop.f32.mrf.mxu0
    %v4160 = vadd.f32 %v4111, %v4159
    %4161 = vmatmul.bf16.gmra.mxu0 %v3942
    %v4162 = vpop.f32.mrf.mxu0
    %v4163 = vadd.f32 %v4114, %v4162
    %v4164 = vpop.f32.mrf.mxu0
    %v4165 = vadd.f32 %v4116, %v4164
    %4166 = vmatmul.bf16.gmra.mxu0 %v3946
    %v4167 = vpop.f32.mrf.mxu0
    %v4168 = vadd.f32 %v4119, %v4167
    %v4169 = vpop.f32.mrf.mxu0
    %v4170 = vadd.f32 %v4121, %v4169
    %4171 = vmatmul.bf16.gmra.mxu0 %v3950
    %v4172 = vpop.f32.mrf.mxu0
    %v4173 = vadd.f32 %v4124, %v4172
    %v4174 = vpop.f32.mrf.mxu0
    %v4175 = vadd.f32 %v4126, %v4174
    %4176 = vmatmul.bf16.gmra.mxu0 %v3954
    %v4177 = vpop.f32.mrf.mxu0
    %v4178 = vadd.f32 %v4129, %v4177
    %v4179 = vpop.f32.mrf.mxu0
    %v4180 = vadd.f32 %v4131, %v4179
    %4181 = vmatmul.bf16.gmra.mxu0 %v3958
    %v4182 = vpop.f32.mrf.mxu0
    %v4183 = vadd.f32 %v4134, %v4182
    %v4184 = vpop.f32.mrf.mxu0
    %v4185 = vadd.f32 %v4136, %v4184
    %4186 = vdwg.mxu0
    %s4187 = scalar_lea.vmem [#allocation2], 2304
    %v4188 = vld [vmem:[%s4187] sm:$0xff]
    %v4189 = vld [vmem:[%s4187 + $0x8] sm:$0xff]
    %v4190 = vld [vmem:[%s4187 + $0x10] sm:$0xff]
    %v4191 = vld [vmem:[%s4187 + $0x18] sm:$0xff]
    %v4192 = vld [vmem:[%s4187 + $0x20] sm:$0xff]
    %v4193 = vld [vmem:[%s4187 + $0x28] sm:$0xff]
    %v4194 = vld [vmem:[%s4187 + $0x30] sm:$0xff]
    %v4195 = vld [vmem:[%s4187 + $0x38] sm:$0xff]
    %v4196 = vld [vmem:[%s4187 + $0x40] sm:$0xff]
    %v4197 = vld [vmem:[%s4187 + $0x48] sm:$0xff]
    %v4198 = vld [vmem:[%s4187 + $0x50] sm:$0xff]
    %v4199 = vld [vmem:[%s4187 + $0x58] sm:$0xff]
    %v4200 = vld [vmem:[%s4187 + $0x60] sm:$0xff]
    %v4201 = vld [vmem:[%s4187 + $0x68] sm:$0xff]
    %v4202 = vld [vmem:[%s4187 + $0x70] sm:$0xff]
    %v4203 = vld [vmem:[%s4187 + $0x78] sm:$0xff]
    %v4204 = vld [vmem:[%s4187 + $0x80] sm:$0xff]
    %v4205 = vld [vmem:[%s4187 + $0x88] sm:$0xff]
    %v4206 = vld [vmem:[%s4187 + $0x90] sm:$0xff]
    %v4207 = vld [vmem:[%s4187 + $0x98] sm:$0xff]
    %v4208 = vld [vmem:[%s4187 + $0xa0] sm:$0xff]
    %v4209 = vld [vmem:[%s4187 + $0xa8] sm:$0xff]
    %v4210 = vld [vmem:[%s4187 + $0xb0] sm:$0xff]
    %v4211 = vld [vmem:[%s4187 + $0xb8] sm:$0xff]
    %v4212 = vld [vmem:[%s4187 + $0xc0] sm:$0xff]
    %v4213 = vld [vmem:[%s4187 + $0xc8] sm:$0xff]
    %v4214 = vld [vmem:[%s4187 + $0xd0] sm:$0xff]
    %v4215 = vld [vmem:[%s4187 + $0xd8] sm:$0xff]
    %v4216 = vld [vmem:[%s4187 + $0xe0] sm:$0xff]
    %v4217 = vld [vmem:[%s4187 + $0xe8] sm:$0xff]
    %v4218 = vld [vmem:[%s4187 + $0xf0] sm:$0xff]
    %v4219 = vld [vmem:[%s4187 + $0xf8] sm:$0xff]
    %v4252 = vunpack.c.l.b16 %v4188
    %v4253 = vunpack.c.h.b16 %v4188
    %v4254 = vunpack.c.l.b16 %v4189
    %v4255 = vunpack.c.h.b16 %v4189
    %v4256 = vunpack.c.l.b16 %v4190
    %v4257 = vunpack.c.h.b16 %v4190
    %v4258 = vunpack.c.l.b16 %v4191
    %v4259 = vunpack.c.h.b16 %v4191
    %v4260 = vunpack.c.l.b16 %v4192
    %v4261 = vunpack.c.h.b16 %v4192
    %v4262 = vunpack.c.l.b16 %v4193
    %v4263 = vunpack.c.h.b16 %v4193
    %v4264 = vunpack.c.l.b16 %v4194
    %v4265 = vunpack.c.h.b16 %v4194
    %v4266 = vunpack.c.l.b16 %v4195
    %v4267 = vunpack.c.h.b16 %v4195
    %v4268 = vunpack.c.l.b16 %v4196
    %v4269 = vunpack.c.h.b16 %v4196
    %v4270 = vunpack.c.l.b16 %v4197
    %v4271 = vunpack.c.h.b16 %v4197
    %v4272 = vunpack.c.l.b16 %v4198
    %v4273 = vunpack.c.h.b16 %v4198
    %v4274 = vunpack.c.l.b16 %v4199
    %v4275 = vunpack.c.h.b16 %v4199
    %v4276 = vunpack.c.l.b16 %v4200
    %v4277 = vunpack.c.h.b16 %v4200
    %v4278 = vunpack.c.l.b16 %v4201
    %v4279 = vunpack.c.h.b16 %v4201
    %v4280 = vunpack.c.l.b16 %v4202
    %v4281 = vunpack.c.h.b16 %v4202
    %v4282 = vunpack.c.l.b16 %v4203
    %v4283 = vunpack.c.h.b16 %v4203
    %v4284 = vunpack.c.l.b16 %v4204
    %v4285 = vunpack.c.h.b16 %v4204
    %v4286 = vunpack.c.l.b16 %v4205
    %v4287 = vunpack.c.h.b16 %v4205
    %v4288 = vunpack.c.l.b16 %v4206
    %v4289 = vunpack.c.h.b16 %v4206
    %v4290 = vunpack.c.l.b16 %v4207
    %v4291 = vunpack.c.h.b16 %v4207
    %v4292 = vunpack.c.l.b16 %v4208
    %v4293 = vunpack.c.h.b16 %v4208
    %v4294 = vunpack.c.l.b16 %v4209
    %v4295 = vunpack.c.h.b16 %v4209
    %v4296 = vunpack.c.l.b16 %v4210
    %v4297 = vunpack.c.h.b16 %v4210
    %v4298 = vunpack.c.l.b16 %v4211
    %v4299 = vunpack.c.h.b16 %v4211
    %v4300 = vunpack.c.l.b16 %v4212
    %v4301 = vunpack.c.h.b16 %v4212
    %v4302 = vunpack.c.l.b16 %v4213
    %v4303 = vunpack.c.h.b16 %v4213
    %v4304 = vunpack.c.l.b16 %v4214
    %v4305 = vunpack.c.h.b16 %v4214
    %v4306 = vunpack.c.l.b16 %v4215
    %v4307 = vunpack.c.h.b16 %v4215
    %v4308 = vunpack.c.l.b16 %v4216
    %v4309 = vunpack.c.h.b16 %v4216
    %v4310 = vunpack.c.l.b16 %v4217
    %v4311 = vunpack.c.h.b16 %v4217
    %v4312 = vunpack.c.l.b16 %v4218
    %v4313 = vunpack.c.h.b16 %v4218
    %v4314 = vunpack.c.l.b16 %v4219
    %v4315 = vunpack.c.h.b16 %v4219
    %v4316 = vpack.c.b16 %v4256, %v4252
    %v4317 = vpack.c.b16 %v4257, %v4253
    %v4318 = vpack.c.b16 %v4258, %v4254
    %v4319 = vpack.c.b16 %v4259, %v4255
    %v4320 = vpack.c.b16 %v4264, %v4260
    %v4321 = vpack.c.b16 %v4265, %v4261
    %v4322 = vpack.c.b16 %v4266, %v4262
    %v4323 = vpack.c.b16 %v4267, %v4263
    %v4324 = vpack.c.b16 %v4272, %v4268
    %v4325 = vpack.c.b16 %v4273, %v4269
    %v4326 = vpack.c.b16 %v4274, %v4270
    %v4327 = vpack.c.b16 %v4275, %v4271
    %v4328 = vpack.c.b16 %v4280, %v4276
    %v4329 = vpack.c.b16 %v4281, %v4277
    %v4330 = vpack.c.b16 %v4282, %v4278
    %v4331 = vpack.c.b16 %v4283, %v4279
    %v4332 = vpack.c.b16 %v4288, %v4284
    %v4333 = vpack.c.b16 %v4289, %v4285
    %v4334 = vpack.c.b16 %v4290, %v4286
    %v4335 = vpack.c.b16 %v4291, %v4287
    %v4336 = vpack.c.b16 %v4296, %v4292
    %v4337 = vpack.c.b16 %v4297, %v4293
    %v4338 = vpack.c.b16 %v4298, %v4294
    %v4339 = vpack.c.b16 %v4299, %v4295
    %v4340 = vpack.c.b16 %v4304, %v4300
    %v4341 = vpack.c.b16 %v4305, %v4301
    %v4342 = vpack.c.b16 %v4306, %v4302
    %v4343 = vpack.c.b16 %v4307, %v4303
    %v4344 = vpack.c.b16 %v4312, %v4308
    %v4345 = vpack.c.b16 %v4313, %v4309
    %v4346 = vpack.c.b16 %v4314, %v4310
    %v4347 = vpack.c.b16 %v4315, %v4311
    %4380 = vmatpush.bf16.msra.mxu0 %v662
    %4381 = vmatpush.bf16.msra.mxu0 %v661
    %4382 = vmatpush.bf16.msra.mxu0 %v660
    %4383 = vmatpush.bf16.msra.mxu0 %v659
    %4384 = vmatpush.bf16.msra.mxu0 %v658
    %4385 = vmatpush.bf16.msra.mxu0 %v657
    %4386 = vmatpush.bf16.msra.mxu0 %v656
    %4387 = vmatpush.bf16.msra.mxu0 %v655
    %4388 = vmatmul.bf16.gmra.mxu0 %v4316
    %v4389 = vpop.f32.mrf.mxu0
    %v4390 = vadd.f32 0.0, %v4389
    %v4391 = vpop.f32.mrf.mxu0
    %v4392 = vadd.f32 0.0, %v4391
    %4393 = vmatmul.bf16.gmra.mxu0 %v4320
    %v4394 = vpop.f32.mrf.mxu0
    %v4395 = vadd.f32 0.0, %v4394
    %v4396 = vpop.f32.mrf.mxu0
    %v4397 = vadd.f32 0.0, %v4396
    %4398 = vmatmul.bf16.gmra.mxu0 %v4324
    %v4399 = vpop.f32.mrf.mxu0
    %v4400 = vadd.f32 0.0, %v4399
    %v4401 = vpop.f32.mrf.mxu0
    %v4402 = vadd.f32 0.0, %v4401
    %4403 = vmatmul.bf16.gmra.mxu0 %v4328
    %v4404 = vpop.f32.mrf.mxu0
    %v4405 = vadd.f32 0.0, %v4404
    %v4406 = vpop.f32.mrf.mxu0
    %v4407 = vadd.f32 0.0, %v4406
    %4408 = vmatmul.bf16.gmra.mxu0 %v4332
    %v4409 = vpop.f32.mrf.mxu0
    %v4410 = vadd.f32 0.0, %v4409
    %v4411 = vpop.f32.mrf.mxu0
    %v4412 = vadd.f32 0.0, %v4411
    %4413 = vmatmul.bf16.gmra.mxu0 %v4336
    %v4414 = vpop.f32.mrf.mxu0
    %v4415 = vadd.f32 0.0, %v4414
    %v4416 = vpop.f32.mrf.mxu0
    %v4417 = vadd.f32 0.0, %v4416
    %4418 = vmatmul.bf16.gmra.mxu0 %v4340
    %v4419 = vpop.f32.mrf.mxu0
    %v4420 = vadd.f32 0.0, %v4419
    %v4421 = vpop.f32.mrf.mxu0
    %v4422 = vadd.f32 0.0, %v4421
    %4423 = vmatmul.bf16.gmra.mxu0 %v4344
    %v4424 = vpop.f32.mrf.mxu0
    %v4425 = vadd.f32 0.0, %v4424
    %v4426 = vpop.f32.mrf.mxu0
    %v4427 = vadd.f32 0.0, %v4426
    %4428 = vdwg.mxu0
    %4429 = vmatpush.bf16.msra.mxu0 %v670
    %4430 = vmatpush.bf16.msra.mxu0 %v669
    %4431 = vmatpush.bf16.msra.mxu0 %v668
    %4432 = vmatpush.bf16.msra.mxu0 %v667
    %4433 = vmatpush.bf16.msra.mxu0 %v666
    %4434 = vmatpush.bf16.msra.mxu0 %v665
    %4435 = vmatpush.bf16.msra.mxu0 %v664
    %4436 = vmatpush.bf16.msra.mxu0 %v663
    %4437 = vmatmul.bf16.gmra.mxu0 %v4317
    %v4438 = vpop.f32.mrf.mxu0
    %v4439 = vadd.f32 %v4390, %v4438
    %v4440 = vpop.f32.mrf.mxu0
    %v4441 = vadd.f32 %v4392, %v4440
    %4442 = vmatmul.bf16.gmra.mxu0 %v4321
    %v4443 = vpop.f32.mrf.mxu0
    %v4444 = vadd.f32 %v4395, %v4443
    %v4445 = vpop.f32.mrf.mxu0
    %v4446 = vadd.f32 %v4397, %v4445
    %4447 = vmatmul.bf16.gmra.mxu0 %v4325
    %v4448 = vpop.f32.mrf.mxu0
    %v4449 = vadd.f32 %v4400, %v4448
    %v4450 = vpop.f32.mrf.mxu0
    %v4451 = vadd.f32 %v4402, %v4450
    %4452 = vmatmul.bf16.gmra.mxu0 %v4329
    %v4453 = vpop.f32.mrf.mxu0
    %v4454 = vadd.f32 %v4405, %v4453
    %v4455 = vpop.f32.mrf.mxu0
    %v4456 = vadd.f32 %v4407, %v4455
    %4457 = vmatmul.bf16.gmra.mxu0 %v4333
    %v4458 = vpop.f32.mrf.mxu0
    %v4459 = vadd.f32 %v4410, %v4458
    %v4460 = vpop.f32.mrf.mxu0
    %v4461 = vadd.f32 %v4412, %v4460
    %4462 = vmatmul.bf16.gmra.mxu0 %v4337
    %v4463 = vpop.f32.mrf.mxu0
    %v4464 = vadd.f32 %v4415, %v4463
    %v4465 = vpop.f32.mrf.mxu0
    %v4466 = vadd.f32 %v4417, %v4465
    %4467 = vmatmul.bf16.gmra.mxu0 %v4341
    %v4468 = vpop.f32.mrf.mxu0
    %v4469 = vadd.f32 %v4420, %v4468
    %v4470 = vpop.f32.mrf.mxu0
    %v4471 = vadd.f32 %v4422, %v4470
    %4472 = vmatmul.bf16.gmra.mxu0 %v4345
    %v4473 = vpop.f32.mrf.mxu0
    %v4474 = vadd.f32 %v4425, %v4473
    %v4475 = vpop.f32.mrf.mxu0
    %v4476 = vadd.f32 %v4427, %v4475
    %4477 = vdwg.mxu0
    %4478 = vmatpush.bf16.msra.mxu0 %v678
    %4479 = vmatpush.bf16.msra.mxu0 %v677
    %4480 = vmatpush.bf16.msra.mxu0 %v676
    %4481 = vmatpush.bf16.msra.mxu0 %v675
    %4482 = vmatpush.bf16.msra.mxu0 %v674
    %4483 = vmatpush.bf16.msra.mxu0 %v673
    %4484 = vmatpush.bf16.msra.mxu0 %v672
    %4485 = vmatpush.bf16.msra.mxu0 %v671
    %4486 = vmatmul.bf16.gmra.mxu0 %v4318
    %v4487 = vpop.f32.mrf.mxu0
    %v4488 = vadd.f32 %v4439, %v4487
    %v4489 = vpop.f32.mrf.mxu0
    %v4490 = vadd.f32 %v4441, %v4489
    %4491 = vmatmul.bf16.gmra.mxu0 %v4322
    %v4492 = vpop.f32.mrf.mxu0
    %v4493 = vadd.f32 %v4444, %v4492
    %v4494 = vpop.f32.mrf.mxu0
    %v4495 = vadd.f32 %v4446, %v4494
    %4496 = vmatmul.bf16.gmra.mxu0 %v4326
    %v4497 = vpop.f32.mrf.mxu0
    %v4498 = vadd.f32 %v4449, %v4497
    %v4499 = vpop.f32.mrf.mxu0
    %v4500 = vadd.f32 %v4451, %v4499
    %4501 = vmatmul.bf16.gmra.mxu0 %v4330
    %v4502 = vpop.f32.mrf.mxu0
    %v4503 = vadd.f32 %v4454, %v4502
    %v4504 = vpop.f32.mrf.mxu0
    %v4505 = vadd.f32 %v4456, %v4504
    %4506 = vmatmul.bf16.gmra.mxu0 %v4334
    %v4507 = vpop.f32.mrf.mxu0
    %v4508 = vadd.f32 %v4459, %v4507
    %v4509 = vpop.f32.mrf.mxu0
    %v4510 = vadd.f32 %v4461, %v4509
    %4511 = vmatmul.bf16.gmra.mxu0 %v4338
    %v4512 = vpop.f32.mrf.mxu0
    %v4513 = vadd.f32 %v4464, %v4512
    %v4514 = vpop.f32.mrf.mxu0
    %v4515 = vadd.f32 %v4466, %v4514
    %4516 = vmatmul.bf16.gmra.mxu0 %v4342
    %v4517 = vpop.f32.mrf.mxu0
    %v4518 = vadd.f32 %v4469, %v4517
    %v4519 = vpop.f32.mrf.mxu0
    %v4520 = vadd.f32 %v4471, %v4519
    %4521 = vmatmul.bf16.gmra.mxu0 %v4346
    %v4522 = vpop.f32.mrf.mxu0
    %v4523 = vadd.f32 %v4474, %v4522
    %v4524 = vpop.f32.mrf.mxu0
    %v4525 = vadd.f32 %v4476, %v4524
    %4526 = vdwg.mxu0
    %4527 = vmatpush.bf16.msra.mxu0 %v686
    %4528 = vmatpush.bf16.msra.mxu0 %v685
    %4529 = vmatpush.bf16.msra.mxu0 %v684
    %4530 = vmatpush.bf16.msra.mxu0 %v683
    %4531 = vmatpush.bf16.msra.mxu0 %v682
    %4532 = vmatpush.bf16.msra.mxu0 %v681
    %4533 = vmatpush.bf16.msra.mxu0 %v680
    %4534 = vmatpush.bf16.msra.mxu0 %v679
    %4535 = vmatmul.bf16.gmra.mxu0 %v4319
    %v4536 = vpop.f32.mrf.mxu0
    %v4537 = vadd.f32 %v4488, %v4536
    %v4538 = vpop.f32.mrf.mxu0
    %v4539 = vadd.f32 %v4490, %v4538
    %4540 = vmatmul.bf16.gmra.mxu0 %v4323
    %v4541 = vpop.f32.mrf.mxu0
    %v4542 = vadd.f32 %v4493, %v4541
    %v4543 = vpop.f32.mrf.mxu0
    %v4544 = vadd.f32 %v4495, %v4543
    %4545 = vmatmul.bf16.gmra.mxu0 %v4327
    %v4546 = vpop.f32.mrf.mxu0
    %v4547 = vadd.f32 %v4498, %v4546
    %v4548 = vpop.f32.mrf.mxu0
    %v4549 = vadd.f32 %v4500, %v4548
    %4550 = vmatmul.bf16.gmra.mxu0 %v4331
    %v4551 = vpop.f32.mrf.mxu0
    %v4552 = vadd.f32 %v4503, %v4551
    %v4553 = vpop.f32.mrf.mxu0
    %v4554 = vadd.f32 %v4505, %v4553
    %4555 = vmatmul.bf16.gmra.mxu0 %v4335
    %v4556 = vpop.f32.mrf.mxu0
    %v4557 = vadd.f32 %v4508, %v4556
    %v4558 = vpop.f32.mrf.mxu0
    %v4559 = vadd.f32 %v4510, %v4558
    %4560 = vmatmul.bf16.gmra.mxu0 %v4339
    %v4561 = vpop.f32.mrf.mxu0
    %v4562 = vadd.f32 %v4513, %v4561
    %v4563 = vpop.f32.mrf.mxu0
    %v4564 = vadd.f32 %v4515, %v4563
    %4565 = vmatmul.bf16.gmra.mxu0 %v4343
    %v4566 = vpop.f32.mrf.mxu0
    %v4567 = vadd.f32 %v4518, %v4566
    %v4568 = vpop.f32.mrf.mxu0
    %v4569 = vadd.f32 %v4520, %v4568
    %4570 = vmatmul.bf16.gmra.mxu0 %v4347
    %v4571 = vpop.f32.mrf.mxu0
    %v4572 = vadd.f32 %v4523, %v4571
    %v4573 = vpop.f32.mrf.mxu0
    %v4574 = vadd.f32 %v4525, %v4573
    %4575 = vdwg.mxu0
    %s4576 = scalar_lea.vmem [#allocation2], 2560
    %v4577 = vld [vmem:[%s4576] sm:$0xff]
    %v4578 = vld [vmem:[%s4576 + $0x8] sm:$0xff]
    %v4579 = vld [vmem:[%s4576 + $0x10] sm:$0xff]
    %v4580 = vld [vmem:[%s4576 + $0x18] sm:$0xff]
    %v4581 = vld [vmem:[%s4576 + $0x20] sm:$0xff]
    %v4582 = vld [vmem:[%s4576 + $0x28] sm:$0xff]
    %v4583 = vld [vmem:[%s4576 + $0x30] sm:$0xff]
    %v4584 = vld [vmem:[%s4576 + $0x38] sm:$0xff]
    %v4585 = vld [vmem:[%s4576 + $0x40] sm:$0xff]
    %v4586 = vld [vmem:[%s4576 + $0x48] sm:$0xff]
    %v4587 = vld [vmem:[%s4576 + $0x50] sm:$0xff]
    %v4588 = vld [vmem:[%s4576 + $0x58] sm:$0xff]
    %v4589 = vld [vmem:[%s4576 + $0x60] sm:$0xff]
    %v4590 = vld [vmem:[%s4576 + $0x68] sm:$0xff]
    %v4591 = vld [vmem:[%s4576 + $0x70] sm:$0xff]
    %v4592 = vld [vmem:[%s4576 + $0x78] sm:$0xff]
    %v4593 = vld [vmem:[%s4576 + $0x80] sm:$0xff]
    %v4594 = vld [vmem:[%s4576 + $0x88] sm:$0xff]
    %v4595 = vld [vmem:[%s4576 + $0x90] sm:$0xff]
    %v4596 = vld [vmem:[%s4576 + $0x98] sm:$0xff]
    %v4597 = vld [vmem:[%s4576 + $0xa0] sm:$0xff]
    %v4598 = vld [vmem:[%s4576 + $0xa8] sm:$0xff]
    %v4599 = vld [vmem:[%s4576 + $0xb0] sm:$0xff]
    %v4600 = vld [vmem:[%s4576 + $0xb8] sm:$0xff]
    %v4601 = vld [vmem:[%s4576 + $0xc0] sm:$0xff]
    %v4602 = vld [vmem:[%s4576 + $0xc8] sm:$0xff]
    %v4603 = vld [vmem:[%s4576 + $0xd0] sm:$0xff]
    %v4604 = vld [vmem:[%s4576 + $0xd8] sm:$0xff]
    %v4605 = vld [vmem:[%s4576 + $0xe0] sm:$0xff]
    %v4606 = vld [vmem:[%s4576 + $0xe8] sm:$0xff]
    %v4607 = vld [vmem:[%s4576 + $0xf0] sm:$0xff]
    %v4608 = vld [vmem:[%s4576 + $0xf8] sm:$0xff]
    %v4641 = vunpack.c.l.b16 %v4577
    %v4642 = vunpack.c.h.b16 %v4577
    %v4643 = vunpack.c.l.b16 %v4578
    %v4644 = vunpack.c.h.b16 %v4578
    %v4645 = vunpack.c.l.b16 %v4579
    %v4646 = vunpack.c.h.b16 %v4579
    %v4647 = vunpack.c.l.b16 %v4580
    %v4648 = vunpack.c.h.b16 %v4580
    %v4649 = vunpack.c.l.b16 %v4581
    %v4650 = vunpack.c.h.b16 %v4581
    %v4651 = vunpack.c.l.b16 %v4582
    %v4652 = vunpack.c.h.b16 %v4582
    %v4653 = vunpack.c.l.b16 %v4583
    %v4654 = vunpack.c.h.b16 %v4583
    %v4655 = vunpack.c.l.b16 %v4584
    %v4656 = vunpack.c.h.b16 %v4584
    %v4657 = vunpack.c.l.b16 %v4585
    %v4658 = vunpack.c.h.b16 %v4585
    %v4659 = vunpack.c.l.b16 %v4586
    %v4660 = vunpack.c.h.b16 %v4586
    %v4661 = vunpack.c.l.b16 %v4587
    %v4662 = vunpack.c.h.b16 %v4587
    %v4663 = vunpack.c.l.b16 %v4588
    %v4664 = vunpack.c.h.b16 %v4588
    %v4665 = vunpack.c.l.b16 %v4589
    %v4666 = vunpack.c.h.b16 %v4589
    %v4667 = vunpack.c.l.b16 %v4590
    %v4668 = vunpack.c.h.b16 %v4590
    %v4669 = vunpack.c.l.b16 %v4591
    %v4670 = vunpack.c.h.b16 %v4591
    %v4671 = vunpack.c.l.b16 %v4592
    %v4672 = vunpack.c.h.b16 %v4592
    %v4673 = vunpack.c.l.b16 %v4593
    %v4674 = vunpack.c.h.b16 %v4593
    %v4675 = vunpack.c.l.b16 %v4594
    %v4676 = vunpack.c.h.b16 %v4594
    %v4677 = vunpack.c.l.b16 %v4595
    %v4678 = vunpack.c.h.b16 %v4595
    %v4679 = vunpack.c.l.b16 %v4596
    %v4680 = vunpack.c.h.b16 %v4596
    %v4681 = vunpack.c.l.b16 %v4597
    %v4682 = vunpack.c.h.b16 %v4597
    %v4683 = vunpack.c.l.b16 %v4598
    %v4684 = vunpack.c.h.b16 %v4598
    %v4685 = vunpack.c.l.b16 %v4599
    %v4686 = vunpack.c.h.b16 %v4599
    %v4687 = vunpack.c.l.b16 %v4600
    %v4688 = vunpack.c.h.b16 %v4600
    %v4689 = vunpack.c.l.b16 %v4601
    %v4690 = vunpack.c.h.b16 %v4601
    %v4691 = vunpack.c.l.b16 %v4602
    %v4692 = vunpack.c.h.b16 %v4602
    %v4693 = vunpack.c.l.b16 %v4603
    %v4694 = vunpack.c.h.b16 %v4603
    %v4695 = vunpack.c.l.b16 %v4604
    %v4696 = vunpack.c.h.b16 %v4604
    %v4697 = vunpack.c.l.b16 %v4605
    %v4698 = vunpack.c.h.b16 %v4605
    %v4699 = vunpack.c.l.b16 %v4606
    %v4700 = vunpack.c.h.b16 %v4606
    %v4701 = vunpack.c.l.b16 %v4607
    %v4702 = vunpack.c.h.b16 %v4607
    %v4703 = vunpack.c.l.b16 %v4608
    %v4704 = vunpack.c.h.b16 %v4608
    %v4705 = vpack.c.b16 %v4645, %v4641
    %v4706 = vpack.c.b16 %v4646, %v4642
    %v4707 = vpack.c.b16 %v4647, %v4643
    %v4708 = vpack.c.b16 %v4648, %v4644
    %v4709 = vpack.c.b16 %v4653, %v4649
    %v4710 = vpack.c.b16 %v4654, %v4650
    %v4711 = vpack.c.b16 %v4655, %v4651
    %v4712 = vpack.c.b16 %v4656, %v4652
    %v4713 = vpack.c.b16 %v4661, %v4657
    %v4714 = vpack.c.b16 %v4662, %v4658
    %v4715 = vpack.c.b16 %v4663, %v4659
    %v4716 = vpack.c.b16 %v4664, %v4660
    %v4717 = vpack.c.b16 %v4669, %v4665
    %v4718 = vpack.c.b16 %v4670, %v4666
    %v4719 = vpack.c.b16 %v4671, %v4667
    %v4720 = vpack.c.b16 %v4672, %v4668
    %v4721 = vpack.c.b16 %v4677, %v4673
    %v4722 = vpack.c.b16 %v4678, %v4674
    %v4723 = vpack.c.b16 %v4679, %v4675
    %v4724 = vpack.c.b16 %v4680, %v4676
    %v4725 = vpack.c.b16 %v4685, %v4681
    %v4726 = vpack.c.b16 %v4686, %v4682
    %v4727 = vpack.c.b16 %v4687, %v4683
    %v4728 = vpack.c.b16 %v4688, %v4684
    %v4729 = vpack.c.b16 %v4693, %v4689
    %v4730 = vpack.c.b16 %v4694, %v4690
    %v4731 = vpack.c.b16 %v4695, %v4691
    %v4732 = vpack.c.b16 %v4696, %v4692
    %v4733 = vpack.c.b16 %v4701, %v4697
    %v4734 = vpack.c.b16 %v4702, %v4698
    %v4735 = vpack.c.b16 %v4703, %v4699
    %v4736 = vpack.c.b16 %v4704, %v4700
    %4769 = vmatpush.bf16.msra.mxu0 %v662
    %4770 = vmatpush.bf16.msra.mxu0 %v661
    %4771 = vmatpush.bf16.msra.mxu0 %v660
    %4772 = vmatpush.bf16.msra.mxu0 %v659
    %4773 = vmatpush.bf16.msra.mxu0 %v658
    %4774 = vmatpush.bf16.msra.mxu0 %v657
    %4775 = vmatpush.bf16.msra.mxu0 %v656
    %4776 = vmatpush.bf16.msra.mxu0 %v655
    %4777 = vmatmul.bf16.gmra.mxu0 %v4705
    %v4778 = vpop.f32.mrf.mxu0
    %v4779 = vadd.f32 0.0, %v4778
    %v4780 = vpop.f32.mrf.mxu0
    %v4781 = vadd.f32 0.0, %v4780
    %4782 = vmatmul.bf16.gmra.mxu0 %v4709
    %v4783 = vpop.f32.mrf.mxu0
    %v4784 = vadd.f32 0.0, %v4783
    %v4785 = vpop.f32.mrf.mxu0
    %v4786 = vadd.f32 0.0, %v4785
    %4787 = vmatmul.bf16.gmra.mxu0 %v4713
    %v4788 = vpop.f32.mrf.mxu0
    %v4789 = vadd.f32 0.0, %v4788
    %v4790 = vpop.f32.mrf.mxu0
    %v4791 = vadd.f32 0.0, %v4790
    %4792 = vmatmul.bf16.gmra.mxu0 %v4717
    %v4793 = vpop.f32.mrf.mxu0
    %v4794 = vadd.f32 0.0, %v4793
    %v4795 = vpop.f32.mrf.mxu0
    %v4796 = vadd.f32 0.0, %v4795
    %4797 = vmatmul.bf16.gmra.mxu0 %v4721
    %v4798 = vpop.f32.mrf.mxu0
    %v4799 = vadd.f32 0.0, %v4798
    %v4800 = vpop.f32.mrf.mxu0
    %v4801 = vadd.f32 0.0, %v4800
    %4802 = vmatmul.bf16.gmra.mxu0 %v4725
    %v4803 = vpop.f32.mrf.mxu0
    %v4804 = vadd.f32 0.0, %v4803
    %v4805 = vpop.f32.mrf.mxu0
    %v4806 = vadd.f32 0.0, %v4805
    %4807 = vmatmul.bf16.gmra.mxu0 %v4729
    %v4808 = vpop.f32.mrf.mxu0
    %v4809 = vadd.f32 0.0, %v4808
    %v4810 = vpop.f32.mrf.mxu0
    %v4811 = vadd.f32 0.0, %v4810
    %4812 = vmatmul.bf16.gmra.mxu0 %v4733
    %v4813 = vpop.f32.mrf.mxu0
    %v4814 = vadd.f32 0.0, %v4813
    %v4815 = vpop.f32.mrf.mxu0
    %v4816 = vadd.f32 0.0, %v4815
    %4817 = vdwg.mxu0
    %4818 = vmatpush.bf16.msra.mxu0 %v670
    %4819 = vmatpush.bf16.msra.mxu0 %v669
    %4820 = vmatpush.bf16.msra.mxu0 %v668
    %4821 = vmatpush.bf16.msra.mxu0 %v667
    %4822 = vmatpush.bf16.msra.mxu0 %v666
    %4823 = vmatpush.bf16.msra.mxu0 %v665
    %4824 = vmatpush.bf16.msra.mxu0 %v664
    %4825 = vmatpush.bf16.msra.mxu0 %v663
    %4826 = vmatmul.bf16.gmra.mxu0 %v4706
    %v4827 = vpop.f32.mrf.mxu0
    %v4828 = vadd.f32 %v4779, %v4827
    %v4829 = vpop.f32.mrf.mxu0
    %v4830 = vadd.f32 %v4781, %v4829
    %4831 = vmatmul.bf16.gmra.mxu0 %v4710
    %v4832 = vpop.f32.mrf.mxu0
    %v4833 = vadd.f32 %v4784, %v4832
    %v4834 = vpop.f32.mrf.mxu0
    %v4835 = vadd.f32 %v4786, %v4834
    %4836 = vmatmul.bf16.gmra.mxu0 %v4714
    %v4837 = vpop.f32.mrf.mxu0
    %v4838 = vadd.f32 %v4789, %v4837
    %v4839 = vpop.f32.mrf.mxu0
    %v4840 = vadd.f32 %v4791, %v4839
    %4841 = vmatmul.bf16.gmra.mxu0 %v4718
    %v4842 = vpop.f32.mrf.mxu0
    %v4843 = vadd.f32 %v4794, %v4842
    %v4844 = vpop.f32.mrf.mxu0
    %v4845 = vadd.f32 %v4796, %v4844
    %4846 = vmatmul.bf16.gmra.mxu0 %v4722
    %v4847 = vpop.f32.mrf.mxu0
    %v4848 = vadd.f32 %v4799, %v4847
    %v4849 = vpop.f32.mrf.mxu0
    %v4850 = vadd.f32 %v4801, %v4849
    %4851 = vmatmul.bf16.gmra.mxu0 %v4726
    %v4852 = vpop.f32.mrf.mxu0
    %v4853 = vadd.f32 %v4804, %v4852
    %v4854 = vpop.f32.mrf.mxu0
    %v4855 = vadd.f32 %v4806, %v4854
    %4856 = vmatmul.bf16.gmra.mxu0 %v4730
    %v4857 = vpop.f32.mrf.mxu0
    %v4858 = vadd.f32 %v4809, %v4857
    %v4859 = vpop.f32.mrf.mxu0
    %v4860 = vadd.f32 %v4811, %v4859
    %4861 = vmatmul.bf16.gmra.mxu0 %v4734
    %v4862 = vpop.f32.mrf.mxu0
    %v4863 = vadd.f32 %v4814, %v4862
    %v4864 = vpop.f32.mrf.mxu0
    %v4865 = vadd.f32 %v4816, %v4864
    %4866 = vdwg.mxu0
    %4867 = vmatpush.bf16.msra.mxu0 %v678
    %4868 = vmatpush.bf16.msra.mxu0 %v677
    %4869 = vmatpush.bf16.msra.mxu0 %v676
    %4870 = vmatpush.bf16.msra.mxu0 %v675
    %4871 = vmatpush.bf16.msra.mxu0 %v674
    %4872 = vmatpush.bf16.msra.mxu0 %v673
    %4873 = vmatpush.bf16.msra.mxu0 %v672
    %4874 = vmatpush.bf16.msra.mxu0 %v671
    %4875 = vmatmul.bf16.gmra.mxu0 %v4707
    %v4876 = vpop.f32.mrf.mxu0
    %v4877 = vadd.f32 %v4828, %v4876
    %v4878 = vpop.f32.mrf.mxu0
    %v4879 = vadd.f32 %v4830, %v4878
    %4880 = vmatmul.bf16.gmra.mxu0 %v4711
    %v4881 = vpop.f32.mrf.mxu0
    %v4882 = vadd.f32 %v4833, %v4881
    %v4883 = vpop.f32.mrf.mxu0
    %v4884 = vadd.f32 %v4835, %v4883
    %4885 = vmatmul.bf16.gmra.mxu0 %v4715
    %v4886 = vpop.f32.mrf.mxu0
    %v4887 = vadd.f32 %v4838, %v4886
    %v4888 = vpop.f32.mrf.mxu0
    %v4889 = vadd.f32 %v4840, %v4888
    %4890 = vmatmul.bf16.gmra.mxu0 %v4719
    %v4891 = vpop.f32.mrf.mxu0
    %v4892 = vadd.f32 %v4843, %v4891
    %v4893 = vpop.f32.mrf.mxu0
    %v4894 = vadd.f32 %v4845, %v4893
    %4895 = vmatmul.bf16.gmra.mxu0 %v4723
    %v4896 = vpop.f32.mrf.mxu0
    %v4897 = vadd.f32 %v4848, %v4896
    %v4898 = vpop.f32.mrf.mxu0
    %v4899 = vadd.f32 %v4850, %v4898
    %4900 = vmatmul.bf16.gmra.mxu0 %v4727
    %v4901 = vpop.f32.mrf.mxu0
    %v4902 = vadd.f32 %v4853, %v4901
    %v4903 = vpop.f32.mrf.mxu0
    %v4904 = vadd.f32 %v4855, %v4903
    %4905 = vmatmul.bf16.gmra.mxu0 %v4731
    %v4906 = vpop.f32.mrf.mxu0
    %v4907 = vadd.f32 %v4858, %v4906
    %v4908 = vpop.f32.mrf.mxu0
    %v4909 = vadd.f32 %v4860, %v4908
    %4910 = vmatmul.bf16.gmra.mxu0 %v4735
    %v4911 = vpop.f32.mrf.mxu0
    %v4912 = vadd.f32 %v4863, %v4911
    %v4913 = vpop.f32.mrf.mxu0
    %v4914 = vadd.f32 %v4865, %v4913
    %4915 = vdwg.mxu0
    %4916 = vmatpush.bf16.msra.mxu0 %v686
    %4917 = vmatpush.bf16.msra.mxu0 %v685
    %4918 = vmatpush.bf16.msra.mxu0 %v684
    %4919 = vmatpush.bf16.msra.mxu0 %v683
    %4920 = vmatpush.bf16.msra.mxu0 %v682
    %4921 = vmatpush.bf16.msra.mxu0 %v681
    %4922 = vmatpush.bf16.msra.mxu0 %v680
    %4923 = vmatpush.bf16.msra.mxu0 %v679
    %4924 = vmatmul.bf16.gmra.mxu0 %v4708
    %v4925 = vpop.f32.mrf.mxu0
    %v4926 = vadd.f32 %v4877, %v4925
    %v4927 = vpop.f32.mrf.mxu0
    %v4928 = vadd.f32 %v4879, %v4927
    %4929 = vmatmul.bf16.gmra.mxu0 %v4712
    %v4930 = vpop.f32.mrf.mxu0
    %v4931 = vadd.f32 %v4882, %v4930
    %v4932 = vpop.f32.mrf.mxu0
    %v4933 = vadd.f32 %v4884, %v4932
    %4934 = vmatmul.bf16.gmra.mxu0 %v4716
    %v4935 = vpop.f32.mrf.mxu0
    %v4936 = vadd.f32 %v4887, %v4935
    %v4937 = vpop.f32.mrf.mxu0
    %v4938 = vadd.f32 %v4889, %v4937
    %4939 = vmatmul.bf16.gmra.mxu0 %v4720
    %v4940 = vpop.f32.mrf.mxu0
    %v4941 = vadd.f32 %v4892, %v4940
    %v4942 = vpop.f32.mrf.mxu0
    %v4943 = vadd.f32 %v4894, %v4942
    %4944 = vmatmul.bf16.gmra.mxu0 %v4724
    %v4945 = vpop.f32.mrf.mxu0
    %v4946 = vadd.f32 %v4897, %v4945
    %v4947 = vpop.f32.mrf.mxu0
    %v4948 = vadd.f32 %v4899, %v4947
    %4949 = vmatmul.bf16.gmra.mxu0 %v4728
    %v4950 = vpop.f32.mrf.mxu0
    %v4951 = vadd.f32 %v4902, %v4950
    %v4952 = vpop.f32.mrf.mxu0
    %v4953 = vadd.f32 %v4904, %v4952
    %4954 = vmatmul.bf16.gmra.mxu0 %v4732
    %v4955 = vpop.f32.mrf.mxu0
    %v4956 = vadd.f32 %v4907, %v4955
    %v4957 = vpop.f32.mrf.mxu0
    %v4958 = vadd.f32 %v4909, %v4957
    %4959 = vmatmul.bf16.gmra.mxu0 %v4736
    %v4960 = vpop.f32.mrf.mxu0
    %v4961 = vadd.f32 %v4912, %v4960
    %v4962 = vpop.f32.mrf.mxu0
    %v4963 = vadd.f32 %v4914, %v4962
    %4964 = vdwg.mxu0
    %s4965 = scalar_lea.vmem [#allocation2], 2816
    %v4966 = vld [vmem:[%s4965] sm:$0xff]
    %v4967 = vld [vmem:[%s4965 + $0x8] sm:$0xff]
    %v4968 = vld [vmem:[%s4965 + $0x10] sm:$0xff]
    %v4969 = vld [vmem:[%s4965 + $0x18] sm:$0xff]
    %v4970 = vld [vmem:[%s4965 + $0x20] sm:$0xff]
    %v4971 = vld [vmem:[%s4965 + $0x28] sm:$0xff]
    %v4972 = vld [vmem:[%s4965 + $0x30] sm:$0xff]
    %v4973 = vld [vmem:[%s4965 + $0x38] sm:$0xff]
    %v4974 = vld [vmem:[%s4965 + $0x40] sm:$0xff]
    %v4975 = vld [vmem:[%s4965 + $0x48] sm:$0xff]
    %v4976 = vld [vmem:[%s4965 + $0x50] sm:$0xff]
    %v4977 = vld [vmem:[%s4965 + $0x58] sm:$0xff]
    %v4978 = vld [vmem:[%s4965 + $0x60] sm:$0xff]
    %v4979 = vld [vmem:[%s4965 + $0x68] sm:$0xff]
    %v4980 = vld [vmem:[%s4965 + $0x70] sm:$0xff]
    %v4981 = vld [vmem:[%s4965 + $0x78] sm:$0xff]
    %v4982 = vld [vmem:[%s4965 + $0x80] sm:$0xff]
    %v4983 = vld [vmem:[%s4965 + $0x88] sm:$0xff]
    %v4984 = vld [vmem:[%s4965 + $0x90] sm:$0xff]
    %v4985 = vld [vmem:[%s4965 + $0x98] sm:$0xff]
    %v4986 = vld [vmem:[%s4965 + $0xa0] sm:$0xff]
    %v4987 = vld [vmem:[%s4965 + $0xa8] sm:$0xff]
    %v4988 = vld [vmem:[%s4965 + $0xb0] sm:$0xff]
    %v4989 = vld [vmem:[%s4965 + $0xb8] sm:$0xff]
    %v4990 = vld [vmem:[%s4965 + $0xc0] sm:$0xff]
    %v4991 = vld [vmem:[%s4965 + $0xc8] sm:$0xff]
    %v4992 = vld [vmem:[%s4965 + $0xd0] sm:$0xff]
    %v4993 = vld [vmem:[%s4965 + $0xd8] sm:$0xff]
    %v4994 = vld [vmem:[%s4965 + $0xe0] sm:$0xff]
    %v4995 = vld [vmem:[%s4965 + $0xe8] sm:$0xff]
    %v4996 = vld [vmem:[%s4965 + $0xf0] sm:$0xff]
    %v4997 = vld [vmem:[%s4965 + $0xf8] sm:$0xff]
    %v5030 = vunpack.c.l.b16 %v4966
    %v5031 = vunpack.c.h.b16 %v4966
    %v5032 = vunpack.c.l.b16 %v4967
    %v5033 = vunpack.c.h.b16 %v4967
    %v5034 = vunpack.c.l.b16 %v4968
    %v5035 = vunpack.c.h.b16 %v4968
    %v5036 = vunpack.c.l.b16 %v4969
    %v5037 = vunpack.c.h.b16 %v4969
    %v5038 = vunpack.c.l.b16 %v4970
    %v5039 = vunpack.c.h.b16 %v4970
    %v5040 = vunpack.c.l.b16 %v4971
    %v5041 = vunpack.c.h.b16 %v4971
    %v5042 = vunpack.c.l.b16 %v4972
    %v5043 = vunpack.c.h.b16 %v4972
    %v5044 = vunpack.c.l.b16 %v4973
    %v5045 = vunpack.c.h.b16 %v4973
    %v5046 = vunpack.c.l.b16 %v4974
    %v5047 = vunpack.c.h.b16 %v4974
    %v5048 = vunpack.c.l.b16 %v4975
    %v5049 = vunpack.c.h.b16 %v4975
    %v5050 = vunpack.c.l.b16 %v4976
    %v5051 = vunpack.c.h.b16 %v4976
    %v5052 = vunpack.c.l.b16 %v4977
    %v5053 = vunpack.c.h.b16 %v4977
    %v5054 = vunpack.c.l.b16 %v4978
    %v5055 = vunpack.c.h.b16 %v4978
    %v5056 = vunpack.c.l.b16 %v4979
    %v5057 = vunpack.c.h.b16 %v4979
    %v5058 = vunpack.c.l.b16 %v4980
    %v5059 = vunpack.c.h.b16 %v4980
    %v5060 = vunpack.c.l.b16 %v4981
    %v5061 = vunpack.c.h.b16 %v4981
    %v5062 = vunpack.c.l.b16 %v4982
    %v5063 = vunpack.c.h.b16 %v4982
    %v5064 = vunpack.c.l.b16 %v4983
    %v5065 = vunpack.c.h.b16 %v4983
    %v5066 = vunpack.c.l.b16 %v4984
    %v5067 = vunpack.c.h.b16 %v4984
    %v5068 = vunpack.c.l.b16 %v4985
    %v5069 = vunpack.c.h.b16 %v4985
    %v5070 = vunpack.c.l.b16 %v4986
    %v5071 = vunpack.c.h.b16 %v4986
    %v5072 = vunpack.c.l.b16 %v4987
    %v5073 = vunpack.c.h.b16 %v4987
    %v5074 = vunpack.c.l.b16 %v4988
    %v5075 = vunpack.c.h.b16 %v4988
    %v5076 = vunpack.c.l.b16 %v4989
    %v5077 = vunpack.c.h.b16 %v4989
    %v5078 = vunpack.c.l.b16 %v4990
    %v5079 = vunpack.c.h.b16 %v4990
    %v5080 = vunpack.c.l.b16 %v4991
    %v5081 = vunpack.c.h.b16 %v4991
    %v5082 = vunpack.c.l.b16 %v4992
    %v5083 = vunpack.c.h.b16 %v4992
    %v5084 = vunpack.c.l.b16 %v4993
    %v5085 = vunpack.c.h.b16 %v4993
    %v5086 = vunpack.c.l.b16 %v4994
    %v5087 = vunpack.c.h.b16 %v4994
    %v5088 = vunpack.c.l.b16 %v4995
    %v5089 = vunpack.c.h.b16 %v4995
    %v5090 = vunpack.c.l.b16 %v4996
    %v5091 = vunpack.c.h.b16 %v4996
    %v5092 = vunpack.c.l.b16 %v4997
    %v5093 = vunpack.c.h.b16 %v4997
    %v5094 = vpack.c.b16 %v5034, %v5030
    %v5095 = vpack.c.b16 %v5035, %v5031
    %v5096 = vpack.c.b16 %v5036, %v5032
    %v5097 = vpack.c.b16 %v5037, %v5033
    %v5098 = vpack.c.b16 %v5042, %v5038
    %v5099 = vpack.c.b16 %v5043, %v5039
    %v5100 = vpack.c.b16 %v5044, %v5040
    %v5101 = vpack.c.b16 %v5045, %v5041
    %v5102 = vpack.c.b16 %v5050, %v5046
    %v5103 = vpack.c.b16 %v5051, %v5047
    %v5104 = vpack.c.b16 %v5052, %v5048
    %v5105 = vpack.c.b16 %v5053, %v5049
    %v5106 = vpack.c.b16 %v5058, %v5054
    %v5107 = vpack.c.b16 %v5059, %v5055
    %v5108 = vpack.c.b16 %v5060, %v5056
    %v5109 = vpack.c.b16 %v5061, %v5057
    %v5110 = vpack.c.b16 %v5066, %v5062
    %v5111 = vpack.c.b16 %v5067, %v5063
    %v5112 = vpack.c.b16 %v5068, %v5064
    %v5113 = vpack.c.b16 %v5069, %v5065
    %v5114 = vpack.c.b16 %v5074, %v5070
    %v5115 = vpack.c.b16 %v5075, %v5071
    %v5116 = vpack.c.b16 %v5076, %v5072
    %v5117 = vpack.c.b16 %v5077, %v5073
    %v5118 = vpack.c.b16 %v5082, %v5078
    %v5119 = vpack.c.b16 %v5083, %v5079
    %v5120 = vpack.c.b16 %v5084, %v5080
    %v5121 = vpack.c.b16 %v5085, %v5081
    %v5122 = vpack.c.b16 %v5090, %v5086
    %v5123 = vpack.c.b16 %v5091, %v5087
    %v5124 = vpack.c.b16 %v5092, %v5088
    %v5125 = vpack.c.b16 %v5093, %v5089
    %5158 = vmatpush.bf16.msra.mxu0 %v662
    %5159 = vmatpush.bf16.msra.mxu0 %v661
    %5160 = vmatpush.bf16.msra.mxu0 %v660
    %5161 = vmatpush.bf16.msra.mxu0 %v659
    %5162 = vmatpush.bf16.msra.mxu0 %v658
    %5163 = vmatpush.bf16.msra.mxu0 %v657
    %5164 = vmatpush.bf16.msra.mxu0 %v656
    %5165 = vmatpush.bf16.msra.mxu0 %v655
    %5166 = vmatmul.bf16.gmra.mxu0 %v5094
    %v5167 = vpop.f32.mrf.mxu0
    %v5168 = vadd.f32 0.0, %v5167
    %v5169 = vpop.f32.mrf.mxu0
    %v5170 = vadd.f32 0.0, %v5169
    %5171 = vmatmul.bf16.gmra.mxu0 %v5098
    %v5172 = vpop.f32.mrf.mxu0
    %v5173 = vadd.f32 0.0, %v5172
    %v5174 = vpop.f32.mrf.mxu0
    %v5175 = vadd.f32 0.0, %v5174
    %5176 = vmatmul.bf16.gmra.mxu0 %v5102
    %v5177 = vpop.f32.mrf.mxu0
    %v5178 = vadd.f32 0.0, %v5177
    %v5179 = vpop.f32.mrf.mxu0
    %v5180 = vadd.f32 0.0, %v5179
    %5181 = vmatmul.bf16.gmra.mxu0 %v5106
    %v5182 = vpop.f32.mrf.mxu0
    %v5183 = vadd.f32 0.0, %v5182
    %v5184 = vpop.f32.mrf.mxu0
    %v5185 = vadd.f32 0.0, %v5184
    %5186 = vmatmul.bf16.gmra.mxu0 %v5110
    %v5187 = vpop.f32.mrf.mxu0
    %v5188 = vadd.f32 0.0, %v5187
    %v5189 = vpop.f32.mrf.mxu0
    %v5190 = vadd.f32 0.0, %v5189
    %5191 = vmatmul.bf16.gmra.mxu0 %v5114
    %v5192 = vpop.f32.mrf.mxu0
    %v5193 = vadd.f32 0.0, %v5192
    %v5194 = vpop.f32.mrf.mxu0
    %v5195 = vadd.f32 0.0, %v5194
    %5196 = vmatmul.bf16.gmra.mxu0 %v5118
    %v5197 = vpop.f32.mrf.mxu0
    %v5198 = vadd.f32 0.0, %v5197
    %v5199 = vpop.f32.mrf.mxu0
    %v5200 = vadd.f32 0.0, %v5199
    %5201 = vmatmul.bf16.gmra.mxu0 %v5122
    %v5202 = vpop.f32.mrf.mxu0
    %v5203 = vadd.f32 0.0, %v5202
    %v5204 = vpop.f32.mrf.mxu0
    %v5205 = vadd.f32 0.0, %v5204
    %5206 = vdwg.mxu0
    %5207 = vmatpush.bf16.msra.mxu0 %v670
    %5208 = vmatpush.bf16.msra.mxu0 %v669
    %5209 = vmatpush.bf16.msra.mxu0 %v668
    %5210 = vmatpush.bf16.msra.mxu0 %v667
    %5211 = vmatpush.bf16.msra.mxu0 %v666
    %5212 = vmatpush.bf16.msra.mxu0 %v665
    %5213 = vmatpush.bf16.msra.mxu0 %v664
    %5214 = vmatpush.bf16.msra.mxu0 %v663
    %5215 = vmatmul.bf16.gmra.mxu0 %v5095
    %v5216 = vpop.f32.mrf.mxu0
    %v5217 = vadd.f32 %v5168, %v5216
    %v5218 = vpop.f32.mrf.mxu0
    %v5219 = vadd.f32 %v5170, %v5218
    %5220 = vmatmul.bf16.gmra.mxu0 %v5099
    %v5221 = vpop.f32.mrf.mxu0
    %v5222 = vadd.f32 %v5173, %v5221
    %v5223 = vpop.f32.mrf.mxu0
    %v5224 = vadd.f32 %v5175, %v5223
    %5225 = vmatmul.bf16.gmra.mxu0 %v5103
    %v5226 = vpop.f32.mrf.mxu0
    %v5227 = vadd.f32 %v5178, %v5226
    %v5228 = vpop.f32.mrf.mxu0
    %v5229 = vadd.f32 %v5180, %v5228
    %5230 = vmatmul.bf16.gmra.mxu0 %v5107
    %v5231 = vpop.f32.mrf.mxu0
    %v5232 = vadd.f32 %v5183, %v5231
    %v5233 = vpop.f32.mrf.mxu0
    %v5234 = vadd.f32 %v5185, %v5233
    %5235 = vmatmul.bf16.gmra.mxu0 %v5111
    %v5236 = vpop.f32.mrf.mxu0
    %v5237 = vadd.f32 %v5188, %v5236
    %v5238 = vpop.f32.mrf.mxu0
    %v5239 = vadd.f32 %v5190, %v5238
    %5240 = vmatmul.bf16.gmra.mxu0 %v5115
    %v5241 = vpop.f32.mrf.mxu0
    %v5242 = vadd.f32 %v5193, %v5241
    %v5243 = vpop.f32.mrf.mxu0
    %v5244 = vadd.f32 %v5195, %v5243
    %5245 = vmatmul.bf16.gmra.mxu0 %v5119
    %v5246 = vpop.f32.mrf.mxu0
    %v5247 = vadd.f32 %v5198, %v5246
    %v5248 = vpop.f32.mrf.mxu0
    %v5249 = vadd.f32 %v5200, %v5248
    %5250 = vmatmul.bf16.gmra.mxu0 %v5123
    %v5251 = vpop.f32.mrf.mxu0
    %v5252 = vadd.f32 %v5203, %v5251
    %v5253 = vpop.f32.mrf.mxu0
    %v5254 = vadd.f32 %v5205, %v5253
    %5255 = vdwg.mxu0
    %5256 = vmatpush.bf16.msra.mxu0 %v678
    %5257 = vmatpush.bf16.msra.mxu0 %v677
    %5258 = vmatpush.bf16.msra.mxu0 %v676
    %5259 = vmatpush.bf16.msra.mxu0 %v675
    %5260 = vmatpush.bf16.msra.mxu0 %v674
    %5261 = vmatpush.bf16.msra.mxu0 %v673
    %5262 = vmatpush.bf16.msra.mxu0 %v672
    %5263 = vmatpush.bf16.msra.mxu0 %v671
    %5264 = vmatmul.bf16.gmra.mxu0 %v5096
    %v5265 = vpop.f32.mrf.mxu0
    %v5266 = vadd.f32 %v5217, %v5265
    %v5267 = vpop.f32.mrf.mxu0
    %v5268 = vadd.f32 %v5219, %v5267
    %5269 = vmatmul.bf16.gmra.mxu0 %v5100
    %v5270 = vpop.f32.mrf.mxu0
    %v5271 = vadd.f32 %v5222, %v5270
    %v5272 = vpop.f32.mrf.mxu0
    %v5273 = vadd.f32 %v5224, %v5272
    %5274 = vmatmul.bf16.gmra.mxu0 %v5104
    %v5275 = vpop.f32.mrf.mxu0
    %v5276 = vadd.f32 %v5227, %v5275
    %v5277 = vpop.f32.mrf.mxu0
    %v5278 = vadd.f32 %v5229, %v5277
    %5279 = vmatmul.bf16.gmra.mxu0 %v5108
    %v5280 = vpop.f32.mrf.mxu0
    %v5281 = vadd.f32 %v5232, %v5280
    %v5282 = vpop.f32.mrf.mxu0
    %v5283 = vadd.f32 %v5234, %v5282
    %5284 = vmatmul.bf16.gmra.mxu0 %v5112
    %v5285 = vpop.f32.mrf.mxu0
    %v5286 = vadd.f32 %v5237, %v5285
    %v5287 = vpop.f32.mrf.mxu0
    %v5288 = vadd.f32 %v5239, %v5287
    %5289 = vmatmul.bf16.gmra.mxu0 %v5116
    %v5290 = vpop.f32.mrf.mxu0
    %v5291 = vadd.f32 %v5242, %v5290
    %v5292 = vpop.f32.mrf.mxu0
    %v5293 = vadd.f32 %v5244, %v5292
    %5294 = vmatmul.bf16.gmra.mxu0 %v5120
    %v5295 = vpop.f32.mrf.mxu0
    %v5296 = vadd.f32 %v5247, %v5295
    %v5297 = vpop.f32.mrf.mxu0
    %v5298 = vadd.f32 %v5249, %v5297
    %5299 = vmatmul.bf16.gmra.mxu0 %v5124
    %v5300 = vpop.f32.mrf.mxu0
    %v5301 = vadd.f32 %v5252, %v5300
    %v5302 = vpop.f32.mrf.mxu0
    %v5303 = vadd.f32 %v5254, %v5302
    %5304 = vdwg.mxu0
    %5305 = vmatpush.bf16.msra.mxu0 %v686
    %5306 = vmatpush.bf16.msra.mxu0 %v685
    %5307 = vmatpush.bf16.msra.mxu0 %v684
    %5308 = vmatpush.bf16.msra.mxu0 %v683
    %5309 = vmatpush.bf16.msra.mxu0 %v682
    %5310 = vmatpush.bf16.msra.mxu0 %v681
    %5311 = vmatpush.bf16.msra.mxu0 %v680
    %5312 = vmatpush.bf16.msra.mxu0 %v679
    %5313 = vmatmul.bf16.gmra.mxu0 %v5097
    %v5314 = vpop.f32.mrf.mxu0
    %v5315 = vadd.f32 %v5266, %v5314
    %v5316 = vpop.f32.mrf.mxu0
    %v5317 = vadd.f32 %v5268, %v5316
    %5318 = vmatmul.bf16.gmra.mxu0 %v5101
    %v5319 = vpop.f32.mrf.mxu0
    %v5320 = vadd.f32 %v5271, %v5319
    %v5321 = vpop.f32.mrf.mxu0
    %v5322 = vadd.f32 %v5273, %v5321
    %5323 = vmatmul.bf16.gmra.mxu0 %v5105
    %v5324 = vpop.f32.mrf.mxu0
    %v5325 = vadd.f32 %v5276, %v5324
    %v5326 = vpop.f32.mrf.mxu0
    %v5327 = vadd.f32 %v5278, %v5326
    %5328 = vmatmul.bf16.gmra.mxu0 %v5109
    %v5329 = vpop.f32.mrf.mxu0
    %v5330 = vadd.f32 %v5281, %v5329
    %v5331 = vpop.f32.mrf.mxu0
    %v5332 = vadd.f32 %v5283, %v5331
    %5333 = vmatmul.bf16.gmra.mxu0 %v5113
    %v5334 = vpop.f32.mrf.mxu0
    %v5335 = vadd.f32 %v5286, %v5334
    %v5336 = vpop.f32.mrf.mxu0
    %v5337 = vadd.f32 %v5288, %v5336
    %5338 = vmatmul.bf16.gmra.mxu0 %v5117
    %v5339 = vpop.f32.mrf.mxu0
    %v5340 = vadd.f32 %v5291, %v5339
    %v5341 = vpop.f32.mrf.mxu0
    %v5342 = vadd.f32 %v5293, %v5341
    %5343 = vmatmul.bf16.gmra.mxu0 %v5121
    %v5344 = vpop.f32.mrf.mxu0
    %v5345 = vadd.f32 %v5296, %v5344
    %v5346 = vpop.f32.mrf.mxu0
    %v5347 = vadd.f32 %v5298, %v5346
    %5348 = vmatmul.bf16.gmra.mxu0 %v5125
    %v5349 = vpop.f32.mrf.mxu0
    %v5350 = vadd.f32 %v5301, %v5349
    %v5351 = vpop.f32.mrf.mxu0
    %v5352 = vadd.f32 %v5303, %v5351
    %5353 = vdwg.mxu0
    %s5354 = scalar_lea.vmem [#allocation2], 3072
    %v5355 = vld [vmem:[%s5354] sm:$0xff]
    %v5356 = vld [vmem:[%s5354 + $0x8] sm:$0xff]
    %v5357 = vld [vmem:[%s5354 + $0x10] sm:$0xff]
    %v5358 = vld [vmem:[%s5354 + $0x18] sm:$0xff]
    %v5359 = vld [vmem:[%s5354 + $0x20] sm:$0xff]
    %v5360 = vld [vmem:[%s5354 + $0x28] sm:$0xff]
    %v5361 = vld [vmem:[%s5354 + $0x30] sm:$0xff]
    %v5362 = vld [vmem:[%s5354 + $0x38] sm:$0xff]
    %v5363 = vld [vmem:[%s5354 + $0x40] sm:$0xff]
    %v5364 = vld [vmem:[%s5354 + $0x48] sm:$0xff]
    %v5365 = vld [vmem:[%s5354 + $0x50] sm:$0xff]
    %v5366 = vld [vmem:[%s5354 + $0x58] sm:$0xff]
    %v5367 = vld [vmem:[%s5354 + $0x60] sm:$0xff]
    %v5368 = vld [vmem:[%s5354 + $0x68] sm:$0xff]
    %v5369 = vld [vmem:[%s5354 + $0x70] sm:$0xff]
    %v5370 = vld [vmem:[%s5354 + $0x78] sm:$0xff]
    %v5371 = vld [vmem:[%s5354 + $0x80] sm:$0xff]
    %v5372 = vld [vmem:[%s5354 + $0x88] sm:$0xff]
    %v5373 = vld [vmem:[%s5354 + $0x90] sm:$0xff]
    %v5374 = vld [vmem:[%s5354 + $0x98] sm:$0xff]
    %v5375 = vld [vmem:[%s5354 + $0xa0] sm:$0xff]
    %v5376 = vld [vmem:[%s5354 + $0xa8] sm:$0xff]
    %v5377 = vld [vmem:[%s5354 + $0xb0] sm:$0xff]
    %v5378 = vld [vmem:[%s5354 + $0xb8] sm:$0xff]
    %v5379 = vld [vmem:[%s5354 + $0xc0] sm:$0xff]
    %v5380 = vld [vmem:[%s5354 + $0xc8] sm:$0xff]
    %v5381 = vld [vmem:[%s5354 + $0xd0] sm:$0xff]
    %v5382 = vld [vmem:[%s5354 + $0xd8] sm:$0xff]
    %v5383 = vld [vmem:[%s5354 + $0xe0] sm:$0xff]
    %v5384 = vld [vmem:[%s5354 + $0xe8] sm:$0xff]
    %v5385 = vld [vmem:[%s5354 + $0xf0] sm:$0xff]
    %v5386 = vld [vmem:[%s5354 + $0xf8] sm:$0xff]
    %v5419 = vunpack.c.l.b16 %v5355
    %v5420 = vunpack.c.h.b16 %v5355
    %v5421 = vunpack.c.l.b16 %v5356
    %v5422 = vunpack.c.h.b16 %v5356
    %v5423 = vunpack.c.l.b16 %v5357
    %v5424 = vunpack.c.h.b16 %v5357
    %v5425 = vunpack.c.l.b16 %v5358
    %v5426 = vunpack.c.h.b16 %v5358
    %v5427 = vunpack.c.l.b16 %v5359
    %v5428 = vunpack.c.h.b16 %v5359
    %v5429 = vunpack.c.l.b16 %v5360
    %v5430 = vunpack.c.h.b16 %v5360
    %v5431 = vunpack.c.l.b16 %v5361
    %v5432 = vunpack.c.h.b16 %v5361
    %v5433 = vunpack.c.l.b16 %v5362
    %v5434 = vunpack.c.h.b16 %v5362
    %v5435 = vunpack.c.l.b16 %v5363
    %v5436 = vunpack.c.h.b16 %v5363
    %v5437 = vunpack.c.l.b16 %v5364
    %v5438 = vunpack.c.h.b16 %v5364
    %v5439 = vunpack.c.l.b16 %v5365
    %v5440 = vunpack.c.h.b16 %v5365
    %v5441 = vunpack.c.l.b16 %v5366
    %v5442 = vunpack.c.h.b16 %v5366
    %v5443 = vunpack.c.l.b16 %v5367
    %v5444 = vunpack.c.h.b16 %v5367
    %v5445 = vunpack.c.l.b16 %v5368
    %v5446 = vunpack.c.h.b16 %v5368
    %v5447 = vunpack.c.l.b16 %v5369
    %v5448 = vunpack.c.h.b16 %v5369
    %v5449 = vunpack.c.l.b16 %v5370
    %v5450 = vunpack.c.h.b16 %v5370
    %v5451 = vunpack.c.l.b16 %v5371
    %v5452 = vunpack.c.h.b16 %v5371
    %v5453 = vunpack.c.l.b16 %v5372
    %v5454 = vunpack.c.h.b16 %v5372
    %v5455 = vunpack.c.l.b16 %v5373
    %v5456 = vunpack.c.h.b16 %v5373
    %v5457 = vunpack.c.l.b16 %v5374
    %v5458 = vunpack.c.h.b16 %v5374
    %v5459 = vunpack.c.l.b16 %v5375
    %v5460 = vunpack.c.h.b16 %v5375
    %v5461 = vunpack.c.l.b16 %v5376
    %v5462 = vunpack.c.h.b16 %v5376
    %v5463 = vunpack.c.l.b16 %v5377
    %v5464 = vunpack.c.h.b16 %v5377
    %v5465 = vunpack.c.l.b16 %v5378
    %v5466 = vunpack.c.h.b16 %v5378
    %v5467 = vunpack.c.l.b16 %v5379
    %v5468 = vunpack.c.h.b16 %v5379
    %v5469 = vunpack.c.l.b16 %v5380
    %v5470 = vunpack.c.h.b16 %v5380
    %v5471 = vunpack.c.l.b16 %v5381
    %v5472 = vunpack.c.h.b16 %v5381
    %v5473 = vunpack.c.l.b16 %v5382
    %v5474 = vunpack.c.h.b16 %v5382
    %v5475 = vunpack.c.l.b16 %v5383
    %v5476 = vunpack.c.h.b16 %v5383
    %v5477 = vunpack.c.l.b16 %v5384
    %v5478 = vunpack.c.h.b16 %v5384
    %v5479 = vunpack.c.l.b16 %v5385
    %v5480 = vunpack.c.h.b16 %v5385
    %v5481 = vunpack.c.l.b16 %v5386
    %v5482 = vunpack.c.h.b16 %v5386
    %v5483 = vpack.c.b16 %v5423, %v5419
    %v5484 = vpack.c.b16 %v5424, %v5420
    %v5485 = vpack.c.b16 %v5425, %v5421
    %v5486 = vpack.c.b16 %v5426, %v5422
    %v5487 = vpack.c.b16 %v5431, %v5427
    %v5488 = vpack.c.b16 %v5432, %v5428
    %v5489 = vpack.c.b16 %v5433, %v5429
    %v5490 = vpack.c.b16 %v5434, %v5430
    %v5491 = vpack.c.b16 %v5439, %v5435
    %v5492 = vpack.c.b16 %v5440, %v5436
    %v5493 = vpack.c.b16 %v5441, %v5437
    %v5494 = vpack.c.b16 %v5442, %v5438
    %v5495 = vpack.c.b16 %v5447, %v5443
    %v5496 = vpack.c.b16 %v5448, %v5444
    %v5497 = vpack.c.b16 %v5449, %v5445
    %v5498 = vpack.c.b16 %v5450, %v5446
    %v5499 = vpack.c.b16 %v5455, %v5451
    %v5500 = vpack.c.b16 %v5456, %v5452
    %v5501 = vpack.c.b16 %v5457, %v5453
    %v5502 = vpack.c.b16 %v5458, %v5454
    %v5503 = vpack.c.b16 %v5463, %v5459
    %v5504 = vpack.c.b16 %v5464, %v5460
    %v5505 = vpack.c.b16 %v5465, %v5461
    %v5506 = vpack.c.b16 %v5466, %v5462
    %v5507 = vpack.c.b16 %v5471, %v5467
    %v5508 = vpack.c.b16 %v5472, %v5468
    %v5509 = vpack.c.b16 %v5473, %v5469
    %v5510 = vpack.c.b16 %v5474, %v5470
    %v5511 = vpack.c.b16 %v5479, %v5475
    %v5512 = vpack.c.b16 %v5480, %v5476
    %v5513 = vpack.c.b16 %v5481, %v5477
    %v5514 = vpack.c.b16 %v5482, %v5478
    %5547 = vmatpush.bf16.msra.mxu0 %v662
    %5548 = vmatpush.bf16.msra.mxu0 %v661
    %5549 = vmatpush.bf16.msra.mxu0 %v660
    %5550 = vmatpush.bf16.msra.mxu0 %v659
    %5551 = vmatpush.bf16.msra.mxu0 %v658
    %5552 = vmatpush.bf16.msra.mxu0 %v657
    %5553 = vmatpush.bf16.msra.mxu0 %v656
    %5554 = vmatpush.bf16.msra.mxu0 %v655
    %5555 = vmatmul.bf16.gmra.mxu0 %v5483
    %v5556 = vpop.f32.mrf.mxu0
    %v5557 = vadd.f32 0.0, %v5556
    %v5558 = vpop.f32.mrf.mxu0
    %v5559 = vadd.f32 0.0, %v5558
    %5560 = vmatmul.bf16.gmra.mxu0 %v5487
    %v5561 = vpop.f32.mrf.mxu0
    %v5562 = vadd.f32 0.0, %v5561
    %v5563 = vpop.f32.mrf.mxu0
    %v5564 = vadd.f32 0.0, %v5563
    %5565 = vmatmul.bf16.gmra.mxu0 %v5491
    %v5566 = vpop.f32.mrf.mxu0
    %v5567 = vadd.f32 0.0, %v5566
    %v5568 = vpop.f32.mrf.mxu0
    %v5569 = vadd.f32 0.0, %v5568
    %5570 = vmatmul.bf16.gmra.mxu0 %v5495
    %v5571 = vpop.f32.mrf.mxu0
    %v5572 = vadd.f32 0.0, %v5571
    %v5573 = vpop.f32.mrf.mxu0
    %v5574 = vadd.f32 0.0, %v5573
    %5575 = vmatmul.bf16.gmra.mxu0 %v5499
    %v5576 = vpop.f32.mrf.mxu0
    %v5577 = vadd.f32 0.0, %v5576
    %v5578 = vpop.f32.mrf.mxu0
    %v5579 = vadd.f32 0.0, %v5578
    %5580 = vmatmul.bf16.gmra.mxu0 %v5503
    %v5581 = vpop.f32.mrf.mxu0
    %v5582 = vadd.f32 0.0, %v5581
    %v5583 = vpop.f32.mrf.mxu0
    %v5584 = vadd.f32 0.0, %v5583
    %5585 = vmatmul.bf16.gmra.mxu0 %v5507
    %v5586 = vpop.f32.mrf.mxu0
    %v5587 = vadd.f32 0.0, %v5586
    %v5588 = vpop.f32.mrf.mxu0
    %v5589 = vadd.f32 0.0, %v5588
    %5590 = vmatmul.bf16.gmra.mxu0 %v5511
    %v5591 = vpop.f32.mrf.mxu0
    %v5592 = vadd.f32 0.0, %v5591
    %v5593 = vpop.f32.mrf.mxu0
    %v5594 = vadd.f32 0.0, %v5593
    %5595 = vdwg.mxu0
    %5596 = vmatpush.bf16.msra.mxu0 %v670
    %5597 = vmatpush.bf16.msra.mxu0 %v669
    %5598 = vmatpush.bf16.msra.mxu0 %v668
    %5599 = vmatpush.bf16.msra.mxu0 %v667
    %5600 = vmatpush.bf16.msra.mxu0 %v666
    %5601 = vmatpush.bf16.msra.mxu0 %v665
    %5602 = vmatpush.bf16.msra.mxu0 %v664
    %5603 = vmatpush.bf16.msra.mxu0 %v663
    %5604 = vmatmul.bf16.gmra.mxu0 %v5484
    %v5605 = vpop.f32.mrf.mxu0
    %v5606 = vadd.f32 %v5557, %v5605
    %v5607 = vpop.f32.mrf.mxu0
    %v5608 = vadd.f32 %v5559, %v5607
    %5609 = vmatmul.bf16.gmra.mxu0 %v5488
    %v5610 = vpop.f32.mrf.mxu0
    %v5611 = vadd.f32 %v5562, %v5610
    %v5612 = vpop.f32.mrf.mxu0
    %v5613 = vadd.f32 %v5564, %v5612
    %5614 = vmatmul.bf16.gmra.mxu0 %v5492
    %v5615 = vpop.f32.mrf.mxu0
    %v5616 = vadd.f32 %v5567, %v5615
    %v5617 = vpop.f32.mrf.mxu0
    %v5618 = vadd.f32 %v5569, %v5617
    %5619 = vmatmul.bf16.gmra.mxu0 %v5496
    %v5620 = vpop.f32.mrf.mxu0
    %v5621 = vadd.f32 %v5572, %v5620
    %v5622 = vpop.f32.mrf.mxu0
    %v5623 = vadd.f32 %v5574, %v5622
    %5624 = vmatmul.bf16.gmra.mxu0 %v5500
    %v5625 = vpop.f32.mrf.mxu0
    %v5626 = vadd.f32 %v5577, %v5625
    %v5627 = vpop.f32.mrf.mxu0
    %v5628 = vadd.f32 %v5579, %v5627
    %5629 = vmatmul.bf16.gmra.mxu0 %v5504
    %v5630 = vpop.f32.mrf.mxu0
    %v5631 = vadd.f32 %v5582, %v5630
    %v5632 = vpop.f32.mrf.mxu0
    %v5633 = vadd.f32 %v5584, %v5632
    %5634 = vmatmul.bf16.gmra.mxu0 %v5508
    %v5635 = vpop.f32.mrf.mxu0
    %v5636 = vadd.f32 %v5587, %v5635
    %v5637 = vpop.f32.mrf.mxu0
    %v5638 = vadd.f32 %v5589, %v5637
    %5639 = vmatmul.bf16.gmra.mxu0 %v5512
    %v5640 = vpop.f32.mrf.mxu0
    %v5641 = vadd.f32 %v5592, %v5640
    %v5642 = vpop.f32.mrf.mxu0
    %v5643 = vadd.f32 %v5594, %v5642
    %5644 = vdwg.mxu0
    %5645 = vmatpush.bf16.msra.mxu0 %v678
    %5646 = vmatpush.bf16.msra.mxu0 %v677
    %5647 = vmatpush.bf16.msra.mxu0 %v676
    %5648 = vmatpush.bf16.msra.mxu0 %v675
    %5649 = vmatpush.bf16.msra.mxu0 %v674
    %5650 = vmatpush.bf16.msra.mxu0 %v673
    %5651 = vmatpush.bf16.msra.mxu0 %v672
    %5652 = vmatpush.bf16.msra.mxu0 %v671
    %5653 = vmatmul.bf16.gmra.mxu0 %v5485
    %v5654 = vpop.f32.mrf.mxu0
    %v5655 = vadd.f32 %v5606, %v5654
    %v5656 = vpop.f32.mrf.mxu0
    %v5657 = vadd.f32 %v5608, %v5656
    %5658 = vmatmul.bf16.gmra.mxu0 %v5489
    %v5659 = vpop.f32.mrf.mxu0
    %v5660 = vadd.f32 %v5611, %v5659
    %v5661 = vpop.f32.mrf.mxu0
    %v5662 = vadd.f32 %v5613, %v5661
    %5663 = vmatmul.bf16.gmra.mxu0 %v5493
    %v5664 = vpop.f32.mrf.mxu0
    %v5665 = vadd.f32 %v5616, %v5664
    %v5666 = vpop.f32.mrf.mxu0
    %v5667 = vadd.f32 %v5618, %v5666
    %5668 = vmatmul.bf16.gmra.mxu0 %v5497
    %v5669 = vpop.f32.mrf.mxu0
    %v5670 = vadd.f32 %v5621, %v5669
    %v5671 = vpop.f32.mrf.mxu0
    %v5672 = vadd.f32 %v5623, %v5671
    %5673 = vmatmul.bf16.gmra.mxu0 %v5501
    %v5674 = vpop.f32.mrf.mxu0
    %v5675 = vadd.f32 %v5626, %v5674
    %v5676 = vpop.f32.mrf.mxu0
    %v5677 = vadd.f32 %v5628, %v5676
    %5678 = vmatmul.bf16.gmra.mxu0 %v5505
    %v5679 = vpop.f32.mrf.mxu0
    %v5680 = vadd.f32 %v5631, %v5679
    %v5681 = vpop.f32.mrf.mxu0
    %v5682 = vadd.f32 %v5633, %v5681
    %5683 = vmatmul.bf16.gmra.mxu0 %v5509
    %v5684 = vpop.f32.mrf.mxu0
    %v5685 = vadd.f32 %v5636, %v5684
    %v5686 = vpop.f32.mrf.mxu0
    %v5687 = vadd.f32 %v5638, %v5686
    %5688 = vmatmul.bf16.gmra.mxu0 %v5513
    %v5689 = vpop.f32.mrf.mxu0
    %v5690 = vadd.f32 %v5641, %v5689
    %v5691 = vpop.f32.mrf.mxu0
    %v5692 = vadd.f32 %v5643, %v5691
    %5693 = vdwg.mxu0
    %5694 = vmatpush.bf16.msra.mxu0 %v686
    %5695 = vmatpush.bf16.msra.mxu0 %v685
    %5696 = vmatpush.bf16.msra.mxu0 %v684
    %5697 = vmatpush.bf16.msra.mxu0 %v683
    %5698 = vmatpush.bf16.msra.mxu0 %v682
    %5699 = vmatpush.bf16.msra.mxu0 %v681
    %5700 = vmatpush.bf16.msra.mxu0 %v680
    %5701 = vmatpush.bf16.msra.mxu0 %v679
    %5702 = vmatmul.bf16.gmra.mxu0 %v5486
    %v5703 = vpop.f32.mrf.mxu0
    %v5704 = vadd.f32 %v5655, %v5703
    %v5705 = vpop.f32.mrf.mxu0
    %v5706 = vadd.f32 %v5657, %v5705
    %5707 = vmatmul.bf16.gmra.mxu0 %v5490
    %v5708 = vpop.f32.mrf.mxu0
    %v5709 = vadd.f32 %v5660, %v5708
    %v5710 = vpop.f32.mrf.mxu0
    %v5711 = vadd.f32 %v5662, %v5710
    %5712 = vmatmul.bf16.gmra.mxu0 %v5494
    %v5713 = vpop.f32.mrf.mxu0
    %v5714 = vadd.f32 %v5665, %v5713
    %v5715 = vpop.f32.mrf.mxu0
    %v5716 = vadd.f32 %v5667, %v5715
    %5717 = vmatmul.bf16.gmra.mxu0 %v5498
    %v5718 = vpop.f32.mrf.mxu0
    %v5719 = vadd.f32 %v5670, %v5718
    %v5720 = vpop.f32.mrf.mxu0
    %v5721 = vadd.f32 %v5672, %v5720
    %5722 = vmatmul.bf16.gmra.mxu0 %v5502
    %v5723 = vpop.f32.mrf.mxu0
    %v5724 = vadd.f32 %v5675, %v5723
    %v5725 = vpop.f32.mrf.mxu0
    %v5726 = vadd.f32 %v5677, %v5725
    %5727 = vmatmul.bf16.gmra.mxu0 %v5506
    %v5728 = vpop.f32.mrf.mxu0
    %v5729 = vadd.f32 %v5680, %v5728
    %v5730 = vpop.f32.mrf.mxu0
    %v5731 = vadd.f32 %v5682, %v5730
    %5732 = vmatmul.bf16.gmra.mxu0 %v5510
    %v5733 = vpop.f32.mrf.mxu0
    %v5734 = vadd.f32 %v5685, %v5733
    %v5735 = vpop.f32.mrf.mxu0
    %v5736 = vadd.f32 %v5687, %v5735
    %5737 = vmatmul.bf16.gmra.mxu0 %v5514
    %v5738 = vpop.f32.mrf.mxu0
    %v5739 = vadd.f32 %v5690, %v5738
    %v5740 = vpop.f32.mrf.mxu0
    %v5741 = vadd.f32 %v5692, %v5740
    %5742 = vdwg.mxu0
    %s5743 = scalar_lea.vmem [#allocation2], 3328
    %v5744 = vld [vmem:[%s5743] sm:$0xff]
    %v5745 = vld [vmem:[%s5743 + $0x8] sm:$0xff]
    %v5746 = vld [vmem:[%s5743 + $0x10] sm:$0xff]
    %v5747 = vld [vmem:[%s5743 + $0x18] sm:$0xff]
    %v5748 = vld [vmem:[%s5743 + $0x20] sm:$0xff]
    %v5749 = vld [vmem:[%s5743 + $0x28] sm:$0xff]
    %v5750 = vld [vmem:[%s5743 + $0x30] sm:$0xff]
    %v5751 = vld [vmem:[%s5743 + $0x38] sm:$0xff]
    %v5752 = vld [vmem:[%s5743 + $0x40] sm:$0xff]
    %v5753 = vld [vmem:[%s5743 + $0x48] sm:$0xff]
    %v5754 = vld [vmem:[%s5743 + $0x50] sm:$0xff]
    %v5755 = vld [vmem:[%s5743 + $0x58] sm:$0xff]
    %v5756 = vld [vmem:[%s5743 + $0x60] sm:$0xff]
    %v5757 = vld [vmem:[%s5743 + $0x68] sm:$0xff]
    %v5758 = vld [vmem:[%s5743 + $0x70] sm:$0xff]
    %v5759 = vld [vmem:[%s5743 + $0x78] sm:$0xff]
    %v5760 = vld [vmem:[%s5743 + $0x80] sm:$0xff]
    %v5761 = vld [vmem:[%s5743 + $0x88] sm:$0xff]
    %v5762 = vld [vmem:[%s5743 + $0x90] sm:$0xff]
    %v5763 = vld [vmem:[%s5743 + $0x98] sm:$0xff]
    %v5764 = vld [vmem:[%s5743 + $0xa0] sm:$0xff]
    %v5765 = vld [vmem:[%s5743 + $0xa8] sm:$0xff]
    %v5766 = vld [vmem:[%s5743 + $0xb0] sm:$0xff]
    %v5767 = vld [vmem:[%s5743 + $0xb8] sm:$0xff]
    %v5768 = vld [vmem:[%s5743 + $0xc0] sm:$0xff]
    %v5769 = vld [vmem:[%s5743 + $0xc8] sm:$0xff]
    %v5770 = vld [vmem:[%s5743 + $0xd0] sm:$0xff]
    %v5771 = vld [vmem:[%s5743 + $0xd8] sm:$0xff]
    %v5772 = vld [vmem:[%s5743 + $0xe0] sm:$0xff]
    %v5773 = vld [vmem:[%s5743 + $0xe8] sm:$0xff]
    %v5774 = vld [vmem:[%s5743 + $0xf0] sm:$0xff]
    %v5775 = vld [vmem:[%s5743 + $0xf8] sm:$0xff]
    %v5808 = vunpack.c.l.b16 %v5744
    %v5809 = vunpack.c.h.b16 %v5744
    %v5810 = vunpack.c.l.b16 %v5745
    %v5811 = vunpack.c.h.b16 %v5745
    %v5812 = vunpack.c.l.b16 %v5746
    %v5813 = vunpack.c.h.b16 %v5746
    %v5814 = vunpack.c.l.b16 %v5747
    %v5815 = vunpack.c.h.b16 %v5747
    %v5816 = vunpack.c.l.b16 %v5748
    %v5817 = vunpack.c.h.b16 %v5748
    %v5818 = vunpack.c.l.b16 %v5749
    %v5819 = vunpack.c.h.b16 %v5749
    %v5820 = vunpack.c.l.b16 %v5750
    %v5821 = vunpack.c.h.b16 %v5750
    %v5822 = vunpack.c.l.b16 %v5751
    %v5823 = vunpack.c.h.b16 %v5751
    %v5824 = vunpack.c.l.b16 %v5752
    %v5825 = vunpack.c.h.b16 %v5752
    %v5826 = vunpack.c.l.b16 %v5753
    %v5827 = vunpack.c.h.b16 %v5753
    %v5828 = vunpack.c.l.b16 %v5754
    %v5829 = vunpack.c.h.b16 %v5754
    %v5830 = vunpack.c.l.b16 %v5755
    %v5831 = vunpack.c.h.b16 %v5755
    %v5832 = vunpack.c.l.b16 %v5756
    %v5833 = vunpack.c.h.b16 %v5756
    %v5834 = vunpack.c.l.b16 %v5757
    %v5835 = vunpack.c.h.b16 %v5757
    %v5836 = vunpack.c.l.b16 %v5758
    %v5837 = vunpack.c.h.b16 %v5758
    %v5838 = vunpack.c.l.b16 %v5759
    %v5839 = vunpack.c.h.b16 %v5759
    %v5840 = vunpack.c.l.b16 %v5760
    %v5841 = vunpack.c.h.b16 %v5760
    %v5842 = vunpack.c.l.b16 %v5761
    %v5843 = vunpack.c.h.b16 %v5761
    %v5844 = vunpack.c.l.b16 %v5762
    %v5845 = vunpack.c.h.b16 %v5762
    %v5846 = vunpack.c.l.b16 %v5763
    %v5847 = vunpack.c.h.b16 %v5763
    %v5848 = vunpack.c.l.b16 %v5764
    %v5849 = vunpack.c.h.b16 %v5764
    %v5850 = vunpack.c.l.b16 %v5765
    %v5851 = vunpack.c.h.b16 %v5765
    %v5852 = vunpack.c.l.b16 %v5766
    %v5853 = vunpack.c.h.b16 %v5766
    %v5854 = vunpack.c.l.b16 %v5767
    %v5855 = vunpack.c.h.b16 %v5767
    %v5856 = vunpack.c.l.b16 %v5768
    %v5857 = vunpack.c.h.b16 %v5768
    %v5858 = vunpack.c.l.b16 %v5769
    %v5859 = vunpack.c.h.b16 %v5769
    %v5860 = vunpack.c.l.b16 %v5770
    %v5861 = vunpack.c.h.b16 %v5770
    %v5862 = vunpack.c.l.b16 %v5771
    %v5863 = vunpack.c.h.b16 %v5771
    %v5864 = vunpack.c.l.b16 %v5772
    %v5865 = vunpack.c.h.b16 %v5772
    %v5866 = vunpack.c.l.b16 %v5773
    %v5867 = vunpack.c.h.b16 %v5773
    %v5868 = vunpack.c.l.b16 %v5774
    %v5869 = vunpack.c.h.b16 %v5774
    %v5870 = vunpack.c.l.b16 %v5775
    %v5871 = vunpack.c.h.b16 %v5775
    %v5872 = vpack.c.b16 %v5812, %v5808
    %v5873 = vpack.c.b16 %v5813, %v5809
    %v5874 = vpack.c.b16 %v5814, %v5810
    %v5875 = vpack.c.b16 %v5815, %v5811
    %v5876 = vpack.c.b16 %v5820, %v5816
    %v5877 = vpack.c.b16 %v5821, %v5817
    %v5878 = vpack.c.b16 %v5822, %v5818
    %v5879 = vpack.c.b16 %v5823, %v5819
    %v5880 = vpack.c.b16 %v5828, %v5824
    %v5881 = vpack.c.b16 %v5829, %v5825
    %v5882 = vpack.c.b16 %v5830, %v5826
    %v5883 = vpack.c.b16 %v5831, %v5827
    %v5884 = vpack.c.b16 %v5836, %v5832
    %v5885 = vpack.c.b16 %v5837, %v5833
    %v5886 = vpack.c.b16 %v5838, %v5834
    %v5887 = vpack.c.b16 %v5839, %v5835
    %v5888 = vpack.c.b16 %v5844, %v5840
    %v5889 = vpack.c.b16 %v5845, %v5841
    %v5890 = vpack.c.b16 %v5846, %v5842
    %v5891 = vpack.c.b16 %v5847, %v5843
    %v5892 = vpack.c.b16 %v5852, %v5848
    %v5893 = vpack.c.b16 %v5853, %v5849
    %v5894 = vpack.c.b16 %v5854, %v5850
    %v5895 = vpack.c.b16 %v5855, %v5851
    %v5896 = vpack.c.b16 %v5860, %v5856
    %v5897 = vpack.c.b16 %v5861, %v5857
    %v5898 = vpack.c.b16 %v5862, %v5858
    %v5899 = vpack.c.b16 %v5863, %v5859
    %v5900 = vpack.c.b16 %v5868, %v5864
    %v5901 = vpack.c.b16 %v5869, %v5865
    %v5902 = vpack.c.b16 %v5870, %v5866
    %v5903 = vpack.c.b16 %v5871, %v5867
    %5936 = vmatpush.bf16.msra.mxu0 %v662
    %5937 = vmatpush.bf16.msra.mxu0 %v661
    %5938 = vmatpush.bf16.msra.mxu0 %v660
    %5939 = vmatpush.bf16.msra.mxu0 %v659
    %5940 = vmatpush.bf16.msra.mxu0 %v658
    %5941 = vmatpush.bf16.msra.mxu0 %v657
    %5942 = vmatpush.bf16.msra.mxu0 %v656
    %5943 = vmatpush.bf16.msra.mxu0 %v655
    %5944 = vmatmul.bf16.gmra.mxu0 %v5872
    %v5945 = vpop.f32.mrf.mxu0
    %v5946 = vadd.f32 0.0, %v5945
    %v5947 = vpop.f32.mrf.mxu0
    %v5948 = vadd.f32 0.0, %v5947
    %5949 = vmatmul.bf16.gmra.mxu0 %v5876
    %v5950 = vpop.f32.mrf.mxu0
    %v5951 = vadd.f32 0.0, %v5950
    %v5952 = vpop.f32.mrf.mxu0
    %v5953 = vadd.f32 0.0, %v5952
    %5954 = vmatmul.bf16.gmra.mxu0 %v5880
    %v5955 = vpop.f32.mrf.mxu0
    %v5956 = vadd.f32 0.0, %v5955
    %v5957 = vpop.f32.mrf.mxu0
    %v5958 = vadd.f32 0.0, %v5957
    %5959 = vmatmul.bf16.gmra.mxu0 %v5884
    %v5960 = vpop.f32.mrf.mxu0
    %v5961 = vadd.f32 0.0, %v5960
    %v5962 = vpop.f32.mrf.mxu0
    %v5963 = vadd.f32 0.0, %v5962
    %5964 = vmatmul.bf16.gmra.mxu0 %v5888
    %v5965 = vpop.f32.mrf.mxu0
    %v5966 = vadd.f32 0.0, %v5965
    %v5967 = vpop.f32.mrf.mxu0
    %v5968 = vadd.f32 0.0, %v5967
    %5969 = vmatmul.bf16.gmra.mxu0 %v5892
    %v5970 = vpop.f32.mrf.mxu0
    %v5971 = vadd.f32 0.0, %v5970
    %v5972 = vpop.f32.mrf.mxu0
    %v5973 = vadd.f32 0.0, %v5972
    %5974 = vmatmul.bf16.gmra.mxu0 %v5896
    %v5975 = vpop.f32.mrf.mxu0
    %v5976 = vadd.f32 0.0, %v5975
    %v5977 = vpop.f32.mrf.mxu0
    %v5978 = vadd.f32 0.0, %v5977
    %5979 = vmatmul.bf16.gmra.mxu0 %v5900
    %v5980 = vpop.f32.mrf.mxu0
    %v5981 = vadd.f32 0.0, %v5980
    %v5982 = vpop.f32.mrf.mxu0
    %v5983 = vadd.f32 0.0, %v5982
    %5984 = vdwg.mxu0
    %5985 = vmatpush.bf16.msra.mxu0 %v670
    %5986 = vmatpush.bf16.msra.mxu0 %v669
    %5987 = vmatpush.bf16.msra.mxu0 %v668
    %5988 = vmatpush.bf16.msra.mxu0 %v667
    %5989 = vmatpush.bf16.msra.mxu0 %v666
    %5990 = vmatpush.bf16.msra.mxu0 %v665
    %5991 = vmatpush.bf16.msra.mxu0 %v664
    %5992 = vmatpush.bf16.msra.mxu0 %v663
    %5993 = vmatmul.bf16.gmra.mxu0 %v5873
    %v5994 = vpop.f32.mrf.mxu0
    %v5995 = vadd.f32 %v5946, %v5994
    %v5996 = vpop.f32.mrf.mxu0
    %v5997 = vadd.f32 %v5948, %v5996
    %5998 = vmatmul.bf16.gmra.mxu0 %v5877
    %v5999 = vpop.f32.mrf.mxu0
    %v6000 = vadd.f32 %v5951, %v5999
    %v6001 = vpop.f32.mrf.mxu0
    %v6002 = vadd.f32 %v5953, %v6001
    %6003 = vmatmul.bf16.gmra.mxu0 %v5881
    %v6004 = vpop.f32.mrf.mxu0
    %v6005 = vadd.f32 %v5956, %v6004
    %v6006 = vpop.f32.mrf.mxu0
    %v6007 = vadd.f32 %v5958, %v6006
    %6008 = vmatmul.bf16.gmra.mxu0 %v5885
    %v6009 = vpop.f32.mrf.mxu0
    %v6010 = vadd.f32 %v5961, %v6009
    %v6011 = vpop.f32.mrf.mxu0
    %v6012 = vadd.f32 %v5963, %v6011
    %6013 = vmatmul.bf16.gmra.mxu0 %v5889
    %v6014 = vpop.f32.mrf.mxu0
    %v6015 = vadd.f32 %v5966, %v6014
    %v6016 = vpop.f32.mrf.mxu0
    %v6017 = vadd.f32 %v5968, %v6016
    %6018 = vmatmul.bf16.gmra.mxu0 %v5893
    %v6019 = vpop.f32.mrf.mxu0
    %v6020 = vadd.f32 %v5971, %v6019
    %v6021 = vpop.f32.mrf.mxu0
    %v6022 = vadd.f32 %v5973, %v6021
    %6023 = vmatmul.bf16.gmra.mxu0 %v5897
    %v6024 = vpop.f32.mrf.mxu0
    %v6025 = vadd.f32 %v5976, %v6024
    %v6026 = vpop.f32.mrf.mxu0
    %v6027 = vadd.f32 %v5978, %v6026
    %6028 = vmatmul.bf16.gmra.mxu0 %v5901
    %v6029 = vpop.f32.mrf.mxu0
    %v6030 = vadd.f32 %v5981, %v6029
    %v6031 = vpop.f32.mrf.mxu0
    %v6032 = vadd.f32 %v5983, %v6031
    %6033 = vdwg.mxu0
    %6034 = vmatpush.bf16.msra.mxu0 %v678
    %6035 = vmatpush.bf16.msra.mxu0 %v677
    %6036 = vmatpush.bf16.msra.mxu0 %v676
    %6037 = vmatpush.bf16.msra.mxu0 %v675
    %6038 = vmatpush.bf16.msra.mxu0 %v674
    %6039 = vmatpush.bf16.msra.mxu0 %v673
    %6040 = vmatpush.bf16.msra.mxu0 %v672
    %6041 = vmatpush.bf16.msra.mxu0 %v671
    %6042 = vmatmul.bf16.gmra.mxu0 %v5874
    %v6043 = vpop.f32.mrf.mxu0
    %v6044 = vadd.f32 %v5995, %v6043
    %v6045 = vpop.f32.mrf.mxu0
    %v6046 = vadd.f32 %v5997, %v6045
    %6047 = vmatmul.bf16.gmra.mxu0 %v5878
    %v6048 = vpop.f32.mrf.mxu0
    %v6049 = vadd.f32 %v6000, %v6048
    %v6050 = vpop.f32.mrf.mxu0
    %v6051 = vadd.f32 %v6002, %v6050
    %6052 = vmatmul.bf16.gmra.mxu0 %v5882
    %v6053 = vpop.f32.mrf.mxu0
    %v6054 = vadd.f32 %v6005, %v6053
    %v6055 = vpop.f32.mrf.mxu0
    %v6056 = vadd.f32 %v6007, %v6055
    %6057 = vmatmul.bf16.gmra.mxu0 %v5886
    %v6058 = vpop.f32.mrf.mxu0
    %v6059 = vadd.f32 %v6010, %v6058
    %v6060 = vpop.f32.mrf.mxu0
    %v6061 = vadd.f32 %v6012, %v6060
    %6062 = vmatmul.bf16.gmra.mxu0 %v5890
    %v6063 = vpop.f32.mrf.mxu0
    %v6064 = vadd.f32 %v6015, %v6063
    %v6065 = vpop.f32.mrf.mxu0
    %v6066 = vadd.f32 %v6017, %v6065
    %6067 = vmatmul.bf16.gmra.mxu0 %v5894
    %v6068 = vpop.f32.mrf.mxu0
    %v6069 = vadd.f32 %v6020, %v6068
    %v6070 = vpop.f32.mrf.mxu0
    %v6071 = vadd.f32 %v6022, %v6070
    %6072 = vmatmul.bf16.gmra.mxu0 %v5898
    %v6073 = vpop.f32.mrf.mxu0
    %v6074 = vadd.f32 %v6025, %v6073
    %v6075 = vpop.f32.mrf.mxu0
    %v6076 = vadd.f32 %v6027, %v6075
    %6077 = vmatmul.bf16.gmra.mxu0 %v5902
    %v6078 = vpop.f32.mrf.mxu0
    %v6079 = vadd.f32 %v6030, %v6078
    %v6080 = vpop.f32.mrf.mxu0
    %v6081 = vadd.f32 %v6032, %v6080
    %6082 = vdwg.mxu0
    %6083 = vmatpush.bf16.msra.mxu0 %v686
    %6084 = vmatpush.bf16.msra.mxu0 %v685
    %6085 = vmatpush.bf16.msra.mxu0 %v684
    %6086 = vmatpush.bf16.msra.mxu0 %v683
    %6087 = vmatpush.bf16.msra.mxu0 %v682
    %6088 = vmatpush.bf16.msra.mxu0 %v681
    %6089 = vmatpush.bf16.msra.mxu0 %v680
    %6090 = vmatpush.bf16.msra.mxu0 %v679
    %6091 = vmatmul.bf16.gmra.mxu0 %v5875
    %v6092 = vpop.f32.mrf.mxu0
    %v6093 = vadd.f32 %v6044, %v6092
    %v6094 = vpop.f32.mrf.mxu0
    %v6095 = vadd.f32 %v6046, %v6094
    %6096 = vmatmul.bf16.gmra.mxu0 %v5879
    %v6097 = vpop.f32.mrf.mxu0
    %v6098 = vadd.f32 %v6049, %v6097
    %v6099 = vpop.f32.mrf.mxu0
    %v6100 = vadd.f32 %v6051, %v6099
    %6101 = vmatmul.bf16.gmra.mxu0 %v5883
    %v6102 = vpop.f32.mrf.mxu0
    %v6103 = vadd.f32 %v6054, %v6102
    %v6104 = vpop.f32.mrf.mxu0
    %v6105 = vadd.f32 %v6056, %v6104
    %6106 = vmatmul.bf16.gmra.mxu0 %v5887
    %v6107 = vpop.f32.mrf.mxu0
    %v6108 = vadd.f32 %v6059, %v6107
    %v6109 = vpop.f32.mrf.mxu0
    %v6110 = vadd.f32 %v6061, %v6109
    %6111 = vmatmul.bf16.gmra.mxu0 %v5891
    %v6112 = vpop.f32.mrf.mxu0
    %v6113 = vadd.f32 %v6064, %v6112
    %v6114 = vpop.f32.mrf.mxu0
    %v6115 = vadd.f32 %v6066, %v6114
    %6116 = vmatmul.bf16.gmra.mxu0 %v5895
    %v6117 = vpop.f32.mrf.mxu0
    %v6118 = vadd.f32 %v6069, %v6117
    %v6119 = vpop.f32.mrf.mxu0
    %v6120 = vadd.f32 %v6071, %v6119
    %6121 = vmatmul.bf16.gmra.mxu0 %v5899
    %v6122 = vpop.f32.mrf.mxu0
    %v6123 = vadd.f32 %v6074, %v6122
    %v6124 = vpop.f32.mrf.mxu0
    %v6125 = vadd.f32 %v6076, %v6124
    %6126 = vmatmul.bf16.gmra.mxu0 %v5903
    %v6127 = vpop.f32.mrf.mxu0
    %v6128 = vadd.f32 %v6079, %v6127
    %v6129 = vpop.f32.mrf.mxu0
    %v6130 = vadd.f32 %v6081, %v6129
    %6131 = vdwg.mxu0
    %s6132 = scalar_lea.vmem [#allocation2], 3584
    %v6133 = vld [vmem:[%s6132] sm:$0xff]
    %v6134 = vld [vmem:[%s6132 + $0x8] sm:$0xff]
    %v6135 = vld [vmem:[%s6132 + $0x10] sm:$0xff]
    %v6136 = vld [vmem:[%s6132 + $0x18] sm:$0xff]
    %v6137 = vld [vmem:[%s6132 + $0x20] sm:$0xff]
    %v6138 = vld [vmem:[%s6132 + $0x28] sm:$0xff]
    %v6139 = vld [vmem:[%s6132 + $0x30] sm:$0xff]
    %v6140 = vld [vmem:[%s6132 + $0x38] sm:$0xff]
    %v6141 = vld [vmem:[%s6132 + $0x40] sm:$0xff]
    %v6142 = vld [vmem:[%s6132 + $0x48] sm:$0xff]
    %v6143 = vld [vmem:[%s6132 + $0x50] sm:$0xff]
    %v6144 = vld [vmem:[%s6132 + $0x58] sm:$0xff]
    %v6145 = vld [vmem:[%s6132 + $0x60] sm:$0xff]
    %v6146 = vld [vmem:[%s6132 + $0x68] sm:$0xff]
    %v6147 = vld [vmem:[%s6132 + $0x70] sm:$0xff]
    %v6148 = vld [vmem:[%s6132 + $0x78] sm:$0xff]
    %v6149 = vld [vmem:[%s6132 + $0x80] sm:$0xff]
    %v6150 = vld [vmem:[%s6132 + $0x88] sm:$0xff]
    %v6151 = vld [vmem:[%s6132 + $0x90] sm:$0xff]
    %v6152 = vld [vmem:[%s6132 + $0x98] sm:$0xff]
    %v6153 = vld [vmem:[%s6132 + $0xa0] sm:$0xff]
    %v6154 = vld [vmem:[%s6132 + $0xa8] sm:$0xff]
    %v6155 = vld [vmem:[%s6132 + $0xb0] sm:$0xff]
    %v6156 = vld [vmem:[%s6132 + $0xb8] sm:$0xff]
    %v6157 = vld [vmem:[%s6132 + $0xc0] sm:$0xff]
    %v6158 = vld [vmem:[%s6132 + $0xc8] sm:$0xff]
    %v6159 = vld [vmem:[%s6132 + $0xd0] sm:$0xff]
    %v6160 = vld [vmem:[%s6132 + $0xd8] sm:$0xff]
    %v6161 = vld [vmem:[%s6132 + $0xe0] sm:$0xff]
    %v6162 = vld [vmem:[%s6132 + $0xe8] sm:$0xff]
    %v6163 = vld [vmem:[%s6132 + $0xf0] sm:$0xff]
    %v6164 = vld [vmem:[%s6132 + $0xf8] sm:$0xff]
    %v6197 = vunpack.c.l.b16 %v6133
    %v6198 = vunpack.c.h.b16 %v6133
    %v6199 = vunpack.c.l.b16 %v6134
    %v6200 = vunpack.c.h.b16 %v6134
    %v6201 = vunpack.c.l.b16 %v6135
    %v6202 = vunpack.c.h.b16 %v6135
    %v6203 = vunpack.c.l.b16 %v6136
    %v6204 = vunpack.c.h.b16 %v6136
    %v6205 = vunpack.c.l.b16 %v6137
    %v6206 = vunpack.c.h.b16 %v6137
    %v6207 = vunpack.c.l.b16 %v6138
    %v6208 = vunpack.c.h.b16 %v6138
    %v6209 = vunpack.c.l.b16 %v6139
    %v6210 = vunpack.c.h.b16 %v6139
    %v6211 = vunpack.c.l.b16 %v6140
    %v6212 = vunpack.c.h.b16 %v6140
    %v6213 = vunpack.c.l.b16 %v6141
    %v6214 = vunpack.c.h.b16 %v6141
    %v6215 = vunpack.c.l.b16 %v6142
    %v6216 = vunpack.c.h.b16 %v6142
    %v6217 = vunpack.c.l.b16 %v6143
    %v6218 = vunpack.c.h.b16 %v6143
    %v6219 = vunpack.c.l.b16 %v6144
    %v6220 = vunpack.c.h.b16 %v6144
    %v6221 = vunpack.c.l.b16 %v6145
    %v6222 = vunpack.c.h.b16 %v6145
    %v6223 = vunpack.c.l.b16 %v6146
    %v6224 = vunpack.c.h.b16 %v6146
    %v6225 = vunpack.c.l.b16 %v6147
    %v6226 = vunpack.c.h.b16 %v6147
    %v6227 = vunpack.c.l.b16 %v6148
    %v6228 = vunpack.c.h.b16 %v6148
    %v6229 = vunpack.c.l.b16 %v6149
    %v6230 = vunpack.c.h.b16 %v6149
    %v6231 = vunpack.c.l.b16 %v6150
    %v6232 = vunpack.c.h.b16 %v6150
    %v6233 = vunpack.c.l.b16 %v6151
    %v6234 = vunpack.c.h.b16 %v6151
    %v6235 = vunpack.c.l.b16 %v6152
    %v6236 = vunpack.c.h.b16 %v6152
    %v6237 = vunpack.c.l.b16 %v6153
    %v6238 = vunpack.c.h.b16 %v6153
    %v6239 = vunpack.c.l.b16 %v6154
    %v6240 = vunpack.c.h.b16 %v6154
    %v6241 = vunpack.c.l.b16 %v6155
    %v6242 = vunpack.c.h.b16 %v6155
    %v6243 = vunpack.c.l.b16 %v6156
    %v6244 = vunpack.c.h.b16 %v6156
    %v6245 = vunpack.c.l.b16 %v6157
    %v6246 = vunpack.c.h.b16 %v6157
    %v6247 = vunpack.c.l.b16 %v6158
    %v6248 = vunpack.c.h.b16 %v6158
    %v6249 = vunpack.c.l.b16 %v6159
    %v6250 = vunpack.c.h.b16 %v6159
    %v6251 = vunpack.c.l.b16 %v6160
    %v6252 = vunpack.c.h.b16 %v6160
    %v6253 = vunpack.c.l.b16 %v6161
    %v6254 = vunpack.c.h.b16 %v6161
    %v6255 = vunpack.c.l.b16 %v6162
    %v6256 = vunpack.c.h.b16 %v6162
    %v6257 = vunpack.c.l.b16 %v6163
    %v6258 = vunpack.c.h.b16 %v6163
    %v6259 = vunpack.c.l.b16 %v6164
    %v6260 = vunpack.c.h.b16 %v6164
    %v6261 = vpack.c.b16 %v6201, %v6197
    %v6262 = vpack.c.b16 %v6202, %v6198
    %v6263 = vpack.c.b16 %v6203, %v6199
    %v6264 = vpack.c.b16 %v6204, %v6200
    %v6265 = vpack.c.b16 %v6209, %v6205
    %v6266 = vpack.c.b16 %v6210, %v6206
    %v6267 = vpack.c.b16 %v6211, %v6207
    %v6268 = vpack.c.b16 %v6212, %v6208
    %v6269 = vpack.c.b16 %v6217, %v6213
    %v6270 = vpack.c.b16 %v6218, %v6214
    %v6271 = vpack.c.b16 %v6219, %v6215
    %v6272 = vpack.c.b16 %v6220, %v6216
    %v6273 = vpack.c.b16 %v6225, %v6221
    %v6274 = vpack.c.b16 %v6226, %v6222
    %v6275 = vpack.c.b16 %v6227, %v6223
    %v6276 = vpack.c.b16 %v6228, %v6224
    %v6277 = vpack.c.b16 %v6233, %v6229
    %v6278 = vpack.c.b16 %v6234, %v6230
    %v6279 = vpack.c.b16 %v6235, %v6231
    %v6280 = vpack.c.b16 %v6236, %v6232
    %v6281 = vpack.c.b16 %v6241, %v6237
    %v6282 = vpack.c.b16 %v6242, %v6238
    %v6283 = vpack.c.b16 %v6243, %v6239
    %v6284 = vpack.c.b16 %v6244, %v6240
    %v6285 = vpack.c.b16 %v6249, %v6245
    %v6286 = vpack.c.b16 %v6250, %v6246
    %v6287 = vpack.c.b16 %v6251, %v6247
    %v6288 = vpack.c.b16 %v6252, %v6248
    %v6289 = vpack.c.b16 %v6257, %v6253
    %v6290 = vpack.c.b16 %v6258, %v6254
    %v6291 = vpack.c.b16 %v6259, %v6255
    %v6292 = vpack.c.b16 %v6260, %v6256
    %6325 = vmatpush.bf16.msra.mxu0 %v662
    %6326 = vmatpush.bf16.msra.mxu0 %v661
    %6327 = vmatpush.bf16.msra.mxu0 %v660
    %6328 = vmatpush.bf16.msra.mxu0 %v659
    %6329 = vmatpush.bf16.msra.mxu0 %v658
    %6330 = vmatpush.bf16.msra.mxu0 %v657
    %6331 = vmatpush.bf16.msra.mxu0 %v656
    %6332 = vmatpush.bf16.msra.mxu0 %v655
    %6333 = vmatmul.bf16.gmra.mxu0 %v6261
    %v6334 = vpop.f32.mrf.mxu0
    %v6335 = vadd.f32 0.0, %v6334
    %v6336 = vpop.f32.mrf.mxu0
    %v6337 = vadd.f32 0.0, %v6336
    %6338 = vmatmul.bf16.gmra.mxu0 %v6265
    %v6339 = vpop.f32.mrf.mxu0
    %v6340 = vadd.f32 0.0, %v6339
    %v6341 = vpop.f32.mrf.mxu0
    %v6342 = vadd.f32 0.0, %v6341
    %6343 = vmatmul.bf16.gmra.mxu0 %v6269
    %v6344 = vpop.f32.mrf.mxu0
    %v6345 = vadd.f32 0.0, %v6344
    %v6346 = vpop.f32.mrf.mxu0
    %v6347 = vadd.f32 0.0, %v6346
    %6348 = vmatmul.bf16.gmra.mxu0 %v6273
    %v6349 = vpop.f32.mrf.mxu0
    %v6350 = vadd.f32 0.0, %v6349
    %v6351 = vpop.f32.mrf.mxu0
    %v6352 = vadd.f32 0.0, %v6351
    %6353 = vmatmul.bf16.gmra.mxu0 %v6277
    %v6354 = vpop.f32.mrf.mxu0
    %v6355 = vadd.f32 0.0, %v6354
    %v6356 = vpop.f32.mrf.mxu0
    %v6357 = vadd.f32 0.0, %v6356
    %6358 = vmatmul.bf16.gmra.mxu0 %v6281
    %v6359 = vpop.f32.mrf.mxu0
    %v6360 = vadd.f32 0.0, %v6359
    %v6361 = vpop.f32.mrf.mxu0
    %v6362 = vadd.f32 0.0, %v6361
    %6363 = vmatmul.bf16.gmra.mxu0 %v6285
    %v6364 = vpop.f32.mrf.mxu0
    %v6365 = vadd.f32 0.0, %v6364
    %v6366 = vpop.f32.mrf.mxu0
    %v6367 = vadd.f32 0.0, %v6366
    %6368 = vmatmul.bf16.gmra.mxu0 %v6289
    %v6369 = vpop.f32.mrf.mxu0
    %v6370 = vadd.f32 0.0, %v6369
    %v6371 = vpop.f32.mrf.mxu0
    %v6372 = vadd.f32 0.0, %v6371
    %6373 = vdwg.mxu0
    %6374 = vmatpush.bf16.msra.mxu0 %v670
    %6375 = vmatpush.bf16.msra.mxu0 %v669
    %6376 = vmatpush.bf16.msra.mxu0 %v668
    %6377 = vmatpush.bf16.msra.mxu0 %v667
    %6378 = vmatpush.bf16.msra.mxu0 %v666
    %6379 = vmatpush.bf16.msra.mxu0 %v665
    %6380 = vmatpush.bf16.msra.mxu0 %v664
    %6381 = vmatpush.bf16.msra.mxu0 %v663
    %6382 = vmatmul.bf16.gmra.mxu0 %v6262
    %v6383 = vpop.f32.mrf.mxu0
    %v6384 = vadd.f32 %v6335, %v6383
    %v6385 = vpop.f32.mrf.mxu0
    %v6386 = vadd.f32 %v6337, %v6385
    %6387 = vmatmul.bf16.gmra.mxu0 %v6266
    %v6388 = vpop.f32.mrf.mxu0
    %v6389 = vadd.f32 %v6340, %v6388
    %v6390 = vpop.f32.mrf.mxu0
    %v6391 = vadd.f32 %v6342, %v6390
    %6392 = vmatmul.bf16.gmra.mxu0 %v6270
    %v6393 = vpop.f32.mrf.mxu0
    %v6394 = vadd.f32 %v6345, %v6393
    %v6395 = vpop.f32.mrf.mxu0
    %v6396 = vadd.f32 %v6347, %v6395
    %6397 = vmatmul.bf16.gmra.mxu0 %v6274
    %v6398 = vpop.f32.mrf.mxu0
    %v6399 = vadd.f32 %v6350, %v6398
    %v6400 = vpop.f32.mrf.mxu0
    %v6401 = vadd.f32 %v6352, %v6400
    %6402 = vmatmul.bf16.gmra.mxu0 %v6278
    %v6403 = vpop.f32.mrf.mxu0
    %v6404 = vadd.f32 %v6355, %v6403
    %v6405 = vpop.f32.mrf.mxu0
    %v6406 = vadd.f32 %v6357, %v6405
    %6407 = vmatmul.bf16.gmra.mxu0 %v6282
    %v6408 = vpop.f32.mrf.mxu0
    %v6409 = vadd.f32 %v6360, %v6408
    %v6410 = vpop.f32.mrf.mxu0
    %v6411 = vadd.f32 %v6362, %v6410
    %6412 = vmatmul.bf16.gmra.mxu0 %v6286
    %v6413 = vpop.f32.mrf.mxu0
    %v6414 = vadd.f32 %v6365, %v6413
    %v6415 = vpop.f32.mrf.mxu0
    %v6416 = vadd.f32 %v6367, %v6415
    %6417 = vmatmul.bf16.gmra.mxu0 %v6290
    %v6418 = vpop.f32.mrf.mxu0
    %v6419 = vadd.f32 %v6370, %v6418
    %v6420 = vpop.f32.mrf.mxu0
    %v6421 = vadd.f32 %v6372, %v6420
    %6422 = vdwg.mxu0
    %6423 = vmatpush.bf16.msra.mxu0 %v678
    %6424 = vmatpush.bf16.msra.mxu0 %v677
    %6425 = vmatpush.bf16.msra.mxu0 %v676
    %6426 = vmatpush.bf16.msra.mxu0 %v675
    %6427 = vmatpush.bf16.msra.mxu0 %v674
    %6428 = vmatpush.bf16.msra.mxu0 %v673
    %6429 = vmatpush.bf16.msra.mxu0 %v672
    %6430 = vmatpush.bf16.msra.mxu0 %v671
    %6431 = vmatmul.bf16.gmra.mxu0 %v6263
    %v6432 = vpop.f32.mrf.mxu0
    %v6433 = vadd.f32 %v6384, %v6432
    %v6434 = vpop.f32.mrf.mxu0
    %v6435 = vadd.f32 %v6386, %v6434
    %6436 = vmatmul.bf16.gmra.mxu0 %v6267
    %v6437 = vpop.f32.mrf.mxu0
    %v6438 = vadd.f32 %v6389, %v6437
    %v6439 = vpop.f32.mrf.mxu0
    %v6440 = vadd.f32 %v6391, %v6439
    %6441 = vmatmul.bf16.gmra.mxu0 %v6271
    %v6442 = vpop.f32.mrf.mxu0
    %v6443 = vadd.f32 %v6394, %v6442
    %v6444 = vpop.f32.mrf.mxu0
    %v6445 = vadd.f32 %v6396, %v6444
    %6446 = vmatmul.bf16.gmra.mxu0 %v6275
    %v6447 = vpop.f32.mrf.mxu0
    %v6448 = vadd.f32 %v6399, %v6447
    %v6449 = vpop.f32.mrf.mxu0
    %v6450 = vadd.f32 %v6401, %v6449
    %6451 = vmatmul.bf16.gmra.mxu0 %v6279
    %v6452 = vpop.f32.mrf.mxu0
    %v6453 = vadd.f32 %v6404, %v6452
    %v6454 = vpop.f32.mrf.mxu0
    %v6455 = vadd.f32 %v6406, %v6454
    %6456 = vmatmul.bf16.gmra.mxu0 %v6283
    %v6457 = vpop.f32.mrf.mxu0
    %v6458 = vadd.f32 %v6409, %v6457
    %v6459 = vpop.f32.mrf.mxu0
    %v6460 = vadd.f32 %v6411, %v6459
    %6461 = vmatmul.bf16.gmra.mxu0 %v6287
    %v6462 = vpop.f32.mrf.mxu0
    %v6463 = vadd.f32 %v6414, %v6462
    %v6464 = vpop.f32.mrf.mxu0
    %v6465 = vadd.f32 %v6416, %v6464
    %6466 = vmatmul.bf16.gmra.mxu0 %v6291
    %v6467 = vpop.f32.mrf.mxu0
    %v6468 = vadd.f32 %v6419, %v6467
    %v6469 = vpop.f32.mrf.mxu0
    %v6470 = vadd.f32 %v6421, %v6469
    %6471 = vdwg.mxu0
    %6472 = vmatpush.bf16.msra.mxu0 %v686
    %6473 = vmatpush.bf16.msra.mxu0 %v685
    %6474 = vmatpush.bf16.msra.mxu0 %v684
    %6475 = vmatpush.bf16.msra.mxu0 %v683
    %6476 = vmatpush.bf16.msra.mxu0 %v682
    %6477 = vmatpush.bf16.msra.mxu0 %v681
    %6478 = vmatpush.bf16.msra.mxu0 %v680
    %6479 = vmatpush.bf16.msra.mxu0 %v679
    %6480 = vmatmul.bf16.gmra.mxu0 %v6264
    %v6481 = vpop.f32.mrf.mxu0
    %v6482 = vadd.f32 %v6433, %v6481
    %v6483 = vpop.f32.mrf.mxu0
    %v6484 = vadd.f32 %v6435, %v6483
    %6485 = vmatmul.bf16.gmra.mxu0 %v6268
    %v6486 = vpop.f32.mrf.mxu0
    %v6487 = vadd.f32 %v6438, %v6486
    %v6488 = vpop.f32.mrf.mxu0
    %v6489 = vadd.f32 %v6440, %v6488
    %6490 = vmatmul.bf16.gmra.mxu0 %v6272
    %v6491 = vpop.f32.mrf.mxu0
    %v6492 = vadd.f32 %v6443, %v6491
    %v6493 = vpop.f32.mrf.mxu0
    %v6494 = vadd.f32 %v6445, %v6493
    %6495 = vmatmul.bf16.gmra.mxu0 %v6276
    %v6496 = vpop.f32.mrf.mxu0
    %v6497 = vadd.f32 %v6448, %v6496
    %v6498 = vpop.f32.mrf.mxu0
    %v6499 = vadd.f32 %v6450, %v6498
    %6500 = vmatmul.bf16.gmra.mxu0 %v6280
    %v6501 = vpop.f32.mrf.mxu0
    %v6502 = vadd.f32 %v6453, %v6501
    %v6503 = vpop.f32.mrf.mxu0
    %v6504 = vadd.f32 %v6455, %v6503
    %6505 = vmatmul.bf16.gmra.mxu0 %v6284
    %v6506 = vpop.f32.mrf.mxu0
    %v6507 = vadd.f32 %v6458, %v6506
    %v6508 = vpop.f32.mrf.mxu0
    %v6509 = vadd.f32 %v6460, %v6508
    %6510 = vmatmul.bf16.gmra.mxu0 %v6288
    %v6511 = vpop.f32.mrf.mxu0
    %v6512 = vadd.f32 %v6463, %v6511
    %v6513 = vpop.f32.mrf.mxu0
    %v6514 = vadd.f32 %v6465, %v6513
    %6515 = vmatmul.bf16.gmra.mxu0 %v6292
    %v6516 = vpop.f32.mrf.mxu0
    %v6517 = vadd.f32 %v6468, %v6516
    %v6518 = vpop.f32.mrf.mxu0
    %v6519 = vadd.f32 %v6470, %v6518
    %6520 = vdwg.mxu0
    %s6521 = scalar_lea.vmem [#allocation2], 3840
    %v6522 = vld [vmem:[%s6521] sm:$0xff]
    %v6523 = vld [vmem:[%s6521 + $0x8] sm:$0xff]
    %v6524 = vld [vmem:[%s6521 + $0x10] sm:$0xff]
    %v6525 = vld [vmem:[%s6521 + $0x18] sm:$0xff]
    %v6526 = vld [vmem:[%s6521 + $0x20] sm:$0xff]
    %v6527 = vld [vmem:[%s6521 + $0x28] sm:$0xff]
    %v6528 = vld [vmem:[%s6521 + $0x30] sm:$0xff]
    %v6529 = vld [vmem:[%s6521 + $0x38] sm:$0xff]
    %v6530 = vld [vmem:[%s6521 + $0x40] sm:$0xff]
    %v6531 = vld [vmem:[%s6521 + $0x48] sm:$0xff]
    %v6532 = vld [vmem:[%s6521 + $0x50] sm:$0xff]
    %v6533 = vld [vmem:[%s6521 + $0x58] sm:$0xff]
    %v6534 = vld [vmem:[%s6521 + $0x60] sm:$0xff]
    %v6535 = vld [vmem:[%s6521 + $0x68] sm:$0xff]
    %v6536 = vld [vmem:[%s6521 + $0x70] sm:$0xff]
    %v6537 = vld [vmem:[%s6521 + $0x78] sm:$0xff]
    %v6538 = vld [vmem:[%s6521 + $0x80] sm:$0xff]
    %v6539 = vld [vmem:[%s6521 + $0x88] sm:$0xff]
    %v6540 = vld [vmem:[%s6521 + $0x90] sm:$0xff]
    %v6541 = vld [vmem:[%s6521 + $0x98] sm:$0xff]
    %v6542 = vld [vmem:[%s6521 + $0xa0] sm:$0xff]
    %v6543 = vld [vmem:[%s6521 + $0xa8] sm:$0xff]
    %v6544 = vld [vmem:[%s6521 + $0xb0] sm:$0xff]
    %v6545 = vld [vmem:[%s6521 + $0xb8] sm:$0xff]
    %v6546 = vld [vmem:[%s6521 + $0xc0] sm:$0xff]
    %v6547 = vld [vmem:[%s6521 + $0xc8] sm:$0xff]
    %v6548 = vld [vmem:[%s6521 + $0xd0] sm:$0xff]
    %v6549 = vld [vmem:[%s6521 + $0xd8] sm:$0xff]
    %v6550 = vld [vmem:[%s6521 + $0xe0] sm:$0xff]
    %v6551 = vld [vmem:[%s6521 + $0xe8] sm:$0xff]
    %v6552 = vld [vmem:[%s6521 + $0xf0] sm:$0xff]
    %v6553 = vld [vmem:[%s6521 + $0xf8] sm:$0xff]
    %v6586 = vunpack.c.l.b16 %v6522
    %v6587 = vunpack.c.h.b16 %v6522
    %v6588 = vunpack.c.l.b16 %v6523
    %v6589 = vunpack.c.h.b16 %v6523
    %v6590 = vunpack.c.l.b16 %v6524
    %v6591 = vunpack.c.h.b16 %v6524
    %v6592 = vunpack.c.l.b16 %v6525
    %v6593 = vunpack.c.h.b16 %v6525
    %v6594 = vunpack.c.l.b16 %v6526
    %v6595 = vunpack.c.h.b16 %v6526
    %v6596 = vunpack.c.l.b16 %v6527
    %v6597 = vunpack.c.h.b16 %v6527
    %v6598 = vunpack.c.l.b16 %v6528
    %v6599 = vunpack.c.h.b16 %v6528
    %v6600 = vunpack.c.l.b16 %v6529
    %v6601 = vunpack.c.h.b16 %v6529
    %v6602 = vunpack.c.l.b16 %v6530
    %v6603 = vunpack.c.h.b16 %v6530
    %v6604 = vunpack.c.l.b16 %v6531
    %v6605 = vunpack.c.h.b16 %v6531
    %v6606 = vunpack.c.l.b16 %v6532
    %v6607 = vunpack.c.h.b16 %v6532
    %v6608 = vunpack.c.l.b16 %v6533
    %v6609 = vunpack.c.h.b16 %v6533
    %v6610 = vunpack.c.l.b16 %v6534
    %v6611 = vunpack.c.h.b16 %v6534
    %v6612 = vunpack.c.l.b16 %v6535
    %v6613 = vunpack.c.h.b16 %v6535
    %v6614 = vunpack.c.l.b16 %v6536
    %v6615 = vunpack.c.h.b16 %v6536
    %v6616 = vunpack.c.l.b16 %v6537
    %v6617 = vunpack.c.h.b16 %v6537
    %v6618 = vunpack.c.l.b16 %v6538
    %v6619 = vunpack.c.h.b16 %v6538
    %v6620 = vunpack.c.l.b16 %v6539
    %v6621 = vunpack.c.h.b16 %v6539
    %v6622 = vunpack.c.l.b16 %v6540
    %v6623 = vunpack.c.h.b16 %v6540
    %v6624 = vunpack.c.l.b16 %v6541
    %v6625 = vunpack.c.h.b16 %v6541
    %v6626 = vunpack.c.l.b16 %v6542
    %v6627 = vunpack.c.h.b16 %v6542
    %v6628 = vunpack.c.l.b16 %v6543
    %v6629 = vunpack.c.h.b16 %v6543
    %v6630 = vunpack.c.l.b16 %v6544
    %v6631 = vunpack.c.h.b16 %v6544
    %v6632 = vunpack.c.l.b16 %v6545
    %v6633 = vunpack.c.h.b16 %v6545
    %v6634 = vunpack.c.l.b16 %v6546
    %v6635 = vunpack.c.h.b16 %v6546
    %v6636 = vunpack.c.l.b16 %v6547
    %v6637 = vunpack.c.h.b16 %v6547
    %v6638 = vunpack.c.l.b16 %v6548
    %v6639 = vunpack.c.h.b16 %v6548
    %v6640 = vunpack.c.l.b16 %v6549
    %v6641 = vunpack.c.h.b16 %v6549
    %v6642 = vunpack.c.l.b16 %v6550
    %v6643 = vunpack.c.h.b16 %v6550
    %v6644 = vunpack.c.l.b16 %v6551
    %v6645 = vunpack.c.h.b16 %v6551
    %v6646 = vunpack.c.l.b16 %v6552
    %v6647 = vunpack.c.h.b16 %v6552
    %v6648 = vunpack.c.l.b16 %v6553
    %v6649 = vunpack.c.h.b16 %v6553
    %v6650 = vpack.c.b16 %v6590, %v6586
    %v6651 = vpack.c.b16 %v6591, %v6587
    %v6652 = vpack.c.b16 %v6592, %v6588
    %v6653 = vpack.c.b16 %v6593, %v6589
    %v6654 = vpack.c.b16 %v6598, %v6594
    %v6655 = vpack.c.b16 %v6599, %v6595
    %v6656 = vpack.c.b16 %v6600, %v6596
    %v6657 = vpack.c.b16 %v6601, %v6597
    %v6658 = vpack.c.b16 %v6606, %v6602
    %v6659 = vpack.c.b16 %v6607, %v6603
    %v6660 = vpack.c.b16 %v6608, %v6604
    %v6661 = vpack.c.b16 %v6609, %v6605
    %v6662 = vpack.c.b16 %v6614, %v6610
    %v6663 = vpack.c.b16 %v6615, %v6611
    %v6664 = vpack.c.b16 %v6616, %v6612
    %v6665 = vpack.c.b16 %v6617, %v6613
    %v6666 = vpack.c.b16 %v6622, %v6618
    %v6667 = vpack.c.b16 %v6623, %v6619
    %v6668 = vpack.c.b16 %v6624, %v6620
    %v6669 = vpack.c.b16 %v6625, %v6621
    %v6670 = vpack.c.b16 %v6630, %v6626
    %v6671 = vpack.c.b16 %v6631, %v6627
    %v6672 = vpack.c.b16 %v6632, %v6628
    %v6673 = vpack.c.b16 %v6633, %v6629
    %v6674 = vpack.c.b16 %v6638, %v6634
    %v6675 = vpack.c.b16 %v6639, %v6635
    %v6676 = vpack.c.b16 %v6640, %v6636
    %v6677 = vpack.c.b16 %v6641, %v6637
    %v6678 = vpack.c.b16 %v6646, %v6642
    %v6679 = vpack.c.b16 %v6647, %v6643
    %v6680 = vpack.c.b16 %v6648, %v6644
    %v6681 = vpack.c.b16 %v6649, %v6645
    %6714 = vmatpush.bf16.msra.mxu0 %v662
    %6715 = vmatpush.bf16.msra.mxu0 %v661
    %6716 = vmatpush.bf16.msra.mxu0 %v660
    %6717 = vmatpush.bf16.msra.mxu0 %v659
    %6718 = vmatpush.bf16.msra.mxu0 %v658
    %6719 = vmatpush.bf16.msra.mxu0 %v657
    %6720 = vmatpush.bf16.msra.mxu0 %v656
    %6721 = vmatpush.bf16.msra.mxu0 %v655
    %6722 = vmatmul.bf16.gmra.mxu0 %v6650
    %v6723 = vpop.f32.mrf.mxu0
    %v6724 = vadd.f32 0.0, %v6723
    %v6725 = vpop.f32.mrf.mxu0
    %v6726 = vadd.f32 0.0, %v6725
    %6727 = vmatmul.bf16.gmra.mxu0 %v6654
    %v6728 = vpop.f32.mrf.mxu0
    %v6729 = vadd.f32 0.0, %v6728
    %v6730 = vpop.f32.mrf.mxu0
    %v6731 = vadd.f32 0.0, %v6730
    %6732 = vmatmul.bf16.gmra.mxu0 %v6658
    %v6733 = vpop.f32.mrf.mxu0
    %v6734 = vadd.f32 0.0, %v6733
    %v6735 = vpop.f32.mrf.mxu0
    %v6736 = vadd.f32 0.0, %v6735
    %6737 = vmatmul.bf16.gmra.mxu0 %v6662
    %v6738 = vpop.f32.mrf.mxu0
    %v6739 = vadd.f32 0.0, %v6738
    %v6740 = vpop.f32.mrf.mxu0
    %v6741 = vadd.f32 0.0, %v6740
    %6742 = vmatmul.bf16.gmra.mxu0 %v6666
    %v6743 = vpop.f32.mrf.mxu0
    %v6744 = vadd.f32 0.0, %v6743
    %v6745 = vpop.f32.mrf.mxu0
    %v6746 = vadd.f32 0.0, %v6745
    %6747 = vmatmul.bf16.gmra.mxu0 %v6670
    %v6748 = vpop.f32.mrf.mxu0
    %v6749 = vadd.f32 0.0, %v6748
    %v6750 = vpop.f32.mrf.mxu0
    %v6751 = vadd.f32 0.0, %v6750
    %6752 = vmatmul.bf16.gmra.mxu0 %v6674
    %v6753 = vpop.f32.mrf.mxu0
    %v6754 = vadd.f32 0.0, %v6753
    %v6755 = vpop.f32.mrf.mxu0
    %v6756 = vadd.f32 0.0, %v6755
    %6757 = vmatmul.bf16.gmra.mxu0 %v6678
    %v6758 = vpop.f32.mrf.mxu0
    %v6759 = vadd.f32 0.0, %v6758
    %v6760 = vpop.f32.mrf.mxu0
    %v6761 = vadd.f32 0.0, %v6760
    %6762 = vdwg.mxu0
    %6763 = vmatpush.bf16.msra.mxu0 %v670
    %6764 = vmatpush.bf16.msra.mxu0 %v669
    %6765 = vmatpush.bf16.msra.mxu0 %v668
    %6766 = vmatpush.bf16.msra.mxu0 %v667
    %6767 = vmatpush.bf16.msra.mxu0 %v666
    %6768 = vmatpush.bf16.msra.mxu0 %v665
    %6769 = vmatpush.bf16.msra.mxu0 %v664
    %6770 = vmatpush.bf16.msra.mxu0 %v663
    %6771 = vmatmul.bf16.gmra.mxu0 %v6651
    %v6772 = vpop.f32.mrf.mxu0
    %v6773 = vadd.f32 %v6724, %v6772
    %v6774 = vpop.f32.mrf.mxu0
    %v6775 = vadd.f32 %v6726, %v6774
    %6776 = vmatmul.bf16.gmra.mxu0 %v6655
    %v6777 = vpop.f32.mrf.mxu0
    %v6778 = vadd.f32 %v6729, %v6777
    %v6779 = vpop.f32.mrf.mxu0
    %v6780 = vadd.f32 %v6731, %v6779
    %6781 = vmatmul.bf16.gmra.mxu0 %v6659
    %v6782 = vpop.f32.mrf.mxu0
    %v6783 = vadd.f32 %v6734, %v6782
    %v6784 = vpop.f32.mrf.mxu0
    %v6785 = vadd.f32 %v6736, %v6784
    %6786 = vmatmul.bf16.gmra.mxu0 %v6663
    %v6787 = vpop.f32.mrf.mxu0
    %v6788 = vadd.f32 %v6739, %v6787
    %v6789 = vpop.f32.mrf.mxu0
    %v6790 = vadd.f32 %v6741, %v6789
    %6791 = vmatmul.bf16.gmra.mxu0 %v6667
    %v6792 = vpop.f32.mrf.mxu0
    %v6793 = vadd.f32 %v6744, %v6792
    %v6794 = vpop.f32.mrf.mxu0
    %v6795 = vadd.f32 %v6746, %v6794
    %6796 = vmatmul.bf16.gmra.mxu0 %v6671
    %v6797 = vpop.f32.mrf.mxu0
    %v6798 = vadd.f32 %v6749, %v6797
    %v6799 = vpop.f32.mrf.mxu0
    %v6800 = vadd.f32 %v6751, %v6799
    %6801 = vmatmul.bf16.gmra.mxu0 %v6675
    %v6802 = vpop.f32.mrf.mxu0
    %v6803 = vadd.f32 %v6754, %v6802
    %v6804 = vpop.f32.mrf.mxu0
    %v6805 = vadd.f32 %v6756, %v6804
    %6806 = vmatmul.bf16.gmra.mxu0 %v6679
    %v6807 = vpop.f32.mrf.mxu0
    %v6808 = vadd.f32 %v6759, %v6807
    %v6809 = vpop.f32.mrf.mxu0
    %v6810 = vadd.f32 %v6761, %v6809
    %6811 = vdwg.mxu0
    %6812 = vmatpush.bf16.msra.mxu0 %v678
    %6813 = vmatpush.bf16.msra.mxu0 %v677
    %6814 = vmatpush.bf16.msra.mxu0 %v676
    %6815 = vmatpush.bf16.msra.mxu0 %v675
    %6816 = vmatpush.bf16.msra.mxu0 %v674
    %6817 = vmatpush.bf16.msra.mxu0 %v673
    %6818 = vmatpush.bf16.msra.mxu0 %v672
    %6819 = vmatpush.bf16.msra.mxu0 %v671
    %6820 = vmatmul.bf16.gmra.mxu0 %v6652
    %v6821 = vpop.f32.mrf.mxu0
    %v6822 = vadd.f32 %v6773, %v6821
    %v6823 = vpop.f32.mrf.mxu0
    %v6824 = vadd.f32 %v6775, %v6823
    %6825 = vmatmul.bf16.gmra.mxu0 %v6656
    %v6826 = vpop.f32.mrf.mxu0
    %v6827 = vadd.f32 %v6778, %v6826
    %v6828 = vpop.f32.mrf.mxu0
    %v6829 = vadd.f32 %v6780, %v6828
    %6830 = vmatmul.bf16.gmra.mxu0 %v6660
    %v6831 = vpop.f32.mrf.mxu0
    %v6832 = vadd.f32 %v6783, %v6831
    %v6833 = vpop.f32.mrf.mxu0
    %v6834 = vadd.f32 %v6785, %v6833
    %6835 = vmatmul.bf16.gmra.mxu0 %v6664
    %v6836 = vpop.f32.mrf.mxu0
    %v6837 = vadd.f32 %v6788, %v6836
    %v6838 = vpop.f32.mrf.mxu0
    %v6839 = vadd.f32 %v6790, %v6838
    %6840 = vmatmul.bf16.gmra.mxu0 %v6668
    %v6841 = vpop.f32.mrf.mxu0
    %v6842 = vadd.f32 %v6793, %v6841
    %v6843 = vpop.f32.mrf.mxu0
    %v6844 = vadd.f32 %v6795, %v6843
    %6845 = vmatmul.bf16.gmra.mxu0 %v6672
    %v6846 = vpop.f32.mrf.mxu0
    %v6847 = vadd.f32 %v6798, %v6846
    %v6848 = vpop.f32.mrf.mxu0
    %v6849 = vadd.f32 %v6800, %v6848
    %6850 = vmatmul.bf16.gmra.mxu0 %v6676
    %v6851 = vpop.f32.mrf.mxu0
    %v6852 = vadd.f32 %v6803, %v6851
    %v6853 = vpop.f32.mrf.mxu0
    %v6854 = vadd.f32 %v6805, %v6853
    %6855 = vmatmul.bf16.gmra.mxu0 %v6680
    %v6856 = vpop.f32.mrf.mxu0
    %v6857 = vadd.f32 %v6808, %v6856
    %v6858 = vpop.f32.mrf.mxu0
    %v6859 = vadd.f32 %v6810, %v6858
    %6860 = vdwg.mxu0
    %6861 = vmatpush.bf16.msra.mxu0 %v686
    %6862 = vmatpush.bf16.msra.mxu0 %v685
    %6863 = vmatpush.bf16.msra.mxu0 %v684
    %6864 = vmatpush.bf16.msra.mxu0 %v683
    %6865 = vmatpush.bf16.msra.mxu0 %v682
    %6866 = vmatpush.bf16.msra.mxu0 %v681
    %6867 = vmatpush.bf16.msra.mxu0 %v680
    %6868 = vmatpush.bf16.msra.mxu0 %v679
    %6869 = vmatmul.bf16.gmra.mxu0 %v6653
    %v6870 = vpop.f32.mrf.mxu0
    %v6871 = vadd.f32 %v6822, %v6870
    %v6872 = vpop.f32.mrf.mxu0
    %v6873 = vadd.f32 %v6824, %v6872
    %6874 = vmatmul.bf16.gmra.mxu0 %v6657
    %v6875 = vpop.f32.mrf.mxu0
    %v6876 = vadd.f32 %v6827, %v6875
    %v6877 = vpop.f32.mrf.mxu0
    %v6878 = vadd.f32 %v6829, %v6877
    %6879 = vmatmul.bf16.gmra.mxu0 %v6661
    %v6880 = vpop.f32.mrf.mxu0
    %v6881 = vadd.f32 %v6832, %v6880
    %v6882 = vpop.f32.mrf.mxu0
    %v6883 = vadd.f32 %v6834, %v6882
    %6884 = vmatmul.bf16.gmra.mxu0 %v6665
    %v6885 = vpop.f32.mrf.mxu0
    %v6886 = vadd.f32 %v6837, %v6885
    %v6887 = vpop.f32.mrf.mxu0
    %v6888 = vadd.f32 %v6839, %v6887
    %6889 = vmatmul.bf16.gmra.mxu0 %v6669
    %v6890 = vpop.f32.mrf.mxu0
    %v6891 = vadd.f32 %v6842, %v6890
    %v6892 = vpop.f32.mrf.mxu0
    %v6893 = vadd.f32 %v6844, %v6892
    %6894 = vmatmul.bf16.gmra.mxu0 %v6673
    %v6895 = vpop.f32.mrf.mxu0
    %v6896 = vadd.f32 %v6847, %v6895
    %v6897 = vpop.f32.mrf.mxu0
    %v6898 = vadd.f32 %v6849, %v6897
    %6899 = vmatmul.bf16.gmra.mxu0 %v6677
    %v6900 = vpop.f32.mrf.mxu0
    %v6901 = vadd.f32 %v6852, %v6900
    %v6902 = vpop.f32.mrf.mxu0
    %v6903 = vadd.f32 %v6854, %v6902
    %6904 = vmatmul.bf16.gmra.mxu0 %v6681
    %v6905 = vpop.f32.mrf.mxu0
    %v6906 = vadd.f32 %v6857, %v6905
    %v6907 = vpop.f32.mrf.mxu0
    %v6908 = vadd.f32 %v6859, %v6907
    %6909 = vdwg.mxu0
    %6926 = vrot.lane.b32.xlu0 %v1425, 8
    %v6927 = vpop.permute.xlu0 %6926
    %6928 = vrot.lane.b32.xlu0 %v1427, 8
    %v6929 = vpop.permute.xlu0 %6928
    %6930 = vrot.lane.b32.xlu0 %v1430, 8
    %v6931 = vpop.permute.xlu0 %6930
    %6932 = vrot.lane.b32.xlu0 %v1432, 8
    %v6933 = vpop.permute.xlu0 %6932
    %6934 = vrot.lane.b32.xlu0 %v1435, 8
    %v6935 = vpop.permute.xlu0 %6934
    %6936 = vrot.lane.b32.xlu0 %v1437, 8
    %v6937 = vpop.permute.xlu0 %6936
    %6938 = vrot.lane.b32.xlu0 %v1440, 8
    %v6939 = vpop.permute.xlu0 %6938
    %6940 = vrot.lane.b32.xlu0 %v1442, 8
    %v6941 = vpop.permute.xlu0 %6940
    %6942 = vrot.lane.b32.xlu0 %v1445, 8
    %v6943 = vpop.permute.xlu0 %6942
    %6944 = vrot.lane.b32.xlu0 %v1447, 8
    %v6945 = vpop.permute.xlu0 %6944
    %6946 = vrot.lane.b32.xlu0 %v1450, 8
    %v6947 = vpop.permute.xlu0 %6946
    %6948 = vrot.lane.b32.xlu0 %v1452, 8
    %v6949 = vpop.permute.xlu0 %6948
    %6950 = vrot.lane.b32.xlu0 %v1455, 8
    %v6951 = vpop.permute.xlu0 %6950
    %6952 = vrot.lane.b32.xlu0 %v1457, 8
    %v6953 = vpop.permute.xlu0 %6952
    %6954 = vrot.lane.b32.xlu0 %v1460, 8
    %v6955 = vpop.permute.xlu0 %6954
    %6956 = vrot.lane.b32.xlu0 %v1462, 8
    %v6957 = vpop.permute.xlu0 %6956
    %6990 = vrot.lane.b32.xlu0 %v1814, 16
    %v6991 = vpop.permute.xlu0 %6990
    %6992 = vrot.lane.b32.xlu0 %v1816, 16
    %v6993 = vpop.permute.xlu0 %6992
    %6994 = vrot.lane.b32.xlu0 %v1819, 16
    %v6995 = vpop.permute.xlu0 %6994
    %6996 = vrot.lane.b32.xlu0 %v1821, 16
    %v6997 = vpop.permute.xlu0 %6996
    %6998 = vrot.lane.b32.xlu0 %v1824, 16
    %v6999 = vpop.permute.xlu0 %6998
    %7000 = vrot.lane.b32.xlu0 %v1826, 16
    %v7001 = vpop.permute.xlu0 %7000
    %7002 = vrot.lane.b32.xlu0 %v1829, 16
    %v7003 = vpop.permute.xlu0 %7002
    %7004 = vrot.lane.b32.xlu0 %v1831, 16
    %v7005 = vpop.permute.xlu0 %7004
    %7006 = vrot.lane.b32.xlu0 %v1834, 16
    %v7007 = vpop.permute.xlu0 %7006
    %7008 = vrot.lane.b32.xlu0 %v1836, 16
    %v7009 = vpop.permute.xlu0 %7008
    %7010 = vrot.lane.b32.xlu0 %v1839, 16
    %v7011 = vpop.permute.xlu0 %7010
    %7012 = vrot.lane.b32.xlu0 %v1841, 16
    %v7013 = vpop.permute.xlu0 %7012
    %7014 = vrot.lane.b32.xlu0 %v1844, 16
    %v7015 = vpop.permute.xlu0 %7014
    %7016 = vrot.lane.b32.xlu0 %v1846, 16
    %v7017 = vpop.permute.xlu0 %7016
    %7018 = vrot.lane.b32.xlu0 %v1849, 16
    %v7019 = vpop.permute.xlu0 %7018
    %7020 = vrot.lane.b32.xlu0 %v1851, 16
    %v7021 = vpop.permute.xlu0 %7020
    %7054 = vrot.lane.b32.xlu0 %v2203, 24
    %v7055 = vpop.permute.xlu0 %7054
    %7056 = vrot.lane.b32.xlu0 %v2205, 24
    %v7057 = vpop.permute.xlu0 %7056
    %7058 = vrot.lane.b32.xlu0 %v2208, 24
    %v7059 = vpop.permute.xlu0 %7058
    %7060 = vrot.lane.b32.xlu0 %v2210, 24
    %v7061 = vpop.permute.xlu0 %7060
    %7062 = vrot.lane.b32.xlu0 %v2213, 24
    %v7063 = vpop.permute.xlu0 %7062
    %7064 = vrot.lane.b32.xlu0 %v2215, 24
    %v7065 = vpop.permute.xlu0 %7064
    %7066 = vrot.lane.b32.xlu0 %v2218, 24
    %v7067 = vpop.permute.xlu0 %7066
    %7068 = vrot.lane.b32.xlu0 %v2220, 24
    %v7069 = vpop.permute.xlu0 %7068
    %7070 = vrot.lane.b32.xlu0 %v2223, 24
    %v7071 = vpop.permute.xlu0 %7070
    %7072 = vrot.lane.b32.xlu0 %v2225, 24
    %v7073 = vpop.permute.xlu0 %7072
    %7074 = vrot.lane.b32.xlu0 %v2228, 24
    %v7075 = vpop.permute.xlu0 %7074
    %7076 = vrot.lane.b32.xlu0 %v2230, 24
    %v7077 = vpop.permute.xlu0 %7076
    %7078 = vrot.lane.b32.xlu0 %v2233, 24
    %v7079 = vpop.permute.xlu0 %7078
    %7080 = vrot.lane.b32.xlu0 %v2235, 24
    %v7081 = vpop.permute.xlu0 %7080
    %7082 = vrot.lane.b32.xlu0 %v2238, 24
    %v7083 = vpop.permute.xlu0 %7082
    %7084 = vrot.lane.b32.xlu0 %v2240, 24
    %v7085 = vpop.permute.xlu0 %7084
    %7118 = vrot.lane.b32.xlu0 %v2592, 32
    %v7119 = vpop.permute.xlu0 %7118
    %7120 = vrot.lane.b32.xlu0 %v2594, 32
    %v7121 = vpop.permute.xlu0 %7120
    %7122 = vrot.lane.b32.xlu0 %v2597, 32
    %v7123 = vpop.permute.xlu0 %7122
    %7124 = vrot.lane.b32.xlu0 %v2599, 32
    %v7125 = vpop.permute.xlu0 %7124
    %7126 = vrot.lane.b32.xlu0 %v2602, 32
    %v7127 = vpop.permute.xlu0 %7126
    %7128 = vrot.lane.b32.xlu0 %v2604, 32
    %v7129 = vpop.permute.xlu0 %7128
    %7130 = vrot.lane.b32.xlu0 %v2607, 32
    %v7131 = vpop.permute.xlu0 %7130
    %7132 = vrot.lane.b32.xlu0 %v2609, 32
    %v7133 = vpop.permute.xlu0 %7132
    %7134 = vrot.lane.b32.xlu0 %v2612, 32
    %v7135 = vpop.permute.xlu0 %7134
    %7136 = vrot.lane.b32.xlu0 %v2614, 32
    %v7137 = vpop.permute.xlu0 %7136
    %7138 = vrot.lane.b32.xlu0 %v2617, 32
    %v7139 = vpop.permute.xlu0 %7138
    %7140 = vrot.lane.b32.xlu0 %v2619, 32
    %v7141 = vpop.permute.xlu0 %7140
    %7142 = vrot.lane.b32.xlu0 %v2622, 32
    %v7143 = vpop.permute.xlu0 %7142
    %7144 = vrot.lane.b32.xlu0 %v2624, 32
    %v7145 = vpop.permute.xlu0 %7144
    %7146 = vrot.lane.b32.xlu0 %v2627, 32
    %v7147 = vpop.permute.xlu0 %7146
    %7148 = vrot.lane.b32.xlu0 %v2629, 32
    %v7149 = vpop.permute.xlu0 %7148
    %7182 = vrot.lane.b32.xlu0 %v2981, 40
    %v7183 = vpop.permute.xlu0 %7182
    %7184 = vrot.lane.b32.xlu0 %v2983, 40
    %v7185 = vpop.permute.xlu0 %7184
    %7186 = vrot.lane.b32.xlu0 %v2986, 40
    %v7187 = vpop.permute.xlu0 %7186
    %7188 = vrot.lane.b32.xlu0 %v2988, 40
    %v7189 = vpop.permute.xlu0 %7188
    %7190 = vrot.lane.b32.xlu0 %v2991, 40
    %v7191 = vpop.permute.xlu0 %7190
    %7192 = vrot.lane.b32.xlu0 %v2993, 40
    %v7193 = vpop.permute.xlu0 %7192
    %7194 = vrot.lane.b32.xlu0 %v2996, 40
    %v7195 = vpop.permute.xlu0 %7194
    %7196 = vrot.lane.b32.xlu0 %v2998, 40
    %v7197 = vpop.permute.xlu0 %7196
    %7198 = vrot.lane.b32.xlu0 %v3001, 40
    %v7199 = vpop.permute.xlu0 %7198
    %7200 = vrot.lane.b32.xlu0 %v3003, 40
    %v7201 = vpop.permute.xlu0 %7200
    %7202 = vrot.lane.b32.xlu0 %v3006, 40
    %v7203 = vpop.permute.xlu0 %7202
    %7204 = vrot.lane.b32.xlu0 %v3008, 40
    %v7205 = vpop.permute.xlu0 %7204
    %7206 = vrot.lane.b32.xlu0 %v3011, 40
    %v7207 = vpop.permute.xlu0 %7206
    %7208 = vrot.lane.b32.xlu0 %v3013, 40
    %v7209 = vpop.permute.xlu0 %7208
    %7210 = vrot.lane.b32.xlu0 %v3016, 40
    %v7211 = vpop.permute.xlu0 %7210
    %7212 = vrot.lane.b32.xlu0 %v3018, 40
    %v7213 = vpop.permute.xlu0 %7212
    %7246 = vrot.lane.b32.xlu0 %v3370, 48
    %v7247 = vpop.permute.xlu0 %7246
    %7248 = vrot.lane.b32.xlu0 %v3372, 48
    %v7249 = vpop.permute.xlu0 %7248
    %7250 = vrot.lane.b32.xlu0 %v3375, 48
    %v7251 = vpop.permute.xlu0 %7250
    %7252 = vrot.lane.b32.xlu0 %v3377, 48
    %v7253 = vpop.permute.xlu0 %7252
    %7254 = vrot.lane.b32.xlu0 %v3380, 48
    %v7255 = vpop.permute.xlu0 %7254
    %7256 = vrot.lane.b32.xlu0 %v3382, 48
    %v7257 = vpop.permute.xlu0 %7256
    %7258 = vrot.lane.b32.xlu0 %v3385, 48
    %v7259 = vpop.permute.xlu0 %7258
    %7260 = vrot.lane.b32.xlu0 %v3387, 48
    %v7261 = vpop.permute.xlu0 %7260
    %7262 = vrot.lane.b32.xlu0 %v3390, 48
    %v7263 = vpop.permute.xlu0 %7262
    %7264 = vrot.lane.b32.xlu0 %v3392, 48
    %v7265 = vpop.permute.xlu0 %7264
    %7266 = vrot.lane.b32.xlu0 %v3395, 48
    %v7267 = vpop.permute.xlu0 %7266
    %7268 = vrot.lane.b32.xlu0 %v3397, 48
    %v7269 = vpop.permute.xlu0 %7268
    %7270 = vrot.lane.b32.xlu0 %v3400, 48
    %v7271 = vpop.permute.xlu0 %7270
    %7272 = vrot.lane.b32.xlu0 %v3402, 48
    %v7273 = vpop.permute.xlu0 %7272
    %7274 = vrot.lane.b32.xlu0 %v3405, 48
    %v7275 = vpop.permute.xlu0 %7274
    %7276 = vrot.lane.b32.xlu0 %v3407, 48
    %v7277 = vpop.permute.xlu0 %7276
    %7310 = vrot.lane.b32.xlu0 %v3759, 56
    %v7311 = vpop.permute.xlu0 %7310
    %7312 = vrot.lane.b32.xlu0 %v3761, 56
    %v7313 = vpop.permute.xlu0 %7312
    %7314 = vrot.lane.b32.xlu0 %v3764, 56
    %v7315 = vpop.permute.xlu0 %7314
    %7316 = vrot.lane.b32.xlu0 %v3766, 56
    %v7317 = vpop.permute.xlu0 %7316
    %7318 = vrot.lane.b32.xlu0 %v3769, 56
    %v7319 = vpop.permute.xlu0 %7318
    %7320 = vrot.lane.b32.xlu0 %v3771, 56
    %v7321 = vpop.permute.xlu0 %7320
    %7322 = vrot.lane.b32.xlu0 %v3774, 56
    %v7323 = vpop.permute.xlu0 %7322
    %7324 = vrot.lane.b32.xlu0 %v3776, 56
    %v7325 = vpop.permute.xlu0 %7324
    %7326 = vrot.lane.b32.xlu0 %v3779, 56
    %v7327 = vpop.permute.xlu0 %7326
    %7328 = vrot.lane.b32.xlu0 %v3781, 56
    %v7329 = vpop.permute.xlu0 %7328
    %7330 = vrot.lane.b32.xlu0 %v3784, 56
    %v7331 = vpop.permute.xlu0 %7330
    %7332 = vrot.lane.b32.xlu0 %v3786, 56
    %v7333 = vpop.permute.xlu0 %7332
    %7334 = vrot.lane.b32.xlu0 %v3789, 56
    %v7335 = vpop.permute.xlu0 %7334
    %7336 = vrot.lane.b32.xlu0 %v3791, 56
    %v7337 = vpop.permute.xlu0 %7336
    %7338 = vrot.lane.b32.xlu0 %v3794, 56
    %v7339 = vpop.permute.xlu0 %7338
    %7340 = vrot.lane.b32.xlu0 %v3796, 56
    %v7341 = vpop.permute.xlu0 %7340
    %7374 = vrot.lane.b32.xlu0 %v4148, 64
    %v7375 = vpop.permute.xlu0 %7374
    %7376 = vrot.lane.b32.xlu0 %v4150, 64
    %v7377 = vpop.permute.xlu0 %7376
    %7378 = vrot.lane.b32.xlu0 %v4153, 64
    %v7379 = vpop.permute.xlu0 %7378
    %7380 = vrot.lane.b32.xlu0 %v4155, 64
    %v7381 = vpop.permute.xlu0 %7380
    %7382 = vrot.lane.b32.xlu0 %v4158, 64
    %v7383 = vpop.permute.xlu0 %7382
    %7384 = vrot.lane.b32.xlu0 %v4160, 64
    %v7385 = vpop.permute.xlu0 %7384
    %7386 = vrot.lane.b32.xlu0 %v4163, 64
    %v7387 = vpop.permute.xlu0 %7386
    %7388 = vrot.lane.b32.xlu0 %v4165, 64
    %v7389 = vpop.permute.xlu0 %7388
    %7390 = vrot.lane.b32.xlu0 %v4168, 64
    %v7391 = vpop.permute.xlu0 %7390
    %7392 = vrot.lane.b32.xlu0 %v4170, 64
    %v7393 = vpop.permute.xlu0 %7392
    %7394 = vrot.lane.b32.xlu0 %v4173, 64
    %v7395 = vpop.permute.xlu0 %7394
    %7396 = vrot.lane.b32.xlu0 %v4175, 64
    %v7397 = vpop.permute.xlu0 %7396
    %7398 = vrot.lane.b32.xlu0 %v4178, 64
    %v7399 = vpop.permute.xlu0 %7398
    %7400 = vrot.lane.b32.xlu0 %v4180, 64
    %v7401 = vpop.permute.xlu0 %7400
    %7402 = vrot.lane.b32.xlu0 %v4183, 64
    %v7403 = vpop.permute.xlu0 %7402
    %7404 = vrot.lane.b32.xlu0 %v4185, 64
    %v7405 = vpop.permute.xlu0 %7404
    %7438 = vrot.lane.b32.xlu0 %v4537, 72
    %v7439 = vpop.permute.xlu0 %7438
    %7440 = vrot.lane.b32.xlu0 %v4539, 72
    %v7441 = vpop.permute.xlu0 %7440
    %7442 = vrot.lane.b32.xlu0 %v4542, 72
    %v7443 = vpop.permute.xlu0 %7442
    %7444 = vrot.lane.b32.xlu0 %v4544, 72
    %v7445 = vpop.permute.xlu0 %7444
    %7446 = vrot.lane.b32.xlu0 %v4547, 72
    %v7447 = vpop.permute.xlu0 %7446
    %7448 = vrot.lane.b32.xlu0 %v4549, 72
    %v7449 = vpop.permute.xlu0 %7448
    %7450 = vrot.lane.b32.xlu0 %v4552, 72
    %v7451 = vpop.permute.xlu0 %7450
    %7452 = vrot.lane.b32.xlu0 %v4554, 72
    %v7453 = vpop.permute.xlu0 %7452
    %7454 = vrot.lane.b32.xlu0 %v4557, 72
    %v7455 = vpop.permute.xlu0 %7454
    %7456 = vrot.lane.b32.xlu0 %v4559, 72
    %v7457 = vpop.permute.xlu0 %7456
    %7458 = vrot.lane.b32.xlu0 %v4562, 72
    %v7459 = vpop.permute.xlu0 %7458
    %7460 = vrot.lane.b32.xlu0 %v4564, 72
    %v7461 = vpop.permute.xlu0 %7460
    %7462 = vrot.lane.b32.xlu0 %v4567, 72
    %v7463 = vpop.permute.xlu0 %7462
    %7464 = vrot.lane.b32.xlu0 %v4569, 72
    %v7465 = vpop.permute.xlu0 %7464
    %7466 = vrot.lane.b32.xlu0 %v4572, 72
    %v7467 = vpop.permute.xlu0 %7466
    %7468 = vrot.lane.b32.xlu0 %v4574, 72
    %v7469 = vpop.permute.xlu0 %7468
    %7502 = vrot.lane.b32.xlu0 %v4926, 80
    %v7503 = vpop.permute.xlu0 %7502
    %7504 = vrot.lane.b32.xlu0 %v4928, 80
    %v7505 = vpop.permute.xlu0 %7504
    %7506 = vrot.lane.b32.xlu0 %v4931, 80
    %v7507 = vpop.permute.xlu0 %7506
    %7508 = vrot.lane.b32.xlu0 %v4933, 80
    %v7509 = vpop.permute.xlu0 %7508
    %7510 = vrot.lane.b32.xlu0 %v4936, 80
    %v7511 = vpop.permute.xlu0 %7510
    %7512 = vrot.lane.b32.xlu0 %v4938, 80
    %v7513 = vpop.permute.xlu0 %7512
    %7514 = vrot.lane.b32.xlu0 %v4941, 80
    %v7515 = vpop.permute.xlu0 %7514
    %7516 = vrot.lane.b32.xlu0 %v4943, 80
    %v7517 = vpop.permute.xlu0 %7516
    %7518 = vrot.lane.b32.xlu0 %v4946, 80
    %v7519 = vpop.permute.xlu0 %7518
    %7520 = vrot.lane.b32.xlu0 %v4948, 80
    %v7521 = vpop.permute.xlu0 %7520
    %7522 = vrot.lane.b32.xlu0 %v4951, 80
    %v7523 = vpop.permute.xlu0 %7522
    %7524 = vrot.lane.b32.xlu0 %v4953, 80
    %v7525 = vpop.permute.xlu0 %7524
    %7526 = vrot.lane.b32.xlu0 %v4956, 80
    %v7527 = vpop.permute.xlu0 %7526
    %7528 = vrot.lane.b32.xlu0 %v4958, 80
    %v7529 = vpop.permute.xlu0 %7528
    %7530 = vrot.lane.b32.xlu0 %v4961, 80
    %v7531 = vpop.permute.xlu0 %7530
    %7532 = vrot.lane.b32.xlu0 %v4963, 80
    %v7533 = vpop.permute.xlu0 %7532
    %7566 = vrot.lane.b32.xlu0 %v5315, 88
    %v7567 = vpop.permute.xlu0 %7566
    %7568 = vrot.lane.b32.xlu0 %v5317, 88
    %v7569 = vpop.permute.xlu0 %7568
    %7570 = vrot.lane.b32.xlu0 %v5320, 88
    %v7571 = vpop.permute.xlu0 %7570
    %7572 = vrot.lane.b32.xlu0 %v5322, 88
    %v7573 = vpop.permute.xlu0 %7572
    %7574 = vrot.lane.b32.xlu0 %v5325, 88
    %v7575 = vpop.permute.xlu0 %7574
    %7576 = vrot.lane.b32.xlu0 %v5327, 88
    %v7577 = vpop.permute.xlu0 %7576
    %7578 = vrot.lane.b32.xlu0 %v5330, 88
    %v7579 = vpop.permute.xlu0 %7578
    %7580 = vrot.lane.b32.xlu0 %v5332, 88
    %v7581 = vpop.permute.xlu0 %7580
    %7582 = vrot.lane.b32.xlu0 %v5335, 88
    %v7583 = vpop.permute.xlu0 %7582
    %7584 = vrot.lane.b32.xlu0 %v5337, 88
    %v7585 = vpop.permute.xlu0 %7584
    %7586 = vrot.lane.b32.xlu0 %v5340, 88
    %v7587 = vpop.permute.xlu0 %7586
    %7588 = vrot.lane.b32.xlu0 %v5342, 88
    %v7589 = vpop.permute.xlu0 %7588
    %7590 = vrot.lane.b32.xlu0 %v5345, 88
    %v7591 = vpop.permute.xlu0 %7590
    %7592 = vrot.lane.b32.xlu0 %v5347, 88
    %v7593 = vpop.permute.xlu0 %7592
    %7594 = vrot.lane.b32.xlu0 %v5350, 88
    %v7595 = vpop.permute.xlu0 %7594
    %7596 = vrot.lane.b32.xlu0 %v5352, 88
    %v7597 = vpop.permute.xlu0 %7596
    %7630 = vrot.lane.b32.xlu0 %v5704, 96
    %v7631 = vpop.permute.xlu0 %7630
    %7632 = vrot.lane.b32.xlu0 %v5706, 96
    %v7633 = vpop.permute.xlu0 %7632
    %7634 = vrot.lane.b32.xlu0 %v5709, 96
    %v7635 = vpop.permute.xlu0 %7634
    %7636 = vrot.lane.b32.xlu0 %v5711, 96
    %v7637 = vpop.permute.xlu0 %7636
    %7638 = vrot.lane.b32.xlu0 %v5714, 96
    %v7639 = vpop.permute.xlu0 %7638
    %7640 = vrot.lane.b32.xlu0 %v5716, 96
    %v7641 = vpop.permute.xlu0 %7640
    %7642 = vrot.lane.b32.xlu0 %v5719, 96
    %v7643 = vpop.permute.xlu0 %7642
    %7644 = vrot.lane.b32.xlu0 %v5721, 96
    %v7645 = vpop.permute.xlu0 %7644
    %7646 = vrot.lane.b32.xlu0 %v5724, 96
    %v7647 = vpop.permute.xlu0 %7646
    %7648 = vrot.lane.b32.xlu0 %v5726, 96
    %v7649 = vpop.permute.xlu0 %7648
    %7650 = vrot.lane.b32.xlu0 %v5729, 96
    %v7651 = vpop.permute.xlu0 %7650
    %7652 = vrot.lane.b32.xlu0 %v5731, 96
    %v7653 = vpop.permute.xlu0 %7652
    %7654 = vrot.lane.b32.xlu0 %v5734, 96
    %v7655 = vpop.permute.xlu0 %7654
    %7656 = vrot.lane.b32.xlu0 %v5736, 96
    %v7657 = vpop.permute.xlu0 %7656
    %7658 = vrot.lane.b32.xlu0 %v5739, 96
    %v7659 = vpop.permute.xlu0 %7658
    %7660 = vrot.lane.b32.xlu0 %v5741, 96
    %v7661 = vpop.permute.xlu0 %7660
    %7694 = vrot.lane.b32.xlu0 %v6093, 104
    %v7695 = vpop.permute.xlu0 %7694
    %7696 = vrot.lane.b32.xlu0 %v6095, 104
    %v7697 = vpop.permute.xlu0 %7696
    %7698 = vrot.lane.b32.xlu0 %v6098, 104
    %v7699 = vpop.permute.xlu0 %7698
    %7700 = vrot.lane.b32.xlu0 %v6100, 104
    %v7701 = vpop.permute.xlu0 %7700
    %7702 = vrot.lane.b32.xlu0 %v6103, 104
    %v7703 = vpop.permute.xlu0 %7702
    %7704 = vrot.lane.b32.xlu0 %v6105, 104
    %v7705 = vpop.permute.xlu0 %7704
    %7706 = vrot.lane.b32.xlu0 %v6108, 104
    %v7707 = vpop.permute.xlu0 %7706
    %7708 = vrot.lane.b32.xlu0 %v6110, 104
    %v7709 = vpop.permute.xlu0 %7708
    %7710 = vrot.lane.b32.xlu0 %v6113, 104
    %v7711 = vpop.permute.xlu0 %7710
    %7712 = vrot.lane.b32.xlu0 %v6115, 104
    %v7713 = vpop.permute.xlu0 %7712
    %7714 = vrot.lane.b32.xlu0 %v6118, 104
    %v7715 = vpop.permute.xlu0 %7714
    %7716 = vrot.lane.b32.xlu0 %v6120, 104
    %v7717 = vpop.permute.xlu0 %7716
    %7718 = vrot.lane.b32.xlu0 %v6123, 104
    %v7719 = vpop.permute.xlu0 %7718
    %7720 = vrot.lane.b32.xlu0 %v6125, 104
    %v7721 = vpop.permute.xlu0 %7720
    %7722 = vrot.lane.b32.xlu0 %v6128, 104
    %v7723 = vpop.permute.xlu0 %7722
    %7724 = vrot.lane.b32.xlu0 %v6130, 104
    %v7725 = vpop.permute.xlu0 %7724
    %7758 = vrot.lane.b32.xlu0 %v6482, 112
    %v7759 = vpop.permute.xlu0 %7758
    %7760 = vrot.lane.b32.xlu0 %v6484, 112
    %v7761 = vpop.permute.xlu0 %7760
    %7762 = vrot.lane.b32.xlu0 %v6487, 112
    %v7763 = vpop.permute.xlu0 %7762
    %7764 = vrot.lane.b32.xlu0 %v6489, 112
    %v7765 = vpop.permute.xlu0 %7764
    %7766 = vrot.lane.b32.xlu0 %v6492, 112
    %v7767 = vpop.permute.xlu0 %7766
    %7768 = vrot.lane.b32.xlu0 %v6494, 112
    %v7769 = vpop.permute.xlu0 %7768
    %7770 = vrot.lane.b32.xlu0 %v6497, 112
    %v7771 = vpop.permute.xlu0 %7770
    %7772 = vrot.lane.b32.xlu0 %v6499, 112
    %v7773 = vpop.permute.xlu0 %7772
    %7774 = vrot.lane.b32.xlu0 %v6502, 112
    %v7775 = vpop.permute.xlu0 %7774
    %7776 = vrot.lane.b32.xlu0 %v6504, 112
    %v7777 = vpop.permute.xlu0 %7776
    %7778 = vrot.lane.b32.xlu0 %v6507, 112
    %v7779 = vpop.permute.xlu0 %7778
    %7780 = vrot.lane.b32.xlu0 %v6509, 112
    %v7781 = vpop.permute.xlu0 %7780
    %7782 = vrot.lane.b32.xlu0 %v6512, 112
    %v7783 = vpop.permute.xlu0 %7782
    %7784 = vrot.lane.b32.xlu0 %v6514, 112
    %v7785 = vpop.permute.xlu0 %7784
    %7786 = vrot.lane.b32.xlu0 %v6517, 112
    %v7787 = vpop.permute.xlu0 %7786
    %7788 = vrot.lane.b32.xlu0 %v6519, 112
    %v7789 = vpop.permute.xlu0 %7788
    %7822 = vrot.lane.b32.xlu0 %v6871, 120
    %v7823 = vpop.permute.xlu0 %7822
    %7824 = vrot.lane.b32.xlu0 %v6873, 120
    %v7825 = vpop.permute.xlu0 %7824
    %7826 = vrot.lane.b32.xlu0 %v6876, 120
    %v7827 = vpop.permute.xlu0 %7826
    %7828 = vrot.lane.b32.xlu0 %v6878, 120
    %v7829 = vpop.permute.xlu0 %7828
    %7830 = vrot.lane.b32.xlu0 %v6881, 120
    %v7831 = vpop.permute.xlu0 %7830
    %7832 = vrot.lane.b32.xlu0 %v6883, 120
    %v7833 = vpop.permute.xlu0 %7832
    %7834 = vrot.lane.b32.xlu0 %v6886, 120
    %v7835 = vpop.permute.xlu0 %7834
    %7836 = vrot.lane.b32.xlu0 %v6888, 120
    %v7837 = vpop.permute.xlu0 %7836
    %7838 = vrot.lane.b32.xlu0 %v6891, 120
    %v7839 = vpop.permute.xlu0 %7838
    %7840 = vrot.lane.b32.xlu0 %v6893, 120
    %v7841 = vpop.permute.xlu0 %7840
    %7842 = vrot.lane.b32.xlu0 %v6896, 120
    %v7843 = vpop.permute.xlu0 %7842
    %7844 = vrot.lane.b32.xlu0 %v6898, 120
    %v7845 = vpop.permute.xlu0 %7844
    %7846 = vrot.lane.b32.xlu0 %v6901, 120
    %v7847 = vpop.permute.xlu0 %7846
    %7848 = vrot.lane.b32.xlu0 %v6903, 120
    %v7849 = vpop.permute.xlu0 %7848
    %7850 = vrot.lane.b32.xlu0 %v6906, 120
    %v7851 = vpop.permute.xlu0 %7850
    %7852 = vrot.lane.b32.xlu0 %v6908, 120
    %v7853 = vpop.permute.xlu0 %7852
    %vm7870 = vcmask 64512
    %v7871 = vsel %vm7870, %v1036, %v6927
    %v7872 = vsel %vm7870, %v1038, %v6929
    %v7873 = vsel %vm7870, %v1041, %v6931
    %v7874 = vsel %vm7870, %v1043, %v6933
    %v7875 = vsel %vm7870, %v1046, %v6935
    %v7876 = vsel %vm7870, %v1048, %v6937
    %v7877 = vsel %vm7870, %v1051, %v6939
    %v7878 = vsel %vm7870, %v1053, %v6941
    %v7879 = vsel %vm7870, %v1056, %v6943
    %v7880 = vsel %vm7870, %v1058, %v6945
    %v7881 = vsel %vm7870, %v1061, %v6947
    %v7882 = vsel %vm7870, %v1063, %v6949
    %v7883 = vsel %vm7870, %v1066, %v6951
    %v7884 = vsel %vm7870, %v1068, %v6953
    %v7885 = vsel %vm7870, %v1071, %v6955
    %v7886 = vsel %vm7870, %v1073, %v6957
    %v7887 = vsel %vm197, %v7871, %v6991
    %v7888 = vsel %vm197, %v7872, %v6993
    %v7889 = vsel %vm197, %v7873, %v6995
    %v7890 = vsel %vm197, %v7874, %v6997
    %v7891 = vsel %vm197, %v7875, %v6999
    %v7892 = vsel %vm197, %v7876, %v7001
    %v7893 = vsel %vm197, %v7877, %v7003
    %v7894 = vsel %vm197, %v7878, %v7005
    %v7895 = vsel %vm197, %v7879, %v7007
    %v7896 = vsel %vm197, %v7880, %v7009
    %v7897 = vsel %vm197, %v7881, %v7011
    %v7898 = vsel %vm197, %v7882, %v7013
    %v7899 = vsel %vm197, %v7883, %v7015
    %v7900 = vsel %vm197, %v7884, %v7017
    %v7901 = vsel %vm197, %v7885, %v7019
    %v7902 = vsel %vm197, %v7886, %v7021
    %vm7903 = vcmask 195584
    %v7904 = vsel %vm7903, %v7887, %v7055
    %v7905 = vsel %vm7903, %v7888, %v7057
    %v7906 = vsel %vm7903, %v7889, %v7059
    %v7907 = vsel %vm7903, %v7890, %v7061
    %v7908 = vsel %vm7903, %v7891, %v7063
    %v7909 = vsel %vm7903, %v7892, %v7065
    %v7910 = vsel %vm7903, %v7893, %v7067
    %v7911 = vsel %vm7903, %v7894, %v7069
    %v7912 = vsel %vm7903, %v7895, %v7071
    %v7913 = vsel %vm7903, %v7896, %v7073
    %v7914 = vsel %vm7903, %v7897, %v7075
    %v7915 = vsel %vm7903, %v7898, %v7077
    %v7916 = vsel %vm7903, %v7899, %v7079
    %v7917 = vsel %vm7903, %v7900, %v7081
    %v7918 = vsel %vm7903, %v7901, %v7083
    %v7919 = vsel %vm7903, %v7902, %v7085
    %vm7920 = vcmask 261120
    %v7921 = vsel %vm7920, %v7904, %v7119
    %v7922 = vsel %vm7920, %v7905, %v7121
    %v7923 = vsel %vm7920, %v7906, %v7123
    %v7924 = vsel %vm7920, %v7907, %v7125
    %v7925 = vsel %vm7920, %v7908, %v7127
    %v7926 = vsel %vm7920, %v7909, %v7129
    %v7927 = vsel %vm7920, %v7910, %v7131
    %v7928 = vsel %vm7920, %v7911, %v7133
    %v7929 = vsel %vm7920, %v7912, %v7135
    %v7930 = vsel %vm7920, %v7913, %v7137
    %v7931 = vsel %vm7920, %v7914, %v7139
    %v7932 = vsel %vm7920, %v7915, %v7141
    %v7933 = vsel %vm7920, %v7916, %v7143
    %v7934 = vsel %vm7920, %v7917, %v7145
    %v7935 = vsel %vm7920, %v7918, %v7147
    %v7936 = vsel %vm7920, %v7919, %v7149
    %vm7937 = vcmask 326656
    %v7938 = vsel %vm7937, %v7921, %v7183
    %v7939 = vsel %vm7937, %v7922, %v7185
    %v7940 = vsel %vm7937, %v7923, %v7187
    %v7941 = vsel %vm7937, %v7924, %v7189
    %v7942 = vsel %vm7937, %v7925, %v7191
    %v7943 = vsel %vm7937, %v7926, %v7193
    %v7944 = vsel %vm7937, %v7927, %v7195
    %v7945 = vsel %vm7937, %v7928, %v7197
    %v7946 = vsel %vm7937, %v7929, %v7199
    %v7947 = vsel %vm7937, %v7930, %v7201
    %v7948 = vsel %vm7937, %v7931, %v7203
    %v7949 = vsel %vm7937, %v7932, %v7205
    %v7950 = vsel %vm7937, %v7933, %v7207
    %v7951 = vsel %vm7937, %v7934, %v7209
    %v7952 = vsel %vm7937, %v7935, %v7211
    %v7953 = vsel %vm7937, %v7936, %v7213
    %vm7954 = vcmask 392192
    %v7955 = vsel %vm7954, %v7938, %v7247
    %v7956 = vsel %vm7954, %v7939, %v7249
    %v7957 = vsel %vm7954, %v7940, %v7251
    %v7958 = vsel %vm7954, %v7941, %v7253
    %v7959 = vsel %vm7954, %v7942, %v7255
    %v7960 = vsel %vm7954, %v7943, %v7257
    %v7961 = vsel %vm7954, %v7944, %v7259
    %v7962 = vsel %vm7954, %v7945, %v7261
    %v7963 = vsel %vm7954, %v7946, %v7263
    %v7964 = vsel %vm7954, %v7947, %v7265
    %v7965 = vsel %vm7954, %v7948, %v7267
    %v7966 = vsel %vm7954, %v7949, %v7269
    %v7967 = vsel %vm7954, %v7950, %v7271
    %v7968 = vsel %vm7954, %v7951, %v7273
    %v7969 = vsel %vm7954, %v7952, %v7275
    %v7970 = vsel %vm7954, %v7953, %v7277
    %vm7971 = vcmask 457728
    %v7972 = vsel %vm7971, %v7955, %v7311
    %v7973 = vsel %vm7971, %v7956, %v7313
    %v7974 = vsel %vm7971, %v7957, %v7315
    %v7975 = vsel %vm7971, %v7958, %v7317
    %v7976 = vsel %vm7971, %v7959, %v7319
    %v7977 = vsel %vm7971, %v7960, %v7321
    %v7978 = vsel %vm7971, %v7961, %v7323
    %v7979 = vsel %vm7971, %v7962, %v7325
    %v7980 = vsel %vm7971, %v7963, %v7327
    %v7981 = vsel %vm7971, %v7964, %v7329
    %v7982 = vsel %vm7971, %v7965, %v7331
    %v7983 = vsel %vm7971, %v7966, %v7333
    %v7984 = vsel %vm7971, %v7967, %v7335
    %v7985 = vsel %vm7971, %v7968, %v7337
    %v7986 = vsel %vm7971, %v7969, %v7339
    %v7987 = vsel %vm7971, %v7970, %v7341
    %vm7988 = vcmask 523264
    %v7989 = vsel %vm7988, %v7972, %v7375
    %v7990 = vsel %vm7988, %v7973, %v7377
    %v7991 = vsel %vm7988, %v7974, %v7379
    %v7992 = vsel %vm7988, %v7975, %v7381
    %v7993 = vsel %vm7988, %v7976, %v7383
    %v7994 = vsel %vm7988, %v7977, %v7385
    %v7995 = vsel %vm7988, %v7978, %v7387
    %v7996 = vsel %vm7988, %v7979, %v7389
    %v7997 = vsel %vm7988, %v7980, %v7391
    %v7998 = vsel %vm7988, %v7981, %v7393
    %v7999 = vsel %vm7988, %v7982, %v7395
    %v8000 = vsel %vm7988, %v7983, %v7397
    %v8001 = vsel %vm7988, %v7984, %v7399
    %v8002 = vsel %vm7988, %v7985, %v7401
    %v8003 = vsel %vm7988, %v7986, %v7403
    %v8004 = vsel %vm7988, %v7987, %v7405
    %vm8005 = vcmask 588800
    %v8006 = vsel %vm8005, %v7989, %v7439
    %v8007 = vsel %vm8005, %v7990, %v7441
    %v8008 = vsel %vm8005, %v7991, %v7443
    %v8009 = vsel %vm8005, %v7992, %v7445
    %v8010 = vsel %vm8005, %v7993, %v7447
    %v8011 = vsel %vm8005, %v7994, %v7449
    %v8012 = vsel %vm8005, %v7995, %v7451
    %v8013 = vsel %vm8005, %v7996, %v7453
    %v8014 = vsel %vm8005, %v7997, %v7455
    %v8015 = vsel %vm8005, %v7998, %v7457
    %v8016 = vsel %vm8005, %v7999, %v7459
    %v8017 = vsel %vm8005, %v8000, %v7461
    %v8018 = vsel %vm8005, %v8001, %v7463
    %v8019 = vsel %vm8005, %v8002, %v7465
    %v8020 = vsel %vm8005, %v8003, %v7467
    %v8021 = vsel %vm8005, %v8004, %v7469
    %vm8022 = vcmask 654336
    %v8023 = vsel %vm8022, %v8006, %v7503
    %v8024 = vsel %vm8022, %v8007, %v7505
    %v8025 = vsel %vm8022, %v8008, %v7507
    %v8026 = vsel %vm8022, %v8009, %v7509
    %v8027 = vsel %vm8022, %v8010, %v7511
    %v8028 = vsel %vm8022, %v8011, %v7513
    %v8029 = vsel %vm8022, %v8012, %v7515
    %v8030 = vsel %vm8022, %v8013, %v7517
    %v8031 = vsel %vm8022, %v8014, %v7519
    %v8032 = vsel %vm8022, %v8015, %v7521
    %v8033 = vsel %vm8022, %v8016, %v7523
    %v8034 = vsel %vm8022, %v8017, %v7525
    %v8035 = vsel %vm8022, %v8018, %v7527
    %v8036 = vsel %vm8022, %v8019, %v7529
    %v8037 = vsel %vm8022, %v8020, %v7531
    %v8038 = vsel %vm8022, %v8021, %v7533
    %vm8039 = vcmask 719872
    %v8040 = vsel %vm8039, %v8023, %v7567
    %v8041 = vsel %vm8039, %v8024, %v7569
    %v8042 = vsel %vm8039, %v8025, %v7571
    %v8043 = vsel %vm8039, %v8026, %v7573
    %v8044 = vsel %vm8039, %v8027, %v7575
    %v8045 = vsel %vm8039, %v8028, %v7577
    %v8046 = vsel %vm8039, %v8029, %v7579
    %v8047 = vsel %vm8039, %v8030, %v7581
    %v8048 = vsel %vm8039, %v8031, %v7583
    %v8049 = vsel %vm8039, %v8032, %v7585
    %v8050 = vsel %vm8039, %v8033, %v7587
    %v8051 = vsel %vm8039, %v8034, %v7589
    %v8052 = vsel %vm8039, %v8035, %v7591
    %v8053 = vsel %vm8039, %v8036, %v7593
    %v8054 = vsel %vm8039, %v8037, %v7595
    %v8055 = vsel %vm8039, %v8038, %v7597
    %vm8056 = vcmask 785408
    %v8057 = vsel %vm8056, %v8040, %v7631
    %v8058 = vsel %vm8056, %v8041, %v7633
    %v8059 = vsel %vm8056, %v8042, %v7635
    %v8060 = vsel %vm8056, %v8043, %v7637
    %v8061 = vsel %vm8056, %v8044, %v7639
    %v8062 = vsel %vm8056, %v8045, %v7641
    %v8063 = vsel %vm8056, %v8046, %v7643
    %v8064 = vsel %vm8056, %v8047, %v7645
    %v8065 = vsel %vm8056, %v8048, %v7647
    %v8066 = vsel %vm8056, %v8049, %v7649
    %v8067 = vsel %vm8056, %v8050, %v7651
    %v8068 = vsel %vm8056, %v8051, %v7653
    %v8069 = vsel %vm8056, %v8052, %v7655
    %v8070 = vsel %vm8056, %v8053, %v7657
    %v8071 = vsel %vm8056, %v8054, %v7659
    %v8072 = vsel %vm8056, %v8055, %v7661
    %vm8073 = vcmask 850944
    %v8074 = vsel %vm8073, %v8057, %v7695
    %v8075 = vsel %vm8073, %v8058, %v7697
    %v8076 = vsel %vm8073, %v8059, %v7699
    %v8077 = vsel %vm8073, %v8060, %v7701
    %v8078 = vsel %vm8073, %v8061, %v7703
    %v8079 = vsel %vm8073, %v8062, %v7705
    %v8080 = vsel %vm8073, %v8063, %v7707
    %v8081 = vsel %vm8073, %v8064, %v7709
    %v8082 = vsel %vm8073, %v8065, %v7711
    %v8083 = vsel %vm8073, %v8066, %v7713
    %v8084 = vsel %vm8073, %v8067, %v7715
    %v8085 = vsel %vm8073, %v8068, %v7717
    %v8086 = vsel %vm8073, %v8069, %v7719
    %v8087 = vsel %vm8073, %v8070, %v7721
    %v8088 = vsel %vm8073, %v8071, %v7723
    %v8089 = vsel %vm8073, %v8072, %v7725
    %vm8090 = vcmask 916480
    %v8091 = vsel %vm8090, %v8074, %v7759
    %v8092 = vsel %vm8090, %v8075, %v7761
    %v8093 = vsel %vm8090, %v8076, %v7763
    %v8094 = vsel %vm8090, %v8077, %v7765
    %v8095 = vsel %vm8090, %v8078, %v7767
    %v8096 = vsel %vm8090, %v8079, %v7769
    %v8097 = vsel %vm8090, %v8080, %v7771
    %v8098 = vsel %vm8090, %v8081, %v7773
    %v8099 = vsel %vm8090, %v8082, %v7775
    %v8100 = vsel %vm8090, %v8083, %v7777
    %v8101 = vsel %vm8090, %v8084, %v7779
    %v8102 = vsel %vm8090, %v8085, %v7781
    %v8103 = vsel %vm8090, %v8086, %v7783
    %v8104 = vsel %vm8090, %v8087, %v7785
    %v8105 = vsel %vm8090, %v8088, %v7787
    %v8106 = vsel %vm8090, %v8089, %v7789
    %vm8107 = vcmask 982016
    %v8108 = vsel %vm8107, %v8091, %v7823
    %v8109 = vsel %vm8107, %v8092, %v7825
    %v8110 = vsel %vm8107, %v8093, %v7827
    %v8111 = vsel %vm8107, %v8094, %v7829
    %v8112 = vsel %vm8107, %v8095, %v7831
    %v8113 = vsel %vm8107, %v8096, %v7833
    %v8114 = vsel %vm8107, %v8097, %v7835
    %v8115 = vsel %vm8107, %v8098, %v7837
    %v8116 = vsel %vm8107, %v8099, %v7839
    %v8117 = vsel %vm8107, %v8100, %v7841
    %v8118 = vsel %vm8107, %v8101, %v7843
    %v8119 = vsel %vm8107, %v8102, %v7845
    %v8120 = vsel %vm8107, %v8103, %v7847
    %v8121 = vsel %vm8107, %v8104, %v7849
    %v8122 = vsel %vm8107, %v8105, %v7851
    %v8123 = vsel %vm8107, %v8106, %v7853
    %v8124 = vpack.c.bf16 %v8109, %v8108
    %v8125 = vpack.c.bf16 %v8111, %v8110
    %v8126 = vpack.c.bf16 %v8113, %v8112
    %v8127 = vpack.c.bf16 %v8115, %v8114
    %v8128 = vpack.c.bf16 %v8117, %v8116
    %v8129 = vpack.c.bf16 %v8119, %v8118
    %v8130 = vpack.c.bf16 %v8121, %v8120
    %v8131 = vpack.c.bf16 %v8123, %v8122
    %v8132 = vld [vmem:[%s3] sm:$0xf]
    %v8133 = vld [vmem:[%s3 + $0x4] sm:$0xf]
    %v8134 = vld [vmem:[%s3 + $0x8] sm:$0xf]
    %v8135 = vld [vmem:[%s3 + $0xc] sm:$0xf]
    %v8136 = vld [vmem:[%s3 + $0x10] sm:$0xf]
    %v8137 = vld [vmem:[%s3 + $0x14] sm:$0xf]
    %v8138 = vld [vmem:[%s3 + $0x18] sm:$0xf]
    %v8139 = vld [vmem:[%s3 + $0x1c] sm:$0xf]
    %v8140 = vld [vmem:[%s3 + $0x20] sm:$0xf]
    %v8141 = vld [vmem:[%s3 + $0x24] sm:$0xf]
    %v8142 = vld [vmem:[%s3 + $0x28] sm:$0xf]
    %v8143 = vld [vmem:[%s3 + $0x2c] sm:$0xf]
    %v8144 = vld [vmem:[%s3 + $0x30] sm:$0xf]
    %v8145 = vld [vmem:[%s3 + $0x34] sm:$0xf]
    %v8146 = vld [vmem:[%s3 + $0x38] sm:$0xf]
    %v8147 = vld [vmem:[%s3 + $0x3c] sm:$0xf]
    %v8164 = vunpack.c.l.b16 %v8132
    %v8165 = vunpack.c.l.b16 %v8133
    %v8166 = vunpack.c.l.b16 %v8134
    %v8167 = vunpack.c.l.b16 %v8135
    %v8168 = vunpack.c.l.b16 %v8136
    %v8169 = vunpack.c.l.b16 %v8137
    %v8170 = vunpack.c.l.b16 %v8138
    %v8171 = vunpack.c.l.b16 %v8139
    %v8172 = vunpack.c.l.b16 %v8140
    %v8173 = vunpack.c.l.b16 %v8141
    %v8174 = vunpack.c.l.b16 %v8142
    %v8175 = vunpack.c.l.b16 %v8143
    %v8176 = vunpack.c.l.b16 %v8144
    %v8177 = vunpack.c.l.b16 %v8145
    %v8178 = vunpack.c.l.b16 %v8146
    %v8179 = vunpack.c.l.b16 %v8147
    %v8180 = vpack.c.b16 %v8165, %v8164
    %v8181 = vpack.c.b16 %v8167, %v8166
    %v8182 = vpack.c.b16 %v8169, %v8168
    %v8183 = vpack.c.b16 %v8171, %v8170
    %v8184 = vpack.c.b16 %v8173, %v8172
    %v8185 = vpack.c.b16 %v8175, %v8174
    %v8186 = vpack.c.b16 %v8177, %v8176
    %v8187 = vpack.c.b16 %v8179, %v8178
    %8196 = vmatpush.bf16.msra.mxu0 %v8187
    %8197 = vmatpush.bf16.msra.mxu0 %v8186
    %8198 = vmatpush.bf16.msra.mxu0 %v8185
    %8199 = vmatpush.bf16.msra.mxu0 %v8184
    %8200 = vmatpush.bf16.msra.mxu0 %v8183
    %8201 = vmatpush.bf16.msra.mxu0 %v8182
    %8202 = vmatpush.bf16.msra.mxu0 %v8181
    %8203 = vmatpush.bf16.msra.mxu0 %v8180
    %8204 = vmatmul.bf16.gmra.mxu0 %v8124
    %v8205 = vpop.f32.mrf.mxu0
    %v8206 = vadd.f32 0.0, %v8205
    %v8207 = vpop.f32.mrf.mxu0
    %v8208 = vadd.f32 0.0, %v8207
    %8209 = vmatmul.bf16.gmra.mxu0 %v8125
    %v8210 = vpop.f32.mrf.mxu0
    %v8211 = vadd.f32 0.0, %v8210
    %v8212 = vpop.f32.mrf.mxu0
    %v8213 = vadd.f32 0.0, %v8212
    %8214 = vmatmul.bf16.gmra.mxu0 %v8126
    %v8215 = vpop.f32.mrf.mxu0
    %v8216 = vadd.f32 0.0, %v8215
    %v8217 = vpop.f32.mrf.mxu0
    %v8218 = vadd.f32 0.0, %v8217
    %8219 = vmatmul.bf16.gmra.mxu0 %v8127
    %v8220 = vpop.f32.mrf.mxu0
    %v8221 = vadd.f32 0.0, %v8220
    %v8222 = vpop.f32.mrf.mxu0
    %v8223 = vadd.f32 0.0, %v8222
    %8224 = vmatmul.bf16.gmra.mxu0 %v8128
    %v8225 = vpop.f32.mrf.mxu0
    %v8226 = vadd.f32 0.0, %v8225
    %v8227 = vpop.f32.mrf.mxu0
    %v8228 = vadd.f32 0.0, %v8227
    %8229 = vmatmul.bf16.gmra.mxu0 %v8129
    %v8230 = vpop.f32.mrf.mxu0
    %v8231 = vadd.f32 0.0, %v8230
    %v8232 = vpop.f32.mrf.mxu0
    %v8233 = vadd.f32 0.0, %v8232
    %8234 = vmatmul.bf16.gmra.mxu0 %v8130
    %v8235 = vpop.f32.mrf.mxu0
    %v8236 = vadd.f32 0.0, %v8235
    %v8237 = vpop.f32.mrf.mxu0
    %v8238 = vadd.f32 0.0, %v8237
    %8239 = vmatmul.bf16.gmra.mxu0 %v8131
    %v8240 = vpop.f32.mrf.mxu0
    %v8241 = vadd.f32 0.0, %v8240
    %v8242 = vpop.f32.mrf.mxu0
    %v8243 = vadd.f32 0.0, %v8242
    %8244 = vdwg.mxu0
    %v8245 = vsel %vm197, %v8206, 0.0
    %v8246 = vsel %vm197, %v8208, 0.0
    %v8247 = vadd.f32 %v8245, %v8246
    %v8248 = vsel %vm197, %v8211, 0.0
    %v8249 = vadd.f32 %v8247, %v8248
    %v8250 = vsel %vm197, %v8213, 0.0
    %v8251 = vadd.f32 %v8249, %v8250
    %v8252 = vsel %vm197, %v8216, 0.0
    %v8253 = vadd.f32 %v8251, %v8252
    %v8254 = vsel %vm197, %v8218, 0.0
    %v8255 = vadd.f32 %v8253, %v8254
    %v8256 = vsel %vm197, %v8221, 0.0
    %v8257 = vadd.f32 %v8255, %v8256
    %v8258 = vsel %vm197, %v8223, 0.0
    %v8259 = vadd.f32 %v8257, %v8258
    %v8260 = vrot.slane %v8259, 4
    %v8261 = vadd.f32 %v8259, %v8260
    %v8262 = vrot.slane %v8261, 2
    %v8263 = vadd.f32 %v8261, %v8262
    %v8264 = vrot.slane %v8263, 1
    %v8265 = vadd.f32 %v8263, %v8264
    %v8266 = vsel %vm197, %v8226, 0.0
    %v8267 = vsel %vm197, %v8228, 0.0
    %v8268 = vadd.f32 %v8266, %v8267
    %v8269 = vsel %vm197, %v8231, 0.0
    %v8270 = vadd.f32 %v8268, %v8269
    %v8271 = vsel %vm197, %v8233, 0.0
    %v8272 = vadd.f32 %v8270, %v8271
    %v8273 = vsel %vm197, %v8236, 0.0
    %v8274 = vadd.f32 %v8272, %v8273
    %v8275 = vsel %vm197, %v8238, 0.0
    %v8276 = vadd.f32 %v8274, %v8275
    %v8277 = vsel %vm197, %v8241, 0.0
    %v8278 = vadd.f32 %v8276, %v8277
    %v8279 = vsel %vm197, %v8243, 0.0
    %v8280 = vadd.f32 %v8278, %v8279
    %v8281 = vrot.slane %v8280, 4
    %v8282 = vadd.f32 %v8280, %v8281
    %v8283 = vrot.slane %v8282, 2
    %v8284 = vadd.f32 %v8282, %v8283
    %v8285 = vrot.slane %v8284, 1
    %v8286 = vadd.f32 %v8284, %v8285
    %v8287 = vrcp.pop 64.0
    %v8288 = vmul.f32 64.0, %v8287
    %v8289 = vsub.f32 1.0, %v8288
    %v8290 = vmul.f32 %v8287, %v8289
    %v8291 = vadd.f32 %v8287, %v8290
    %vm8292 = vweird.f32 %v8287
    %v8293 = vsel %vm8292, %v8287, %v8291
    %v8294 = vmul.f32 %v8265, %v8293
    %v8295 = vmul.f32 %v8286, %v8293
    %v8296 = vsub.f32 %v8206, %v8294
    %v8297 = vsub.f32 %v8208, %v8294
    %v8298 = vsub.f32 %v8211, %v8294
    %v8299 = vsub.f32 %v8213, %v8294
    %v8300 = vsub.f32 %v8216, %v8294
    %v8301 = vsub.f32 %v8218, %v8294
    %v8302 = vsub.f32 %v8221, %v8294
    %v8303 = vsub.f32 %v8223, %v8294
    %v8304 = vsub.f32 %v8226, %v8295
    %v8305 = vsub.f32 %v8228, %v8295
    %v8306 = vsub.f32 %v8231, %v8295
    %v8307 = vsub.f32 %v8233, %v8295
    %v8308 = vsub.f32 %v8236, %v8295
    %v8309 = vsub.f32 %v8238, %v8295
    %v8310 = vsub.f32 %v8241, %v8295
    %v8311 = vsub.f32 %v8243, %v8295
    %v8312 = vmul.f32 %v8296, %v8296
    %v8313 = vmul.f32 %v8297, %v8297
    %v8314 = vmul.f32 %v8298, %v8298
    %v8315 = vmul.f32 %v8299, %v8299
    %v8316 = vmul.f32 %v8300, %v8300
    %v8317 = vmul.f32 %v8301, %v8301
    %v8318 = vmul.f32 %v8302, %v8302
    %v8319 = vmul.f32 %v8303, %v8303
    %v8320 = vmul.f32 %v8304, %v8304
    %v8321 = vmul.f32 %v8305, %v8305
    %v8322 = vmul.f32 %v8306, %v8306
    %v8323 = vmul.f32 %v8307, %v8307
    %v8324 = vmul.f32 %v8308, %v8308
    %v8325 = vmul.f32 %v8309, %v8309
    %v8326 = vmul.f32 %v8310, %v8310
    %v8327 = vmul.f32 %v8311, %v8311
    %v8328 = vsel %vm197, %v8312, 0.0
    %v8329 = vsel %vm197, %v8313, 0.0
    %v8330 = vadd.f32 %v8328, %v8329
    %v8331 = vsel %vm197, %v8314, 0.0
    %v8332 = vadd.f32 %v8330, %v8331
    %v8333 = vsel %vm197, %v8315, 0.0
    %v8334 = vadd.f32 %v8332, %v8333
    %v8335 = vsel %vm197, %v8316, 0.0
    %v8336 = vadd.f32 %v8334, %v8335
    %v8337 = vsel %vm197, %v8317, 0.0
    %v8338 = vadd.f32 %v8336, %v8337
    %v8339 = vsel %vm197, %v8318, 0.0
    %v8340 = vadd.f32 %v8338, %v8339
    %v8341 = vsel %vm197, %v8319, 0.0
    %v8342 = vadd.f32 %v8340, %v8341
    %v8343 = vrot.slane %v8342, 4
    %v8344 = vadd.f32 %v8342, %v8343
    %v8345 = vrot.slane %v8344, 2
    %v8346 = vadd.f32 %v8344, %v8345
    %v8347 = vrot.slane %v8346, 1
    %v8348 = vadd.f32 %v8346, %v8347
    %v8349 = vsel %vm197, %v8320, 0.0
    %v8350 = vsel %vm197, %v8321, 0.0
    %v8351 = vadd.f32 %v8349, %v8350
    %v8352 = vsel %vm197, %v8322, 0.0
    %v8353 = vadd.f32 %v8351, %v8352
    %v8354 = vsel %vm197, %v8323, 0.0
    %v8355 = vadd.f32 %v8353, %v8354
    %v8356 = vsel %vm197, %v8324, 0.0
    %v8357 = vadd.f32 %v8355, %v8356
    %v8358 = vsel %vm197, %v8325, 0.0
    %v8359 = vadd.f32 %v8357, %v8358
    %v8360 = vsel %vm197, %v8326, 0.0
    %v8361 = vadd.f32 %v8359, %v8360
    %v8362 = vsel %vm197, %v8327, 0.0
    %v8363 = vadd.f32 %v8361, %v8362
    %v8364 = vrot.slane %v8363, 4
    %v8365 = vadd.f32 %v8363, %v8364
    %v8366 = vrot.slane %v8365, 2
    %v8367 = vadd.f32 %v8365, %v8366
    %v8368 = vrot.slane %v8367, 1
    %v8369 = vadd.f32 %v8367, %v8368
    %v8370 = vmul.f32 %v8348, %v8293
    %v8371 = vmul.f32 %v8369, %v8293
    %v8372 = vadd.f32 %v8370, 1e-05
    %v8373 = vadd.f32 %v8371, 1e-05
    %v8374 = vrsqrt.pop %v8372
    %v8375 = vmul.f32 %v8374, %v8372
    %v8376 = vmul.f32 %v8375, %v8374
    %v8377 = vmul.f32 0.5, %v8376
    %v8378 = vsub.f32 1.5, %v8377
    %v8379 = vmul.f32 %v8374, %v8378
    %vm8380 = vweird.f32 %v8372
    %vm8381 = vweird.f32 %v8374
    %vm8382 = vmor %vm8380, %vm8381
    %v8383 = vsel %vm8382, %v8374, %v8379
    %v8384 = vrsqrt.pop %v8373
    %v8385 = vmul.f32 %v8384, %v8373
    %v8386 = vmul.f32 %v8385, %v8384
    %v8387 = vmul.f32 0.5, %v8386
    %v8388 = vsub.f32 1.5, %v8387
    %v8389 = vmul.f32 %v8384, %v8388
    %vm8390 = vweird.f32 %v8373
    %vm8391 = vweird.f32 %v8384
    %vm8392 = vmor %vm8390, %vm8391
    %v8393 = vsel %vm8392, %v8384, %v8389
    %v8394 = vmul.f32 %v8296, %v8383
    %v8395 = vmul.f32 %v8297, %v8383
    %v8396 = vmul.f32 %v8298, %v8383
    %v8397 = vmul.f32 %v8299, %v8383
    %v8398 = vmul.f32 %v8300, %v8383
    %v8399 = vmul.f32 %v8301, %v8383
    %v8400 = vmul.f32 %v8302, %v8383
    %v8401 = vmul.f32 %v8303, %v8383
    %v8402 = vmul.f32 %v8304, %v8393
    %v8403 = vmul.f32 %v8305, %v8393
    %v8404 = vmul.f32 %v8306, %v8393
    %v8405 = vmul.f32 %v8307, %v8393
    %v8406 = vmul.f32 %v8308, %v8393
    %v8407 = vmul.f32 %v8309, %v8393
    %v8408 = vmul.f32 %v8310, %v8393
    %v8409 = vmul.f32 %v8311, %v8393
    %vm8410 = vcmp.ge.f32.partialorder %v8394, 0.0
    %vm8411 = vcmp.ge.f32.partialorder %v8395, 0.0
    %vm8412 = vcmp.ge.f32.partialorder %v8396, 0.0
    %vm8413 = vcmp.ge.f32.partialorder %v8397, 0.0
    %vm8414 = vcmp.ge.f32.partialorder %v8398, 0.0
    %vm8415 = vcmp.ge.f32.partialorder %v8399, 0.0
    %vm8416 = vcmp.ge.f32.partialorder %v8400, 0.0
    %vm8417 = vcmp.ge.f32.partialorder %v8401, 0.0
    %vm8418 = vcmp.ge.f32.partialorder %v8402, 0.0
    %vm8419 = vcmp.ge.f32.partialorder %v8403, 0.0
    %vm8420 = vcmp.ge.f32.partialorder %v8404, 0.0
    %vm8421 = vcmp.ge.f32.partialorder %v8405, 0.0
    %vm8422 = vcmp.ge.f32.partialorder %v8406, 0.0
    %vm8423 = vcmp.ge.f32.partialorder %v8407, 0.0
    %vm8424 = vcmp.ge.f32.partialorder %v8408, 0.0
    %vm8425 = vcmp.ge.f32.partialorder %v8409, 0.0
    %v8426 = vmul.f32 %v8394, 0.05
    %v8427 = vmul.f32 %v8395, 0.05
    %v8428 = vmul.f32 %v8396, 0.05
    %v8429 = vmul.f32 %v8397, 0.05
    %v8430 = vmul.f32 %v8398, 0.05
    %v8431 = vmul.f32 %v8399, 0.05
    %v8432 = vmul.f32 %v8400, 0.05
    %v8433 = vmul.f32 %v8401, 0.05
    %v8434 = vmul.f32 %v8402, 0.05
    %v8435 = vmul.f32 %v8403, 0.05
    %v8436 = vmul.f32 %v8404, 0.05
    %v8437 = vmul.f32 %v8405, 0.05
    %v8438 = vmul.f32 %v8406, 0.05
    %v8439 = vmul.f32 %v8407, 0.05
    %v8440 = vmul.f32 %v8408, 0.05
    %v8441 = vmul.f32 %v8409, 0.05
    %v8442 = vsel %vm8410, %v8394, %v8426
    %v8443 = vsel %vm8411, %v8395, %v8427
    %v8444 = vsel %vm8412, %v8396, %v8428
    %v8445 = vsel %vm8413, %v8397, %v8429
    %v8446 = vsel %vm8414, %v8398, %v8430
    %v8447 = vsel %vm8415, %v8399, %v8431
    %v8448 = vsel %vm8416, %v8400, %v8432
    %v8449 = vsel %vm8417, %v8401, %v8433
    %v8450 = vsel %vm8418, %v8402, %v8434
    %v8451 = vsel %vm8419, %v8403, %v8435
    %v8452 = vsel %vm8420, %v8404, %v8436
    %v8453 = vsel %vm8421, %v8405, %v8437
    %v8454 = vsel %vm8422, %v8406, %v8438
    %v8455 = vsel %vm8423, %v8407, %v8439
    %v8456 = vsel %vm8424, %v8408, %v8440
    %v8457 = vsel %vm8425, %v8409, %v8441
    %v8458 = vpack.c.bf16 %v8443, %v8442
    %v8459 = vpack.c.bf16 %v8445, %v8444
    %v8460 = vpack.c.bf16 %v8447, %v8446
    %v8461 = vpack.c.bf16 %v8449, %v8448
    %v8462 = vpack.c.bf16 %v8451, %v8450
    %v8463 = vpack.c.bf16 %v8453, %v8452
    %v8464 = vpack.c.bf16 %v8455, %v8454
    %v8465 = vpack.c.bf16 %v8457, %v8456
    %v8466 = vld [vmem:[#allocation4] sm:$0xf]
    %v8467 = vld [vmem:[#allocation4 + $0x4] sm:$0xf]
    %v8468 = vld [vmem:[#allocation4 + $0x8] sm:$0xf]
    %v8469 = vld [vmem:[#allocation4 + $0xc] sm:$0xf]
    %v8474 = vunpack.c.l.b16 %v8466
    %v8475 = vunpack.c.l.b16 %v8467
    %v8476 = vunpack.c.l.b16 %v8468
    %v8477 = vunpack.c.l.b16 %v8469
    %v8478 = vpack.c.b16 %v8475, %v8474
    %v8479 = vpack.c.b16 %v8477, %v8476
    %8482 = vmatpush.bf16.msra.mxu0 %v8465
    %8483 = vmatpush.bf16.msra.mxu0 %v8464
    %8484 = vmatpush.bf16.msra.mxu0 %v8463
    %8485 = vmatpush.bf16.msra.mxu0 %v8462
    %8486 = vmatpush.bf16.msra.mxu0 %v8461
    %8487 = vmatpush.bf16.msra.mxu0 %v8460
    %8488 = vmatpush.bf16.msra.mxu0 %v8459
    %8489 = vmatpush.bf16.msra.mxu0 %v8458
    %8490 = vmatmul.bf16.gmra.mxu0 %v8478
    %v8491 = vpop.f32.mrf.mxu0
    %v8492 = vadd.f32 0.0, %v8491
    %v8493 = vpop.f32.mrf.mxu0
    %v8494 = vadd.f32 0.0, %v8493
    %8495 = vmatmul.bf16.gmra.mxu0 %v8479
    %v8496 = vpop.f32.mrf.mxu0
    %v8497 = vadd.f32 0.0, %v8496
    %v8498 = vpop.f32.mrf.mxu0
    %v8499 = vadd.f32 0.0, %v8498
    %8500 = vdwg.mxu0
    %s8501 = scalar_lea.vmem [#allocation4], 16
    %v8502 = vld [vmem:[%s8501] sm:$0xf]
    %v8503 = vld [vmem:[%s8501 + $0x4] sm:$0xf]
    %v8504 = vld [vmem:[%s8501 + $0x8] sm:$0xf]
    %v8505 = vld [vmem:[%s8501 + $0xc] sm:$0xf]
    %v8510 = vunpack.c.l.b16 %v8502
    %v8511 = vunpack.c.l.b16 %v8503
    %v8512 = vunpack.c.l.b16 %v8504
    %v8513 = vunpack.c.l.b16 %v8505
    %v8514 = vpack.c.b16 %v8511, %v8510
    %v8515 = vpack.c.b16 %v8513, %v8512
    %8518 = vmatpush.bf16.msra.mxu0 %v8465
    %8519 = vmatpush.bf16.msra.mxu0 %v8464
    %8520 = vmatpush.bf16.msra.mxu0 %v8463
    %8521 = vmatpush.bf16.msra.mxu0 %v8462
    %8522 = vmatpush.bf16.msra.mxu0 %v8461
    %8523 = vmatpush.bf16.msra.mxu0 %v8460
    %8524 = vmatpush.bf16.msra.mxu0 %v8459
    %8525 = vmatpush.bf16.msra.mxu0 %v8458
    %8526 = vmatmul.bf16.gmra.mxu0 %v8514
    %v8527 = vpop.f32.mrf.mxu0
    %v8528 = vadd.f32 0.0, %v8527
    %v8529 = vpop.f32.mrf.mxu0
    %v8530 = vadd.f32 0.0, %v8529
    %8531 = vmatmul.bf16.gmra.mxu0 %v8515
    %v8532 = vpop.f32.mrf.mxu0
    %v8533 = vadd.f32 0.0, %v8532
    %v8534 = vpop.f32.mrf.mxu0
    %v8535 = vadd.f32 0.0, %v8534
    %8536 = vdwg.mxu0
    %s8537 = scalar_lea.vmem [#allocation4], 32
    %v8538 = vld [vmem:[%s8537] sm:$0xf]
    %v8539 = vld [vmem:[%s8537 + $0x4] sm:$0xf]
    %v8540 = vld [vmem:[%s8537 + $0x8] sm:$0xf]
    %v8541 = vld [vmem:[%s8537 + $0xc] sm:$0xf]
    %v8546 = vunpack.c.l.b16 %v8538
    %v8547 = vunpack.c.l.b16 %v8539
    %v8548 = vunpack.c.l.b16 %v8540
    %v8549 = vunpack.c.l.b16 %v8541
    %v8550 = vpack.c.b16 %v8547, %v8546
    %v8551 = vpack.c.b16 %v8549, %v8548
    %8554 = vmatpush.bf16.msra.mxu0 %v8465
    %8555 = vmatpush.bf16.msra.mxu0 %v8464
    %8556 = vmatpush.bf16.msra.mxu0 %v8463
    %8557 = vmatpush.bf16.msra.mxu0 %v8462
    %8558 = vmatpush.bf16.msra.mxu0 %v8461
    %8559 = vmatpush.bf16.msra.mxu0 %v8460
    %8560 = vmatpush.bf16.msra.mxu0 %v8459
    %8561 = vmatpush.bf16.msra.mxu0 %v8458
    %8562 = vmatmul.bf16.gmra.mxu0 %v8550
    %v8563 = vpop.f32.mrf.mxu0
    %v8564 = vadd.f32 0.0, %v8563
    %v8565 = vpop.f32.mrf.mxu0
    %v8566 = vadd.f32 0.0, %v8565
    %8567 = vmatmul.bf16.gmra.mxu0 %v8551
    %v8568 = vpop.f32.mrf.mxu0
    %v8569 = vadd.f32 0.0, %v8568
    %v8570 = vpop.f32.mrf.mxu0
    %v8571 = vadd.f32 0.0, %v8570
    %8572 = vdwg.mxu0
    %s8573 = scalar_lea.vmem [#allocation4], 48
    %v8574 = vld [vmem:[%s8573] sm:$0xf]
    %v8575 = vld [vmem:[%s8573 + $0x4] sm:$0xf]
    %v8576 = vld [vmem:[%s8573 + $0x8] sm:$0xf]
    %v8577 = vld [vmem:[%s8573 + $0xc] sm:$0xf]
    %v8582 = vunpack.c.l.b16 %v8574
    %v8583 = vunpack.c.l.b16 %v8575
    %v8584 = vunpack.c.l.b16 %v8576
    %v8585 = vunpack.c.l.b16 %v8577
    %v8586 = vpack.c.b16 %v8583, %v8582
    %v8587 = vpack.c.b16 %v8585, %v8584
    %8590 = vmatpush.bf16.msra.mxu0 %v8465
    %8591 = vmatpush.bf16.msra.mxu0 %v8464
    %8592 = vmatpush.bf16.msra.mxu0 %v8463
    %8593 = vmatpush.bf16.msra.mxu0 %v8462
    %8594 = vmatpush.bf16.msra.mxu0 %v8461
    %8595 = vmatpush.bf16.msra.mxu0 %v8460
    %8596 = vmatpush.bf16.msra.mxu0 %v8459
    %8597 = vmatpush.bf16.msra.mxu0 %v8458
    %8598 = vmatmul.bf16.gmra.mxu0 %v8586
    %v8599 = vpop.f32.mrf.mxu0
    %v8600 = vadd.f32 0.0, %v8599
    %v8601 = vpop.f32.mrf.mxu0
    %v8602 = vadd.f32 0.0, %v8601
    %8603 = vmatmul.bf16.gmra.mxu0 %v8587
    %v8604 = vpop.f32.mrf.mxu0
    %v8605 = vadd.f32 0.0, %v8604
    %v8606 = vpop.f32.mrf.mxu0
    %v8607 = vadd.f32 0.0, %v8606
    %8608 = vdwg.mxu0
    %s8609 = scalar_lea.vmem [#allocation4], 64
    %v8610 = vld [vmem:[%s8609] sm:$0xf]
    %v8611 = vld [vmem:[%s8609 + $0x4] sm:$0xf]
    %v8612 = vld [vmem:[%s8609 + $0x8] sm:$0xf]
    %v8613 = vld [vmem:[%s8609 + $0xc] sm:$0xf]
    %v8618 = vunpack.c.l.b16 %v8610
    %v8619 = vunpack.c.l.b16 %v8611
    %v8620 = vunpack.c.l.b16 %v8612
    %v8621 = vunpack.c.l.b16 %v8613
    %v8622 = vpack.c.b16 %v8619, %v8618
    %v8623 = vpack.c.b16 %v8621, %v8620
    %8626 = vmatpush.bf16.msra.mxu0 %v8465
    %8627 = vmatpush.bf16.msra.mxu0 %v8464
    %8628 = vmatpush.bf16.msra.mxu0 %v8463
    %8629 = vmatpush.bf16.msra.mxu0 %v8462
    %8630 = vmatpush.bf16.msra.mxu0 %v8461
    %8631 = vmatpush.bf16.msra.mxu0 %v8460
    %8632 = vmatpush.bf16.msra.mxu0 %v8459
    %8633 = vmatpush.bf16.msra.mxu0 %v8458
    %8634 = vmatmul.bf16.gmra.mxu0 %v8622
    %v8635 = vpop.f32.mrf.mxu0
    %v8636 = vadd.f32 0.0, %v8635
    %v8637 = vpop.f32.mrf.mxu0
    %v8638 = vadd.f32 0.0, %v8637
    %8639 = vmatmul.bf16.gmra.mxu0 %v8623
    %v8640 = vpop.f32.mrf.mxu0
    %v8641 = vadd.f32 0.0, %v8640
    %v8642 = vpop.f32.mrf.mxu0
    %v8643 = vadd.f32 0.0, %v8642
    %8644 = vdwg.mxu0
    %s8645 = scalar_lea.vmem [#allocation4], 80
    %v8646 = vld [vmem:[%s8645] sm:$0xf]
    %v8647 = vld [vmem:[%s8645 + $0x4] sm:$0xf]
    %v8648 = vld [vmem:[%s8645 + $0x8] sm:$0xf]
    %v8649 = vld [vmem:[%s8645 + $0xc] sm:$0xf]
    %v8654 = vunpack.c.l.b16 %v8646
    %v8655 = vunpack.c.l.b16 %v8647
    %v8656 = vunpack.c.l.b16 %v8648
    %v8657 = vunpack.c.l.b16 %v8649
    %v8658 = vpack.c.b16 %v8655, %v8654
    %v8659 = vpack.c.b16 %v8657, %v8656
    %8662 = vmatpush.bf16.msra.mxu0 %v8465
    %8663 = vmatpush.bf16.msra.mxu0 %v8464
    %8664 = vmatpush.bf16.msra.mxu0 %v8463
    %8665 = vmatpush.bf16.msra.mxu0 %v8462
    %8666 = vmatpush.bf16.msra.mxu0 %v8461
    %8667 = vmatpush.bf16.msra.mxu0 %v8460
    %8668 = vmatpush.bf16.msra.mxu0 %v8459
    %8669 = vmatpush.bf16.msra.mxu0 %v8458
    %8670 = vmatmul.bf16.gmra.mxu0 %v8658
    %v8671 = vpop.f32.mrf.mxu0
    %v8672 = vadd.f32 0.0, %v8671
    %v8673 = vpop.f32.mrf.mxu0
    %v8674 = vadd.f32 0.0, %v8673
    %8675 = vmatmul.bf16.gmra.mxu0 %v8659
    %v8676 = vpop.f32.mrf.mxu0
    %v8677 = vadd.f32 0.0, %v8676
    %v8678 = vpop.f32.mrf.mxu0
    %v8679 = vadd.f32 0.0, %v8678
    %8680 = vdwg.mxu0
    %s8681 = scalar_lea.vmem [#allocation4], 96
    %v8682 = vld [vmem:[%s8681] sm:$0xf]
    %v8683 = vld [vmem:[%s8681 + $0x4] sm:$0xf]
    %v8684 = vld [vmem:[%s8681 + $0x8] sm:$0xf]
    %v8685 = vld [vmem:[%s8681 + $0xc] sm:$0xf]
    %v8690 = vunpack.c.l.b16 %v8682
    %v8691 = vunpack.c.l.b16 %v8683
    %v8692 = vunpack.c.l.b16 %v8684
    %v8693 = vunpack.c.l.b16 %v8685
    %v8694 = vpack.c.b16 %v8691, %v8690
    %v8695 = vpack.c.b16 %v8693, %v8692
    %8698 = vmatpush.bf16.msra.mxu0 %v8465
    %8699 = vmatpush.bf16.msra.mxu0 %v8464
    %8700 = vmatpush.bf16.msra.mxu0 %v8463
    %8701 = vmatpush.bf16.msra.mxu0 %v8462
    %8702 = vmatpush.bf16.msra.mxu0 %v8461
    %8703 = vmatpush.bf16.msra.mxu0 %v8460
    %8704 = vmatpush.bf16.msra.mxu0 %v8459
    %8705 = vmatpush.bf16.msra.mxu0 %v8458
    %8706 = vmatmul.bf16.gmra.mxu0 %v8694
    %v8707 = vpop.f32.mrf.mxu0
    %v8708 = vadd.f32 0.0, %v8707
    %v8709 = vpop.f32.mrf.mxu0
    %v8710 = vadd.f32 0.0, %v8709
    %8711 = vmatmul.bf16.gmra.mxu0 %v8695
    %v8712 = vpop.f32.mrf.mxu0
    %v8713 = vadd.f32 0.0, %v8712
    %v8714 = vpop.f32.mrf.mxu0
    %v8715 = vadd.f32 0.0, %v8714
    %8716 = vdwg.mxu0
    %s8717 = scalar_lea.vmem [#allocation4], 112
    %v8718 = vld [vmem:[%s8717] sm:$0xf]
    %v8719 = vld [vmem:[%s8717 + $0x4] sm:$0xf]
    %v8720 = vld [vmem:[%s8717 + $0x8] sm:$0xf]
    %v8721 = vld [vmem:[%s8717 + $0xc] sm:$0xf]
    %v8726 = vunpack.c.l.b16 %v8718
    %v8727 = vunpack.c.l.b16 %v8719
    %v8728 = vunpack.c.l.b16 %v8720
    %v8729 = vunpack.c.l.b16 %v8721
    %v8730 = vpack.c.b16 %v8727, %v8726
    %v8731 = vpack.c.b16 %v8729, %v8728
    %8734 = vmatpush.bf16.msra.mxu0 %v8465
    %8735 = vmatpush.bf16.msra.mxu0 %v8464
    %8736 = vmatpush.bf16.msra.mxu0 %v8463
    %8737 = vmatpush.bf16.msra.mxu0 %v8462
    %8738 = vmatpush.bf16.msra.mxu0 %v8461
    %8739 = vmatpush.bf16.msra.mxu0 %v8460
    %8740 = vmatpush.bf16.msra.mxu0 %v8459
    %8741 = vmatpush.bf16.msra.mxu0 %v8458
    %8742 = vmatmul.bf16.gmra.mxu0 %v8730
    %v8743 = vpop.f32.mrf.mxu0
    %v8744 = vadd.f32 0.0, %v8743
    %v8745 = vpop.f32.mrf.mxu0
    %v8746 = vadd.f32 0.0, %v8745
    %8747 = vmatmul.bf16.gmra.mxu0 %v8731
    %v8748 = vpop.f32.mrf.mxu0
    %v8749 = vadd.f32 0.0, %v8748
    %v8750 = vpop.f32.mrf.mxu0
    %v8751 = vadd.f32 0.0, %v8750
    %8752 = vdwg.mxu0
    %s8753 = scalar_lea.vmem [#allocation4], 128
    %v8754 = vld [vmem:[%s8753] sm:$0xf]
    %v8755 = vld [vmem:[%s8753 + $0x4] sm:$0xf]
    %v8756 = vld [vmem:[%s8753 + $0x8] sm:$0xf]
    %v8757 = vld [vmem:[%s8753 + $0xc] sm:$0xf]
    %v8762 = vunpack.c.l.b16 %v8754
    %v8763 = vunpack.c.l.b16 %v8755
    %v8764 = vunpack.c.l.b16 %v8756
    %v8765 = vunpack.c.l.b16 %v8757
    %v8766 = vpack.c.b16 %v8763, %v8762
    %v8767 = vpack.c.b16 %v8765, %v8764
    %8770 = vmatpush.bf16.msra.mxu0 %v8465
    %8771 = vmatpush.bf16.msra.mxu0 %v8464
    %8772 = vmatpush.bf16.msra.mxu0 %v8463
    %8773 = vmatpush.bf16.msra.mxu0 %v8462
    %8774 = vmatpush.bf16.msra.mxu0 %v8461
    %8775 = vmatpush.bf16.msra.mxu0 %v8460
    %8776 = vmatpush.bf16.msra.mxu0 %v8459
    %8777 = vmatpush.bf16.msra.mxu0 %v8458
    %8778 = vmatmul.bf16.gmra.mxu0 %v8766
    %v8779 = vpop.f32.mrf.mxu0
    %v8780 = vadd.f32 0.0, %v8779
    %v8781 = vpop.f32.mrf.mxu0
    %v8782 = vadd.f32 0.0, %v8781
    %8783 = vmatmul.bf16.gmra.mxu0 %v8767
    %v8784 = vpop.f32.mrf.mxu0
    %v8785 = vadd.f32 0.0, %v8784
    %v8786 = vpop.f32.mrf.mxu0
    %v8787 = vadd.f32 0.0, %v8786
    %8788 = vdwg.mxu0
    %s8789 = scalar_lea.vmem [#allocation4], 144
    %v8790 = vld [vmem:[%s8789] sm:$0xf]
    %v8791 = vld [vmem:[%s8789 + $0x4] sm:$0xf]
    %v8792 = vld [vmem:[%s8789 + $0x8] sm:$0xf]
    %v8793 = vld [vmem:[%s8789 + $0xc] sm:$0xf]
    %v8798 = vunpack.c.l.b16 %v8790
    %v8799 = vunpack.c.l.b16 %v8791
    %v8800 = vunpack.c.l.b16 %v8792
    %v8801 = vunpack.c.l.b16 %v8793
    %v8802 = vpack.c.b16 %v8799, %v8798
    %v8803 = vpack.c.b16 %v8801, %v8800
    %8806 = vmatpush.bf16.msra.mxu0 %v8465
    %8807 = vmatpush.bf16.msra.mxu0 %v8464
    %8808 = vmatpush.bf16.msra.mxu0 %v8463
    %8809 = vmatpush.bf16.msra.mxu0 %v8462
    %8810 = vmatpush.bf16.msra.mxu0 %v8461
    %8811 = vmatpush.bf16.msra.mxu0 %v8460
    %8812 = vmatpush.bf16.msra.mxu0 %v8459
    %8813 = vmatpush.bf16.msra.mxu0 %v8458
    %8814 = vmatmul.bf16.gmra.mxu0 %v8802
    %v8815 = vpop.f32.mrf.mxu0
    %v8816 = vadd.f32 0.0, %v8815
    %v8817 = vpop.f32.mrf.mxu0
    %v8818 = vadd.f32 0.0, %v8817
    %8819 = vmatmul.bf16.gmra.mxu0 %v8803
    %v8820 = vpop.f32.mrf.mxu0
    %v8821 = vadd.f32 0.0, %v8820
    %v8822 = vpop.f32.mrf.mxu0
    %v8823 = vadd.f32 0.0, %v8822
    %8824 = vdwg.mxu0
    %s8825 = scalar_lea.vmem [#allocation4], 160
    %v8826 = vld [vmem:[%s8825] sm:$0xf]
    %v8827 = vld [vmem:[%s8825 + $0x4] sm:$0xf]
    %v8828 = vld [vmem:[%s8825 + $0x8] sm:$0xf]
    %v8829 = vld [vmem:[%s8825 + $0xc] sm:$0xf]
    %v8834 = vunpack.c.l.b16 %v8826
    %v8835 = vunpack.c.l.b16 %v8827
    %v8836 = vunpack.c.l.b16 %v8828
    %v8837 = vunpack.c.l.b16 %v8829
    %v8838 = vpack.c.b16 %v8835, %v8834
    %v8839 = vpack.c.b16 %v8837, %v8836
    %8842 = vmatpush.bf16.msra.mxu0 %v8465
    %8843 = vmatpush.bf16.msra.mxu0 %v8464
    %8844 = vmatpush.bf16.msra.mxu0 %v8463
    %8845 = vmatpush.bf16.msra.mxu0 %v8462
    %8846 = vmatpush.bf16.msra.mxu0 %v8461
    %8847 = vmatpush.bf16.msra.mxu0 %v8460
    %8848 = vmatpush.bf16.msra.mxu0 %v8459
    %8849 = vmatpush.bf16.msra.mxu0 %v8458
    %8850 = vmatmul.bf16.gmra.mxu0 %v8838
    %v8851 = vpop.f32.mrf.mxu0
    %v8852 = vadd.f32 0.0, %v8851
    %v8853 = vpop.f32.mrf.mxu0
    %v8854 = vadd.f32 0.0, %v8853
    %8855 = vmatmul.bf16.gmra.mxu0 %v8839
    %v8856 = vpop.f32.mrf.mxu0
    %v8857 = vadd.f32 0.0, %v8856
    %v8858 = vpop.f32.mrf.mxu0
    %v8859 = vadd.f32 0.0, %v8858
    %8860 = vdwg.mxu0
    %s8861 = scalar_lea.vmem [#allocation4], 176
    %v8862 = vld [vmem:[%s8861] sm:$0xf]
    %v8863 = vld [vmem:[%s8861 + $0x4] sm:$0xf]
    %v8864 = vld [vmem:[%s8861 + $0x8] sm:$0xf]
    %v8865 = vld [vmem:[%s8861 + $0xc] sm:$0xf]
    %v8870 = vunpack.c.l.b16 %v8862
    %v8871 = vunpack.c.l.b16 %v8863
    %v8872 = vunpack.c.l.b16 %v8864
    %v8873 = vunpack.c.l.b16 %v8865
    %v8874 = vpack.c.b16 %v8871, %v8870
    %v8875 = vpack.c.b16 %v8873, %v8872
    %8878 = vmatpush.bf16.msra.mxu0 %v8465
    %8879 = vmatpush.bf16.msra.mxu0 %v8464
    %8880 = vmatpush.bf16.msra.mxu0 %v8463
    %8881 = vmatpush.bf16.msra.mxu0 %v8462
    %8882 = vmatpush.bf16.msra.mxu0 %v8461
    %8883 = vmatpush.bf16.msra.mxu0 %v8460
    %8884 = vmatpush.bf16.msra.mxu0 %v8459
    %8885 = vmatpush.bf16.msra.mxu0 %v8458
    %8886 = vmatmul.bf16.gmra.mxu0 %v8874
    %v8887 = vpop.f32.mrf.mxu0
    %v8888 = vadd.f32 0.0, %v8887
    %v8889 = vpop.f32.mrf.mxu0
    %v8890 = vadd.f32 0.0, %v8889
    %8891 = vmatmul.bf16.gmra.mxu0 %v8875
    %v8892 = vpop.f32.mrf.mxu0
    %v8893 = vadd.f32 0.0, %v8892
    %v8894 = vpop.f32.mrf.mxu0
    %v8895 = vadd.f32 0.0, %v8894
    %8896 = vdwg.mxu0
    %s8897 = scalar_lea.vmem [#allocation4], 192
    %v8898 = vld [vmem:[%s8897] sm:$0xf]
    %v8899 = vld [vmem:[%s8897 + $0x4] sm:$0xf]
    %v8900 = vld [vmem:[%s8897 + $0x8] sm:$0xf]
    %v8901 = vld [vmem:[%s8897 + $0xc] sm:$0xf]
    %v8906 = vunpack.c.l.b16 %v8898
    %v8907 = vunpack.c.l.b16 %v8899
    %v8908 = vunpack.c.l.b16 %v8900
    %v8909 = vunpack.c.l.b16 %v8901
    %v8910 = vpack.c.b16 %v8907, %v8906
    %v8911 = vpack.c.b16 %v8909, %v8908
    %8914 = vmatpush.bf16.msra.mxu0 %v8465
    %8915 = vmatpush.bf16.msra.mxu0 %v8464
    %8916 = vmatpush.bf16.msra.mxu0 %v8463
    %8917 = vmatpush.bf16.msra.mxu0 %v8462
    %8918 = vmatpush.bf16.msra.mxu0 %v8461
    %8919 = vmatpush.bf16.msra.mxu0 %v8460
    %8920 = vmatpush.bf16.msra.mxu0 %v8459
    %8921 = vmatpush.bf16.msra.mxu0 %v8458
    %8922 = vmatmul.bf16.gmra.mxu0 %v8910
    %v8923 = vpop.f32.mrf.mxu0
    %v8924 = vadd.f32 0.0, %v8923
    %v8925 = vpop.f32.mrf.mxu0
    %v8926 = vadd.f32 0.0, %v8925
    %8927 = vmatmul.bf16.gmra.mxu0 %v8911
    %v8928 = vpop.f32.mrf.mxu0
    %v8929 = vadd.f32 0.0, %v8928
    %v8930 = vpop.f32.mrf.mxu0
    %v8931 = vadd.f32 0.0, %v8930
    %8932 = vdwg.mxu0
    %s8933 = scalar_lea.vmem [#allocation4], 208
    %v8934 = vld [vmem:[%s8933] sm:$0xf]
    %v8935 = vld [vmem:[%s8933 + $0x4] sm:$0xf]
    %v8936 = vld [vmem:[%s8933 + $0x8] sm:$0xf]
    %v8937 = vld [vmem:[%s8933 + $0xc] sm:$0xf]
    %v8942 = vunpack.c.l.b16 %v8934
    %v8943 = vunpack.c.l.b16 %v8935
    %v8944 = vunpack.c.l.b16 %v8936
    %v8945 = vunpack.c.l.b16 %v8937
    %v8946 = vpack.c.b16 %v8943, %v8942
    %v8947 = vpack.c.b16 %v8945, %v8944
    %8950 = vmatpush.bf16.msra.mxu0 %v8465
    %8951 = vmatpush.bf16.msra.mxu0 %v8464
    %8952 = vmatpush.bf16.msra.mxu0 %v8463
    %8953 = vmatpush.bf16.msra.mxu0 %v8462
    %8954 = vmatpush.bf16.msra.mxu0 %v8461
    %8955 = vmatpush.bf16.msra.mxu0 %v8460
    %8956 = vmatpush.bf16.msra.mxu0 %v8459
    %8957 = vmatpush.bf16.msra.mxu0 %v8458
    %8958 = vmatmul.bf16.gmra.mxu0 %v8946
    %v8959 = vpop.f32.mrf.mxu0
    %v8960 = vadd.f32 0.0, %v8959
    %v8961 = vpop.f32.mrf.mxu0
    %v8962 = vadd.f32 0.0, %v8961
    %8963 = vmatmul.bf16.gmra.mxu0 %v8947
    %v8964 = vpop.f32.mrf.mxu0
    %v8965 = vadd.f32 0.0, %v8964
    %v8966 = vpop.f32.mrf.mxu0
    %v8967 = vadd.f32 0.0, %v8966
    %8968 = vdwg.mxu0
    %s8969 = scalar_lea.vmem [#allocation4], 224
    %v8970 = vld [vmem:[%s8969] sm:$0xf]
    %v8971 = vld [vmem:[%s8969 + $0x4] sm:$0xf]
    %v8972 = vld [vmem:[%s8969 + $0x8] sm:$0xf]
    %v8973 = vld [vmem:[%s8969 + $0xc] sm:$0xf]
    %v8978 = vunpack.c.l.b16 %v8970
    %v8979 = vunpack.c.l.b16 %v8971
    %v8980 = vunpack.c.l.b16 %v8972
    %v8981 = vunpack.c.l.b16 %v8973
    %v8982 = vpack.c.b16 %v8979, %v8978
    %v8983 = vpack.c.b16 %v8981, %v8980
    %8986 = vmatpush.bf16.msra.mxu0 %v8465
    %8987 = vmatpush.bf16.msra.mxu0 %v8464
    %8988 = vmatpush.bf16.msra.mxu0 %v8463
    %8989 = vmatpush.bf16.msra.mxu0 %v8462
    %8990 = vmatpush.bf16.msra.mxu0 %v8461
    %8991 = vmatpush.bf16.msra.mxu0 %v8460
    %8992 = vmatpush.bf16.msra.mxu0 %v8459
    %8993 = vmatpush.bf16.msra.mxu0 %v8458
    %8994 = vmatmul.bf16.gmra.mxu0 %v8982
    %v8995 = vpop.f32.mrf.mxu0
    %v8996 = vadd.f32 0.0, %v8995
    %v8997 = vpop.f32.mrf.mxu0
    %v8998 = vadd.f32 0.0, %v8997
    %8999 = vmatmul.bf16.gmra.mxu0 %v8983
    %v9000 = vpop.f32.mrf.mxu0
    %v9001 = vadd.f32 0.0, %v9000
    %v9002 = vpop.f32.mrf.mxu0
    %v9003 = vadd.f32 0.0, %v9002
    %9004 = vdwg.mxu0
    %s9005 = scalar_lea.vmem [#allocation4], 240
    %v9006 = vld [vmem:[%s9005] sm:$0xf]
    %v9007 = vld [vmem:[%s9005 + $0x4] sm:$0xf]
    %v9008 = vld [vmem:[%s9005 + $0x8] sm:$0xf]
    %v9009 = vld [vmem:[%s9005 + $0xc] sm:$0xf]
    %v9014 = vunpack.c.l.b16 %v9006
    %v9015 = vunpack.c.l.b16 %v9007
    %v9016 = vunpack.c.l.b16 %v9008
    %v9017 = vunpack.c.l.b16 %v9009
    %v9018 = vpack.c.b16 %v9015, %v9014
    %v9019 = vpack.c.b16 %v9017, %v9016
    %9022 = vmatpush.bf16.msra.mxu0 %v8465
    %9023 = vmatpush.bf16.msra.mxu0 %v8464
    %9024 = vmatpush.bf16.msra.mxu0 %v8463
    %9025 = vmatpush.bf16.msra.mxu0 %v8462
    %9026 = vmatpush.bf16.msra.mxu0 %v8461
    %9027 = vmatpush.bf16.msra.mxu0 %v8460
    %9028 = vmatpush.bf16.msra.mxu0 %v8459
    %9029 = vmatpush.bf16.msra.mxu0 %v8458
    %9030 = vmatmul.bf16.gmra.mxu0 %v9018
    %v9031 = vpop.f32.mrf.mxu0
    %v9032 = vadd.f32 0.0, %v9031
    %v9033 = vpop.f32.mrf.mxu0
    %v9034 = vadd.f32 0.0, %v9033
    %9035 = vmatmul.bf16.gmra.mxu0 %v9019
    %v9036 = vpop.f32.mrf.mxu0
    %v9037 = vadd.f32 0.0, %v9036
    %v9038 = vpop.f32.mrf.mxu0
    %v9039 = vadd.f32 0.0, %v9038
    %9040 = vdwg.mxu0
    %9045 = vrot.lane.b32.xlu0 %v8528, 16
    %v9046 = vpop.permute.xlu0 %9045
    %9047 = vrot.lane.b32.xlu0 %v8530, 16
    %v9048 = vpop.permute.xlu0 %9047
    %9049 = vrot.lane.b32.xlu0 %v8533, 16
    %v9050 = vpop.permute.xlu0 %9049
    %9051 = vrot.lane.b32.xlu0 %v8535, 16
    %v9052 = vpop.permute.xlu0 %9051
    %9061 = vrot.lane.b32.xlu0 %v8564, 32
    %v9062 = vpop.permute.xlu0 %9061
    %9063 = vrot.lane.b32.xlu0 %v8566, 32
    %v9064 = vpop.permute.xlu0 %9063
    %9065 = vrot.lane.b32.xlu0 %v8569, 32
    %v9066 = vpop.permute.xlu0 %9065
    %9067 = vrot.lane.b32.xlu0 %v8571, 32
    %v9068 = vpop.permute.xlu0 %9067
    %9077 = vrot.lane.b32.xlu0 %v8600, 48
    %v9078 = vpop.permute.xlu0 %9077
    %9079 = vrot.lane.b32.xlu0 %v8602, 48
    %v9080 = vpop.permute.xlu0 %9079
    %9081 = vrot.lane.b32.xlu0 %v8605, 48
    %v9082 = vpop.permute.xlu0 %9081
    %9083 = vrot.lane.b32.xlu0 %v8607, 48
    %v9084 = vpop.permute.xlu0 %9083
    %9093 = vrot.lane.b32.xlu0 %v8636, 64
    %v9094 = vpop.permute.xlu0 %9093
    %9095 = vrot.lane.b32.xlu0 %v8638, 64
    %v9096 = vpop.permute.xlu0 %9095
    %9097 = vrot.lane.b32.xlu0 %v8641, 64
    %v9098 = vpop.permute.xlu0 %9097
    %9099 = vrot.lane.b32.xlu0 %v8643, 64
    %v9100 = vpop.permute.xlu0 %9099
    %9109 = vrot.lane.b32.xlu0 %v8672, 80
    %v9110 = vpop.permute.xlu0 %9109
    %9111 = vrot.lane.b32.xlu0 %v8674, 80
    %v9112 = vpop.permute.xlu0 %9111
    %9113 = vrot.lane.b32.xlu0 %v8677, 80
    %v9114 = vpop.permute.xlu0 %9113
    %9115 = vrot.lane.b32.xlu0 %v8679, 80
    %v9116 = vpop.permute.xlu0 %9115
    %9125 = vrot.lane.b32.xlu0 %v8708, 96
    %v9126 = vpop.permute.xlu0 %9125
    %9127 = vrot.lane.b32.xlu0 %v8710, 96
    %v9128 = vpop.permute.xlu0 %9127
    %9129 = vrot.lane.b32.xlu0 %v8713, 96
    %v9130 = vpop.permute.xlu0 %9129
    %9131 = vrot.lane.b32.xlu0 %v8715, 96
    %v9132 = vpop.permute.xlu0 %9131
    %9141 = vrot.lane.b32.xlu0 %v8744, 112
    %v9142 = vpop.permute.xlu0 %9141
    %9143 = vrot.lane.b32.xlu0 %v8746, 112
    %v9144 = vpop.permute.xlu0 %9143
    %9145 = vrot.lane.b32.xlu0 %v8749, 112
    %v9146 = vpop.permute.xlu0 %9145
    %9147 = vrot.lane.b32.xlu0 %v8751, 112
    %v9148 = vpop.permute.xlu0 %9147
    %9157 = vrot.lane.b32.xlu0 %v8816, 16
    %v9158 = vpop.permute.xlu0 %9157
    %9159 = vrot.lane.b32.xlu0 %v8818, 16
    %v9160 = vpop.permute.xlu0 %9159
    %9161 = vrot.lane.b32.xlu0 %v8821, 16
    %v9162 = vpop.permute.xlu0 %9161
    %9163 = vrot.lane.b32.xlu0 %v8823, 16
    %v9164 = vpop.permute.xlu0 %9163
    %9173 = vrot.lane.b32.xlu0 %v8852, 32
    %v9174 = vpop.permute.xlu0 %9173
    %9175 = vrot.lane.b32.xlu0 %v8854, 32
    %v9176 = vpop.permute.xlu0 %9175
    %9177 = vrot.lane.b32.xlu0 %v8857, 32
    %v9178 = vpop.permute.xlu0 %9177
    %9179 = vrot.lane.b32.xlu0 %v8859, 32
    %v9180 = vpop.permute.xlu0 %9179
    %9189 = vrot.lane.b32.xlu0 %v8888, 48
    %v9190 = vpop.permute.xlu0 %9189
    %9191 = vrot.lane.b32.xlu0 %v8890, 48
    %v9192 = vpop.permute.xlu0 %9191
    %9193 = vrot.lane.b32.xlu0 %v8893, 48
    %v9194 = vpop.permute.xlu0 %9193
    %9195 = vrot.lane.b32.xlu0 %v8895, 48
    %v9196 = vpop.permute.xlu0 %9195
    %9205 = vrot.lane.b32.xlu0 %v8924, 64
    %v9206 = vpop.permute.xlu0 %9205
    %9207 = vrot.lane.b32.xlu0 %v8926, 64
    %v9208 = vpop.permute.xlu0 %9207
    %9209 = vrot.lane.b32.xlu0 %v8929, 64
    %v9210 = vpop.permute.xlu0 %9209
    %9211 = vrot.lane.b32.xlu0 %v8931, 64
    %v9212 = vpop.permute.xlu0 %9211
    %9221 = vrot.lane.b32.xlu0 %v8960, 80
    %v9222 = vpop.permute.xlu0 %9221
    %9223 = vrot.lane.b32.xlu0 %v8962, 80
    %v9224 = vpop.permute.xlu0 %9223
    %9225 = vrot.lane.b32.xlu0 %v8965, 80
    %v9226 = vpop.permute.xlu0 %9225
    %9227 = vrot.lane.b32.xlu0 %v8967, 80
    %v9228 = vpop.permute.xlu0 %9227
    %9237 = vrot.lane.b32.xlu0 %v8996, 96
    %v9238 = vpop.permute.xlu0 %9237
    %9239 = vrot.lane.b32.xlu0 %v8998, 96
    %v9240 = vpop.permute.xlu0 %9239
    %9241 = vrot.lane.b32.xlu0 %v9001, 96
    %v9242 = vpop.permute.xlu0 %9241
    %9243 = vrot.lane.b32.xlu0 %v9003, 96
    %v9244 = vpop.permute.xlu0 %9243
    %9253 = vrot.lane.b32.xlu0 %v9032, 112
    %v9254 = vpop.permute.xlu0 %9253
    %9255 = vrot.lane.b32.xlu0 %v9034, 112
    %v9256 = vpop.permute.xlu0 %9255
    %9257 = vrot.lane.b32.xlu0 %v9037, 112
    %v9258 = vpop.permute.xlu0 %9257
    %9259 = vrot.lane.b32.xlu0 %v9039, 112
    %v9260 = vpop.permute.xlu0 %9259
    %v9265 = vsel %vm197, %v8492, %v9046
    %v9266 = vsel %vm197, %v8494, %v9048
    %v9267 = vsel %vm197, %v8497, %v9050
    %v9268 = vsel %vm197, %v8499, %v9052
    %v9269 = vsel %vm7920, %v9265, %v9062
    %v9270 = vsel %vm7920, %v9266, %v9064
    %v9271 = vsel %vm7920, %v9267, %v9066
    %v9272 = vsel %vm7920, %v9268, %v9068
    %v9273 = vsel %vm7954, %v9269, %v9078
    %v9274 = vsel %vm7954, %v9270, %v9080
    %v9275 = vsel %vm7954, %v9271, %v9082
    %v9276 = vsel %vm7954, %v9272, %v9084
    %v9277 = vsel %vm7988, %v9273, %v9094
    %v9278 = vsel %vm7988, %v9274, %v9096
    %v9279 = vsel %vm7988, %v9275, %v9098
    %v9280 = vsel %vm7988, %v9276, %v9100
    %v9281 = vsel %vm8022, %v9277, %v9110
    %v9282 = vsel %vm8022, %v9278, %v9112
    %v9283 = vsel %vm8022, %v9279, %v9114
    %v9284 = vsel %vm8022, %v9280, %v9116
    %v9285 = vsel %vm8056, %v9281, %v9126
    %v9286 = vsel %vm8056, %v9282, %v9128
    %v9287 = vsel %vm8056, %v9283, %v9130
    %v9288 = vsel %vm8056, %v9284, %v9132
    %v9289 = vsel %vm8090, %v9285, %v9142
    %v9290 = vsel %vm8090, %v9286, %v9144
    %v9291 = vsel %vm8090, %v9287, %v9146
    %v9292 = vsel %vm8090, %v9288, %v9148
    %v9293 = vsel %vm197, %v8780, %v9158
    %v9294 = vsel %vm197, %v8782, %v9160
    %v9295 = vsel %vm197, %v8785, %v9162
    %v9296 = vsel %vm197, %v8787, %v9164
    %v9297 = vsel %vm7920, %v9293, %v9174
    %v9298 = vsel %vm7920, %v9294, %v9176
    %v9299 = vsel %vm7920, %v9295, %v9178
    %v9300 = vsel %vm7920, %v9296, %v9180
    %v9301 = vsel %vm7954, %v9297, %v9190
    %v9302 = vsel %vm7954, %v9298, %v9192
    %v9303 = vsel %vm7954, %v9299, %v9194
    %v9304 = vsel %vm7954, %v9300, %v9196
    %v9305 = vsel %vm7988, %v9301, %v9206
    %v9306 = vsel %vm7988, %v9302, %v9208
    %v9307 = vsel %vm7988, %v9303, %v9210
    %v9308 = vsel %vm7988, %v9304, %v9212
    %v9309 = vsel %vm8022, %v9305, %v9222
    %v9310 = vsel %vm8022, %v9306, %v9224
    %v9311 = vsel %vm8022, %v9307, %v9226
    %v9312 = vsel %vm8022, %v9308, %v9228
    %v9313 = vsel %vm8056, %v9309, %v9238
    %v9314 = vsel %vm8056, %v9310, %v9240
    %v9315 = vsel %vm8056, %v9311, %v9242
    %v9316 = vsel %vm8056, %v9312, %v9244
    %v9317 = vsel %vm8090, %v9313, %v9254
    %v9318 = vsel %vm8090, %v9314, %v9256
    %v9319 = vsel %vm8090, %v9315, %v9258
    %v9320 = vsel %vm8090, %v9316, %v9260
    %v9321 = vpack.c.bf16 %v9290, %v9289
    %v9322 = vpack.c.bf16 %v9318, %v9317
    %v9323 = vpack.c.bf16 %v9292, %v9291
    %v9324 = vpack.c.bf16 %v9320, %v9319
    %v9325 = vld [vmem:[%s5] sm:$0xf]
    %v9326 = vld [vmem:[%s5 + $0x4] sm:$0xf]
    %v9327 = vld [vmem:[%s5 + $0x8] sm:$0xf]
    %v9328 = vld [vmem:[%s5 + $0xc] sm:$0xf]
    %v9329 = vld [vmem:[%s5 + $0x10] sm:$0xf]
    %v9330 = vld [vmem:[%s5 + $0x14] sm:$0xf]
    %v9331 = vld [vmem:[%s5 + $0x18] sm:$0xf]
    %v9332 = vld [vmem:[%s5 + $0x1c] sm:$0xf]
    %v9333 = vld [vmem:[%s5 + $0x20] sm:$0xf]
    %v9334 = vld [vmem:[%s5 + $0x24] sm:$0xf]
    %v9335 = vld [vmem:[%s5 + $0x28] sm:$0xf]
    %v9336 = vld [vmem:[%s5 + $0x2c] sm:$0xf]
    %v9337 = vld [vmem:[%s5 + $0x30] sm:$0xf]
    %v9338 = vld [vmem:[%s5 + $0x34] sm:$0xf]
    %v9339 = vld [vmem:[%s5 + $0x38] sm:$0xf]
    %v9340 = vld [vmem:[%s5 + $0x3c] sm:$0xf]
    %v9341 = vld [vmem:[%s5 + $0x40] sm:$0xf]
    %v9342 = vld [vmem:[%s5 + $0x44] sm:$0xf]
    %v9343 = vld [vmem:[%s5 + $0x48] sm:$0xf]
    %v9344 = vld [vmem:[%s5 + $0x4c] sm:$0xf]
    %v9345 = vld [vmem:[%s5 + $0x50] sm:$0xf]
    %v9346 = vld [vmem:[%s5 + $0x54] sm:$0xf]
    %v9347 = vld [vmem:[%s5 + $0x58] sm:$0xf]
    %v9348 = vld [vmem:[%s5 + $0x5c] sm:$0xf]
    %v9349 = vld [vmem:[%s5 + $0x60] sm:$0xf]
    %v9350 = vld [vmem:[%s5 + $0x64] sm:$0xf]
    %v9351 = vld [vmem:[%s5 + $0x68] sm:$0xf]
    %v9352 = vld [vmem:[%s5 + $0x6c] sm:$0xf]
    %v9353 = vld [vmem:[%s5 + $0x70] sm:$0xf]
    %v9354 = vld [vmem:[%s5 + $0x74] sm:$0xf]
    %v9355 = vld [vmem:[%s5 + $0x78] sm:$0xf]
    %v9356 = vld [vmem:[%s5 + $0x7c] sm:$0xf]
    %v9389 = vunpack.c.l.b16 %v9325
    %v9390 = vunpack.c.l.b16 %v9326
    %v9391 = vunpack.c.l.b16 %v9327
    %v9392 = vunpack.c.l.b16 %v9328
    %v9393 = vunpack.c.l.b16 %v9329
    %v9394 = vunpack.c.l.b16 %v9330
    %v9395 = vunpack.c.l.b16 %v9331
    %v9396 = vunpack.c.l.b16 %v9332
    %v9397 = vunpack.c.l.b16 %v9333
    %v9398 = vunpack.c.l.b16 %v9334
    %v9399 = vunpack.c.l.b16 %v9335
    %v9400 = vunpack.c.l.b16 %v9336
    %v9401 = vunpack.c.l.b16 %v9337
    %v9402 = vunpack.c.l.b16 %v9338
    %v9403 = vunpack.c.l.b16 %v9339
    %v9404 = vunpack.c.l.b16 %v9340
    %v9405 = vunpack.c.l.b16 %v9341
    %v9406 = vunpack.c.l.b16 %v9342
    %v9407 = vunpack.c.l.b16 %v9343
    %v9408 = vunpack.c.l.b16 %v9344
    %v9409 = vunpack.c.l.b16 %v9345
    %v9410 = vunpack.c.l.b16 %v9346
    %v9411 = vunpack.c.l.b16 %v9347
    %v9412 = vunpack.c.l.b16 %v9348
    %v9413 = vunpack.c.l.b16 %v9349
    %v9414 = vunpack.c.l.b16 %v9350
    %v9415 = vunpack.c.l.b16 %v9351
    %v9416 = vunpack.c.l.b16 %v9352
    %v9417 = vunpack.c.l.b16 %v9353
    %v9418 = vunpack.c.l.b16 %v9354
    %v9419 = vunpack.c.l.b16 %v9355
    %v9420 = vunpack.c.l.b16 %v9356
    %v9421 = vpack.c.b16 %v9390, %v9389
    %v9422 = vpack.c.b16 %v9392, %v9391
    %v9423 = vpack.c.b16 %v9394, %v9393
    %v9424 = vpack.c.b16 %v9396, %v9395
    %v9425 = vpack.c.b16 %v9398, %v9397
    %v9426 = vpack.c.b16 %v9400, %v9399
    %v9427 = vpack.c.b16 %v9402, %v9401
    %v9428 = vpack.c.b16 %v9404, %v9403
    %v9429 = vpack.c.b16 %v9406, %v9405
    %v9430 = vpack.c.b16 %v9408, %v9407
    %v9431 = vpack.c.b16 %v9410, %v9409
    %v9432 = vpack.c.b16 %v9412, %v9411
    %v9433 = vpack.c.b16 %v9414, %v9413
    %v9434 = vpack.c.b16 %v9416, %v9415
    %v9435 = vpack.c.b16 %v9418, %v9417
    %v9436 = vpack.c.b16 %v9420, %v9419
    %9453 = vmatpush.bf16.msra.mxu0 %v9428
    %9454 = vmatpush.bf16.msra.mxu0 %v9427
    %9455 = vmatpush.bf16.msra.mxu0 %v9426
    %9456 = vmatpush.bf16.msra.mxu0 %v9425
    %9457 = vmatpush.bf16.msra.mxu0 %v9424
    %9458 = vmatpush.bf16.msra.mxu0 %v9423
    %9459 = vmatpush.bf16.msra.mxu0 %v9422
    %9460 = vmatpush.bf16.msra.mxu0 %v9421
    %9461 = vmatmul.bf16.gmra.mxu0 %v9321
    %v9462 = vpop.f32.mrf.mxu0
    %v9463 = vadd.f32 0.0, %v9462
    %v9464 = vpop.f32.mrf.mxu0
    %v9465 = vadd.f32 0.0, %v9464
    %9466 = vmatmul.bf16.gmra.mxu0 %v9323
    %v9467 = vpop.f32.mrf.mxu0
    %v9468 = vadd.f32 0.0, %v9467
    %v9469 = vpop.f32.mrf.mxu0
    %v9470 = vadd.f32 0.0, %v9469
    %9471 = vdwg.mxu0
    %9472 = vmatpush.bf16.msra.mxu0 %v9436
    %9473 = vmatpush.bf16.msra.mxu0 %v9435
    %9474 = vmatpush.bf16.msra.mxu0 %v9434
    %9475 = vmatpush.bf16.msra.mxu0 %v9433
    %9476 = vmatpush.bf16.msra.mxu0 %v9432
    %9477 = vmatpush.bf16.msra.mxu0 %v9431
    %9478 = vmatpush.bf16.msra.mxu0 %v9430
    %9479 = vmatpush.bf16.msra.mxu0 %v9429
    %9480 = vmatmul.bf16.gmra.mxu0 %v9322
    %v9481 = vpop.f32.mrf.mxu0
    %v9482 = vadd.f32 %v9463, %v9481
    %v9483 = vpop.f32.mrf.mxu0
    %v9484 = vadd.f32 %v9465, %v9483
    %9485 = vmatmul.bf16.gmra.mxu0 %v9324
    %v9486 = vpop.f32.mrf.mxu0
    %v9487 = vadd.f32 %v9468, %v9486
    %v9488 = vpop.f32.mrf.mxu0
    %v9489 = vadd.f32 %v9470, %v9488
    %9490 = vdwg.mxu0
    %v9491 = vsel %vm7920, %v9482, 0.0
    %v9492 = vsel %vm7920, %v9484, 0.0
    %v9493 = vadd.f32 %v9491, %v9492
    %v9494 = vrot.slane %v9493, 4
    %v9495 = vadd.f32 %v9493, %v9494
    %v9496 = vrot.slane %v9495, 2
    %v9497 = vadd.f32 %v9495, %v9496
    %v9498 = vrot.slane %v9497, 1
    %v9499 = vadd.f32 %v9497, %v9498
    %v9500 = vsel %vm7920, %v9487, 0.0
    %v9501 = vsel %vm7920, %v9489, 0.0
    %v9502 = vadd.f32 %v9500, %v9501
    %v9503 = vrot.slane %v9502, 4
    %v9504 = vadd.f32 %v9502, %v9503
    %v9505 = vrot.slane %v9504, 2
    %v9506 = vadd.f32 %v9504, %v9505
    %v9507 = vrot.slane %v9506, 1
    %v9508 = vadd.f32 %v9506, %v9507
    %v9509 = vrcp.pop 16.0
    %v9510 = vmul.f32 16.0, %v9509
    %v9511 = vsub.f32 1.0, %v9510
    %v9512 = vmul.f32 %v9509, %v9511
    %v9513 = vadd.f32 %v9509, %v9512
    %vm9514 = vweird.f32 %v9509
    %v9515 = vsel %vm9514, %v9509, %v9513
    %v9516 = vmul.f32 %v9499, %v9515
    %v9517 = vmul.f32 %v9508, %v9515
    %v9518 = vsub.f32 %v9482, %v9516
    %v9519 = vsub.f32 %v9484, %v9516
    %v9520 = vsub.f32 %v9487, %v9517
    %v9521 = vsub.f32 %v9489, %v9517
    %v9522 = vmul.f32 %v9518, %v9518
    %v9523 = vmul.f32 %v9519, %v9519
    %v9524 = vmul.f32 %v9520, %v9520
    %v9525 = vmul.f32 %v9521, %v9521
    %v9526 = vsel %vm7920, %v9522, 0.0
    %v9527 = vsel %vm7920, %v9523, 0.0
    %v9528 = vadd.f32 %v9526, %v9527
    %v9529 = vrot.slane %v9528, 4
    %v9530 = vadd.f32 %v9528, %v9529
    %v9531 = vrot.slane %v9530, 2
    %v9532 = vadd.f32 %v9530, %v9531
    %v9533 = vrot.slane %v9532, 1
    %v9534 = vadd.f32 %v9532, %v9533
    %v9535 = vsel %vm7920, %v9524, 0.0
    %v9536 = vsel %vm7920, %v9525, 0.0
    %v9537 = vadd.f32 %v9535, %v9536
    %v9538 = vrot.slane %v9537, 4
    %v9539 = vadd.f32 %v9537, %v9538
    %v9540 = vrot.slane %v9539, 2
    %v9541 = vadd.f32 %v9539, %v9540
    %v9542 = vrot.slane %v9541, 1
    %v9543 = vadd.f32 %v9541, %v9542
    %v9544 = vmul.f32 %v9534, %v9515
    %v9545 = vmul.f32 %v9543, %v9515
    %v9546 = vadd.f32 %v9544, 1e-05
    %v9547 = vadd.f32 %v9545, 1e-05
    %v9548 = vrsqrt.pop %v9546
    %v9549 = vmul.f32 %v9548, %v9546
    %v9550 = vmul.f32 %v9549, %v9548
    %v9551 = vmul.f32 0.5, %v9550
    %v9552 = vsub.f32 1.5, %v9551
    %v9553 = vmul.f32 %v9548, %v9552
    %vm9554 = vweird.f32 %v9546
    %vm9555 = vweird.f32 %v9548
    %vm9556 = vmor %vm9554, %vm9555
    %v9557 = vsel %vm9556, %v9548, %v9553
    %v9558 = vrsqrt.pop %v9547
    %v9559 = vmul.f32 %v9558, %v9547
    %v9560 = vmul.f32 %v9559, %v9558
    %v9561 = vmul.f32 0.5, %v9560
    %v9562 = vsub.f32 1.5, %v9561
    %v9563 = vmul.f32 %v9558, %v9562
    %vm9564 = vweird.f32 %v9547
    %vm9565 = vweird.f32 %v9558
    %vm9566 = vmor %vm9564, %vm9565
    %v9567 = vsel %vm9566, %v9558, %v9563
    %v9568 = vmul.f32 %v9518, %v9557
    %v9569 = vmul.f32 %v9519, %v9557
    %v9570 = vmul.f32 %v9520, %v9567
    %v9571 = vmul.f32 %v9521, %v9567
    %vm9572 = vcmp.ge.f32.partialorder %v9568, 0.0
    %vm9573 = vcmp.ge.f32.partialorder %v9569, 0.0
    %vm9574 = vcmp.ge.f32.partialorder %v9570, 0.0
    %vm9575 = vcmp.ge.f32.partialorder %v9571, 0.0
    %v9576 = vmul.f32 %v9568, 0.05
    %v9577 = vmul.f32 %v9569, 0.05
    %v9578 = vmul.f32 %v9570, 0.05
    %v9579 = vmul.f32 %v9571, 0.05
    %v9580 = vsel %vm9572, %v9568, %v9576
    %v9581 = vsel %vm9573, %v9569, %v9577
    %v9582 = vsel %vm9574, %v9570, %v9578
    %v9583 = vsel %vm9575, %v9571, %v9579
    %v9584 = vpack.c.bf16 %v9581, %v9580
    %v9585 = vpack.c.bf16 %v9583, %v9582
    %v9586 = vld [vmem:[#allocation6] sm:$0x1]
    %v9588 = vsel %vm7920, %v9586, 0
    %9590 = vmatpush.bf16.msra.mxu0 0
    %9591 = vmatpush.bf16.msra.mxu0 0
    %9592 = vmatpush.bf16.msra.mxu0 0
    %9593 = vmatpush.bf16.msra.mxu0 0
    %9594 = vmatpush.bf16.msra.mxu0 0
    %9595 = vmatpush.bf16.msra.mxu0 0
    %9596 = vmatpush.bf16.msra.mxu0 %v9585
    %9597 = vmatpush.bf16.msra.mxu0 %v9584
    %9598 = vmatmul.bf16.gmra.mxu0 %v9588
    %v9599 = vpop.f32.mrf.mxu0
    %v9600 = vadd.f32 0.0, %v9599
    %v9601 = vpop.f32.mrf.mxu0
    %9602 = vdwg.mxu0
    %s9603 = scalar_lea.vmem [#allocation6], 1
    %v9604 = vld [vmem:[%s9603] sm:$0x1]
    %v9606 = vsel %vm7920, %v9604, 0
    %9608 = vmatpush.bf16.msra.mxu0 0
    %9609 = vmatpush.bf16.msra.mxu0 0
    %9610 = vmatpush.bf16.msra.mxu0 0
    %9611 = vmatpush.bf16.msra.mxu0 0
    %9612 = vmatpush.bf16.msra.mxu0 0
    %9613 = vmatpush.bf16.msra.mxu0 0
    %9614 = vmatpush.bf16.msra.mxu0 %v9585
    %9615 = vmatpush.bf16.msra.mxu0 %v9584
    %9616 = vmatmul.bf16.gmra.mxu0 %v9606
    %v9617 = vpop.f32.mrf.mxu0
    %v9618 = vadd.f32 0.0, %v9617
    %v9619 = vpop.f32.mrf.mxu0
    %9620 = vdwg.mxu0
    %s9621 = scalar_lea.vmem [#allocation6], 2
    %v9622 = vld [vmem:[%s9621] sm:$0x1]
    %v9624 = vsel %vm7920, %v9622, 0
    %9626 = vmatpush.bf16.msra.mxu0 0
    %9627 = vmatpush.bf16.msra.mxu0 0
    %9628 = vmatpush.bf16.msra.mxu0 0
    %9629 = vmatpush.bf16.msra.mxu0 0
    %9630 = vmatpush.bf16.msra.mxu0 0
    %9631 = vmatpush.bf16.msra.mxu0 0
    %9632 = vmatpush.bf16.msra.mxu0 %v9585
    %9633 = vmatpush.bf16.msra.mxu0 %v9584
    %9634 = vmatmul.bf16.gmra.mxu0 %v9624
    %v9635 = vpop.f32.mrf.mxu0
    %v9636 = vadd.f32 0.0, %v9635
    %v9637 = vpop.f32.mrf.mxu0
    %9638 = vdwg.mxu0
    %s9639 = scalar_lea.vmem [#allocation6], 3
    %v9640 = vld [vmem:[%s9639] sm:$0x1]
    %v9642 = vsel %vm7920, %v9640, 0
    %9644 = vmatpush.bf16.msra.mxu0 0
    %9645 = vmatpush.bf16.msra.mxu0 0
    %9646 = vmatpush.bf16.msra.mxu0 0
    %9647 = vmatpush.bf16.msra.mxu0 0
    %9648 = vmatpush.bf16.msra.mxu0 0
    %9649 = vmatpush.bf16.msra.mxu0 0
    %9650 = vmatpush.bf16.msra.mxu0 %v9585
    %9651 = vmatpush.bf16.msra.mxu0 %v9584
    %9652 = vmatmul.bf16.gmra.mxu0 %v9642
    %v9653 = vpop.f32.mrf.mxu0
    %v9654 = vadd.f32 0.0, %v9653
    %v9655 = vpop.f32.mrf.mxu0
    %9656 = vdwg.mxu0
    %s9657 = scalar_lea.vmem [#allocation6], 4
    %v9658 = vld [vmem:[%s9657] sm:$0x1]
    %v9660 = vsel %vm7920, %v9658, 0
    %9662 = vmatpush.bf16.msra.mxu0 0
    %9663 = vmatpush.bf16.msra.mxu0 0
    %9664 = vmatpush.bf16.msra.mxu0 0
    %9665 = vmatpush.bf16.msra.mxu0 0
    %9666 = vmatpush.bf16.msra.mxu0 0
    %9667 = vmatpush.bf16.msra.mxu0 0
    %9668 = vmatpush.bf16.msra.mxu0 %v9585
    %9669 = vmatpush.bf16.msra.mxu0 %v9584
    %9670 = vmatmul.bf16.gmra.mxu0 %v9660
    %v9671 = vpop.f32.mrf.mxu0
    %v9672 = vadd.f32 0.0, %v9671
    %v9673 = vpop.f32.mrf.mxu0
    %9674 = vdwg.mxu0
    %s9675 = scalar_lea.vmem [#allocation6], 5
    %v9676 = vld [vmem:[%s9675] sm:$0x1]
    %v9678 = vsel %vm7920, %v9676, 0
    %9680 = vmatpush.bf16.msra.mxu0 0
    %9681 = vmatpush.bf16.msra.mxu0 0
    %9682 = vmatpush.bf16.msra.mxu0 0
    %9683 = vmatpush.bf16.msra.mxu0 0
    %9684 = vmatpush.bf16.msra.mxu0 0
    %9685 = vmatpush.bf16.msra.mxu0 0
    %9686 = vmatpush.bf16.msra.mxu0 %v9585
    %9687 = vmatpush.bf16.msra.mxu0 %v9584
    %9688 = vmatmul.bf16.gmra.mxu0 %v9678
    %v9689 = vpop.f32.mrf.mxu0
    %v9690 = vadd.f32 0.0, %v9689
    %v9691 = vpop.f32.mrf.mxu0
    %9692 = vdwg.mxu0
    %s9693 = scalar_lea.vmem [#allocation6], 6
    %v9694 = vld [vmem:[%s9693] sm:$0x1]
    %v9696 = vsel %vm7920, %v9694, 0
    %9698 = vmatpush.bf16.msra.mxu0 0
    %9699 = vmatpush.bf16.msra.mxu0 0
    %9700 = vmatpush.bf16.msra.mxu0 0
    %9701 = vmatpush.bf16.msra.mxu0 0
    %9702 = vmatpush.bf16.msra.mxu0 0
    %9703 = vmatpush.bf16.msra.mxu0 0
    %9704 = vmatpush.bf16.msra.mxu0 %v9585
    %9705 = vmatpush.bf16.msra.mxu0 %v9584
    %9706 = vmatmul.bf16.gmra.mxu0 %v9696
    %v9707 = vpop.f32.mrf.mxu0
    %v9708 = vadd.f32 0.0, %v9707
    %v9709 = vpop.f32.mrf.mxu0
    %9710 = vdwg.mxu0
    %s9711 = scalar_lea.vmem [#allocation6], 7
    %v9712 = vld [vmem:[%s9711] sm:$0x1]
    %v9714 = vsel %vm7920, %v9712, 0
    %9716 = vmatpush.bf16.msra.mxu0 0
    %9717 = vmatpush.bf16.msra.mxu0 0
    %9718 = vmatpush.bf16.msra.mxu0 0
    %9719 = vmatpush.bf16.msra.mxu0 0
    %9720 = vmatpush.bf16.msra.mxu0 0
    %9721 = vmatpush.bf16.msra.mxu0 0
    %9722 = vmatpush.bf16.msra.mxu0 %v9585
    %9723 = vmatpush.bf16.msra.mxu0 %v9584
    %9724 = vmatmul.bf16.gmra.mxu0 %v9714
    %v9725 = vpop.f32.mrf.mxu0
    %v9726 = vadd.f32 0.0, %v9725
    %v9727 = vpop.f32.mrf.mxu0
    %9728 = vdwg.mxu0
    %s9729 = scalar_lea.vmem [#allocation6], 8
    %v9730 = vld [vmem:[%s9729] sm:$0x1]
    %v9732 = vsel %vm7920, %v9730, 0
    %9734 = vmatpush.bf16.msra.mxu0 0
    %9735 = vmatpush.bf16.msra.mxu0 0
    %9736 = vmatpush.bf16.msra.mxu0 0
    %9737 = vmatpush.bf16.msra.mxu0 0
    %9738 = vmatpush.bf16.msra.mxu0 0
    %9739 = vmatpush.bf16.msra.mxu0 0
    %9740 = vmatpush.bf16.msra.mxu0 %v9585
    %9741 = vmatpush.bf16.msra.mxu0 %v9584
    %9742 = vmatmul.bf16.gmra.mxu0 %v9732
    %v9743 = vpop.f32.mrf.mxu0
    %v9744 = vadd.f32 0.0, %v9743
    %v9745 = vpop.f32.mrf.mxu0
    %9746 = vdwg.mxu0
    %s9747 = scalar_lea.vmem [#allocation6], 9
    %v9748 = vld [vmem:[%s9747] sm:$0x1]
    %v9750 = vsel %vm7920, %v9748, 0
    %9752 = vmatpush.bf16.msra.mxu0 0
    %9753 = vmatpush.bf16.msra.mxu0 0
    %9754 = vmatpush.bf16.msra.mxu0 0
    %9755 = vmatpush.bf16.msra.mxu0 0
    %9756 = vmatpush.bf16.msra.mxu0 0
    %9757 = vmatpush.bf16.msra.mxu0 0
    %9758 = vmatpush.bf16.msra.mxu0 %v9585
    %9759 = vmatpush.bf16.msra.mxu0 %v9584
    %9760 = vmatmul.bf16.gmra.mxu0 %v9750
    %v9761 = vpop.f32.mrf.mxu0
    %v9762 = vadd.f32 0.0, %v9761
    %v9763 = vpop.f32.mrf.mxu0
    %9764 = vdwg.mxu0
    %s9765 = scalar_lea.vmem [#allocation6], 10
    %v9766 = vld [vmem:[%s9765] sm:$0x1]
    %v9768 = vsel %vm7920, %v9766, 0
    %9770 = vmatpush.bf16.msra.mxu0 0
    %9771 = vmatpush.bf16.msra.mxu0 0
    %9772 = vmatpush.bf16.msra.mxu0 0
    %9773 = vmatpush.bf16.msra.mxu0 0
    %9774 = vmatpush.bf16.msra.mxu0 0
    %9775 = vmatpush.bf16.msra.mxu0 0
    %9776 = vmatpush.bf16.msra.mxu0 %v9585
    %9777 = vmatpush.bf16.msra.mxu0 %v9584
    %9778 = vmatmul.bf16.gmra.mxu0 %v9768
    %v9779 = vpop.f32.mrf.mxu0
    %v9780 = vadd.f32 0.0, %v9779
    %v9781 = vpop.f32.mrf.mxu0
    %9782 = vdwg.mxu0
    %s9783 = scalar_lea.vmem [#allocation6], 11
    %v9784 = vld [vmem:[%s9783] sm:$0x1]
    %v9786 = vsel %vm7920, %v9784, 0
    %9788 = vmatpush.bf16.msra.mxu0 0
    %9789 = vmatpush.bf16.msra.mxu0 0
    %9790 = vmatpush.bf16.msra.mxu0 0
    %9791 = vmatpush.bf16.msra.mxu0 0
    %9792 = vmatpush.bf16.msra.mxu0 0
    %9793 = vmatpush.bf16.msra.mxu0 0
    %9794 = vmatpush.bf16.msra.mxu0 %v9585
    %9795 = vmatpush.bf16.msra.mxu0 %v9584
    %9796 = vmatmul.bf16.gmra.mxu0 %v9786
    %v9797 = vpop.f32.mrf.mxu0
    %v9798 = vadd.f32 0.0, %v9797
    %v9799 = vpop.f32.mrf.mxu0
    %9800 = vdwg.mxu0
    %s9801 = scalar_lea.vmem [#allocation6], 12
    %v9802 = vld [vmem:[%s9801] sm:$0x1]
    %v9804 = vsel %vm7920, %v9802, 0
    %9806 = vmatpush.bf16.msra.mxu0 0
    %9807 = vmatpush.bf16.msra.mxu0 0
    %9808 = vmatpush.bf16.msra.mxu0 0
    %9809 = vmatpush.bf16.msra.mxu0 0
    %9810 = vmatpush.bf16.msra.mxu0 0
    %9811 = vmatpush.bf16.msra.mxu0 0
    %9812 = vmatpush.bf16.msra.mxu0 %v9585
    %9813 = vmatpush.bf16.msra.mxu0 %v9584
    %9814 = vmatmul.bf16.gmra.mxu0 %v9804
    %v9815 = vpop.f32.mrf.mxu0
    %v9816 = vadd.f32 0.0, %v9815
    %v9817 = vpop.f32.mrf.mxu0
    %9818 = vdwg.mxu0
    %s9819 = scalar_lea.vmem [#allocation6], 13
    %v9820 = vld [vmem:[%s9819] sm:$0x1]
    %v9822 = vsel %vm7920, %v9820, 0
    %9824 = vmatpush.bf16.msra.mxu0 0
    %9825 = vmatpush.bf16.msra.mxu0 0
    %9826 = vmatpush.bf16.msra.mxu0 0
    %9827 = vmatpush.bf16.msra.mxu0 0
    %9828 = vmatpush.bf16.msra.mxu0 0
    %9829 = vmatpush.bf16.msra.mxu0 0
    %9830 = vmatpush.bf16.msra.mxu0 %v9585
    %9831 = vmatpush.bf16.msra.mxu0 %v9584
    %9832 = vmatmul.bf16.gmra.mxu0 %v9822
    %v9833 = vpop.f32.mrf.mxu0
    %v9834 = vadd.f32 0.0, %v9833
    %v9835 = vpop.f32.mrf.mxu0
    %9836 = vdwg.mxu0
    %s9837 = scalar_lea.vmem [#allocation6], 14
    %v9838 = vld [vmem:[%s9837] sm:$0x1]
    %v9840 = vsel %vm7920, %v9838, 0
    %9842 = vmatpush.bf16.msra.mxu0 0
    %9843 = vmatpush.bf16.msra.mxu0 0
    %9844 = vmatpush.bf16.msra.mxu0 0
    %9845 = vmatpush.bf16.msra.mxu0 0
    %9846 = vmatpush.bf16.msra.mxu0 0
    %9847 = vmatpush.bf16.msra.mxu0 0
    %9848 = vmatpush.bf16.msra.mxu0 %v9585
    %9849 = vmatpush.bf16.msra.mxu0 %v9584
    %9850 = vmatmul.bf16.gmra.mxu0 %v9840
    %v9851 = vpop.f32.mrf.mxu0
    %v9852 = vadd.f32 0.0, %v9851
    %v9853 = vpop.f32.mrf.mxu0
    %9854 = vdwg.mxu0
    %s9855 = scalar_lea.vmem [#allocation6], 15
    %v9856 = vld [vmem:[%s9855] sm:$0x1]
    %v9858 = vsel %vm7920, %v9856, 0
    %9860 = vmatpush.bf16.msra.mxu0 0
    %9861 = vmatpush.bf16.msra.mxu0 0
    %9862 = vmatpush.bf16.msra.mxu0 0
    %9863 = vmatpush.bf16.msra.mxu0 0
    %9864 = vmatpush.bf16.msra.mxu0 0
    %9865 = vmatpush.bf16.msra.mxu0 0
    %9866 = vmatpush.bf16.msra.mxu0 %v9585
    %9867 = vmatpush.bf16.msra.mxu0 %v9584
    %9868 = vmatmul.bf16.gmra.mxu0 %v9858
    %v9869 = vpop.f32.mrf.mxu0
    %v9870 = vadd.f32 0.0, %v9869
    %v9871 = vpop.f32.mrf.mxu0
    %9872 = vdwg.mxu0
    %9874 = vrot.lane.b32.xlu0 %v9618, 32
    %v9875 = vpop.permute.xlu0 %9874
    %9878 = vrot.lane.b32.xlu0 %v9636, 64
    %v9879 = vpop.permute.xlu0 %9878
    %9882 = vrot.lane.b32.xlu0 %v9654, 96
    %v9883 = vpop.permute.xlu0 %9882
    %9886 = vrot.lane.b32.xlu0 %v9690, 32
    %v9887 = vpop.permute.xlu0 %9886
    %9890 = vrot.lane.b32.xlu0 %v9708, 64
    %v9891 = vpop.permute.xlu0 %9890
    %9894 = vrot.lane.b32.xlu0 %v9726, 96
    %v9895 = vpop.permute.xlu0 %9894
    %9898 = vrot.lane.b32.xlu0 %v9762, 32
    %v9899 = vpop.permute.xlu0 %9898
    %9902 = vrot.lane.b32.xlu0 %v9780, 64
    %v9903 = vpop.permute.xlu0 %9902
    %9906 = vrot.lane.b32.xlu0 %v9798, 96
    %v9907 = vpop.permute.xlu0 %9906
    %9910 = vrot.lane.b32.xlu0 %v9834, 32
    %v9911 = vpop.permute.xlu0 %9910
    %9914 = vrot.lane.b32.xlu0 %v9852, 64
    %v9915 = vpop.permute.xlu0 %9914
    %9918 = vrot.lane.b32.xlu0 %v9870, 96
    %v9919 = vpop.permute.xlu0 %9918
    %v9921 = vsel %vm7920, %v9600, %v9875
    %v9922 = vsel %vm7988, %v9921, %v9879
    %v9923 = vsel %vm8056, %v9922, %v9883
    %v9924 = vsel %vm7920, %v9672, %v9887
    %v9925 = vsel %vm7988, %v9924, %v9891
    %v9926 = vsel %vm8056, %v9925, %v9895
    %v9927 = vsel %vm7920, %v9744, %v9899
    %v9928 = vsel %vm7988, %v9927, %v9903
    %v9929 = vsel %vm8056, %v9928, %v9907
    %v9930 = vsel %vm7920, %v9816, %v9911
    %v9931 = vsel %vm7988, %v9930, %v9915
    %v9932 = vsel %vm8056, %v9931, %v9919
    %v9933 = vpack.c.bf16 %v9923, %v9923
    %v9934 = vpack.c.bf16 %v9926, %v9926
    %v9935 = vpack.c.bf16 %v9929, %v9929
    %v9936 = vpack.c.bf16 %v9932, %v9932
    %v9937 = vld [vmem:[#allocation7] sm:$0xf]
    %v9938 = vld [vmem:[#allocation7 + $0x4] sm:$0xf]
    %v9939 = vld [vmem:[#allocation7 + $0x8] sm:$0xf]
    %v9940 = vld [vmem:[#allocation7 + $0xc] sm:$0xf]
    %v9941 = vld [vmem:[#allocation7 + $0x10] sm:$0xf]
    %v9942 = vld [vmem:[#allocation7 + $0x14] sm:$0xf]
    %v9943 = vld [vmem:[#allocation7 + $0x18] sm:$0xf]
    %v9944 = vld [vmem:[#allocation7 + $0x1c] sm:$0xf]
    %v9945 = vld [vmem:[#allocation7 + $0x20] sm:$0xf]
    %v9946 = vld [vmem:[#allocation7 + $0x24] sm:$0xf]
    %v9947 = vld [vmem:[#allocation7 + $0x28] sm:$0xf]
    %v9948 = vld [vmem:[#allocation7 + $0x2c] sm:$0xf]
    %v9949 = vld [vmem:[#allocation7 + $0x30] sm:$0xf]
    %v9950 = vld [vmem:[#allocation7 + $0x34] sm:$0xf]
    %v9951 = vld [vmem:[#allocation7 + $0x38] sm:$0xf]
    %v9952 = vld [vmem:[#allocation7 + $0x3c] sm:$0xf]
    %v9953 = vld [vmem:[#allocation7 + $0x40] sm:$0xf]
    %v9954 = vld [vmem:[#allocation7 + $0x44] sm:$0xf]
    %v9955 = vld [vmem:[#allocation7 + $0x48] sm:$0xf]
    %v9956 = vld [vmem:[#allocation7 + $0x4c] sm:$0xf]
    %v9957 = vld [vmem:[#allocation7 + $0x50] sm:$0xf]
    %v9958 = vld [vmem:[#allocation7 + $0x54] sm:$0xf]
    %v9959 = vld [vmem:[#allocation7 + $0x58] sm:$0xf]
    %v9960 = vld [vmem:[#allocation7 + $0x5c] sm:$0xf]
    %v9961 = vld [vmem:[#allocation7 + $0x60] sm:$0xf]
    %v9962 = vld [vmem:[#allocation7 + $0x64] sm:$0xf]
    %v9963 = vld [vmem:[#allocation7 + $0x68] sm:$0xf]
    %v9964 = vld [vmem:[#allocation7 + $0x6c] sm:$0xf]
    %v9965 = vld [vmem:[#allocation7 + $0x70] sm:$0xf]
    %v9966 = vld [vmem:[#allocation7 + $0x74] sm:$0xf]
    %v9967 = vld [vmem:[#allocation7 + $0x78] sm:$0xf]
    %v9968 = vld [vmem:[#allocation7 + $0x7c] sm:$0xf]
    %v9969 = vld [vmem:[#allocation7 + $0x80] sm:$0xf]
    %v9970 = vld [vmem:[#allocation7 + $0x84] sm:$0xf]
    %v9971 = vld [vmem:[#allocation7 + $0x88] sm:$0xf]
    %v9972 = vld [vmem:[#allocation7 + $0x8c] sm:$0xf]
    %v9973 = vld [vmem:[#allocation7 + $0x90] sm:$0xf]
    %v9974 = vld [vmem:[#allocation7 + $0x94] sm:$0xf]
    %v9975 = vld [vmem:[#allocation7 + $0x98] sm:$0xf]
    %v9976 = vld [vmem:[#allocation7 + $0x9c] sm:$0xf]
    %v9977 = vld [vmem:[#allocation7 + $0xa0] sm:$0xf]
    %v9978 = vld [vmem:[#allocation7 + $0xa4] sm:$0xf]
    %v9979 = vld [vmem:[#allocation7 + $0xa8] sm:$0xf]
    %v9980 = vld [vmem:[#allocation7 + $0xac] sm:$0xf]
    %v9981 = vld [vmem:[#allocation7 + $0xb0] sm:$0xf]
    %v9982 = vld [vmem:[#allocation7 + $0xb4] sm:$0xf]
    %v9983 = vld [vmem:[#allocation7 + $0xb8] sm:$0xf]
    %v9984 = vld [vmem:[#allocation7 + $0xbc] sm:$0xf]
    %v9985 = vld [vmem:[#allocation7 + $0xc0] sm:$0xf]
    %v9986 = vld [vmem:[#allocation7 + $0xc4] sm:$0xf]
    %v9987 = vld [vmem:[#allocation7 + $0xc8] sm:$0xf]
    %v9988 = vld [vmem:[#allocation7 + $0xcc] sm:$0xf]
    %v9989 = vld [vmem:[#allocation7 + $0xd0] sm:$0xf]
    %v9990 = vld [vmem:[#allocation7 + $0xd4] sm:$0xf]
    %v9991 = vld [vmem:[#allocation7 + $0xd8] sm:$0xf]
    %v9992 = vld [vmem:[#allocation7 + $0xdc] sm:$0xf]
    %v9993 = vld [vmem:[#allocation7 + $0xe0] sm:$0xf]
    %v9994 = vld [vmem:[#allocation7 + $0xe4] sm:$0xf]
    %v9995 = vld [vmem:[#allocation7 + $0xe8] sm:$0xf]
    %v9996 = vld [vmem:[#allocation7 + $0xec] sm:$0xf]
    %v9997 = vld [vmem:[#allocation7 + $0xf0] sm:$0xf]
    %v9998 = vld [vmem:[#allocation7 + $0xf4] sm:$0xf]
    %v9999 = vld [vmem:[#allocation7 + $0xf8] sm:$0xf]
    %v10000 = vld [vmem:[#allocation7 + $0xfc] sm:$0xf]
    %v10065 = vunpack.c.l.b16 %v9937
    %v10066 = vunpack.c.l.b16 %v9938
    %v10067 = vunpack.c.l.b16 %v9939
    %v10068 = vunpack.c.l.b16 %v9940
    %v10069 = vunpack.c.l.b16 %v9941
    %v10070 = vunpack.c.l.b16 %v9942
    %v10071 = vunpack.c.l.b16 %v9943
    %v10072 = vunpack.c.l.b16 %v9944
    %v10073 = vunpack.c.l.b16 %v9945
    %v10074 = vunpack.c.l.b16 %v9946
    %v10075 = vunpack.c.l.b16 %v9947
    %v10076 = vunpack.c.l.b16 %v9948
    %v10077 = vunpack.c.l.b16 %v9949
    %v10078 = vunpack.c.l.b16 %v9950
    %v10079 = vunpack.c.l.b16 %v9951
    %v10080 = vunpack.c.l.b16 %v9952
    %v10081 = vunpack.c.l.b16 %v9953
    %v10082 = vunpack.c.l.b16 %v9954
    %v10083 = vunpack.c.l.b16 %v9955
    %v10084 = vunpack.c.l.b16 %v9956
    %v10085 = vunpack.c.l.b16 %v9957
    %v10086 = vunpack.c.l.b16 %v9958
    %v10087 = vunpack.c.l.b16 %v9959
    %v10088 = vunpack.c.l.b16 %v9960
    %v10089 = vunpack.c.l.b16 %v9961
    %v10090 = vunpack.c.l.b16 %v9962
    %v10091 = vunpack.c.l.b16 %v9963
    %v10092 = vunpack.c.l.b16 %v9964
    %v10093 = vunpack.c.l.b16 %v9965
    %v10094 = vunpack.c.l.b16 %v9966
    %v10095 = vunpack.c.l.b16 %v9967
    %v10096 = vunpack.c.l.b16 %v9968
    %v10097 = vunpack.c.l.b16 %v9969
    %v10098 = vunpack.c.l.b16 %v9970
    %v10099 = vunpack.c.l.b16 %v9971
    %v10100 = vunpack.c.l.b16 %v9972
    %v10101 = vunpack.c.l.b16 %v9973
    %v10102 = vunpack.c.l.b16 %v9974
    %v10103 = vunpack.c.l.b16 %v9975
    %v10104 = vunpack.c.l.b16 %v9976
    %v10105 = vunpack.c.l.b16 %v9977
    %v10106 = vunpack.c.l.b16 %v9978
    %v10107 = vunpack.c.l.b16 %v9979
    %v10108 = vunpack.c.l.b16 %v9980
    %v10109 = vunpack.c.l.b16 %v9981
    %v10110 = vunpack.c.l.b16 %v9982
    %v10111 = vunpack.c.l.b16 %v9983
    %v10112 = vunpack.c.l.b16 %v9984
    %v10113 = vunpack.c.l.b16 %v9985
    %v10114 = vunpack.c.l.b16 %v9986
    %v10115 = vunpack.c.l.b16 %v9987
    %v10116 = vunpack.c.l.b16 %v9988
    %v10117 = vunpack.c.l.b16 %v9989
    %v10118 = vunpack.c.l.b16 %v9990
    %v10119 = vunpack.c.l.b16 %v9991
    %v10120 = vunpack.c.l.b16 %v9992
    %v10121 = vunpack.c.l.b16 %v9993
    %v10122 = vunpack.c.l.b16 %v9994
    %v10123 = vunpack.c.l.b16 %v9995
    %v10124 = vunpack.c.l.b16 %v9996
    %v10125 = vunpack.c.l.b16 %v9997
    %v10126 = vunpack.c.l.b16 %v9998
    %v10127 = vunpack.c.l.b16 %v9999
    %v10128 = vunpack.c.l.b16 %v10000
    %v10129 = vpack.c.b16 %v10066, %v10065
    %v10130 = vpack.c.b16 %v10068, %v10067
    %v10131 = vpack.c.b16 %v10070, %v10069
    %v10132 = vpack.c.b16 %v10072, %v10071
    %v10133 = vpack.c.b16 %v10074, %v10073
    %v10134 = vpack.c.b16 %v10076, %v10075
    %v10135 = vpack.c.b16 %v10078, %v10077
    %v10136 = vpack.c.b16 %v10080, %v10079
    %v10137 = vpack.c.b16 %v10082, %v10081
    %v10138 = vpack.c.b16 %v10084, %v10083
    %v10139 = vpack.c.b16 %v10086, %v10085
    %v10140 = vpack.c.b16 %v10088, %v10087
    %v10141 = vpack.c.b16 %v10090, %v10089
    %v10142 = vpack.c.b16 %v10092, %v10091
    %v10143 = vpack.c.b16 %v10094, %v10093
    %v10144 = vpack.c.b16 %v10096, %v10095
    %v10145 = vpack.c.b16 %v10098, %v10097
    %v10146 = vpack.c.b16 %v10100, %v10099
    %v10147 = vpack.c.b16 %v10102, %v10101
    %v10148 = vpack.c.b16 %v10104, %v10103
    %v10149 = vpack.c.b16 %v10106, %v10105
    %v10150 = vpack.c.b16 %v10108, %v10107
    %v10151 = vpack.c.b16 %v10110, %v10109
    %v10152 = vpack.c.b16 %v10112, %v10111
    %v10153 = vpack.c.b16 %v10114, %v10113
    %v10154 = vpack.c.b16 %v10116, %v10115
    %v10155 = vpack.c.b16 %v10118, %v10117
    %v10156 = vpack.c.b16 %v10120, %v10119
    %v10157 = vpack.c.b16 %v10122, %v10121
    %v10158 = vpack.c.b16 %v10124, %v10123
    %v10159 = vpack.c.b16 %v10126, %v10125
    %v10160 = vpack.c.b16 %v10128, %v10127
    %10193 = vmatpush.bf16.msra.mxu0 %v10136
    %10194 = vmatpush.bf16.msra.mxu0 %v10135
    %10195 = vmatpush.bf16.msra.mxu0 %v10134
    %10196 = vmatpush.bf16.msra.mxu0 %v10133
    %10197 = vmatpush.bf16.msra.mxu0 %v10132
    %10198 = vmatpush.bf16.msra.mxu0 %v10131
    %10199 = vmatpush.bf16.msra.mxu0 %v10130
    %10200 = vmatpush.bf16.msra.mxu0 %v10129
    %10201 = vmatmul.bf16.gmra.mxu0 %v9933
    %v10202 = vpop.f32.mrf.mxu0
    %v10203 = vadd.f32 0.0, %v10202
    %v10204 = vpop.f32.mrf.mxu0
    %10205 = vdwg.mxu0
    %10206 = vmatpush.bf16.msra.mxu0 %v10144
    %10207 = vmatpush.bf16.msra.mxu0 %v10143
    %10208 = vmatpush.bf16.msra.mxu0 %v10142
    %10209 = vmatpush.bf16.msra.mxu0 %v10141
    %10210 = vmatpush.bf16.msra.mxu0 %v10140
    %10211 = vmatpush.bf16.msra.mxu0 %v10139
    %10212 = vmatpush.bf16.msra.mxu0 %v10138
    %10213 = vmatpush.bf16.msra.mxu0 %v10137
    %10214 = vmatmul.bf16.gmra.mxu0 %v9934
    %v10215 = vpop.f32.mrf.mxu0
    %v10216 = vadd.f32 %v10203, %v10215
    %v10217 = vpop.f32.mrf.mxu0
    %10218 = vdwg.mxu0
    %10219 = vmatpush.bf16.msra.mxu0 %v10152
    %10220 = vmatpush.bf16.msra.mxu0 %v10151
    %10221 = vmatpush.bf16.msra.mxu0 %v10150
    %10222 = vmatpush.bf16.msra.mxu0 %v10149
    %10223 = vmatpush.bf16.msra.mxu0 %v10148
    %10224 = vmatpush.bf16.msra.mxu0 %v10147
    %10225 = vmatpush.bf16.msra.mxu0 %v10146
    %10226 = vmatpush.bf16.msra.mxu0 %v10145
    %10227 = vmatmul.bf16.gmra.mxu0 %v9935
    %v10228 = vpop.f32.mrf.mxu0
    %v10229 = vadd.f32 %v10216, %v10228
    %v10230 = vpop.f32.mrf.mxu0
    %10231 = vdwg.mxu0
    %10232 = vmatpush.bf16.msra.mxu0 %v10160
    %10233 = vmatpush.bf16.msra.mxu0 %v10159
    %10234 = vmatpush.bf16.msra.mxu0 %v10158
    %10235 = vmatpush.bf16.msra.mxu0 %v10157
    %10236 = vmatpush.bf16.msra.mxu0 %v10156
    %10237 = vmatpush.bf16.msra.mxu0 %v10155
    %10238 = vmatpush.bf16.msra.mxu0 %v10154
    %10239 = vmatpush.bf16.msra.mxu0 %v10153
    %10240 = vmatmul.bf16.gmra.mxu0 %v9936
    %v10241 = vpop.f32.mrf.mxu0
    %v10242 = vadd.f32 %v10229, %v10241
    %v10243 = vpop.f32.mrf.mxu0
    %10244 = vdwg.mxu0
    %10245 = vst [vmem:[%s8] sm:$0x3] %v10242
    // Predicated region
    $region50: #{forward.1} parent=1 // pred_check
      _
    $region51: #{forward.1} parent=1 // pred_check_branch
      %10247 = sbr.rel (0) target = $region53
    $region52: #{forward.1} parent=1 // pred_region
      _
    $region53: #{forward.1} parent=1 // pred_fallthru
      _
    // Predicated region
    $region54: #{forward.1} parent=1 // pred_check
      _
    $region55: #{forward.1} parent=1 // pred_check_branch
      %10249 = sbr.rel (0) target = $region57
    $region56: #{forward.1} parent=1 // pred_region
      _
    $region57: #{forward.1} parent=1 // pred_fallthru
      _
    %10250 = vsyncpa [#allocation3], 1
    %10251 = vsyncpa [#allocation5], 1
    %10252 = vsyncpa [#allocation8], 1

</llo_original>
